<compile_context>
chip_gen: v7x
topology: tpu7x:2x2x1
jax: 0.10.0
libtpu: 0.0.40
codegen_flags: <defaults>
</compile_context>

<pallas_src>
import numpy as np
import jax
import jax.numpy as jnp
from jax.experimental import pallas as pl
from jax.experimental.pallas import tpu as pltpu

WINDOW_SIZE = 5
C1 = (0.01 * 255.0) ** 2
C2 = (0.03 * 255.0) ** 2


def _gaussian_1d(window_size, sigma):
    """1D gaussian matching torch `gaussian`, with create_window's 2D renorm folded in."""
    xs = np.arange(window_size, dtype=np.float64)
    g = np.exp(-((xs - window_size // 2) ** 2) / (2.0 * sigma ** 2))
    g = g / g.sum()
    # create_window() renormalizes the 2D outer product (== 1.0 up to rounding);
    # fold it back into the 1D factor so outer(g, g) equals the torch window.
    g = g / np.sqrt(np.outer(g, g).sum())
    return g


def _conv_matrix(n_valid, n_full, dilation, g1d):
    """Banded (n_full, n_full) matrix M: (M @ X) is the zero-padded 'same' dilated
    1D Gaussian conv over the first n_valid rows of X; rows/cols >= n_valid are 0."""
    ws = g1d.shape[0]
    c = ws // 2
    M = np.zeros((n_full, n_full), dtype=np.float64)
    for i in range(n_valid):
        for k in range(ws):
            j = i + (k - c) * dilation
            if 0 <= j < n_valid:
                M[i, j] += g1d[k]
    return M


def _pool_matrix(n_valid, n_full):
    """(n_full, n_full) matrix P: (P @ X) averages row pairs of the first n_valid
    rows into the first n_valid//2 rows; everything else is 0."""
    M = np.zeros((n_full, n_full), dtype=np.float64)
    for i in range(n_valid // 2):
        M[i, 2 * i] = 0.5
        M[i, 2 * i + 1] = 0.5
    return M


def _make_msssim_kernel(H, W, levels, level_dims):
    """Kernel: per-image mean(SSIM map) at every MS-SSIM level.

    Refs (per grid step over B*C):
      img1 (1,H,W), img2 (1,H,W)            scaled input images
      rh (levels,H,H), rw (levels,W,W)      banded dilated-Gaussian conv operators
      ph (levels-1,H,H), pw (levels-1,W,W)  2x2 avg-pool operators
      out (1,1,levels)                      per-level mean of the SSIM map
    """

    def kernel(img1_ref, img2_ref, rh_ref, rw_ref, ph_ref, pw_ref, out_ref):
        x1 = img1_ref[0]          # (H, W) f32; level-l image embedded top-left
        x2 = img2_ref[0]

        row_idx = jax.lax.broadcasted_iota(jnp.int32, (H, W), 0)
        col_idx = jax.lax.broadcasted_iota(jnp.int32, (H, W), 1)
        lvl_idx = jax.lax.broadcasted_iota(jnp.int32, (1, 1, levels), 2)
        acc = jnp.zeros((1, 1, levels), dtype=jnp.float32)

        for l in range(levels):
            hl, wl = level_dims[l]
            rh = rh_ref[l]        # (H, H)
            rw = rw_ref[l]        # (W, W)

            def conv(v, rh=rh, rw=rw):
                # separable zero-padded dilated 5x5 conv == two banded matmuls (MXU)
                t = jnp.dot(rh, v, preferred_element_type=jnp.float32)
                return jnp.dot(t, rw, preferred_element_type=jnp.float32)

            mu1 = conv(x1)
            mu2 = conv(x2)
            s11 = conv(x1 * x1)   # squares / products computed once, elementwise
            s22 = conv(x2 * x2)
            s12 = conv(x1 * x2)

            mu1_sq = mu1 * mu1
            mu2_sq = mu2 * mu2
            mu1_mu2 = mu1 * mu2
            sigma1_sq = s11 - mu1_sq
            sigma2_sq = s22 - mu2_sq
            sigma12 = s12 - mu1_mu2

            num = (2.0 * mu1_mu2 + C1) * (2.0 * sigma12 + C2)
            den = (mu1_sq + mu2_sq + C1) * (sigma1_sq + sigma2_sq + C2)
            ssim_map = num * pl.reciprocal(den, approx=False)   # EUP, not VALU

            if hl == H and wl == W:
                masked = ssim_map
            else:
                valid = (row_idx < hl) & (col_idx < wl)
                masked = jnp.where(valid, ssim_map, 0.0)
            mean_l = jnp.sum(masked) * (1.0 / float(hl * wl))
            acc = acc + jnp.where(lvl_idx == l, mean_l, 0.0)

            if l + 1 < levels:
                ph = ph_ref[l]    # (H, H)
                pw = pw_ref[l]    # (W, W)
                x1 = jnp.dot(jnp.dot(ph, x1, preferred_element_type=jnp.float32),
                             pw, preferred_element_type=jnp.float32)
                x2 = jnp.dot(jnp.dot(ph, x2, preferred_element_type=jnp.float32),
                             pw, preferred_element_type=jnp.float32)

        out_ref[...] = acc

    return kernel


class NormMSSSIM:
    """JAX/Pallas port of NORMMSSSIM (sigma=1.0, levels=5, channel=1, size_average=True)."""

    def __init__(self, sigma=1.0, levels=5, channel=1):
        self.sigma = sigma
        self.levels = levels
        self.channel = channel
        self.g1d = _gaussian_1d(WINDOW_SIZE, sigma)          # deterministic buffer
        self.weights = jnp.array([0.0448, 0.2856, 0.3001, 0.2363, 0.1333],
                                 dtype=jnp.float32)

    def _level_means(self, img1, img2):
        """Per-image, per-level mean(ssim_map): one fused pallas_call for all levels."""
        B, C, H, W = img1.shape
        BC = B * C
        levels = self.levels

        # Trace-time (numpy) construction of the per-level banded operators.
        level_dims = []
        rh_l, rw_l, ph_l, pw_l = [], [], [], []
        h, w = H, W
        for l in range(levels):
            d = 1 + int(l ** 1.5)          # dilations 1, 2, 3, 6, 9
            level_dims.append((h, w))
            rh_l.append(_conv_matrix(h, H, d, self.g1d))
            rw_l.append(_conv_matrix(w, W, d, self.g1d).T)
            if l + 1 < levels:
                ph_l.append(_pool_matrix(h, H))
                pw_l.append(_pool_matrix(w, W).T)
                h, w = h // 2, w // 2
        rh_all = jnp.asarray(np.stack(rh_l).astype(np.float32))
        rw_all = jnp.asarray(np.stack(rw_l).astype(np.float32))
        ph_all = jnp.asarray(np.stack(ph_l).astype(np.float32))
        pw_all = jnp.asarray(np.stack(pw_l).astype(np.float32))

        x1 = img1.reshape(BC, H, W).astype(jnp.float32)
        x2 = img2.reshape(BC, H, W).astype(jnp.float32)

        kernel = _make_msssim_kernel(H, W, levels, tuple(level_dims))

        out = pl.pallas_call(
            kernel,
            out_shape=jax.ShapeDtypeStruct((BC, 1, levels), jnp.float32),
            grid=(BC,),
            in_specs=[
                pl.BlockSpec((1, H, W), lambda b: (b, 0, 0)),
                pl.BlockSpec((1, H, W), lambda b: (b, 0, 0)),
                pl.BlockSpec((levels, H, H), lambda b: (0, 0, 0)),
                pl.BlockSpec((levels, W, W), lambda b: (0, 0, 0)),
                pl.BlockSpec((levels - 1, H, H), lambda b: (0, 0, 0)),
                pl.BlockSpec((levels - 1, W, W), lambda b: (0, 0, 0)),
            ],
            out_specs=pl.BlockSpec((1, 1, levels), lambda b: (b, 0, 0)),
            compiler_params=pltpu.CompilerParams(
                dimension_semantics=("parallel",),   # megacore sharding on v7x
                vmem_limit_bytes=32 * 1024 * 1024,
            ),
        )(x1, x2, rh_all, rw_all, ph_all, pw_all)
        return out                                   # (BC, 1, levels)

    def msssim(self, img1, img2):
        means = self._level_means(img1, img2)
        mssim = jnp.mean(means, axis=(0, 1))         # size_average over B*C*H*W
        return jnp.prod(mssim ** self.weights)

    def __call__(self, img1, img2):
        m = jnp.max(img2)
        img1 = (img1 + 1e-12) / (m + 1e-12) * 255.0
        img2 = (img2 + 1e-12) / (m + 1e-12) * 255.0
        return 1.0 - self.msssim(img1, img2)


if __name__ == "__main__":
    # channel=1 (module default); spatial=32 so that 5 levels of 2x2 pooling
    # stay valid (the level-4 image is 2x2), matching how the torch module is used.
    key = jax.random.PRNGKey(0)
    k1, k2 = jax.random.split(key)
    img1 = jax.random.uniform(k1, (2, 1, 32, 32), dtype=jnp.float32)
    img2 = jax.random.uniform(k2, (2, 1, 32, 32), dtype=jnp.float32)

    model = NormMSSSIM(sigma=1.0, levels=5, channel=1)
    loss_fn = jax.jit(model.__call__)
    loss = loss_fn(img1, img2)
    jax.block_until_ready(loss)
    print("KERNEL_OK")
</pallas_src>

<mosaic_0001>
module attributes {stable_mosaic.version = 11 : i64} {
  func.func @kernel(%arg0: i32, %arg1: memref<1x32x32xf32, #tpu.memory_space<vmem>>, %arg2: memref<1x32x32xf32, #tpu.memory_space<vmem>>, %arg3: memref<5x32x32xf32, #tpu.memory_space<vmem>>, %arg4: memref<5x32x32xf32, #tpu.memory_space<vmem>>, %arg5: memref<4x32x32xf32, #tpu.memory_space<vmem>>, %arg6: memref<4x32x32xf32, #tpu.memory_space<vmem>>, %arg7: memref<1x1x5xf32, #tpu.memory_space<vmem>>) attributes {dimension_semantics = [#tpu.dimension_semantics<parallel>], iteration_bounds = array<i64: 2>, scalar_prefetch = 0 : i64, scratch_operands = 0 : i64, tpu.core_type = #tpu.core_type<tc>, window_params = [{transform_indices = @transform_0, window_bounds = array<i64: 1, 32, 32>}, {transform_indices = @transform_1, window_bounds = array<i64: 1, 32, 32>}, {pipeline_mode = #tpu.pipeline_mode<synchronous>, transform_indices = @transform_2, window_bounds = array<i64: 5, 32, 32>}, {pipeline_mode = #tpu.pipeline_mode<synchronous>, transform_indices = @transform_3, window_bounds = array<i64: 5, 32, 32>}, {pipeline_mode = #tpu.pipeline_mode<synchronous>, transform_indices = @transform_4, window_bounds = array<i64: 4, 32, 32>}, {pipeline_mode = #tpu.pipeline_mode<synchronous>, transform_indices = @transform_5, window_bounds = array<i64: 4, 32, 32>}, {transform_indices = @transform_6, window_bounds = array<i64: 1, 1, 5>}]} {
    %c0 = arith.constant 0 : index
    %c0_0 = arith.constant 0 : index
    %c0_1 = arith.constant 0 : index
    %0 = vector.load %arg1[%c0, %c0_0, %c0_1] : memref<1x32x32xf32, #tpu.memory_space<vmem>>, vector<1x32x32xf32>
    %1 = vector.shape_cast %0 : vector<1x32x32xf32> to vector<32x32xf32>
    %c0_2 = arith.constant 0 : index
    %c0_3 = arith.constant 0 : index
    %c0_4 = arith.constant 0 : index
    %2 = vector.load %arg2[%c0_2, %c0_3, %c0_4] : memref<1x32x32xf32, #tpu.memory_space<vmem>>, vector<1x32x32xf32>
    %3 = vector.shape_cast %2 : vector<1x32x32xf32> to vector<32x32xf32>
    %4 = tpu.iota {dimensions = array<i32: 0>} : vector<32x32xi32>
    %5 = tpu.iota {dimensions = array<i32: 1>} : vector<32x32xi32>
    %6 = tpu.iota {dimensions = array<i32: 2>} : vector<1x1x5xi32>
    %cst = arith.constant 0.000000e+00 : f32
    %7 = vector.broadcast %cst : f32 to vector<1x1x5xf32>
    %c0_5 = arith.constant 0 : index
    %c0_6 = arith.constant 0 : index
    %c0_7 = arith.constant 0 : index
    %8 = vector.load %arg3[%c0_5, %c0_6, %c0_7] : memref<5x32x32xf32, #tpu.memory_space<vmem>>, vector<1x32x32xf32>
    %9 = vector.shape_cast %8 : vector<1x32x32xf32> to vector<32x32xf32>
    %c0_8 = arith.constant 0 : index
    %c0_9 = arith.constant 0 : index
    %c0_10 = arith.constant 0 : index
    %10 = vector.load %arg4[%c0_8, %c0_9, %c0_10] : memref<5x32x32xf32, #tpu.memory_space<vmem>>, vector<1x32x32xf32>
    %11 = vector.shape_cast %10 : vector<1x32x32xf32> to vector<32x32xf32>
    %cst_11 = arith.constant dense<0.000000e+00> : vector<32x32xf32>
    %12 = tpu.matmul %9, %1, %cst_11 {dimension_numbers = #tpu.dot_dimension_numbers<[1], [0], [0], [1], [0, 0, 1, 1], [], []>} : vector<32x32xf32>, vector<32x32xf32>, vector<32x32xf32> -> vector<32x32xf32>
    %cst_12 = arith.constant dense<0.000000e+00> : vector<32x32xf32>
    %13 = tpu.matmul %12, %11, %cst_12 {dimension_numbers = #tpu.dot_dimension_numbers<[1], [0], [0], [1], [0, 0, 1, 1], [], []>} : vector<32x32xf32>, vector<32x32xf32>, vector<32x32xf32> -> vector<32x32xf32>
    %cst_13 = arith.constant dense<0.000000e+00> : vector<32x32xf32>
    %14 = tpu.matmul %9, %3, %cst_13 {dimension_numbers = #tpu.dot_dimension_numbers<[1], [0], [0], [1], [0, 0, 1, 1], [], []>} : vector<32x32xf32>, vector<32x32xf32>, vector<32x32xf32> -> vector<32x32xf32>
    %cst_14 = arith.constant dense<0.000000e+00> : vector<32x32xf32>
    %15 = tpu.matmul %14, %11, %cst_14 {dimension_numbers = #tpu.dot_dimension_numbers<[1], [0], [0], [1], [0, 0, 1, 1], [], []>} : vector<32x32xf32>, vector<32x32xf32>, vector<32x32xf32> -> vector<32x32xf32>
    %16 = arith.mulf %1, %1 : vector<32x32xf32>
    %cst_15 = arith.constant dense<0.000000e+00> : vector<32x32xf32>
    %17 = tpu.matmul %9, %16, %cst_15 {dimension_numbers = #tpu.dot_dimension_numbers<[1], [0], [0], [1], [0, 0, 1, 1], [], []>} : vector<32x32xf32>, vector<32x32xf32>, vector<32x32xf32> -> vector<32x32xf32>
    %cst_16 = arith.constant dense<0.000000e+00> : vector<32x32xf32>
    %18 = tpu.matmul %17, %11, %cst_16 {dimension_numbers = #tpu.dot_dimension_numbers<[1], [0], [0], [1], [0, 0, 1, 1], [], []>} : vector<32x32xf32>, vector<32x32xf32>, vector<32x32xf32> -> vector<32x32xf32>
    %19 = arith.mulf %3, %3 : vector<32x32xf32>
    %cst_17 = arith.constant dense<0.000000e+00> : vector<32x32xf32>
    %20 = tpu.matmul %9, %19, %cst_17 {dimension_numbers = #tpu.dot_dimension_numbers<[1], [0], [0], [1], [0, 0, 1, 1], [], []>} : vector<32x32xf32>, vector<32x32xf32>, vector<32x32xf32> -> vector<32x32xf32>
    %cst_18 = arith.constant dense<0.000000e+00> : vector<32x32xf32>
    %21 = tpu.matmul %20, %11, %cst_18 {dimension_numbers = #tpu.dot_dimension_numbers<[1], [0], [0], [1], [0, 0, 1, 1], [], []>} : vector<32x32xf32>, vector<32x32xf32>, vector<32x32xf32> -> vector<32x32xf32>
    %22 = arith.mulf %1, %3 : vector<32x32xf32>
    %cst_19 = arith.constant dense<0.000000e+00> : vector<32x32xf32>
    %23 = tpu.matmul %9, %22, %cst_19 {dimension_numbers = #tpu.dot_dimension_numbers<[1], [0], [0], [1], [0, 0, 1, 1], [], []>} : vector<32x32xf32>, vector<32x32xf32>, vector<32x32xf32> -> vector<32x32xf32>
    %cst_20 = arith.constant dense<0.000000e+00> : vector<32x32xf32>
    %24 = tpu.matmul %23, %11, %cst_20 {dimension_numbers = #tpu.dot_dimension_numbers<[1], [0], [0], [1], [0, 0, 1, 1], [], []>} : vector<32x32xf32>, vector<32x32xf32>, vector<32x32xf32> -> vector<32x32xf32>
    %25 = arith.mulf %13, %13 : vector<32x32xf32>
    %26 = arith.mulf %15, %15 : vector<32x32xf32>
    %27 = arith.mulf %13, %15 : vector<32x32xf32>
    %28 = arith.subf %18, %25 : vector<32x32xf32>
    %29 = arith.subf %21, %26 : vector<32x32xf32>
    %30 = arith.subf %24, %27 : vector<32x32xf32>
    %cst_21 = arith.constant 2.000000e+00 : f32
    %31 = vector.broadcast %cst_21 : f32 to vector<32x32xf32>
    %32 = arith.mulf %31, %27 : vector<32x32xf32>
    %cst_22 = arith.constant 6.502500e+00 : f32
    %33 = vector.broadcast %cst_22 : f32 to vector<32x32xf32>
    %34 = arith.addf %32, %33 : vector<32x32xf32>
    %cst_23 = arith.constant 2.000000e+00 : f32
    %35 = vector.broadcast %cst_23 : f32 to vector<32x32xf32>
    %36 = arith.mulf %35, %30 : vector<32x32xf32>
    %cst_24 = arith.constant 5.852250e+01 : f32
    %37 = vector.broadcast %cst_24 : f32 to vector<32x32xf32>
    %38 = arith.addf %36, %37 : vector<32x32xf32>
    %39 = arith.mulf %34, %38 : vector<32x32xf32>
    %40 = arith.addf %25, %26 : vector<32x32xf32>
    %cst_25 = arith.constant 6.502500e+00 : f32
    %41 = vector.broadcast %cst_25 : f32 to vector<32x32xf32>
    %42 = arith.addf %40, %41 : vector<32x32xf32>
    %43 = arith.addf %28, %29 : vector<32x32xf32>
    %cst_26 = arith.constant 5.852250e+01 : f32
    %44 = vector.broadcast %cst_26 : f32 to vector<32x32xf32>
    %45 = arith.addf %43, %44 : vector<32x32xf32>
    %46 = arith.mulf %42, %45 : vector<32x32xf32>
    %47 = tpu.reciprocal %46 : vector<32x32xf32> -> vector<32x32xf32>
    %48 = arith.mulf %39, %47 : vector<32x32xf32>
    %49 = vector.shape_cast %48 : vector<32x32xf32> to vector<1x32x32xf32>
    %cst_27 = arith.constant dense<0.000000e+00> : vector<1xf32>
    %50 = vector.multi_reduction <add>, %49, %cst_27 [1, 2] : vector<1x32x32xf32> to vector<1xf32>
    %51 = vector.shape_cast %50 : vector<1xf32> to vector<1x1x1xf32>
    %52 = vector.extract %51[0, 0, 0] : f32 from vector<1x1x1xf32>
    %cst_28 = arith.constant 9.765625E-4 : f32
    %53 = arith.mulf %52, %cst_28 : f32
    %c0_i32 = arith.constant 0 : i32
    %54 = vector.broadcast %c0_i32 : i32 to vector<1x1x5xi32>
    %55 = arith.cmpi eq, %6, %54 : vector<1x1x5xi32>
    %cst_29 = arith.constant 0.000000e+00 : f32
    %56 = vector.broadcast %53 : f32 to vector<1x1x5xf32>
    %57 = vector.broadcast %cst_29 : f32 to vector<1x1x5xf32>
    %58 = arith.select %55, %56, %57 : vector<1x1x5xi1>, vector<1x1x5xf32>
    %59 = arith.addf %7, %58 : vector<1x1x5xf32>
    %c0_30 = arith.constant 0 : index
    %c0_31 = arith.constant 0 : index
    %c0_32 = arith.constant 0 : index
    %60 = vector.load %arg5[%c0_30, %c0_31, %c0_32] : memref<4x32x32xf32, #tpu.memory_space<vmem>>, vector<1x32x32xf32>
    %61 = vector.shape_cast %60 : vector<1x32x32xf32> to vector<32x32xf32>
    %c0_33 = arith.constant 0 : index
    %c0_34 = arith.constant 0 : index
    %c0_35 = arith.constant 0 : index
    %62 = vector.load %arg6[%c0_33, %c0_34, %c0_35] : memref<4x32x32xf32, #tpu.memory_space<vmem>>, vector<1x32x32xf32>
    %63 = vector.shape_cast %62 : vector<1x32x32xf32> to vector<32x32xf32>
    %cst_36 = arith.constant dense<0.000000e+00> : vector<32x32xf32>
    %64 = tpu.matmul %61, %1, %cst_36 {dimension_numbers = #tpu.dot_dimension_numbers<[1], [0], [0], [1], [0, 0, 1, 1], [], []>} : vector<32x32xf32>, vector<32x32xf32>, vector<32x32xf32> -> vector<32x32xf32>
    %cst_37 = arith.constant dense<0.000000e+00> : vector<32x32xf32>
    %65 = tpu.matmul %64, %63, %cst_37 {dimension_numbers = #tpu.dot_dimension_numbers<[1], [0], [0], [1], [0, 0, 1, 1], [], []>} : vector<32x32xf32>, vector<32x32xf32>, vector<32x32xf32> -> vector<32x32xf32>
    %cst_38 = arith.constant dense<0.000000e+00> : vector<32x32xf32>
    %66 = tpu.matmul %61, %3, %cst_38 {dimension_numbers = #tpu.dot_dimension_numbers<[1], [0], [0], [1], [0, 0, 1, 1], [], []>} : vector<32x32xf32>, vector<32x32xf32>, vector<32x32xf32> -> vector<32x32xf32>
    %cst_39 = arith.constant dense<0.000000e+00> : vector<32x32xf32>
    %67 = tpu.matmul %66, %63, %cst_39 {dimension_numbers = #tpu.dot_dimension_numbers<[1], [0], [0], [1], [0, 0, 1, 1], [], []>} : vector<32x32xf32>, vector<32x32xf32>, vector<32x32xf32> -> vector<32x32xf32>
    %c1 = arith.constant 1 : index
    %c0_40 = arith.constant 0 : index
    %c0_41 = arith.constant 0 : index
    %68 = vector.load %arg3[%c1, %c0_40, %c0_41] : memref<5x32x32xf32, #tpu.memory_space<vmem>>, vector<1x32x32xf32>
    %69 = vector.shape_cast %68 : vector<1x32x32xf32> to vector<32x32xf32>
    %c1_42 = arith.constant 1 : index
    %c0_43 = arith.constant 0 : index
    %c0_44 = arith.constant 0 : index
    %70 = vector.load %arg4[%c1_42, %c0_43, %c0_44] : memref<5x32x32xf32, #tpu.memory_space<vmem>>, vector<1x32x32xf32>
    %71 = vector.shape_cast %70 : vector<1x32x32xf32> to vector<32x32xf32>
    %cst_45 = arith.constant dense<0.000000e+00> : vector<32x32xf32>
    %72 = tpu.matmul %69, %65, %cst_45 {dimension_numbers = #tpu.dot_dimension_numbers<[1], [0], [0], [1], [0, 0, 1, 1], [], []>} : vector<32x32xf32>, vector<32x32xf32>, vector<32x32xf32> -> vector<32x32xf32>
    %cst_46 = arith.constant dense<0.000000e+00> : vector<32x32xf32>
    %73 = tpu.matmul %72, %71, %cst_46 {dimension_numbers = #tpu.dot_dimension_numbers<[1], [0], [0], [1], [0, 0, 1, 1], [], []>} : vector<32x32xf32>, vector<32x32xf32>, vector<32x32xf32> -> vector<32x32xf32>
    %cst_47 = arith.constant dense<0.000000e+00> : vector<32x32xf32>
    %74 = tpu.matmul %69, %67, %cst_47 {dimension_numbers = #tpu.dot_dimension_numbers<[1], [0], [0], [1], [0, 0, 1, 1], [], []>} : vector<32x32xf32>, vector<32x32xf32>, vector<32x32xf32> -> vector<32x32xf32>
    %cst_48 = arith.constant dense<0.000000e+00> : vector<32x32xf32>
    %75 = tpu.matmul %74, %71, %cst_48 {dimension_numbers = #tpu.dot_dimension_numbers<[1], [0], [0], [1], [0, 0, 1, 1], [], []>} : vector<32x32xf32>, vector<32x32xf32>, vector<32x32xf32> -> vector<32x32xf32>
    %76 = arith.mulf %65, %65 : vector<32x32xf32>
    %cst_49 = arith.constant dense<0.000000e+00> : vector<32x32xf32>
    %77 = tpu.matmul %69, %76, %cst_49 {dimension_numbers = #tpu.dot_dimension_numbers<[1], [0], [0], [1], [0, 0, 1, 1], [], []>} : vector<32x32xf32>, vector<32x32xf32>, vector<32x32xf32> -> vector<32x32xf32>
    %cst_50 = arith.constant dense<0.000000e+00> : vector<32x32xf32>
    %78 = tpu.matmul %77, %71, %cst_50 {dimension_numbers = #tpu.dot_dimension_numbers<[1], [0], [0], [1], [0, 0, 1, 1], [], []>} : vector<32x32xf32>, vector<32x32xf32>, vector<32x32xf32> -> vector<32x32xf32>
    %79 = arith.mulf %67, %67 : vector<32x32xf32>
    %cst_51 = arith.constant dense<0.000000e+00> : vector<32x32xf32>
    %80 = tpu.matmul %69, %79, %cst_51 {dimension_numbers = #tpu.dot_dimension_numbers<[1], [0], [0], [1], [0, 0, 1, 1], [], []>} : vector<32x32xf32>, vector<32x32xf32>, vector<32x32xf32> -> vector<32x32xf32>
    %cst_52 = arith.constant dense<0.000000e+00> : vector<32x32xf32>
    %81 = tpu.matmul %80, %71, %cst_52 {dimension_numbers = #tpu.dot_dimension_numbers<[1], [0], [0], [1], [0, 0, 1, 1], [], []>} : vector<32x32xf32>, vector<32x32xf32>, vector<32x32xf32> -> vector<32x32xf32>
    %82 = arith.mulf %65, %67 : vector<32x32xf32>
    %cst_53 = arith.constant dense<0.000000e+00> : vector<32x32xf32>
    %83 = tpu.matmul %69, %82, %cst_53 {dimension_numbers = #tpu.dot_dimension_numbers<[1], [0], [0], [1], [0, 0, 1, 1], [], []>} : vector<32x32xf32>, vector<32x32xf32>, vector<32x32xf32> -> vector<32x32xf32>
    %cst_54 = arith.constant dense<0.000000e+00> : vector<32x32xf32>
    %84 = tpu.matmul %83, %71, %cst_54 {dimension_numbers = #tpu.dot_dimension_numbers<[1], [0], [0], [1], [0, 0, 1, 1], [], []>} : vector<32x32xf32>, vector<32x32xf32>, vector<32x32xf32> -> vector<32x32xf32>
    %85 = arith.mulf %73, %73 : vector<32x32xf32>
    %86 = arith.mulf %75, %75 : vector<32x32xf32>
    %87 = arith.mulf %73, %75 : vector<32x32xf32>
    %88 = arith.subf %78, %85 : vector<32x32xf32>
    %89 = arith.subf %81, %86 : vector<32x32xf32>
    %90 = arith.subf %84, %87 : vector<32x32xf32>
    %cst_55 = arith.constant 2.000000e+00 : f32
    %91 = vector.broadcast %cst_55 : f32 to vector<32x32xf32>
    %92 = arith.mulf %91, %87 : vector<32x32xf32>
    %cst_56 = arith.constant 6.502500e+00 : f32
    %93 = vector.broadcast %cst_56 : f32 to vector<32x32xf32>
    %94 = arith.addf %92, %93 : vector<32x32xf32>
    %cst_57 = arith.constant 2.000000e+00 : f32
    %95 = vector.broadcast %cst_57 : f32 to vector<32x32xf32>
    %96 = arith.mulf %95, %90 : vector<32x32xf32>
    %cst_58 = arith.constant 5.852250e+01 : f32
    %97 = vector.broadcast %cst_58 : f32 to vector<32x32xf32>
    %98 = arith.addf %96, %97 : vector<32x32xf32>
    %99 = arith.mulf %94, %98 : vector<32x32xf32>
    %100 = arith.addf %85, %86 : vector<32x32xf32>
    %cst_59 = arith.constant 6.502500e+00 : f32
    %101 = vector.broadcast %cst_59 : f32 to vector<32x32xf32>
    %102 = arith.addf %100, %101 : vector<32x32xf32>
    %103 = arith.addf %88, %89 : vector<32x32xf32>
    %cst_60 = arith.constant 5.852250e+01 : f32
    %104 = vector.broadcast %cst_60 : f32 to vector<32x32xf32>
    %105 = arith.addf %103, %104 : vector<32x32xf32>
    %106 = arith.mulf %102, %105 : vector<32x32xf32>
    %107 = tpu.reciprocal %106 : vector<32x32xf32> -> vector<32x32xf32>
    %108 = arith.mulf %99, %107 : vector<32x32xf32>
    %c16_i32 = arith.constant 16 : i32
    %109 = vector.broadcast %c16_i32 : i32 to vector<32x32xi32>
    %110 = arith.cmpi slt, %4, %109 : vector<32x32xi32>
    %c16_i32_61 = arith.constant 16 : i32
    %111 = vector.broadcast %c16_i32_61 : i32 to vector<32x32xi32>
    %112 = arith.cmpi slt, %5, %111 : vector<32x32xi32>
    %113 = arith.andi %110, %112 : vector<32x32xi1>
    %cst_62 = arith.constant 0.000000e+00 : f32
    %114 = vector.broadcast %cst_62 : f32 to vector<32x32xf32>
    %115 = arith.select %113, %108, %114 : vector<32x32xi1>, vector<32x32xf32>
    %116 = vector.shape_cast %115 : vector<32x32xf32> to vector<1x32x32xf32>
    %cst_63 = arith.constant dense<0.000000e+00> : vector<1xf32>
    %117 = vector.multi_reduction <add>, %116, %cst_63 [1, 2] : vector<1x32x32xf32> to vector<1xf32>
    %118 = vector.shape_cast %117 : vector<1xf32> to vector<1x1x1xf32>
    %119 = vector.extract %118[0, 0, 0] : f32 from vector<1x1x1xf32>
    %cst_64 = arith.constant 3.906250e-03 : f32
    %120 = arith.mulf %119, %cst_64 : f32
    %c1_i32 = arith.constant 1 : i32
    %121 = vector.broadcast %c1_i32 : i32 to vector<1x1x5xi32>
    %122 = arith.cmpi eq, %6, %121 : vector<1x1x5xi32>
    %cst_65 = arith.constant 0.000000e+00 : f32
    %123 = vector.broadcast %120 : f32 to vector<1x1x5xf32>
    %124 = vector.broadcast %cst_65 : f32 to vector<1x1x5xf32>
    %125 = arith.select %122, %123, %124 : vector<1x1x5xi1>, vector<1x1x5xf32>
    %126 = arith.addf %59, %125 : vector<1x1x5xf32>
    %c1_66 = arith.constant 1 : index
    %c0_67 = arith.constant 0 : index
    %c0_68 = arith.constant 0 : index
    %127 = vector.load %arg5[%c1_66, %c0_67, %c0_68] : memref<4x32x32xf32, #tpu.memory_space<vmem>>, vector<1x32x32xf32>
    %128 = vector.shape_cast %127 : vector<1x32x32xf32> to vector<32x32xf32>
    %c1_69 = arith.constant 1 : index
    %c0_70 = arith.constant 0 : index
    %c0_71 = arith.constant 0 : index
    %129 = vector.load %arg6[%c1_69, %c0_70, %c0_71] : memref<4x32x32xf32, #tpu.memory_space<vmem>>, vector<1x32x32xf32>
    %130 = vector.shape_cast %129 : vector<1x32x32xf32> to vector<32x32xf32>
    %cst_72 = arith.constant dense<0.000000e+00> : vector<32x32xf32>
    %131 = tpu.matmul %128, %65, %cst_72 {dimension_numbers = #tpu.dot_dimension_numbers<[1], [0], [0], [1], [0, 0, 1, 1], [], []>} : vector<32x32xf32>, vector<32x32xf32>, vector<32x32xf32> -> vector<32x32xf32>
    %cst_73 = arith.constant dense<0.000000e+00> : vector<32x32xf32>
    %132 = tpu.matmul %131, %130, %cst_73 {dimension_numbers = #tpu.dot_dimension_numbers<[1], [0], [0], [1], [0, 0, 1, 1], [], []>} : vector<32x32xf32>, vector<32x32xf32>, vector<32x32xf32> -> vector<32x32xf32>
    %cst_74 = arith.constant dense<0.000000e+00> : vector<32x32xf32>
    %133 = tpu.matmul %128, %67, %cst_74 {dimension_numbers = #tpu.dot_dimension_numbers<[1], [0], [0], [1], [0, 0, 1, 1], [], []>} : vector<32x32xf32>, vector<32x32xf32>, vector<32x32xf32> -> vector<32x32xf32>
    %cst_75 = arith.constant dense<0.000000e+00> : vector<32x32xf32>
    %134 = tpu.matmul %133, %130, %cst_75 {dimension_numbers = #tpu.dot_dimension_numbers<[1], [0], [0], [1], [0, 0, 1, 1], [], []>} : vector<32x32xf32>, vector<32x32xf32>, vector<32x32xf32> -> vector<32x32xf32>
    %c2 = arith.constant 2 : index
    %c0_76 = arith.constant 0 : index
    %c0_77 = arith.constant 0 : index
    %135 = vector.load %arg3[%c2, %c0_76, %c0_77] : memref<5x32x32xf32, #tpu.memory_space<vmem>>, vector<1x32x32xf32>
    %136 = vector.shape_cast %135 : vector<1x32x32xf32> to vector<32x32xf32>
    %c2_78 = arith.constant 2 : index
    %c0_79 = arith.constant 0 : index
    %c0_80 = arith.constant 0 : index
    %137 = vector.load %arg4[%c2_78, %c0_79, %c0_80] : memref<5x32x32xf32, #tpu.memory_space<vmem>>, vector<1x32x32xf32>
    %138 = vector.shape_cast %137 : vector<1x32x32xf32> to vector<32x32xf32>
    %cst_81 = arith.constant dense<0.000000e+00> : vector<32x32xf32>
    %139 = tpu.matmul %136, %132, %cst_81 {dimension_numbers = #tpu.dot_dimension_numbers<[1], [0], [0], [1], [0, 0, 1, 1], [], []>} : vector<32x32xf32>, vector<32x32xf32>, vector<32x32xf32> -> vector<32x32xf32>
    %cst_82 = arith.constant dense<0.000000e+00> : vector<32x32xf32>
    %140 = tpu.matmul %139, %138, %cst_82 {dimension_numbers = #tpu.dot_dimension_numbers<[1], [0], [0], [1], [0, 0, 1, 1], [], []>} : vector<32x32xf32>, vector<32x32xf32>, vector<32x32xf32> -> vector<32x32xf32>
    %cst_83 = arith.constant dense<0.000000e+00> : vector<32x32xf32>
    %141 = tpu.matmul %136, %134, %cst_83 {dimension_numbers = #tpu.dot_dimension_numbers<[1], [0], [0], [1], [0, 0, 1, 1], [], []>} : vector<32x32xf32>, vector<32x32xf32>, vector<32x32xf32> -> vector<32x32xf32>
    %cst_84 = arith.constant dense<0.000000e+00> : vector<32x32xf32>
    %142 = tpu.matmul %141, %138, %cst_84 {dimension_numbers = #tpu.dot_dimension_numbers<[1], [0], [0], [1], [0, 0, 1, 1], [], []>} : vector<32x32xf32>, vector<32x32xf32>, vector<32x32xf32> -> vector<32x32xf32>
    %143 = arith.mulf %132, %132 : vector<32x32xf32>
    %cst_85 = arith.constant dense<0.000000e+00> : vector<32x32xf32>
    %144 = tpu.matmul %136, %143, %cst_85 {dimension_numbers = #tpu.dot_dimension_numbers<[1], [0], [0], [1], [0, 0, 1, 1], [], []>} : vector<32x32xf32>, vector<32x32xf32>, vector<32x32xf32> -> vector<32x32xf32>
    %cst_86 = arith.constant dense<0.000000e+00> : vector<32x32xf32>
    %145 = tpu.matmul %144, %138, %cst_86 {dimension_numbers = #tpu.dot_dimension_numbers<[1], [0], [0], [1], [0, 0, 1, 1], [], []>} : vector<32x32xf32>, vector<32x32xf32>, vector<32x32xf32> -> vector<32x32xf32>
    %146 = arith.mulf %134, %134 : vector<32x32xf32>
    %cst_87 = arith.constant dense<0.000000e+00> : vector<32x32xf32>
    %147 = tpu.matmul %136, %146, %cst_87 {dimension_numbers = #tpu.dot_dimension_numbers<[1], [0], [0], [1], [0, 0, 1, 1], [], []>} : vector<32x32xf32>, vector<32x32xf32>, vector<32x32xf32> -> vector<32x32xf32>
    %cst_88 = arith.constant dense<0.000000e+00> : vector<32x32xf32>
    %148 = tpu.matmul %147, %138, %cst_88 {dimension_numbers = #tpu.dot_dimension_numbers<[1], [0], [0], [1], [0, 0, 1, 1], [], []>} : vector<32x32xf32>, vector<32x32xf32>, vector<32x32xf32> -> vector<32x32xf32>
    %149 = arith.mulf %132, %134 : vector<32x32xf32>
    %cst_89 = arith.constant dense<0.000000e+00> : vector<32x32xf32>
    %150 = tpu.matmul %136, %149, %cst_89 {dimension_numbers = #tpu.dot_dimension_numbers<[1], [0], [0], [1], [0, 0, 1, 1], [], []>} : vector<32x32xf32>, vector<32x32xf32>, vector<32x32xf32> -> vector<32x32xf32>
    %cst_90 = arith.constant dense<0.000000e+00> : vector<32x32xf32>
    %151 = tpu.matmul %150, %138, %cst_90 {dimension_numbers = #tpu.dot_dimension_numbers<[1], [0], [0], [1], [0, 0, 1, 1], [], []>} : vector<32x32xf32>, vector<32x32xf32>, vector<32x32xf32> -> vector<32x32xf32>
    %152 = arith.mulf %140, %140 : vector<32x32xf32>
    %153 = arith.mulf %142, %142 : vector<32x32xf32>
    %154 = arith.mulf %140, %142 : vector<32x32xf32>
    %155 = arith.subf %145, %152 : vector<32x32xf32>
    %156 = arith.subf %148, %153 : vector<32x32xf32>
    %157 = arith.subf %151, %154 : vector<32x32xf32>
    %cst_91 = arith.constant 2.000000e+00 : f32
    %158 = vector.broadcast %cst_91 : f32 to vector<32x32xf32>
    %159 = arith.mulf %158, %154 : vector<32x32xf32>
    %cst_92 = arith.constant 6.502500e+00 : f32
    %160 = vector.broadcast %cst_92 : f32 to vector<32x32xf32>
    %161 = arith.addf %159, %160 : vector<32x32xf32>
    %cst_93 = arith.constant 2.000000e+00 : f32
    %162 = vector.broadcast %cst_93 : f32 to vector<32x32xf32>
    %163 = arith.mulf %162, %157 : vector<32x32xf32>
    %cst_94 = arith.constant 5.852250e+01 : f32
    %164 = vector.broadcast %cst_94 : f32 to vector<32x32xf32>
    %165 = arith.addf %163, %164 : vector<32x32xf32>
    %166 = arith.mulf %161, %165 : vector<32x32xf32>
    %167 = arith.addf %152, %153 : vector<32x32xf32>
    %cst_95 = arith.constant 6.502500e+00 : f32
    %168 = vector.broadcast %cst_95 : f32 to vector<32x32xf32>
    %169 = arith.addf %167, %168 : vector<32x32xf32>
    %170 = arith.addf %155, %156 : vector<32x32xf32>
    %cst_96 = arith.constant 5.852250e+01 : f32
    %171 = vector.broadcast %cst_96 : f32 to vector<32x32xf32>
    %172 = arith.addf %170, %171 : vector<32x32xf32>
    %173 = arith.mulf %169, %172 : vector<32x32xf32>
    %174 = tpu.reciprocal %173 : vector<32x32xf32> -> vector<32x32xf32>
    %175 = arith.mulf %166, %174 : vector<32x32xf32>
    %c8_i32 = arith.constant 8 : i32
    %176 = vector.broadcast %c8_i32 : i32 to vector<32x32xi32>
    %177 = arith.cmpi slt, %4, %176 : vector<32x32xi32>
    %c8_i32_97 = arith.constant 8 : i32
    %178 = vector.broadcast %c8_i32_97 : i32 to vector<32x32xi32>
    %179 = arith.cmpi slt, %5, %178 : vector<32x32xi32>
    %180 = arith.andi %177, %179 : vector<32x32xi1>
    %cst_98 = arith.constant 0.000000e+00 : f32
    %181 = vector.broadcast %cst_98 : f32 to vector<32x32xf32>
    %182 = arith.select %180, %175, %181 : vector<32x32xi1>, vector<32x32xf32>
    %183 = vector.shape_cast %182 : vector<32x32xf32> to vector<1x32x32xf32>
    %cst_99 = arith.constant dense<0.000000e+00> : vector<1xf32>
    %184 = vector.multi_reduction <add>, %183, %cst_99 [1, 2] : vector<1x32x32xf32> to vector<1xf32>
    %185 = vector.shape_cast %184 : vector<1xf32> to vector<1x1x1xf32>
    %186 = vector.extract %185[0, 0, 0] : f32 from vector<1x1x1xf32>
    %cst_100 = arith.constant 1.562500e-02 : f32
    %187 = arith.mulf %186, %cst_100 : f32
    %c2_i32 = arith.constant 2 : i32
    %188 = vector.broadcast %c2_i32 : i32 to vector<1x1x5xi32>
    %189 = arith.cmpi eq, %6, %188 : vector<1x1x5xi32>
    %cst_101 = arith.constant 0.000000e+00 : f32
    %190 = vector.broadcast %187 : f32 to vector<1x1x5xf32>
    %191 = vector.broadcast %cst_101 : f32 to vector<1x1x5xf32>
    %192 = arith.select %189, %190, %191 : vector<1x1x5xi1>, vector<1x1x5xf32>
    %193 = arith.addf %126, %192 : vector<1x1x5xf32>
    %c2_102 = arith.constant 2 : index
    %c0_103 = arith.constant 0 : index
    %c0_104 = arith.constant 0 : index
    %194 = vector.load %arg5[%c2_102, %c0_103, %c0_104] : memref<4x32x32xf32, #tpu.memory_space<vmem>>, vector<1x32x32xf32>
    %195 = vector.shape_cast %194 : vector<1x32x32xf32> to vector<32x32xf32>
    %c2_105 = arith.constant 2 : index
    %c0_106 = arith.constant 0 : index
    %c0_107 = arith.constant 0 : index
    %196 = vector.load %arg6[%c2_105, %c0_106, %c0_107] : memref<4x32x32xf32, #tpu.memory_space<vmem>>, vector<1x32x32xf32>
    %197 = vector.shape_cast %196 : vector<1x32x32xf32> to vector<32x32xf32>
    %cst_108 = arith.constant dense<0.000000e+00> : vector<32x32xf32>
    %198 = tpu.matmul %195, %132, %cst_108 {dimension_numbers = #tpu.dot_dimension_numbers<[1], [0], [0], [1], [0, 0, 1, 1], [], []>} : vector<32x32xf32>, vector<32x32xf32>, vector<32x32xf32> -> vector<32x32xf32>
    %cst_109 = arith.constant dense<0.000000e+00> : vector<32x32xf32>
    %199 = tpu.matmul %198, %197, %cst_109 {dimension_numbers = #tpu.dot_dimension_numbers<[1], [0], [0], [1], [0, 0, 1, 1], [], []>} : vector<32x32xf32>, vector<32x32xf32>, vector<32x32xf32> -> vector<32x32xf32>
    %cst_110 = arith.constant dense<0.000000e+00> : vector<32x32xf32>
    %200 = tpu.matmul %195, %134, %cst_110 {dimension_numbers = #tpu.dot_dimension_numbers<[1], [0], [0], [1], [0, 0, 1, 1], [], []>} : vector<32x32xf32>, vector<32x32xf32>, vector<32x32xf32> -> vector<32x32xf32>
    %cst_111 = arith.constant dense<0.000000e+00> : vector<32x32xf32>
    %201 = tpu.matmul %200, %197, %cst_111 {dimension_numbers = #tpu.dot_dimension_numbers<[1], [0], [0], [1], [0, 0, 1, 1], [], []>} : vector<32x32xf32>, vector<32x32xf32>, vector<32x32xf32> -> vector<32x32xf32>
    %c3 = arith.constant 3 : index
    %c0_112 = arith.constant 0 : index
    %c0_113 = arith.constant 0 : index
    %202 = vector.load %arg3[%c3, %c0_112, %c0_113] : memref<5x32x32xf32, #tpu.memory_space<vmem>>, vector<1x32x32xf32>
    %203 = vector.shape_cast %202 : vector<1x32x32xf32> to vector<32x32xf32>
    %c3_114 = arith.constant 3 : index
    %c0_115 = arith.constant 0 : index
    %c0_116 = arith.constant 0 : index
    %204 = vector.load %arg4[%c3_114, %c0_115, %c0_116] : memref<5x32x32xf32, #tpu.memory_space<vmem>>, vector<1x32x32xf32>
    %205 = vector.shape_cast %204 : vector<1x32x32xf32> to vector<32x32xf32>
    %cst_117 = arith.constant dense<0.000000e+00> : vector<32x32xf32>
    %206 = tpu.matmul %203, %199, %cst_117 {dimension_numbers = #tpu.dot_dimension_numbers<[1], [0], [0], [1], [0, 0, 1, 1], [], []>} : vector<32x32xf32>, vector<32x32xf32>, vector<32x32xf32> -> vector<32x32xf32>
    %cst_118 = arith.constant dense<0.000000e+00> : vector<32x32xf32>
    %207 = tpu.matmul %206, %205, %cst_118 {dimension_numbers = #tpu.dot_dimension_numbers<[1], [0], [0], [1], [0, 0, 1, 1], [], []>} : vector<32x32xf32>, vector<32x32xf32>, vector<32x32xf32> -> vector<32x32xf32>
    %cst_119 = arith.constant dense<0.000000e+00> : vector<32x32xf32>
    %208 = tpu.matmul %203, %201, %cst_119 {dimension_numbers = #tpu.dot_dimension_numbers<[1], [0], [0], [1], [0, 0, 1, 1], [], []>} : vector<32x32xf32>, vector<32x32xf32>, vector<32x32xf32> -> vector<32x32xf32>
    %cst_120 = arith.constant dense<0.000000e+00> : vector<32x32xf32>
    %209 = tpu.matmul %208, %205, %cst_120 {dimension_numbers = #tpu.dot_dimension_numbers<[1], [0], [0], [1], [0, 0, 1, 1], [], []>} : vector<32x32xf32>, vector<32x32xf32>, vector<32x32xf32> -> vector<32x32xf32>
    %210 = arith.mulf %199, %199 : vector<32x32xf32>
    %cst_121 = arith.constant dense<0.000000e+00> : vector<32x32xf32>
    %211 = tpu.matmul %203, %210, %cst_121 {dimension_numbers = #tpu.dot_dimension_numbers<[1], [0], [0], [1], [0, 0, 1, 1], [], []>} : vector<32x32xf32>, vector<32x32xf32>, vector<32x32xf32> -> vector<32x32xf32>
    %cst_122 = arith.constant dense<0.000000e+00> : vector<32x32xf32>
    %212 = tpu.matmul %211, %205, %cst_122 {dimension_numbers = #tpu.dot_dimension_numbers<[1], [0], [0], [1], [0, 0, 1, 1], [], []>} : vector<32x32xf32>, vector<32x32xf32>, vector<32x32xf32> -> vector<32x32xf32>
    %213 = arith.mulf %201, %201 : vector<32x32xf32>
    %cst_123 = arith.constant dense<0.000000e+00> : vector<32x32xf32>
    %214 = tpu.matmul %203, %213, %cst_123 {dimension_numbers = #tpu.dot_dimension_numbers<[1], [0], [0], [1], [0, 0, 1, 1], [], []>} : vector<32x32xf32>, vector<32x32xf32>, vector<32x32xf32> -> vector<32x32xf32>
    %cst_124 = arith.constant dense<0.000000e+00> : vector<32x32xf32>
    %215 = tpu.matmul %214, %205, %cst_124 {dimension_numbers = #tpu.dot_dimension_numbers<[1], [0], [0], [1], [0, 0, 1, 1], [], []>} : vector<32x32xf32>, vector<32x32xf32>, vector<32x32xf32> -> vector<32x32xf32>
    %216 = arith.mulf %199, %201 : vector<32x32xf32>
    %cst_125 = arith.constant dense<0.000000e+00> : vector<32x32xf32>
    %217 = tpu.matmul %203, %216, %cst_125 {dimension_numbers = #tpu.dot_dimension_numbers<[1], [0], [0], [1], [0, 0, 1, 1], [], []>} : vector<32x32xf32>, vector<32x32xf32>, vector<32x32xf32> -> vector<32x32xf32>
    %cst_126 = arith.constant dense<0.000000e+00> : vector<32x32xf32>
    %218 = tpu.matmul %217, %205, %cst_126 {dimension_numbers = #tpu.dot_dimension_numbers<[1], [0], [0], [1], [0, 0, 1, 1], [], []>} : vector<32x32xf32>, vector<32x32xf32>, vector<32x32xf32> -> vector<32x32xf32>
    %219 = arith.mulf %207, %207 : vector<32x32xf32>
    %220 = arith.mulf %209, %209 : vector<32x32xf32>
    %221 = arith.mulf %207, %209 : vector<32x32xf32>
    %222 = arith.subf %212, %219 : vector<32x32xf32>
    %223 = arith.subf %215, %220 : vector<32x32xf32>
    %224 = arith.subf %218, %221 : vector<32x32xf32>
    %cst_127 = arith.constant 2.000000e+00 : f32
    %225 = vector.broadcast %cst_127 : f32 to vector<32x32xf32>
    %226 = arith.mulf %225, %221 : vector<32x32xf32>
    %cst_128 = arith.constant 6.502500e+00 : f32
    %227 = vector.broadcast %cst_128 : f32 to vector<32x32xf32>
    %228 = arith.addf %226, %227 : vector<32x32xf32>
    %cst_129 = arith.constant 2.000000e+00 : f32
    %229 = vector.broadcast %cst_129 : f32 to vector<32x32xf32>
    %230 = arith.mulf %229, %224 : vector<32x32xf32>
    %cst_130 = arith.constant 5.852250e+01 : f32
    %231 = vector.broadcast %cst_130 : f32 to vector<32x32xf32>
    %232 = arith.addf %230, %231 : vector<32x32xf32>
    %233 = arith.mulf %228, %232 : vector<32x32xf32>
    %234 = arith.addf %219, %220 : vector<32x32xf32>
    %cst_131 = arith.constant 6.502500e+00 : f32
    %235 = vector.broadcast %cst_131 : f32 to vector<32x32xf32>
    %236 = arith.addf %234, %235 : vector<32x32xf32>
    %237 = arith.addf %222, %223 : vector<32x32xf32>
    %cst_132 = arith.constant 5.852250e+01 : f32
    %238 = vector.broadcast %cst_132 : f32 to vector<32x32xf32>
    %239 = arith.addf %237, %238 : vector<32x32xf32>
    %240 = arith.mulf %236, %239 : vector<32x32xf32>
    %241 = tpu.reciprocal %240 : vector<32x32xf32> -> vector<32x32xf32>
    %242 = arith.mulf %233, %241 : vector<32x32xf32>
    %c4_i32 = arith.constant 4 : i32
    %243 = vector.broadcast %c4_i32 : i32 to vector<32x32xi32>
    %244 = arith.cmpi slt, %4, %243 : vector<32x32xi32>
    %c4_i32_133 = arith.constant 4 : i32
    %245 = vector.broadcast %c4_i32_133 : i32 to vector<32x32xi32>
    %246 = arith.cmpi slt, %5, %245 : vector<32x32xi32>
    %247 = arith.andi %244, %246 : vector<32x32xi1>
    %cst_134 = arith.constant 0.000000e+00 : f32
    %248 = vector.broadcast %cst_134 : f32 to vector<32x32xf32>
    %249 = arith.select %247, %242, %248 : vector<32x32xi1>, vector<32x32xf32>
    %250 = vector.shape_cast %249 : vector<32x32xf32> to vector<1x32x32xf32>
    %cst_135 = arith.constant dense<0.000000e+00> : vector<1xf32>
    %251 = vector.multi_reduction <add>, %250, %cst_135 [1, 2] : vector<1x32x32xf32> to vector<1xf32>
    %252 = vector.shape_cast %251 : vector<1xf32> to vector<1x1x1xf32>
    %253 = vector.extract %252[0, 0, 0] : f32 from vector<1x1x1xf32>
    %cst_136 = arith.constant 6.250000e-02 : f32
    %254 = arith.mulf %253, %cst_136 : f32
    %c3_i32 = arith.constant 3 : i32
    %255 = vector.broadcast %c3_i32 : i32 to vector<1x1x5xi32>
    %256 = arith.cmpi eq, %6, %255 : vector<1x1x5xi32>
    %cst_137 = arith.constant 0.000000e+00 : f32
    %257 = vector.broadcast %254 : f32 to vector<1x1x5xf32>
    %258 = vector.broadcast %cst_137 : f32 to vector<1x1x5xf32>
    %259 = arith.select %256, %257, %258 : vector<1x1x5xi1>, vector<1x1x5xf32>
    %260 = arith.addf %193, %259 : vector<1x1x5xf32>
    %c3_138 = arith.constant 3 : index
    %c0_139 = arith.constant 0 : index
    %c0_140 = arith.constant 0 : index
    %261 = vector.load %arg5[%c3_138, %c0_139, %c0_140] : memref<4x32x32xf32, #tpu.memory_space<vmem>>, vector<1x32x32xf32>
    %262 = vector.shape_cast %261 : vector<1x32x32xf32> to vector<32x32xf32>
    %c3_141 = arith.constant 3 : index
    %c0_142 = arith.constant 0 : index
    %c0_143 = arith.constant 0 : index
    %263 = vector.load %arg6[%c3_141, %c0_142, %c0_143] : memref<4x32x32xf32, #tpu.memory_space<vmem>>, vector<1x32x32xf32>
    %264 = vector.shape_cast %263 : vector<1x32x32xf32> to vector<32x32xf32>
    %cst_144 = arith.constant dense<0.000000e+00> : vector<32x32xf32>
    %265 = tpu.matmul %262, %199, %cst_144 {dimension_numbers = #tpu.dot_dimension_numbers<[1], [0], [0], [1], [0, 0, 1, 1], [], []>} : vector<32x32xf32>, vector<32x32xf32>, vector<32x32xf32> -> vector<32x32xf32>
    %cst_145 = arith.constant dense<0.000000e+00> : vector<32x32xf32>
    %266 = tpu.matmul %265, %264, %cst_145 {dimension_numbers = #tpu.dot_dimension_numbers<[1], [0], [0], [1], [0, 0, 1, 1], [], []>} : vector<32x32xf32>, vector<32x32xf32>, vector<32x32xf32> -> vector<32x32xf32>
    %cst_146 = arith.constant dense<0.000000e+00> : vector<32x32xf32>
    %267 = tpu.matmul %262, %201, %cst_146 {dimension_numbers = #tpu.dot_dimension_numbers<[1], [0], [0], [1], [0, 0, 1, 1], [], []>} : vector<32x32xf32>, vector<32x32xf32>, vector<32x32xf32> -> vector<32x32xf32>
    %cst_147 = arith.constant dense<0.000000e+00> : vector<32x32xf32>
    %268 = tpu.matmul %267, %264, %cst_147 {dimension_numbers = #tpu.dot_dimension_numbers<[1], [0], [0], [1], [0, 0, 1, 1], [], []>} : vector<32x32xf32>, vector<32x32xf32>, vector<32x32xf32> -> vector<32x32xf32>
    %c4 = arith.constant 4 : index
    %c0_148 = arith.constant 0 : index
    %c0_149 = arith.constant 0 : index
    %269 = vector.load %arg3[%c4, %c0_148, %c0_149] : memref<5x32x32xf32, #tpu.memory_space<vmem>>, vector<1x32x32xf32>
    %270 = vector.shape_cast %269 : vector<1x32x32xf32> to vector<32x32xf32>
    %c4_150 = arith.constant 4 : index
    %c0_151 = arith.constant 0 : index
    %c0_152 = arith.constant 0 : index
    %271 = vector.load %arg4[%c4_150, %c0_151, %c0_152] : memref<5x32x32xf32, #tpu.memory_space<vmem>>, vector<1x32x32xf32>
    %272 = vector.shape_cast %271 : vector<1x32x32xf32> to vector<32x32xf32>
    %cst_153 = arith.constant dense<0.000000e+00> : vector<32x32xf32>
    %273 = tpu.matmul %270, %266, %cst_153 {dimension_numbers = #tpu.dot_dimension_numbers<[1], [0], [0], [1], [0, 0, 1, 1], [], []>} : vector<32x32xf32>, vector<32x32xf32>, vector<32x32xf32> -> vector<32x32xf32>
    %cst_154 = arith.constant dense<0.000000e+00> : vector<32x32xf32>
    %274 = tpu.matmul %273, %272, %cst_154 {dimension_numbers = #tpu.dot_dimension_numbers<[1], [0], [0], [1], [0, 0, 1, 1], [], []>} : vector<32x32xf32>, vector<32x32xf32>, vector<32x32xf32> -> vector<32x32xf32>
    %cst_155 = arith.constant dense<0.000000e+00> : vector<32x32xf32>
    %275 = tpu.matmul %270, %268, %cst_155 {dimension_numbers = #tpu.dot_dimension_numbers<[1], [0], [0], [1], [0, 0, 1, 1], [], []>} : vector<32x32xf32>, vector<32x32xf32>, vector<32x32xf32> -> vector<32x32xf32>
    %cst_156 = arith.constant dense<0.000000e+00> : vector<32x32xf32>
    %276 = tpu.matmul %275, %272, %cst_156 {dimension_numbers = #tpu.dot_dimension_numbers<[1], [0], [0], [1], [0, 0, 1, 1], [], []>} : vector<32x32xf32>, vector<32x32xf32>, vector<32x32xf32> -> vector<32x32xf32>
    %277 = arith.mulf %266, %266 : vector<32x32xf32>
    %cst_157 = arith.constant dense<0.000000e+00> : vector<32x32xf32>
    %278 = tpu.matmul %270, %277, %cst_157 {dimension_numbers = #tpu.dot_dimension_numbers<[1], [0], [0], [1], [0, 0, 1, 1], [], []>} : vector<32x32xf32>, vector<32x32xf32>, vector<32x32xf32> -> vector<32x32xf32>
    %cst_158 = arith.constant dense<0.000000e+00> : vector<32x32xf32>
    %279 = tpu.matmul %278, %272, %cst_158 {dimension_numbers = #tpu.dot_dimension_numbers<[1], [0], [0], [1], [0, 0, 1, 1], [], []>} : vector<32x32xf32>, vector<32x32xf32>, vector<32x32xf32> -> vector<32x32xf32>
    %280 = arith.mulf %268, %268 : vector<32x32xf32>
    %cst_159 = arith.constant dense<0.000000e+00> : vector<32x32xf32>
    %281 = tpu.matmul %270, %280, %cst_159 {dimension_numbers = #tpu.dot_dimension_numbers<[1], [0], [0], [1], [0, 0, 1, 1], [], []>} : vector<32x32xf32>, vector<32x32xf32>, vector<32x32xf32> -> vector<32x32xf32>
    %cst_160 = arith.constant dense<0.000000e+00> : vector<32x32xf32>
    %282 = tpu.matmul %281, %272, %cst_160 {dimension_numbers = #tpu.dot_dimension_numbers<[1], [0], [0], [1], [0, 0, 1, 1], [], []>} : vector<32x32xf32>, vector<32x32xf32>, vector<32x32xf32> -> vector<32x32xf32>
    %283 = arith.mulf %266, %268 : vector<32x32xf32>
    %cst_161 = arith.constant dense<0.000000e+00> : vector<32x32xf32>
    %284 = tpu.matmul %270, %283, %cst_161 {dimension_numbers = #tpu.dot_dimension_numbers<[1], [0], [0], [1], [0, 0, 1, 1], [], []>} : vector<32x32xf32>, vector<32x32xf32>, vector<32x32xf32> -> vector<32x32xf32>
    %cst_162 = arith.constant dense<0.000000e+00> : vector<32x32xf32>
    %285 = tpu.matmul %284, %272, %cst_162 {dimension_numbers = #tpu.dot_dimension_numbers<[1], [0], [0], [1], [0, 0, 1, 1], [], []>} : vector<32x32xf32>, vector<32x32xf32>, vector<32x32xf32> -> vector<32x32xf32>
    %286 = arith.mulf %274, %274 : vector<32x32xf32>
    %287 = arith.mulf %276, %276 : vector<32x32xf32>
    %288 = arith.mulf %274, %276 : vector<32x32xf32>
    %289 = arith.subf %279, %286 : vector<32x32xf32>
    %290 = arith.subf %282, %287 : vector<32x32xf32>
    %291 = arith.subf %285, %288 : vector<32x32xf32>
    %cst_163 = arith.constant 2.000000e+00 : f32
    %292 = vector.broadcast %cst_163 : f32 to vector<32x32xf32>
    %293 = arith.mulf %292, %288 : vector<32x32xf32>
    %cst_164 = arith.constant 6.502500e+00 : f32
    %294 = vector.broadcast %cst_164 : f32 to vector<32x32xf32>
    %295 = arith.addf %293, %294 : vector<32x32xf32>
    %cst_165 = arith.constant 2.000000e+00 : f32
    %296 = vector.broadcast %cst_165 : f32 to vector<32x32xf32>
    %297 = arith.mulf %296, %291 : vector<32x32xf32>
    %cst_166 = arith.constant 5.852250e+01 : f32
    %298 = vector.broadcast %cst_166 : f32 to vector<32x32xf32>
    %299 = arith.addf %297, %298 : vector<32x32xf32>
    %300 = arith.mulf %295, %299 : vector<32x32xf32>
    %301 = arith.addf %286, %287 : vector<32x32xf32>
    %cst_167 = arith.constant 6.502500e+00 : f32
    %302 = vector.broadcast %cst_167 : f32 to vector<32x32xf32>
    %303 = arith.addf %301, %302 : vector<32x32xf32>
    %304 = arith.addf %289, %290 : vector<32x32xf32>
    %cst_168 = arith.constant 5.852250e+01 : f32
    %305 = vector.broadcast %cst_168 : f32 to vector<32x32xf32>
    %306 = arith.addf %304, %305 : vector<32x32xf32>
    %307 = arith.mulf %303, %306 : vector<32x32xf32>
    %308 = tpu.reciprocal %307 : vector<32x32xf32> -> vector<32x32xf32>
    %309 = arith.mulf %300, %308 : vector<32x32xf32>
    %c2_i32_169 = arith.constant 2 : i32
    %310 = vector.broadcast %c2_i32_169 : i32 to vector<32x32xi32>
    %311 = arith.cmpi slt, %4, %310 : vector<32x32xi32>
    %c2_i32_170 = arith.constant 2 : i32
    %312 = vector.broadcast %c2_i32_170 : i32 to vector<32x32xi32>
    %313 = arith.cmpi slt, %5, %312 : vector<32x32xi32>
    %314 = arith.andi %311, %313 : vector<32x32xi1>
    %cst_171 = arith.constant 0.000000e+00 : f32
    %315 = vector.broadcast %cst_171 : f32 to vector<32x32xf32>
    %316 = arith.select %314, %309, %315 : vector<32x32xi1>, vector<32x32xf32>
    %317 = vector.shape_cast %316 : vector<32x32xf32> to vector<1x32x32xf32>
    %cst_172 = arith.constant dense<0.000000e+00> : vector<1xf32>
    %318 = vector.multi_reduction <add>, %317, %cst_172 [1, 2] : vector<1x32x32xf32> to vector<1xf32>
    %319 = vector.shape_cast %318 : vector<1xf32> to vector<1x1x1xf32>
    %320 = vector.extract %319[0, 0, 0] : f32 from vector<1x1x1xf32>
    %cst_173 = arith.constant 2.500000e-01 : f32
    %321 = arith.mulf %320, %cst_173 : f32
    %c4_i32_174 = arith.constant 4 : i32
    %322 = vector.broadcast %c4_i32_174 : i32 to vector<1x1x5xi32>
    %323 = arith.cmpi eq, %6, %322 : vector<1x1x5xi32>
    %cst_175 = arith.constant 0.000000e+00 : f32
    %324 = vector.broadcast %321 : f32 to vector<1x1x5xf32>
    %325 = vector.broadcast %cst_175 : f32 to vector<1x1x5xf32>
    %326 = arith.select %323, %324, %325 : vector<1x1x5xi1>, vector<1x1x5xf32>
    %327 = arith.addf %260, %326 : vector<1x1x5xf32>
    %c0_176 = arith.constant 0 : index
    %c0_177 = arith.constant 0 : index
    %c0_178 = arith.constant 0 : index
    %328 = vector.load %arg7[%c0_176, %c0_177, %c0_178] : memref<1x1x5xf32, #tpu.memory_space<vmem>>, vector<1x1x5xf32>
    tpu.vector_store %arg7[%c0_176, %c0_177, %c0_178], %327 {strides = array<i32>} : memref<1x1x5xf32, #tpu.memory_space<vmem>>, vector<1x1x5xf32>,
    return
  }
  func.func @transform_0(%arg0: i32) -> (i32, i32, i32) {
    %c0_i32 = arith.constant 0 : i32
    %c0_i32_0 = arith.constant 0 : i32
    %c0_i32_1 = arith.constant 0 : i32
    return %arg0, %c0_i32, %c0_i32_0 : i32, i32, i32
  }
  func.func @transform_1(%arg0: i32) -> (i32, i32, i32) {
    %c0_i32 = arith.constant 0 : i32
    %c0_i32_0 = arith.constant 0 : i32
    %c0_i32_1 = arith.constant 0 : i32
    return %arg0, %c0_i32, %c0_i32_0 : i32, i32, i32
  }
  func.func @transform_2(%arg0: i32) -> (i32, i32, i32) {
    %c0_i32 = arith.constant 0 : i32
    %c0_i32_0 = arith.constant 0 : i32
    %c0_i32_1 = arith.constant 0 : i32
    %c0_i32_2 = arith.constant 0 : i32
    return %c0_i32, %c0_i32_0, %c0_i32_1 : i32, i32, i32
  }
  func.func @transform_3(%arg0: i32) -> (i32, i32, i32) {
    %c0_i32 = arith.constant 0 : i32
    %c0_i32_0 = arith.constant 0 : i32
    %c0_i32_1 = arith.constant 0 : i32
    %c0_i32_2 = arith.constant 0 : i32
    return %c0_i32, %c0_i32_0, %c0_i32_1 : i32, i32, i32
  }
  func.func @transform_4(%arg0: i32) -> (i32, i32, i32) {
    %c0_i32 = arith.constant 0 : i32
    %c0_i32_0 = arith.constant 0 : i32
    %c0_i32_1 = arith.constant 0 : i32
    %c0_i32_2 = arith.constant 0 : i32
    return %c0_i32, %c0_i32_0, %c0_i32_1 : i32, i32, i32
  }
  func.func @transform_5(%arg0: i32) -> (i32, i32, i32) {
    %c0_i32 = arith.constant 0 : i32
    %c0_i32_0 = arith.constant 0 : i32
    %c0_i32_1 = arith.constant 0 : i32
    %c0_i32_2 = arith.constant 0 : i32
    return %c0_i32, %c0_i32_0, %c0_i32_1 : i32, i32, i32
  }
  func.func @transform_6(%arg0: i32) -> (i32, i32, i32) {
    %c0_i32 = arith.constant 0 : i32
    %c0_i32_0 = arith.constant 0 : i32
    %c0_i32_1 = arith.constant 0 : i32
    return %arg0, %c0_i32, %c0_i32_0 : i32, i32, i32
  }
}

</mosaic_0001>

<llo_original>
// kernel: a_call__.1
$region0: #{a_call__.1}
  #allocation0 [shape = 'u32[]', space=smem, size = 0x4, offset = 0x4, fixed_abs, tag = 'smem constant byte address 0x4 - core index']
  #allocation1 [shape = 'u32[144,128]{1,0:T(1,128)}', space=vmem, size = 0x12000, scoped, tag = 'internal scratch']
  %s0 = inlined_call_operand.vmem [shape: f32[2,32,32], index: 0, kind: input, shape index: {}]
  %s1 = inlined_call_operand.vmem [shape: f32[2,32,32], index: 1, kind: input, shape index: {}]
  %s2 = inlined_call_operand.vmem [shape: f32[5,32,32], index: 2, kind: input, shape index: {}, may-alias: {2,3}]
  %s3 = inlined_call_operand.vmem [shape: f32[5,32,32], index: 3, kind: input, shape index: {}, may-alias: {2,3}]
  %s4 = inlined_call_operand.hbm [shape: f32[4,32,32], index: 4, kind: input, shape index: {}]
  %s5 = inlined_call_operand.hbm [shape: f32[4,32,32], index: 5, kind: input, shape index: {}]
  %s6 = inlined_call_operand.vmem [shape: f32[2,1,5], index: 6, kind: output, shape index: {}]
  %s7 = sld [smem:[#allocation0]]
  $region65: #{a_call__.1} parent=0
    _
  %s9 = ssub.s32 1, %s7
  %s10 = scalar_select 0, %s9, %s7
  $region1: #{a_call__.1} parent=0
    #allocation2 [shape = 'u8[65536]{0}', space=vmem, size = 0x10000, scoped, tag = 'input window, operand 4, single buffered']
    #allocation3 [shape = 's32[2]{0}', space=sflag, size = 0x8, scoped, tag = 'scoped memory for a_call__.1']
    #allocation4 [shape = 'u8[65536]{0}', space=vmem, size = 0x10000, scoped, tag = 'input window, operand 5, single buffered']
    #allocation5 [shape = 's32[1]{0}', space=sflag, size = 0x4, scoped, tag = 'scoped memory for a_call__.1']
    %11 = vsyncpa [#allocation3], 0
    %12 = vsyncpa [#allocation5], 0
    loop: start=0, step=1, limit=4
    $region2: #{a_call__.1} parent=1 // loop_pre_header
      _
    $region3: #{a_call__.1} parent=1 // loop_header
      %s14 = sphi 0, %s18
      %p15 = scmp.ge.s32.totalorder %s14, 4
      %s24 = sphi 0, %s26
      %s27 = sphi 0, %s24
      %s28 = sphi 0, %s27
      %s44 = sphi 0, %s28
      %s50 = sphi 0, %s52
      %s53 = sphi 0, %s50
      %s54 = sphi 0, %s53
      %s70 = sphi 0, %s54
      %s74 = sphi 0, %s74
      %s76 = sphi 0, %s74
      %s77 = sphi 0, %s76
      %s91 = sphi 0, %s77
      %s95 = sphi 0, %s95
      %s97 = sphi 0, %s95
      %s98 = sphi 0, %s97
      %s112 = sphi 0, %s98
      %s116 = sphi 0, %s116
      %s118 = sphi 0, %s116
      %s119 = sphi 0, %s118
      %s133 = sphi 0, %s119
      %s137 = sphi 0, %s137
      %s139 = sphi 0, %s137
      %s140 = sphi 0, %s139
      %s154 = sphi 0, %s140
      %s160 = sphi 0, %s162
      %s163 = sphi 0, %s160
      %s164 = sphi 0, %s163
      %s180 = sphi 0, %s164
    $region4: #{a_call__.1} parent=1 // loop_header_branch
      %17 = sbr.rel (%p15) target = $region8
    $region5: #{a_call__.1} parent=1 // loop_body
      %s19 = ssub.s32 %s14, 1
      %s20 = ssub.s32 %s14, 2
      %s21 = sadd.s32 %s14, 1
      %s22 = ssub.s32 %s14, %s21
      %p23 = scmp.eq.s32.totalorder %s22, 0
      %s25 = sadd.s32 %s24, 1
      %s26 = scalar_select %p23, %s24, %s25
      %p29 = pneg %p23
      %p30 = scmp.eq.s32.totalorder %s14, 1
      %p31 = por %p29, %p30
      %p32 = scmp.ne.s32.totalorder %s24, %s27
      %p33 = scmp.eq.s32.totalorder %s14, 0
      %p34 = por %p32, %p33
      %p35 = scmp.ne.s32.totalorder %s24, %s27
      %p36 = scmp.eq.s32.totalorder %s19, 1
      %p37 = por %p35, %p36
      %p38 = scmp.ne.s32.totalorder %s27, %s28
      %p39 = scmp.eq.s32.totalorder %s19, 0
      %p40 = por %p38, %p39
      %p41 = scmp.ne.s32.totalorder %s27, %s28
      %p42 = scmp.eq.s32.totalorder %s20, 1
      %p43 = por %p41, %p42
      %p45 = scmp.ne.s32.totalorder %s28, %s44
      %p46 = scmp.eq.s32.totalorder %s20, 0
      %p47 = por %p45, %p46
      %s48 = ssub.s32 %s14, %s21
      %p49 = scmp.eq.s32.totalorder %s48, 0
      %s51 = sadd.s32 %s50, 1
      %s52 = scalar_select %p49, %s50, %s51
      %p55 = pneg %p49
      %p56 = scmp.eq.s32.totalorder %s14, 1
      %p57 = por %p55, %p56
      %p58 = scmp.ne.s32.totalorder %s50, %s53
      %p59 = scmp.eq.s32.totalorder %s14, 0
      %p60 = por %p58, %p59
      %p61 = scmp.ne.s32.totalorder %s50, %s53
      %p62 = scmp.eq.s32.totalorder %s19, 1
      %p63 = por %p61, %p62
      %p64 = scmp.ne.s32.totalorder %s53, %s54
      %p65 = scmp.eq.s32.totalorder %s19, 0
      %p66 = por %p64, %p65
      %p67 = scmp.ne.s32.totalorder %s53, %s54
      %p68 = scmp.eq.s32.totalorder %s20, 1
      %p69 = por %p67, %p68
      %p71 = scmp.ne.s32.totalorder %s54, %s70
      %p72 = scmp.eq.s32.totalorder %s20, 0
      %p73 = por %p71, %p72
      %s75 = sadd.s32 %s74, 1
      %p78 = scmp.eq.s32.totalorder %s14, 1
      %p79 = scmp.ne.s32.totalorder %s74, %s76
      %p80 = scmp.eq.s32.totalorder %s14, 0
      %p81 = por %p79, %p80
      %p82 = scmp.ne.s32.totalorder %s74, %s76
      %p83 = scmp.eq.s32.totalorder %s19, 1
      %p84 = por %p82, %p83
      %p85 = scmp.ne.s32.totalorder %s76, %s77
      %p86 = scmp.eq.s32.totalorder %s19, 0
      %p87 = por %p85, %p86
      %p88 = scmp.ne.s32.totalorder %s76, %s77
      %p89 = scmp.eq.s32.totalorder %s20, 1
      %p90 = por %p88, %p89
      %p92 = scmp.ne.s32.totalorder %s77, %s91
      %p93 = scmp.eq.s32.totalorder %s20, 0
      %p94 = por %p92, %p93
      %s96 = sadd.s32 %s95, 1
      %p99 = scmp.eq.s32.totalorder %s14, 1
      %p100 = scmp.ne.s32.totalorder %s95, %s97
      %p101 = scmp.eq.s32.totalorder %s14, 0
      %p102 = por %p100, %p101
      %p103 = scmp.ne.s32.totalorder %s95, %s97
      %p104 = scmp.eq.s32.totalorder %s19, 1
      %p105 = por %p103, %p104
      %p106 = scmp.ne.s32.totalorder %s97, %s98
      %p107 = scmp.eq.s32.totalorder %s19, 0
      %p108 = por %p106, %p107
      %p109 = scmp.ne.s32.totalorder %s97, %s98
      %p110 = scmp.eq.s32.totalorder %s20, 1
      %p111 = por %p109, %p110
      %p113 = scmp.ne.s32.totalorder %s98, %s112
      %p114 = scmp.eq.s32.totalorder %s20, 0
      %p115 = por %p113, %p114
      %s117 = sadd.s32 %s116, 1
      %p120 = scmp.eq.s32.totalorder %s14, 1
      %p121 = scmp.ne.s32.totalorder %s116, %s118
      %p122 = scmp.eq.s32.totalorder %s14, 0
      %p123 = por %p121, %p122
      %p124 = scmp.ne.s32.totalorder %s116, %s118
      %p125 = scmp.eq.s32.totalorder %s19, 1
      %p126 = por %p124, %p125
      %p127 = scmp.ne.s32.totalorder %s118, %s119
      %p128 = scmp.eq.s32.totalorder %s19, 0
      %p129 = por %p127, %p128
      %p130 = scmp.ne.s32.totalorder %s118, %s119
      %p131 = scmp.eq.s32.totalorder %s20, 1
      %p132 = por %p130, %p131
      %p134 = scmp.ne.s32.totalorder %s119, %s133
      %p135 = scmp.eq.s32.totalorder %s20, 0
      %p136 = por %p134, %p135
      %s138 = sadd.s32 %s137, 1
      %p141 = scmp.eq.s32.totalorder %s14, 1
      %p142 = scmp.ne.s32.totalorder %s137, %s139
      %p143 = scmp.eq.s32.totalorder %s14, 0
      %p144 = por %p142, %p143
      %p145 = scmp.ne.s32.totalorder %s137, %s139
      %p146 = scmp.eq.s32.totalorder %s19, 1
      %p147 = por %p145, %p146
      %p148 = scmp.ne.s32.totalorder %s139, %s140
      %p149 = scmp.eq.s32.totalorder %s19, 0
      %p150 = por %p148, %p149
      %p151 = scmp.ne.s32.totalorder %s139, %s140
      %p152 = scmp.eq.s32.totalorder %s20, 1
      %p153 = por %p151, %p152
      %p155 = scmp.ne.s32.totalorder %s140, %s154
      %p156 = scmp.eq.s32.totalorder %s20, 0
      %p157 = por %p155, %p156
      %s158 = ssub.s32 %s14, %s21
      %p159 = scmp.eq.s32.totalorder %s158, 0
      %s161 = sadd.s32 %s160, 1
      %s162 = scalar_select %p159, %s160, %s161
      %p165 = pneg %p159
      %p166 = scmp.eq.s32.totalorder %s14, 1
      %p167 = por %p165, %p166
      %p168 = scmp.ne.s32.totalorder %s160, %s163
      %p169 = scmp.eq.s32.totalorder %s14, 0
      %p170 = por %p168, %p169
      %p171 = scmp.ne.s32.totalorder %s160, %s163
      %p172 = scmp.eq.s32.totalorder %s19, 1
      %p173 = por %p171, %p172
      %p174 = scmp.ne.s32.totalorder %s163, %s164
      %p175 = scmp.eq.s32.totalorder %s19, 0
      %p176 = por %p174, %p175
      %p177 = scmp.ne.s32.totalorder %s163, %s164
      %p178 = scmp.eq.s32.totalorder %s20, 1
      %p179 = por %p177, %p178
      %p181 = scmp.ne.s32.totalorder %s164, %s180
      %p182 = scmp.eq.s32.totalorder %s20, 0
      %p183 = por %p181, %p182
      %p184 = scmp.le.s32.totalorder 1, %s14
      %p185 = scmp.lt.s32.totalorder %s14, 3
      %p186 = pnand %p184, %p185
      %p187 = pneg %p186
      // Predicated region
      $region9: #{a_call__.1} parent=5 // pred_check
        _
      $region10: #{a_call__.1} parent=5 // pred_check_branch
        %189 = sbr.rel (%p186) target = $region12
      $region11: #{a_call__.1} parent=5 // pred_region
        %s190 = ssub.s32 %s14, 1
        // Predicated region
        $region13: #{a_call__.1} parent=11 // pred_check
          %p191 = pneg %p87
        $region14: #{a_call__.1} parent=11 // pred_check_branch
          %193 = sbr.rel (%p191) target = $region16
        $region15: #{a_call__.1} parent=11 // pred_region
          _
        $region16: #{a_call__.1} parent=11 // pred_fallthru
          _
        // Predicated region
        $region17: #{a_call__.1} parent=11 // pred_check
          %p194 = pneg %p108
        $region18: #{a_call__.1} parent=11 // pred_check_branch
          %196 = sbr.rel (%p194) target = $region20
        $region19: #{a_call__.1} parent=11 // pred_region
          _
        $region20: #{a_call__.1} parent=11 // pred_fallthru
          _
        // Predicated region
        $region21: #{a_call__.1} parent=11 // pred_check
          %p197 = pneg %p129
        $region22: #{a_call__.1} parent=11 // pred_check_branch
          %199 = sbr.rel (%p197) target = $region24
        $region23: #{a_call__.1} parent=11 // pred_region
          %s201 = ssub.s32 2048, 2048
          %202 = vsyncadd [#allocation3], %s201
          %s203 = sshll.u32 [#allocation2], 4
          %s204 = int_to_ptr.vmem [resolvable:$true] %s203
          %209 = dma.hbm_to_vmem [thread:$0]  %s4, 2048, %s204, [#allocation3], 128, 128, 8
        $region24: #{a_call__.1} parent=11 // pred_fallthru
          _
        // Predicated region
        $region25: #{a_call__.1} parent=11 // pred_check
          %p210 = pneg %p150
        $region26: #{a_call__.1} parent=11 // pred_check_branch
          %212 = sbr.rel (%p210) target = $region28
        $region27: #{a_call__.1} parent=11 // pred_region
          %s214 = ssub.s32 2048, 2048
          %215 = vsyncadd [#allocation5], %s214
          %s216 = sshll.u32 [#allocation4], 4
          %s217 = int_to_ptr.vmem [resolvable:$true] %s216
          %222 = dma.hbm_to_vmem [thread:$0]  %s5, 2048, %s217, [#allocation5], 128, 128, 8
        $region28: #{a_call__.1} parent=11 // pred_fallthru
          _
      $region12: #{a_call__.1} parent=5 // pred_fallthru
        _
      %p223 = scmp.lt.s32.totalorder %s14, 2
      // Predicated region
      $region29: #{a_call__.1} parent=5 // pred_check
        %p224 = pneg %p223
      $region30: #{a_call__.1} parent=5 // pred_check_branch
        %226 = sbr.rel (%p224) target = $region32
      $region31: #{a_call__.1} parent=5 // pred_region
        // Predicated region
        $region33: #{a_call__.1} parent=31 // pred_check
          %p227 = pneg %p34
        $region34: #{a_call__.1} parent=31 // pred_check_branch
          %229 = sbr.rel (%p227) target = $region36
        $region35: #{a_call__.1} parent=31 // pred_region
          %p230 = scmp.lt.s32.totalorder %s14, 1
          %s231 = scalar_select %p230, %s14, 1
          %s232 = smul.addr %s231, 4
          %s233 = smul.addr %s232, 8
          %s234 = scalar_lea.vmem %s0, %s233
        $region36: #{a_call__.1} parent=31 // pred_fallthru
          _
        // Predicated region
        $region37: #{a_call__.1} parent=31 // pred_check
          %p235 = pneg %p60
        $region38: #{a_call__.1} parent=31 // pred_check_branch
          %237 = sbr.rel (%p235) target = $region40
        $region39: #{a_call__.1} parent=31 // pred_region
          %p238 = scmp.lt.s32.totalorder %s14, 1
          %s239 = scalar_select %p238, %s14, 1
          %s240 = smul.addr %s239, 4
          %s241 = smul.addr %s240, 8
          %s242 = scalar_lea.vmem %s1, %s241
        $region40: #{a_call__.1} parent=31 // pred_fallthru
          _
      $region32: #{a_call__.1} parent=5 // pred_fallthru
        _
      %p243 = scmp.le.s32.totalorder 1, %s14
      %p244 = scmp.lt.s32.totalorder %s14, 3
      %p245 = pnand %p243, %p244
      %p246 = pneg %p245
      // Predicated region
      $region41: #{a_call__.1} parent=5 // pred_check
        _
      $region42: #{a_call__.1} parent=5 // pred_check_branch
        %248 = sbr.rel (%p245) target = $region44
      $region43: #{a_call__.1} parent=5 // pred_region
        %s249 = ssub.s32 %s14, 1
        // Predicated region
        $region45: #{a_call__.1} parent=43 // pred_check
          %p250 = pneg %p129
        $region46: #{a_call__.1} parent=43 // pred_check_branch
          %252 = sbr.rel (%p250) target = $region48
        $region47: #{a_call__.1} parent=43 // pred_region
          %253 = dma.done [#allocation3], 2048
        $region48: #{a_call__.1} parent=43 // pred_fallthru
          _
        // Predicated region
        $region49: #{a_call__.1} parent=43 // pred_check
          %p254 = pneg %p150
        $region50: #{a_call__.1} parent=43 // pred_check_branch
          %256 = sbr.rel (%p254) target = $region52
        $region51: #{a_call__.1} parent=43 // pred_region
          %257 = dma.done [#allocation5], 2048
        $region52: #{a_call__.1} parent=43 // pred_fallthru
          _
        %p258 = scmp.lt.s32.totalorder %s19, 1
        %s259 = scalar_select %p258, %s19, 1
        %s260 = smul.addr %s259, 4
        %s261 = smul.addr %s260, 8
        %s262 = scalar_lea.vmem %s0, %s261
        %p263 = pneg %p40
        %p264 = pneg %p37
        %p265 = scmp.lt.s32.totalorder %s19, 1
        %s266 = scalar_select %p265, %s19, 1
        %s267 = smul.addr %s266, 4
        %s268 = smul.addr %s267, 8
        %s269 = scalar_lea.vmem %s1, %s268
        %p270 = pneg %p66
        %p271 = pneg %p63
        %p272 = pneg %p87
        %p273 = pneg %p84
        %p274 = pneg %p108
        %p275 = pneg %p105
        %p276 = pneg %p129
        %p277 = pneg %p126
        %p278 = pneg %p150
        %p279 = pneg %p147
        %p280 = pneg %p176
        %p281 = pneg %p173
        %p282 = scmp.lt.s32.totalorder %s19, 1
        %s283 = scalar_select %p282, %s19, 1
        %s284 = scalar_lea.vmem %s6, %s283
        %p285 = scmp.lt.s32.totalorder %s19, 1
        %s286 = scalar_select %p285, %s19, 1
        %s287 = smul.addr %s286, 4
        %s288 = smul.addr %s287, 8
        %s289 = scalar_lea.vmem %s0, %s288
        %p290 = scmp.lt.s32.totalorder %s19, 1
        %s291 = scalar_select %p290, %s19, 1
        %s292 = smul.addr %s291, 4
        %s293 = smul.addr %s292, 8
        %s294 = scalar_lea.vmem %s1, %s293
        %p295 = scmp.lt.s32.totalorder %s19, 1
        %s296 = scalar_select %p295, %s19, 1
        %s297 = scalar_lea.vmem %s6, %s296
        %v298 = vld [vmem:[%s289] sm:$0xff]
        %v299 = vld [vmem:[%s289 + $0x8] sm:$0xff]
        %v300 = vld [vmem:[%s289 + $0x10] sm:$0xff]
        %v301 = vld [vmem:[%s289 + $0x18] sm:$0xff]
        %v302 = vld [vmem:[%s294] sm:$0xff]
        %v303 = vld [vmem:[%s294 + $0x8] sm:$0xff]
        %v304 = vld [vmem:[%s294 + $0x10] sm:$0xff]
        %v305 = vld [vmem:[%s294 + $0x18] sm:$0xff]
        %v306 = vlaneseq
        %v307 = vshrl.u32 %v306, 7
        %v308 = vadd.s32 %v307, 8
        %v309 = vadd.s32 %v307, 16
        %v310 = vadd.s32 %v307, 24
        %v311 = vlaneseq
        %v312 = vand.u32 %v311, 127
        %v313 = vld [vmem:[%s2] sm:$0xff]
        %v314 = vld [vmem:[%s2 + $0x8] sm:$0xff]
        %v315 = vld [vmem:[%s2 + $0x10] sm:$0xff]
        %v316 = vld [vmem:[%s2 + $0x18] sm:$0xff]
        %v317 = vld [vmem:[%s3] sm:$0xff]
        %v318 = vld [vmem:[%s3 + $0x8] sm:$0xff]
        %v319 = vld [vmem:[%s3 + $0x10] sm:$0xff]
        %v320 = vld [vmem:[%s3 + $0x18] sm:$0xff]
        %vm321 = vcmask 261120
        %v323 = vsel %vm321, %v313, 0
        %v326 = vsel %vm321, %v314, 0
        %v329 = vsel %vm321, %v315, 0
        %v332 = vsel %vm321, %v316, 0
        %334 = vmatprep.subr.mxu0 0.0
        %335 = vmatpush1.msra.mxu0 %v298
        %336 = vmatprep.subr.mxu0 0.0
        %337 = vmatpush1.msra.mxu0 %v299
        %338 = vmatprep.subr.mxu0 0.0
        %339 = vmatpush1.msra.mxu0 %v300
        %340 = vmatprep.subr.mxu0 0.0
        %341 = vmatpush1.msra.mxu0 %v301
        %342 = vmatprep.subr.mxu0 0.0
        %343 = vmatpush1.msra.mxu0 0.0
        %344 = vmatprep.subr.mxu0 0.0
        %345 = vmatpush1.msra.mxu0 0.0
        %346 = vmatprep.subr.mxu0 0.0
        %347 = vmatpush1.msra.mxu0 0.0
        %348 = vmatprep.subr.mxu0 0.0
        %349 = vmatpush1.msra.mxu0 0.0
        %350 = vmatprep.subr.mxu0 0.0
        %351 = vmatpush1.msra.mxu0 0.0
        %352 = vmatprep.subr.mxu0 0.0
        %353 = vmatpush1.msra.mxu0 0.0
        %354 = vmatprep.subr.mxu0 0.0
        %355 = vmatpush1.msra.mxu0 0.0
        %356 = vmatprep.subr.mxu0 0.0
        %357 = vmatpush1.msra.mxu0 0.0
        %358 = vmatprep.subr.mxu0 0.0
        %359 = vmatpush1.msra.mxu0 0.0
        %360 = vmatprep.subr.mxu0 0.0
        %361 = vmatpush1.msra.mxu0 0.0
        %362 = vmatprep.subr.mxu0 0.0
        %363 = vmatpush1.msra.mxu0 0.0
        %364 = vmatprep.subr.mxu0 0.0
        %365 = vmatpush1.msra.mxu0 0.0
        %366 = vmatprep.subr.mxu0 0.0
        %367 = vmatpush1.msra.mxu0 0.0
        %368 = vmatprep.subr.mxu0 0.0
        %369 = vmatpush1.msra.mxu0 0.0
        %370 = vmatprep.subr.mxu0 0.0
        %371 = vmatpush1.msra.mxu0 0.0
        %372 = vmatprep.subr.mxu0 0.0
        %373 = vmatpush1.msra.mxu0 0.0
        %374 = vmatprep.subr.mxu0 0.0
        %375 = vmatpush1.msra.mxu0 0.0
        %376 = vmatprep.subr.mxu0 0.0
        %377 = vmatpush1.msra.mxu0 0.0
        %378 = vmatprep.subr.mxu0 0.0
        %379 = vmatpush1.msra.mxu0 0.0
        %380 = vmatprep.subr.mxu0 0.0
        %381 = vmatpush1.msra.mxu0 0.0
        %382 = vmatprep.subr.mxu0 0.0
        %383 = vmatpush1.msra.mxu0 0.0
        %384 = vmatprep.subr.mxu0 0.0
        %385 = vmatpush1.msra.mxu0 0.0
        %386 = vmatprep.subr.mxu0 0.0
        %387 = vmatpush1.msra.mxu0 0.0
        %388 = vmatprep.subr.mxu0 0.0
        %389 = vmatpush1.msra.mxu0 0.0
        %390 = vmatprep.subr.mxu0 0.0
        %391 = vmatpush1.msra.mxu0 0.0
        %392 = vmatprep.subr.mxu0 0.0
        %393 = vmatpush1.msra.mxu0 0.0
        %394 = vmatprep.subr.mxu0 0.0
        %395 = vmatpush1.msra.mxu0 0.0
        %396 = vmatprep.subr.mxu0 0.0
        %397 = vmatpush1.msra.mxu0 0.0
        %398 = vmatprep.mubr.f32.mxu0 0.0
        %399 = vmatmul.mubr.f32.gmra.mrb[0].mxu0 %v323
        %v400 = vpop.f32.mrb[0].mxu0
        %v401 = vadd.f32 0.0, %v400
        %v402 = vpop.f32.mrb[0].mxu0
        %403 = vmatprep.mubr.f32.mxu0 0.0
        %404 = vmatmul.mubr.f32.gmra.mrb[0].mxu0 %v326
        %v405 = vpop.f32.mrb[0].mxu0
        %v406 = vadd.f32 0.0, %v405
        %v407 = vpop.f32.mrb[0].mxu0
        %408 = vmatprep.mubr.f32.mxu0 0.0
        %409 = vmatmul.mubr.f32.gmra.mrb[0].mxu0 %v329
        %v410 = vpop.f32.mrb[0].mxu0
        %v411 = vadd.f32 0.0, %v410
        %v412 = vpop.f32.mrb[0].mxu0
        %413 = vmatprep.mubr.f32.mxu0 0.0
        %414 = vmatmul.mubr.f32.gmra.mrb[0].mxu0 %v332
        %v415 = vpop.f32.mrb[0].mxu0
        %v416 = vadd.f32 0.0, %v415
        %v417 = vpop.f32.mrb[0].mxu0
        %418 = vdwg.mxu0
        %v420 = vsel %vm321, %v401, 0
        %v423 = vsel %vm321, %v406, 0
        %v426 = vsel %vm321, %v411, 0
        %v429 = vsel %vm321, %v416, 0
        %431 = vmatprep.subr.mxu0 0.0
        %432 = vmatpush1.msra.mxu0 %v317
        %433 = vmatprep.subr.mxu0 0.0
        %434 = vmatpush1.msra.mxu0 %v318
        %435 = vmatprep.subr.mxu0 0.0
        %436 = vmatpush1.msra.mxu0 %v319
        %437 = vmatprep.subr.mxu0 0.0
        %438 = vmatpush1.msra.mxu0 %v320
        %439 = vmatprep.subr.mxu0 0.0
        %440 = vmatpush1.msra.mxu0 0.0
        %441 = vmatprep.subr.mxu0 0.0
        %442 = vmatpush1.msra.mxu0 0.0
        %443 = vmatprep.subr.mxu0 0.0
        %444 = vmatpush1.msra.mxu0 0.0
        %445 = vmatprep.subr.mxu0 0.0
        %446 = vmatpush1.msra.mxu0 0.0
        %447 = vmatprep.subr.mxu0 0.0
        %448 = vmatpush1.msra.mxu0 0.0
        %449 = vmatprep.subr.mxu0 0.0
        %450 = vmatpush1.msra.mxu0 0.0
        %451 = vmatprep.subr.mxu0 0.0
        %452 = vmatpush1.msra.mxu0 0.0
        %453 = vmatprep.subr.mxu0 0.0
        %454 = vmatpush1.msra.mxu0 0.0
        %455 = vmatprep.subr.mxu0 0.0
        %456 = vmatpush1.msra.mxu0 0.0
        %457 = vmatprep.subr.mxu0 0.0
        %458 = vmatpush1.msra.mxu0 0.0
        %459 = vmatprep.subr.mxu0 0.0
        %460 = vmatpush1.msra.mxu0 0.0
        %461 = vmatprep.subr.mxu0 0.0
        %462 = vmatpush1.msra.mxu0 0.0
        %463 = vmatprep.subr.mxu0 0.0
        %464 = vmatpush1.msra.mxu0 0.0
        %465 = vmatprep.subr.mxu0 0.0
        %466 = vmatpush1.msra.mxu0 0.0
        %467 = vmatprep.subr.mxu0 0.0
        %468 = vmatpush1.msra.mxu0 0.0
        %469 = vmatprep.subr.mxu0 0.0
        %470 = vmatpush1.msra.mxu0 0.0
        %471 = vmatprep.subr.mxu0 0.0
        %472 = vmatpush1.msra.mxu0 0.0
        %473 = vmatprep.subr.mxu0 0.0
        %474 = vmatpush1.msra.mxu0 0.0
        %475 = vmatprep.subr.mxu0 0.0
        %476 = vmatpush1.msra.mxu0 0.0
        %477 = vmatprep.subr.mxu0 0.0
        %478 = vmatpush1.msra.mxu0 0.0
        %479 = vmatprep.subr.mxu0 0.0
        %480 = vmatpush1.msra.mxu0 0.0
        %481 = vmatprep.subr.mxu0 0.0
        %482 = vmatpush1.msra.mxu0 0.0
        %483 = vmatprep.subr.mxu0 0.0
        %484 = vmatpush1.msra.mxu0 0.0
        %485 = vmatprep.subr.mxu0 0.0
        %486 = vmatpush1.msra.mxu0 0.0
        %487 = vmatprep.subr.mxu0 0.0
        %488 = vmatpush1.msra.mxu0 0.0
        %489 = vmatprep.subr.mxu0 0.0
        %490 = vmatpush1.msra.mxu0 0.0
        %491 = vmatprep.subr.mxu0 0.0
        %492 = vmatpush1.msra.mxu0 0.0
        %493 = vmatprep.subr.mxu0 0.0
        %494 = vmatpush1.msra.mxu0 0.0
        %495 = vmatprep.mubr.f32.mxu0 0.0
        %496 = vmatmul.mubr.f32.gmra.mrb[0].mxu0 %v420
        %v497 = vpop.f32.mrb[0].mxu0
        %v498 = vadd.f32 0.0, %v497
        %v499 = vpop.f32.mrb[0].mxu0
        %500 = vmatprep.mubr.f32.mxu0 0.0
        %501 = vmatmul.mubr.f32.gmra.mrb[0].mxu0 %v423
        %v502 = vpop.f32.mrb[0].mxu0
        %v503 = vadd.f32 0.0, %v502
        %v504 = vpop.f32.mrb[0].mxu0
        %505 = vmatprep.mubr.f32.mxu0 0.0
        %506 = vmatmul.mubr.f32.gmra.mrb[0].mxu0 %v426
        %v507 = vpop.f32.mrb[0].mxu0
        %v508 = vadd.f32 0.0, %v507
        %v509 = vpop.f32.mrb[0].mxu0
        %510 = vmatprep.mubr.f32.mxu0 0.0
        %511 = vmatmul.mubr.f32.gmra.mrb[0].mxu0 %v429
        %v512 = vpop.f32.mrb[0].mxu0
        %v513 = vadd.f32 0.0, %v512
        %v514 = vpop.f32.mrb[0].mxu0
        %515 = vdwg.mxu0
        %516 = vmatprep.subr.mxu0 0.0
        %517 = vmatpush1.msra.mxu0 %v302
        %518 = vmatprep.subr.mxu0 0.0
        %519 = vmatpush1.msra.mxu0 %v303
        %520 = vmatprep.subr.mxu0 0.0
        %521 = vmatpush1.msra.mxu0 %v304
        %522 = vmatprep.subr.mxu0 0.0
        %523 = vmatpush1.msra.mxu0 %v305
        %524 = vmatprep.subr.mxu0 0.0
        %525 = vmatpush1.msra.mxu0 0.0
        %526 = vmatprep.subr.mxu0 0.0
        %527 = vmatpush1.msra.mxu0 0.0
        %528 = vmatprep.subr.mxu0 0.0
        %529 = vmatpush1.msra.mxu0 0.0
        %530 = vmatprep.subr.mxu0 0.0
        %531 = vmatpush1.msra.mxu0 0.0
        %532 = vmatprep.subr.mxu0 0.0
        %533 = vmatpush1.msra.mxu0 0.0
        %534 = vmatprep.subr.mxu0 0.0
        %535 = vmatpush1.msra.mxu0 0.0
        %536 = vmatprep.subr.mxu0 0.0
        %537 = vmatpush1.msra.mxu0 0.0
        %538 = vmatprep.subr.mxu0 0.0
        %539 = vmatpush1.msra.mxu0 0.0
        %540 = vmatprep.subr.mxu0 0.0
        %541 = vmatpush1.msra.mxu0 0.0
        %542 = vmatprep.subr.mxu0 0.0
        %543 = vmatpush1.msra.mxu0 0.0
        %544 = vmatprep.subr.mxu0 0.0
        %545 = vmatpush1.msra.mxu0 0.0
        %546 = vmatprep.subr.mxu0 0.0
        %547 = vmatpush1.msra.mxu0 0.0
        %548 = vmatprep.subr.mxu0 0.0
        %549 = vmatpush1.msra.mxu0 0.0
        %550 = vmatprep.subr.mxu0 0.0
        %551 = vmatpush1.msra.mxu0 0.0
        %552 = vmatprep.subr.mxu0 0.0
        %553 = vmatpush1.msra.mxu0 0.0
        %554 = vmatprep.subr.mxu0 0.0
        %555 = vmatpush1.msra.mxu0 0.0
        %556 = vmatprep.subr.mxu0 0.0
        %557 = vmatpush1.msra.mxu0 0.0
        %558 = vmatprep.subr.mxu0 0.0
        %559 = vmatpush1.msra.mxu0 0.0
        %560 = vmatprep.subr.mxu0 0.0
        %561 = vmatpush1.msra.mxu0 0.0
        %562 = vmatprep.subr.mxu0 0.0
        %563 = vmatpush1.msra.mxu0 0.0
        %564 = vmatprep.subr.mxu0 0.0
        %565 = vmatpush1.msra.mxu0 0.0
        %566 = vmatprep.subr.mxu0 0.0
        %567 = vmatpush1.msra.mxu0 0.0
        %568 = vmatprep.subr.mxu0 0.0
        %569 = vmatpush1.msra.mxu0 0.0
        %570 = vmatprep.subr.mxu0 0.0
        %571 = vmatpush1.msra.mxu0 0.0
        %572 = vmatprep.subr.mxu0 0.0
        %573 = vmatpush1.msra.mxu0 0.0
        %574 = vmatprep.subr.mxu0 0.0
        %575 = vmatpush1.msra.mxu0 0.0
        %576 = vmatprep.subr.mxu0 0.0
        %577 = vmatpush1.msra.mxu0 0.0
        %578 = vmatprep.subr.mxu0 0.0
        %579 = vmatpush1.msra.mxu0 0.0
        %580 = vmatprep.mubr.f32.mxu0 0.0
        %581 = vmatmul.mubr.f32.gmra.mrb[0].mxu0 %v323
        %v582 = vpop.f32.mrb[0].mxu0
        %v583 = vadd.f32 0.0, %v582
        %v584 = vpop.f32.mrb[0].mxu0
        %585 = vmatprep.mubr.f32.mxu0 0.0
        %586 = vmatmul.mubr.f32.gmra.mrb[0].mxu0 %v326
        %v587 = vpop.f32.mrb[0].mxu0
        %v588 = vadd.f32 0.0, %v587
        %v589 = vpop.f32.mrb[0].mxu0
        %590 = vmatprep.mubr.f32.mxu0 0.0
        %591 = vmatmul.mubr.f32.gmra.mrb[0].mxu0 %v329
        %v592 = vpop.f32.mrb[0].mxu0
        %v593 = vadd.f32 0.0, %v592
        %v594 = vpop.f32.mrb[0].mxu0
        %595 = vmatprep.mubr.f32.mxu0 0.0
        %596 = vmatmul.mubr.f32.gmra.mrb[0].mxu0 %v332
        %v597 = vpop.f32.mrb[0].mxu0
        %v598 = vadd.f32 0.0, %v597
        %v599 = vpop.f32.mrb[0].mxu0
        %600 = vdwg.mxu0
        %v602 = vsel %vm321, %v583, 0
        %v605 = vsel %vm321, %v588, 0
        %v608 = vsel %vm321, %v593, 0
        %v611 = vsel %vm321, %v598, 0
        %613 = vmatprep.subr.mxu0 0.0
        %614 = vmatpush1.msra.mxu0 %v317
        %615 = vmatprep.subr.mxu0 0.0
        %616 = vmatpush1.msra.mxu0 %v318
        %617 = vmatprep.subr.mxu0 0.0
        %618 = vmatpush1.msra.mxu0 %v319
        %619 = vmatprep.subr.mxu0 0.0
        %620 = vmatpush1.msra.mxu0 %v320
        %621 = vmatprep.subr.mxu0 0.0
        %622 = vmatpush1.msra.mxu0 0.0
        %623 = vmatprep.subr.mxu0 0.0
        %624 = vmatpush1.msra.mxu0 0.0
        %625 = vmatprep.subr.mxu0 0.0
        %626 = vmatpush1.msra.mxu0 0.0
        %627 = vmatprep.subr.mxu0 0.0
        %628 = vmatpush1.msra.mxu0 0.0
        %629 = vmatprep.subr.mxu0 0.0
        %630 = vmatpush1.msra.mxu0 0.0
        %631 = vmatprep.subr.mxu0 0.0
        %632 = vmatpush1.msra.mxu0 0.0
        %633 = vmatprep.subr.mxu0 0.0
        %634 = vmatpush1.msra.mxu0 0.0
        %635 = vmatprep.subr.mxu0 0.0
        %636 = vmatpush1.msra.mxu0 0.0
        %637 = vmatprep.subr.mxu0 0.0
        %638 = vmatpush1.msra.mxu0 0.0
        %639 = vmatprep.subr.mxu0 0.0
        %640 = vmatpush1.msra.mxu0 0.0
        %641 = vmatprep.subr.mxu0 0.0
        %642 = vmatpush1.msra.mxu0 0.0
        %643 = vmatprep.subr.mxu0 0.0
        %644 = vmatpush1.msra.mxu0 0.0
        %645 = vmatprep.subr.mxu0 0.0
        %646 = vmatpush1.msra.mxu0 0.0
        %647 = vmatprep.subr.mxu0 0.0
        %648 = vmatpush1.msra.mxu0 0.0
        %649 = vmatprep.subr.mxu0 0.0
        %650 = vmatpush1.msra.mxu0 0.0
        %651 = vmatprep.subr.mxu0 0.0
        %652 = vmatpush1.msra.mxu0 0.0
        %653 = vmatprep.subr.mxu0 0.0
        %654 = vmatpush1.msra.mxu0 0.0
        %655 = vmatprep.subr.mxu0 0.0
        %656 = vmatpush1.msra.mxu0 0.0
        %657 = vmatprep.subr.mxu0 0.0
        %658 = vmatpush1.msra.mxu0 0.0
        %659 = vmatprep.subr.mxu0 0.0
        %660 = vmatpush1.msra.mxu0 0.0
        %661 = vmatprep.subr.mxu0 0.0
        %662 = vmatpush1.msra.mxu0 0.0
        %663 = vmatprep.subr.mxu0 0.0
        %664 = vmatpush1.msra.mxu0 0.0
        %665 = vmatprep.subr.mxu0 0.0
        %666 = vmatpush1.msra.mxu0 0.0
        %667 = vmatprep.subr.mxu0 0.0
        %668 = vmatpush1.msra.mxu0 0.0
        %669 = vmatprep.subr.mxu0 0.0
        %670 = vmatpush1.msra.mxu0 0.0
        %671 = vmatprep.subr.mxu0 0.0
        %672 = vmatpush1.msra.mxu0 0.0
        %673 = vmatprep.subr.mxu0 0.0
        %674 = vmatpush1.msra.mxu0 0.0
        %675 = vmatprep.subr.mxu0 0.0
        %676 = vmatpush1.msra.mxu0 0.0
        %677 = vmatprep.mubr.f32.mxu0 0.0
        %678 = vmatmul.mubr.f32.gmra.mrb[0].mxu0 %v602
        %v679 = vpop.f32.mrb[0].mxu0
        %v680 = vadd.f32 0.0, %v679
        %v681 = vpop.f32.mrb[0].mxu0
        %682 = vmatprep.mubr.f32.mxu0 0.0
        %683 = vmatmul.mubr.f32.gmra.mrb[0].mxu0 %v605
        %v684 = vpop.f32.mrb[0].mxu0
        %v685 = vadd.f32 0.0, %v684
        %v686 = vpop.f32.mrb[0].mxu0
        %687 = vmatprep.mubr.f32.mxu0 0.0
        %688 = vmatmul.mubr.f32.gmra.mrb[0].mxu0 %v608
        %v689 = vpop.f32.mrb[0].mxu0
        %v690 = vadd.f32 0.0, %v689
        %v691 = vpop.f32.mrb[0].mxu0
        %692 = vmatprep.mubr.f32.mxu0 0.0
        %693 = vmatmul.mubr.f32.gmra.mrb[0].mxu0 %v611
        %v694 = vpop.f32.mrb[0].mxu0
        %v695 = vadd.f32 0.0, %v694
        %v696 = vpop.f32.mrb[0].mxu0
        %697 = vdwg.mxu0
        %v698 = vmul.f32 %v298, %v298
        %v699 = vmul.f32 %v299, %v299
        %v700 = vmul.f32 %v300, %v300
        %v701 = vmul.f32 %v301, %v301
        %702 = vmatprep.subr.mxu0 0.0
        %703 = vmatpush1.msra.mxu0 %v698
        %704 = vmatprep.subr.mxu0 0.0
        %705 = vmatpush1.msra.mxu0 %v699
        %706 = vmatprep.subr.mxu0 0.0
        %707 = vmatpush1.msra.mxu0 %v700
        %708 = vmatprep.subr.mxu0 0.0
        %709 = vmatpush1.msra.mxu0 %v701
        %710 = vmatprep.subr.mxu0 0.0
        %711 = vmatpush1.msra.mxu0 0.0
        %712 = vmatprep.subr.mxu0 0.0
        %713 = vmatpush1.msra.mxu0 0.0
        %714 = vmatprep.subr.mxu0 0.0
        %715 = vmatpush1.msra.mxu0 0.0
        %716 = vmatprep.subr.mxu0 0.0
        %717 = vmatpush1.msra.mxu0 0.0
        %718 = vmatprep.subr.mxu0 0.0
        %719 = vmatpush1.msra.mxu0 0.0
        %720 = vmatprep.subr.mxu0 0.0
        %721 = vmatpush1.msra.mxu0 0.0
        %722 = vmatprep.subr.mxu0 0.0
        %723 = vmatpush1.msra.mxu0 0.0
        %724 = vmatprep.subr.mxu0 0.0
        %725 = vmatpush1.msra.mxu0 0.0
        %726 = vmatprep.subr.mxu0 0.0
        %727 = vmatpush1.msra.mxu0 0.0
        %728 = vmatprep.subr.mxu0 0.0
        %729 = vmatpush1.msra.mxu0 0.0
        %730 = vmatprep.subr.mxu0 0.0
        %731 = vmatpush1.msra.mxu0 0.0
        %732 = vmatprep.subr.mxu0 0.0
        %733 = vmatpush1.msra.mxu0 0.0
        %734 = vmatprep.subr.mxu0 0.0
        %735 = vmatpush1.msra.mxu0 0.0
        %736 = vmatprep.subr.mxu0 0.0
        %737 = vmatpush1.msra.mxu0 0.0
        %738 = vmatprep.subr.mxu0 0.0
        %739 = vmatpush1.msra.mxu0 0.0
        %740 = vmatprep.subr.mxu0 0.0
        %741 = vmatpush1.msra.mxu0 0.0
        %742 = vmatprep.subr.mxu0 0.0
        %743 = vmatpush1.msra.mxu0 0.0
        %744 = vmatprep.subr.mxu0 0.0
        %745 = vmatpush1.msra.mxu0 0.0
        %746 = vmatprep.subr.mxu0 0.0
        %747 = vmatpush1.msra.mxu0 0.0
        %748 = vmatprep.subr.mxu0 0.0
        %749 = vmatpush1.msra.mxu0 0.0
        %750 = vmatprep.subr.mxu0 0.0
        %751 = vmatpush1.msra.mxu0 0.0
        %752 = vmatprep.subr.mxu0 0.0
        %753 = vmatpush1.msra.mxu0 0.0
        %754 = vmatprep.subr.mxu0 0.0
        %755 = vmatpush1.msra.mxu0 0.0
        %756 = vmatprep.subr.mxu0 0.0
        %757 = vmatpush1.msra.mxu0 0.0
        %758 = vmatprep.subr.mxu0 0.0
        %759 = vmatpush1.msra.mxu0 0.0
        %760 = vmatprep.subr.mxu0 0.0
        %761 = vmatpush1.msra.mxu0 0.0
        %762 = vmatprep.subr.mxu0 0.0
        %763 = vmatpush1.msra.mxu0 0.0
        %764 = vmatprep.subr.mxu0 0.0
        %765 = vmatpush1.msra.mxu0 0.0
        %766 = vmatprep.mubr.f32.mxu0 0.0
        %767 = vmatmul.mubr.f32.gmra.mrb[0].mxu0 %v323
        %v768 = vpop.f32.mrb[0].mxu0
        %v769 = vadd.f32 0.0, %v768
        %v770 = vpop.f32.mrb[0].mxu0
        %771 = vmatprep.mubr.f32.mxu0 0.0
        %772 = vmatmul.mubr.f32.gmra.mrb[0].mxu0 %v326
        %v773 = vpop.f32.mrb[0].mxu0
        %v774 = vadd.f32 0.0, %v773
        %v775 = vpop.f32.mrb[0].mxu0
        %776 = vmatprep.mubr.f32.mxu0 0.0
        %777 = vmatmul.mubr.f32.gmra.mrb[0].mxu0 %v329
        %v778 = vpop.f32.mrb[0].mxu0
        %v779 = vadd.f32 0.0, %v778
        %v780 = vpop.f32.mrb[0].mxu0
        %781 = vmatprep.mubr.f32.mxu0 0.0
        %782 = vmatmul.mubr.f32.gmra.mrb[0].mxu0 %v332
        %v783 = vpop.f32.mrb[0].mxu0
        %v784 = vadd.f32 0.0, %v783
        %v785 = vpop.f32.mrb[0].mxu0
        %786 = vdwg.mxu0
        %v788 = vsel %vm321, %v769, 0
        %v791 = vsel %vm321, %v774, 0
        %v794 = vsel %vm321, %v779, 0
        %v797 = vsel %vm321, %v784, 0
        %799 = vmatprep.subr.mxu0 0.0
        %800 = vmatpush1.msra.mxu0 %v317
        %801 = vmatprep.subr.mxu0 0.0
        %802 = vmatpush1.msra.mxu0 %v318
        %803 = vmatprep.subr.mxu0 0.0
        %804 = vmatpush1.msra.mxu0 %v319
        %805 = vmatprep.subr.mxu0 0.0
        %806 = vmatpush1.msra.mxu0 %v320
        %807 = vmatprep.subr.mxu0 0.0
        %808 = vmatpush1.msra.mxu0 0.0
        %809 = vmatprep.subr.mxu0 0.0
        %810 = vmatpush1.msra.mxu0 0.0
        %811 = vmatprep.subr.mxu0 0.0
        %812 = vmatpush1.msra.mxu0 0.0
        %813 = vmatprep.subr.mxu0 0.0
        %814 = vmatpush1.msra.mxu0 0.0
        %815 = vmatprep.subr.mxu0 0.0
        %816 = vmatpush1.msra.mxu0 0.0
        %817 = vmatprep.subr.mxu0 0.0
        %818 = vmatpush1.msra.mxu0 0.0
        %819 = vmatprep.subr.mxu0 0.0
        %820 = vmatpush1.msra.mxu0 0.0
        %821 = vmatprep.subr.mxu0 0.0
        %822 = vmatpush1.msra.mxu0 0.0
        %823 = vmatprep.subr.mxu0 0.0
        %824 = vmatpush1.msra.mxu0 0.0
        %825 = vmatprep.subr.mxu0 0.0
        %826 = vmatpush1.msra.mxu0 0.0
        %827 = vmatprep.subr.mxu0 0.0
        %828 = vmatpush1.msra.mxu0 0.0
        %829 = vmatprep.subr.mxu0 0.0
        %830 = vmatpush1.msra.mxu0 0.0
        %831 = vmatprep.subr.mxu0 0.0
        %832 = vmatpush1.msra.mxu0 0.0
        %833 = vmatprep.subr.mxu0 0.0
        %834 = vmatpush1.msra.mxu0 0.0
        %835 = vmatprep.subr.mxu0 0.0
        %836 = vmatpush1.msra.mxu0 0.0
        %837 = vmatprep.subr.mxu0 0.0
        %838 = vmatpush1.msra.mxu0 0.0
        %839 = vmatprep.subr.mxu0 0.0
        %840 = vmatpush1.msra.mxu0 0.0
        %841 = vmatprep.subr.mxu0 0.0
        %842 = vmatpush1.msra.mxu0 0.0
        %843 = vmatprep.subr.mxu0 0.0
        %844 = vmatpush1.msra.mxu0 0.0
        %845 = vmatprep.subr.mxu0 0.0
        %846 = vmatpush1.msra.mxu0 0.0
        %847 = vmatprep.subr.mxu0 0.0
        %848 = vmatpush1.msra.mxu0 0.0
        %849 = vmatprep.subr.mxu0 0.0
        %850 = vmatpush1.msra.mxu0 0.0
        %851 = vmatprep.subr.mxu0 0.0
        %852 = vmatpush1.msra.mxu0 0.0
        %853 = vmatprep.subr.mxu0 0.0
        %854 = vmatpush1.msra.mxu0 0.0
        %855 = vmatprep.subr.mxu0 0.0
        %856 = vmatpush1.msra.mxu0 0.0
        %857 = vmatprep.subr.mxu0 0.0
        %858 = vmatpush1.msra.mxu0 0.0
        %859 = vmatprep.subr.mxu0 0.0
        %860 = vmatpush1.msra.mxu0 0.0
        %861 = vmatprep.subr.mxu0 0.0
        %862 = vmatpush1.msra.mxu0 0.0
        %863 = vmatprep.mubr.f32.mxu0 0.0
        %864 = vmatmul.mubr.f32.gmra.mrb[0].mxu0 %v788
        %v865 = vpop.f32.mrb[0].mxu0
        %v866 = vadd.f32 0.0, %v865
        %v867 = vpop.f32.mrb[0].mxu0
        %868 = vmatprep.mubr.f32.mxu0 0.0
        %869 = vmatmul.mubr.f32.gmra.mrb[0].mxu0 %v791
        %v870 = vpop.f32.mrb[0].mxu0
        %v871 = vadd.f32 0.0, %v870
        %v872 = vpop.f32.mrb[0].mxu0
        %873 = vmatprep.mubr.f32.mxu0 0.0
        %874 = vmatmul.mubr.f32.gmra.mrb[0].mxu0 %v794
        %v875 = vpop.f32.mrb[0].mxu0
        %v876 = vadd.f32 0.0, %v875
        %v877 = vpop.f32.mrb[0].mxu0
        %878 = vmatprep.mubr.f32.mxu0 0.0
        %879 = vmatmul.mubr.f32.gmra.mrb[0].mxu0 %v797
        %v880 = vpop.f32.mrb[0].mxu0
        %v881 = vadd.f32 0.0, %v880
        %v882 = vpop.f32.mrb[0].mxu0
        %883 = vdwg.mxu0
        %v884 = vmul.f32 %v302, %v302
        %v885 = vmul.f32 %v303, %v303
        %v886 = vmul.f32 %v304, %v304
        %v887 = vmul.f32 %v305, %v305
        %888 = vmatprep.subr.mxu0 0.0
        %889 = vmatpush1.msra.mxu0 %v884
        %890 = vmatprep.subr.mxu0 0.0
        %891 = vmatpush1.msra.mxu0 %v885
        %892 = vmatprep.subr.mxu0 0.0
        %893 = vmatpush1.msra.mxu0 %v886
        %894 = vmatprep.subr.mxu0 0.0
        %895 = vmatpush1.msra.mxu0 %v887
        %896 = vmatprep.subr.mxu0 0.0
        %897 = vmatpush1.msra.mxu0 0.0
        %898 = vmatprep.subr.mxu0 0.0
        %899 = vmatpush1.msra.mxu0 0.0
        %900 = vmatprep.subr.mxu0 0.0
        %901 = vmatpush1.msra.mxu0 0.0
        %902 = vmatprep.subr.mxu0 0.0
        %903 = vmatpush1.msra.mxu0 0.0
        %904 = vmatprep.subr.mxu0 0.0
        %905 = vmatpush1.msra.mxu0 0.0
        %906 = vmatprep.subr.mxu0 0.0
        %907 = vmatpush1.msra.mxu0 0.0
        %908 = vmatprep.subr.mxu0 0.0
        %909 = vmatpush1.msra.mxu0 0.0
        %910 = vmatprep.subr.mxu0 0.0
        %911 = vmatpush1.msra.mxu0 0.0
        %912 = vmatprep.subr.mxu0 0.0
        %913 = vmatpush1.msra.mxu0 0.0
        %914 = vmatprep.subr.mxu0 0.0
        %915 = vmatpush1.msra.mxu0 0.0
        %916 = vmatprep.subr.mxu0 0.0
        %917 = vmatpush1.msra.mxu0 0.0
        %918 = vmatprep.subr.mxu0 0.0
        %919 = vmatpush1.msra.mxu0 0.0
        %920 = vmatprep.subr.mxu0 0.0
        %921 = vmatpush1.msra.mxu0 0.0
        %922 = vmatprep.subr.mxu0 0.0
        %923 = vmatpush1.msra.mxu0 0.0
        %924 = vmatprep.subr.mxu0 0.0
        %925 = vmatpush1.msra.mxu0 0.0
        %926 = vmatprep.subr.mxu0 0.0
        %927 = vmatpush1.msra.mxu0 0.0
        %928 = vmatprep.subr.mxu0 0.0
        %929 = vmatpush1.msra.mxu0 0.0
        %930 = vmatprep.subr.mxu0 0.0
        %931 = vmatpush1.msra.mxu0 0.0
        %932 = vmatprep.subr.mxu0 0.0
        %933 = vmatpush1.msra.mxu0 0.0
        %934 = vmatprep.subr.mxu0 0.0
        %935 = vmatpush1.msra.mxu0 0.0
        %936 = vmatprep.subr.mxu0 0.0
        %937 = vmatpush1.msra.mxu0 0.0
        %938 = vmatprep.subr.mxu0 0.0
        %939 = vmatpush1.msra.mxu0 0.0
        %940 = vmatprep.subr.mxu0 0.0
        %941 = vmatpush1.msra.mxu0 0.0
        %942 = vmatprep.subr.mxu0 0.0
        %943 = vmatpush1.msra.mxu0 0.0
        %944 = vmatprep.subr.mxu0 0.0
        %945 = vmatpush1.msra.mxu0 0.0
        %946 = vmatprep.subr.mxu0 0.0
        %947 = vmatpush1.msra.mxu0 0.0
        %948 = vmatprep.subr.mxu0 0.0
        %949 = vmatpush1.msra.mxu0 0.0
        %950 = vmatprep.subr.mxu0 0.0
        %951 = vmatpush1.msra.mxu0 0.0
        %952 = vmatprep.mubr.f32.mxu0 0.0
        %953 = vmatmul.mubr.f32.gmra.mrb[0].mxu0 %v323
        %v954 = vpop.f32.mrb[0].mxu0
        %v955 = vadd.f32 0.0, %v954
        %v956 = vpop.f32.mrb[0].mxu0
        %957 = vmatprep.mubr.f32.mxu0 0.0
        %958 = vmatmul.mubr.f32.gmra.mrb[0].mxu0 %v326
        %v959 = vpop.f32.mrb[0].mxu0
        %v960 = vadd.f32 0.0, %v959
        %v961 = vpop.f32.mrb[0].mxu0
        %962 = vmatprep.mubr.f32.mxu0 0.0
        %963 = vmatmul.mubr.f32.gmra.mrb[0].mxu0 %v329
        %v964 = vpop.f32.mrb[0].mxu0
        %v965 = vadd.f32 0.0, %v964
        %v966 = vpop.f32.mrb[0].mxu0
        %967 = vmatprep.mubr.f32.mxu0 0.0
        %968 = vmatmul.mubr.f32.gmra.mrb[0].mxu0 %v332
        %v969 = vpop.f32.mrb[0].mxu0
        %v970 = vadd.f32 0.0, %v969
        %v971 = vpop.f32.mrb[0].mxu0
        %972 = vdwg.mxu0
        %v974 = vsel %vm321, %v955, 0
        %v977 = vsel %vm321, %v960, 0
        %v980 = vsel %vm321, %v965, 0
        %v983 = vsel %vm321, %v970, 0
        %985 = vmatprep.subr.mxu0 0.0
        %986 = vmatpush1.msra.mxu0 %v317
        %987 = vmatprep.subr.mxu0 0.0
        %988 = vmatpush1.msra.mxu0 %v318
        %989 = vmatprep.subr.mxu0 0.0
        %990 = vmatpush1.msra.mxu0 %v319
        %991 = vmatprep.subr.mxu0 0.0
        %992 = vmatpush1.msra.mxu0 %v320
        %993 = vmatprep.subr.mxu0 0.0
        %994 = vmatpush1.msra.mxu0 0.0
        %995 = vmatprep.subr.mxu0 0.0
        %996 = vmatpush1.msra.mxu0 0.0
        %997 = vmatprep.subr.mxu0 0.0
        %998 = vmatpush1.msra.mxu0 0.0
        %999 = vmatprep.subr.mxu0 0.0
        %1000 = vmatpush1.msra.mxu0 0.0
        %1001 = vmatprep.subr.mxu0 0.0
        %1002 = vmatpush1.msra.mxu0 0.0
        %1003 = vmatprep.subr.mxu0 0.0
        %1004 = vmatpush1.msra.mxu0 0.0
        %1005 = vmatprep.subr.mxu0 0.0
        %1006 = vmatpush1.msra.mxu0 0.0
        %1007 = vmatprep.subr.mxu0 0.0
        %1008 = vmatpush1.msra.mxu0 0.0
        %1009 = vmatprep.subr.mxu0 0.0
        %1010 = vmatpush1.msra.mxu0 0.0
        %1011 = vmatprep.subr.mxu0 0.0
        %1012 = vmatpush1.msra.mxu0 0.0
        %1013 = vmatprep.subr.mxu0 0.0
        %1014 = vmatpush1.msra.mxu0 0.0
        %1015 = vmatprep.subr.mxu0 0.0
        %1016 = vmatpush1.msra.mxu0 0.0
        %1017 = vmatprep.subr.mxu0 0.0
        %1018 = vmatpush1.msra.mxu0 0.0
        %1019 = vmatprep.subr.mxu0 0.0
        %1020 = vmatpush1.msra.mxu0 0.0
        %1021 = vmatprep.subr.mxu0 0.0
        %1022 = vmatpush1.msra.mxu0 0.0
        %1023 = vmatprep.subr.mxu0 0.0
        %1024 = vmatpush1.msra.mxu0 0.0
        %1025 = vmatprep.subr.mxu0 0.0
        %1026 = vmatpush1.msra.mxu0 0.0
        %1027 = vmatprep.subr.mxu0 0.0
        %1028 = vmatpush1.msra.mxu0 0.0
        %1029 = vmatprep.subr.mxu0 0.0
        %1030 = vmatpush1.msra.mxu0 0.0
        %1031 = vmatprep.subr.mxu0 0.0
        %1032 = vmatpush1.msra.mxu0 0.0
        %1033 = vmatprep.subr.mxu0 0.0
        %1034 = vmatpush1.msra.mxu0 0.0
        %1035 = vmatprep.subr.mxu0 0.0
        %1036 = vmatpush1.msra.mxu0 0.0
        %1037 = vmatprep.subr.mxu0 0.0
        %1038 = vmatpush1.msra.mxu0 0.0
        %1039 = vmatprep.subr.mxu0 0.0
        %1040 = vmatpush1.msra.mxu0 0.0
        %1041 = vmatprep.subr.mxu0 0.0
        %1042 = vmatpush1.msra.mxu0 0.0
        %1043 = vmatprep.subr.mxu0 0.0
        %1044 = vmatpush1.msra.mxu0 0.0
        %1045 = vmatprep.subr.mxu0 0.0
        %1046 = vmatpush1.msra.mxu0 0.0
        %1047 = vmatprep.subr.mxu0 0.0
        %1048 = vmatpush1.msra.mxu0 0.0
        %1049 = vmatprep.mubr.f32.mxu0 0.0
        %1050 = vmatmul.mubr.f32.gmra.mrb[0].mxu0 %v974
        %v1051 = vpop.f32.mrb[0].mxu0
        %v1052 = vadd.f32 0.0, %v1051
        %v1053 = vpop.f32.mrb[0].mxu0
        %1054 = vmatprep.mubr.f32.mxu0 0.0
        %1055 = vmatmul.mubr.f32.gmra.mrb[0].mxu0 %v977
        %v1056 = vpop.f32.mrb[0].mxu0
        %v1057 = vadd.f32 0.0, %v1056
        %v1058 = vpop.f32.mrb[0].mxu0
        %1059 = vmatprep.mubr.f32.mxu0 0.0
        %1060 = vmatmul.mubr.f32.gmra.mrb[0].mxu0 %v980
        %v1061 = vpop.f32.mrb[0].mxu0
        %v1062 = vadd.f32 0.0, %v1061
        %v1063 = vpop.f32.mrb[0].mxu0
        %1064 = vmatprep.mubr.f32.mxu0 0.0
        %1065 = vmatmul.mubr.f32.gmra.mrb[0].mxu0 %v983
        %v1066 = vpop.f32.mrb[0].mxu0
        %v1067 = vadd.f32 0.0, %v1066
        %v1068 = vpop.f32.mrb[0].mxu0
        %1069 = vdwg.mxu0
        %v1070 = vmul.f32 %v298, %v302
        %v1071 = vmul.f32 %v299, %v303
        %v1072 = vmul.f32 %v300, %v304
        %v1073 = vmul.f32 %v301, %v305
        %1074 = vmatprep.subr.mxu0 0.0
        %1075 = vmatpush1.msra.mxu0 %v1070
        %1076 = vmatprep.subr.mxu0 0.0
        %1077 = vmatpush1.msra.mxu0 %v1071
        %1078 = vmatprep.subr.mxu0 0.0
        %1079 = vmatpush1.msra.mxu0 %v1072
        %1080 = vmatprep.subr.mxu0 0.0
        %1081 = vmatpush1.msra.mxu0 %v1073
        %1082 = vmatprep.subr.mxu0 0.0
        %1083 = vmatpush1.msra.mxu0 0.0
        %1084 = vmatprep.subr.mxu0 0.0
        %1085 = vmatpush1.msra.mxu0 0.0
        %1086 = vmatprep.subr.mxu0 0.0
        %1087 = vmatpush1.msra.mxu0 0.0
        %1088 = vmatprep.subr.mxu0 0.0
        %1089 = vmatpush1.msra.mxu0 0.0
        %1090 = vmatprep.subr.mxu0 0.0
        %1091 = vmatpush1.msra.mxu0 0.0
        %1092 = vmatprep.subr.mxu0 0.0
        %1093 = vmatpush1.msra.mxu0 0.0
        %1094 = vmatprep.subr.mxu0 0.0
        %1095 = vmatpush1.msra.mxu0 0.0
        %1096 = vmatprep.subr.mxu0 0.0
        %1097 = vmatpush1.msra.mxu0 0.0
        %1098 = vmatprep.subr.mxu0 0.0
        %1099 = vmatpush1.msra.mxu0 0.0
        %1100 = vmatprep.subr.mxu0 0.0
        %1101 = vmatpush1.msra.mxu0 0.0
        %1102 = vmatprep.subr.mxu0 0.0
        %1103 = vmatpush1.msra.mxu0 0.0
        %1104 = vmatprep.subr.mxu0 0.0
        %1105 = vmatpush1.msra.mxu0 0.0
        %1106 = vmatprep.subr.mxu0 0.0
        %1107 = vmatpush1.msra.mxu0 0.0
        %1108 = vmatprep.subr.mxu0 0.0
        %1109 = vmatpush1.msra.mxu0 0.0
        %1110 = vmatprep.subr.mxu0 0.0
        %1111 = vmatpush1.msra.mxu0 0.0
        %1112 = vmatprep.subr.mxu0 0.0
        %1113 = vmatpush1.msra.mxu0 0.0
        %1114 = vmatprep.subr.mxu0 0.0
        %1115 = vmatpush1.msra.mxu0 0.0
        %1116 = vmatprep.subr.mxu0 0.0
        %1117 = vmatpush1.msra.mxu0 0.0
        %1118 = vmatprep.subr.mxu0 0.0
        %1119 = vmatpush1.msra.mxu0 0.0
        %1120 = vmatprep.subr.mxu0 0.0
        %1121 = vmatpush1.msra.mxu0 0.0
        %1122 = vmatprep.subr.mxu0 0.0
        %1123 = vmatpush1.msra.mxu0 0.0
        %1124 = vmatprep.subr.mxu0 0.0
        %1125 = vmatpush1.msra.mxu0 0.0
        %1126 = vmatprep.subr.mxu0 0.0
        %1127 = vmatpush1.msra.mxu0 0.0
        %1128 = vmatprep.subr.mxu0 0.0
        %1129 = vmatpush1.msra.mxu0 0.0
        %1130 = vmatprep.subr.mxu0 0.0
        %1131 = vmatpush1.msra.mxu0 0.0
        %1132 = vmatprep.subr.mxu0 0.0
        %1133 = vmatpush1.msra.mxu0 0.0
        %1134 = vmatprep.subr.mxu0 0.0
        %1135 = vmatpush1.msra.mxu0 0.0
        %1136 = vmatprep.subr.mxu0 0.0
        %1137 = vmatpush1.msra.mxu0 0.0
        %1138 = vmatprep.mubr.f32.mxu0 0.0
        %1139 = vmatmul.mubr.f32.gmra.mrb[0].mxu0 %v323
        %v1140 = vpop.f32.mrb[0].mxu0
        %v1141 = vadd.f32 0.0, %v1140
        %v1142 = vpop.f32.mrb[0].mxu0
        %1143 = vmatprep.mubr.f32.mxu0 0.0
        %1144 = vmatmul.mubr.f32.gmra.mrb[0].mxu0 %v326
        %v1145 = vpop.f32.mrb[0].mxu0
        %v1146 = vadd.f32 0.0, %v1145
        %v1147 = vpop.f32.mrb[0].mxu0
        %1148 = vmatprep.mubr.f32.mxu0 0.0
        %1149 = vmatmul.mubr.f32.gmra.mrb[0].mxu0 %v329
        %v1150 = vpop.f32.mrb[0].mxu0
        %v1151 = vadd.f32 0.0, %v1150
        %v1152 = vpop.f32.mrb[0].mxu0
        %1153 = vmatprep.mubr.f32.mxu0 0.0
        %1154 = vmatmul.mubr.f32.gmra.mrb[0].mxu0 %v332
        %v1155 = vpop.f32.mrb[0].mxu0
        %v1156 = vadd.f32 0.0, %v1155
        %v1157 = vpop.f32.mrb[0].mxu0
        %1158 = vdwg.mxu0
        %v1160 = vsel %vm321, %v1141, 0
        %v1163 = vsel %vm321, %v1146, 0
        %v1166 = vsel %vm321, %v1151, 0
        %v1169 = vsel %vm321, %v1156, 0
        %1171 = vmatprep.subr.mxu0 0.0
        %1172 = vmatpush1.msra.mxu0 %v317
        %1173 = vmatprep.subr.mxu0 0.0
        %1174 = vmatpush1.msra.mxu0 %v318
        %1175 = vmatprep.subr.mxu0 0.0
        %1176 = vmatpush1.msra.mxu0 %v319
        %1177 = vmatprep.subr.mxu0 0.0
        %1178 = vmatpush1.msra.mxu0 %v320
        %1179 = vmatprep.subr.mxu0 0.0
        %1180 = vmatpush1.msra.mxu0 0.0
        %1181 = vmatprep.subr.mxu0 0.0
        %1182 = vmatpush1.msra.mxu0 0.0
        %1183 = vmatprep.subr.mxu0 0.0
        %1184 = vmatpush1.msra.mxu0 0.0
        %1185 = vmatprep.subr.mxu0 0.0
        %1186 = vmatpush1.msra.mxu0 0.0
        %1187 = vmatprep.subr.mxu0 0.0
        %1188 = vmatpush1.msra.mxu0 0.0
        %1189 = vmatprep.subr.mxu0 0.0
        %1190 = vmatpush1.msra.mxu0 0.0
        %1191 = vmatprep.subr.mxu0 0.0
        %1192 = vmatpush1.msra.mxu0 0.0
        %1193 = vmatprep.subr.mxu0 0.0
        %1194 = vmatpush1.msra.mxu0 0.0
        %1195 = vmatprep.subr.mxu0 0.0
        %1196 = vmatpush1.msra.mxu0 0.0
        %1197 = vmatprep.subr.mxu0 0.0
        %1198 = vmatpush1.msra.mxu0 0.0
        %1199 = vmatprep.subr.mxu0 0.0
        %1200 = vmatpush1.msra.mxu0 0.0
        %1201 = vmatprep.subr.mxu0 0.0
        %1202 = vmatpush1.msra.mxu0 0.0
        %1203 = vmatprep.subr.mxu0 0.0
        %1204 = vmatpush1.msra.mxu0 0.0
        %1205 = vmatprep.subr.mxu0 0.0
        %1206 = vmatpush1.msra.mxu0 0.0
        %1207 = vmatprep.subr.mxu0 0.0
        %1208 = vmatpush1.msra.mxu0 0.0
        %1209 = vmatprep.subr.mxu0 0.0
        %1210 = vmatpush1.msra.mxu0 0.0
        %1211 = vmatprep.subr.mxu0 0.0
        %1212 = vmatpush1.msra.mxu0 0.0
        %1213 = vmatprep.subr.mxu0 0.0
        %1214 = vmatpush1.msra.mxu0 0.0
        %1215 = vmatprep.subr.mxu0 0.0
        %1216 = vmatpush1.msra.mxu0 0.0
        %1217 = vmatprep.subr.mxu0 0.0
        %1218 = vmatpush1.msra.mxu0 0.0
        %1219 = vmatprep.subr.mxu0 0.0
        %1220 = vmatpush1.msra.mxu0 0.0
        %1221 = vmatprep.subr.mxu0 0.0
        %1222 = vmatpush1.msra.mxu0 0.0
        %1223 = vmatprep.subr.mxu0 0.0
        %1224 = vmatpush1.msra.mxu0 0.0
        %1225 = vmatprep.subr.mxu0 0.0
        %1226 = vmatpush1.msra.mxu0 0.0
        %1227 = vmatprep.subr.mxu0 0.0
        %1228 = vmatpush1.msra.mxu0 0.0
        %1229 = vmatprep.subr.mxu0 0.0
        %1230 = vmatpush1.msra.mxu0 0.0
        %1231 = vmatprep.subr.mxu0 0.0
        %1232 = vmatpush1.msra.mxu0 0.0
        %1233 = vmatprep.subr.mxu0 0.0
        %1234 = vmatpush1.msra.mxu0 0.0
        %1235 = vmatprep.mubr.f32.mxu0 0.0
        %1236 = vmatmul.mubr.f32.gmra.mrb[0].mxu0 %v1160
        %v1237 = vpop.f32.mrb[0].mxu0
        %v1238 = vadd.f32 0.0, %v1237
        %v1239 = vpop.f32.mrb[0].mxu0
        %1240 = vmatprep.mubr.f32.mxu0 0.0
        %1241 = vmatmul.mubr.f32.gmra.mrb[0].mxu0 %v1163
        %v1242 = vpop.f32.mrb[0].mxu0
        %v1243 = vadd.f32 0.0, %v1242
        %v1244 = vpop.f32.mrb[0].mxu0
        %1245 = vmatprep.mubr.f32.mxu0 0.0
        %1246 = vmatmul.mubr.f32.gmra.mrb[0].mxu0 %v1166
        %v1247 = vpop.f32.mrb[0].mxu0
        %v1248 = vadd.f32 0.0, %v1247
        %v1249 = vpop.f32.mrb[0].mxu0
        %1250 = vmatprep.mubr.f32.mxu0 0.0
        %1251 = vmatmul.mubr.f32.gmra.mrb[0].mxu0 %v1169
        %v1252 = vpop.f32.mrb[0].mxu0
        %v1253 = vadd.f32 0.0, %v1252
        %v1254 = vpop.f32.mrb[0].mxu0
        %1255 = vdwg.mxu0
        %v1256 = vmul.f32 %v498, %v498
        %v1257 = vmul.f32 %v503, %v503
        %v1258 = vmul.f32 %v508, %v508
        %v1259 = vmul.f32 %v513, %v513
        %v1260 = vmul.f32 %v680, %v680
        %v1261 = vmul.f32 %v685, %v685
        %v1262 = vmul.f32 %v690, %v690
        %v1263 = vmul.f32 %v695, %v695
        %v1264 = vmul.f32 %v498, %v680
        %v1265 = vmul.f32 %v503, %v685
        %v1266 = vmul.f32 %v508, %v690
        %v1267 = vmul.f32 %v513, %v695
        %v1268 = vsub.f32 %v866, %v1256
        %v1269 = vsub.f32 %v871, %v1257
        %v1270 = vsub.f32 %v876, %v1258
        %v1271 = vsub.f32 %v881, %v1259
        %v1272 = vsub.f32 %v1052, %v1260
        %v1273 = vsub.f32 %v1057, %v1261
        %v1274 = vsub.f32 %v1062, %v1262
        %v1275 = vsub.f32 %v1067, %v1263
        %v1276 = vsub.f32 %v1238, %v1264
        %v1277 = vsub.f32 %v1243, %v1265
        %v1278 = vsub.f32 %v1248, %v1266
        %v1279 = vsub.f32 %v1253, %v1267
        %v1280 = vmul.f32 %v1264, 2.0
        %v1281 = vmul.f32 %v1265, 2.0
        %v1282 = vmul.f32 %v1266, 2.0
        %v1283 = vmul.f32 %v1267, 2.0
        %v1284 = vadd.f32 %v1280, 6.5025
        %v1285 = vadd.f32 %v1281, 6.5025
        %v1286 = vadd.f32 %v1282, 6.5025
        %v1287 = vadd.f32 %v1283, 6.5025
        %v1288 = vmul.f32 %v1276, 2.0
        %v1289 = vmul.f32 %v1277, 2.0
        %v1290 = vmul.f32 %v1278, 2.0
        %v1291 = vmul.f32 %v1279, 2.0
        %v1292 = vadd.f32 %v1288, 58.5225
        %v1293 = vadd.f32 %v1289, 58.5225
        %v1294 = vadd.f32 %v1290, 58.5225
        %v1295 = vadd.f32 %v1291, 58.5225
        %v1296 = vmul.f32 %v1284, %v1292
        %v1297 = vmul.f32 %v1285, %v1293
        %v1298 = vmul.f32 %v1286, %v1294
        %v1299 = vmul.f32 %v1287, %v1295
        %v1300 = vadd.f32 %v1256, %v1260
        %v1301 = vadd.f32 %v1257, %v1261
        %v1302 = vadd.f32 %v1258, %v1262
        %v1303 = vadd.f32 %v1259, %v1263
        %v1304 = vadd.f32 %v1300, 6.5025
        %v1305 = vadd.f32 %v1301, 6.5025
        %v1306 = vadd.f32 %v1302, 6.5025
        %v1307 = vadd.f32 %v1303, 6.5025
        %v1308 = vadd.f32 %v1268, %v1272
        %v1309 = vadd.f32 %v1269, %v1273
        %v1310 = vadd.f32 %v1270, %v1274
        %v1311 = vadd.f32 %v1271, %v1275
        %v1312 = vadd.f32 %v1308, 58.5225
        %v1313 = vadd.f32 %v1309, 58.5225
        %v1314 = vadd.f32 %v1310, 58.5225
        %v1315 = vadd.f32 %v1311, 58.5225
        %v1316 = vmul.f32 %v1304, %v1312
        %v1317 = vmul.f32 %v1305, %v1313
        %v1318 = vmul.f32 %v1306, %v1314
        %v1319 = vmul.f32 %v1307, %v1315
        %v1320 = vrcp.pop %v1316
        %v1321 = vrcp.pop %v1317
        %v1322 = vrcp.pop %v1318
        %v1323 = vrcp.pop %v1319
        %v1324 = vmul.f32 %v1296, %v1320
        %v1325 = vmul.f32 %v1297, %v1321
        %v1326 = vmul.f32 %v1298, %v1322
        %v1327 = vmul.f32 %v1299, %v1323
        %v1328 = vsel %vm321, %v1324, 0.0
        %v1329 = vsel %vm321, %v1325, 0.0
        %v1330 = vadd.f32 %v1328, %v1329
        %v1331 = vsel %vm321, %v1326, 0.0
        %v1332 = vadd.f32 %v1330, %v1331
        %v1333 = vsel %vm321, %v1327, 0.0
        %v1334 = vadd.f32 %v1332, %v1333
        %1335 = vadd.xlane.f32.xlu0 %v1334
        %v1336 = vpop.xlane.xlu0 %1335
        %v1337 = vrot.slane %v1336, 4
        %v1338 = vadd.f32 %v1336, %v1337
        %v1339 = vrot.slane %v1338, 2
        %v1340 = vadd.f32 %v1338, %v1339
        %v1341 = vrot.slane %v1340, 1
        %v1342 = vadd.f32 %v1340, %v1341
        %s1343 = vtos %v1342
        %s1344 = smul.f32 %s1343, 0.0009765625
        %vm1345 = vcmp.eq.s32.totalorder %v312, 0
        %v1346 = vstv %s1344
        %v1347 = vsel %vm1345, %v1346, 0.0
        %v1348 = vadd.f32 %v1347, 0.0
        %v1349 = vld [vmem:[#allocation2] sm:$0xff]
        %v1350 = vld [vmem:[#allocation2 + $0x8] sm:$0xff]
        %v1351 = vld [vmem:[#allocation2 + $0x10] sm:$0xff]
        %v1352 = vld [vmem:[#allocation2 + $0x18] sm:$0xff]
        %v1353 = vld [vmem:[#allocation4] sm:$0xff]
        %v1354 = vld [vmem:[#allocation4 + $0x8] sm:$0xff]
        %v1355 = vld [vmem:[#allocation4 + $0x10] sm:$0xff]
        %v1356 = vld [vmem:[#allocation4 + $0x18] sm:$0xff]
        %v1358 = vsel %vm321, %v1349, 0
        %v1361 = vsel %vm321, %v1350, 0
        %v1364 = vsel %vm321, %v1351, 0
        %v1367 = vsel %vm321, %v1352, 0
        %1369 = vmatprep.subr.mxu0 0.0
        %1370 = vmatpush1.msra.mxu0 %v298
        %1371 = vmatprep.subr.mxu0 0.0
        %1372 = vmatpush1.msra.mxu0 %v299
        %1373 = vmatprep.subr.mxu0 0.0
        %1374 = vmatpush1.msra.mxu0 %v300
        %1375 = vmatprep.subr.mxu0 0.0
        %1376 = vmatpush1.msra.mxu0 %v301
        %1377 = vmatprep.subr.mxu0 0.0
        %1378 = vmatpush1.msra.mxu0 0.0
        %1379 = vmatprep.subr.mxu0 0.0
        %1380 = vmatpush1.msra.mxu0 0.0
        %1381 = vmatprep.subr.mxu0 0.0
        %1382 = vmatpush1.msra.mxu0 0.0
        %1383 = vmatprep.subr.mxu0 0.0
        %1384 = vmatpush1.msra.mxu0 0.0
        %1385 = vmatprep.subr.mxu0 0.0
        %1386 = vmatpush1.msra.mxu0 0.0
        %1387 = vmatprep.subr.mxu0 0.0
        %1388 = vmatpush1.msra.mxu0 0.0
        %1389 = vmatprep.subr.mxu0 0.0
        %1390 = vmatpush1.msra.mxu0 0.0
        %1391 = vmatprep.subr.mxu0 0.0
        %1392 = vmatpush1.msra.mxu0 0.0
        %1393 = vmatprep.subr.mxu0 0.0
        %1394 = vmatpush1.msra.mxu0 0.0
        %1395 = vmatprep.subr.mxu0 0.0
        %1396 = vmatpush1.msra.mxu0 0.0
        %1397 = vmatprep.subr.mxu0 0.0
        %1398 = vmatpush1.msra.mxu0 0.0
        %1399 = vmatprep.subr.mxu0 0.0
        %1400 = vmatpush1.msra.mxu0 0.0
        %1401 = vmatprep.subr.mxu0 0.0
        %1402 = vmatpush1.msra.mxu0 0.0
        %1403 = vmatprep.subr.mxu0 0.0
        %1404 = vmatpush1.msra.mxu0 0.0
        %1405 = vmatprep.subr.mxu0 0.0
        %1406 = vmatpush1.msra.mxu0 0.0
        %1407 = vmatprep.subr.mxu0 0.0
        %1408 = vmatpush1.msra.mxu0 0.0
        %1409 = vmatprep.subr.mxu0 0.0
        %1410 = vmatpush1.msra.mxu0 0.0
        %1411 = vmatprep.subr.mxu0 0.0
        %1412 = vmatpush1.msra.mxu0 0.0
        %1413 = vmatprep.subr.mxu0 0.0
        %1414 = vmatpush1.msra.mxu0 0.0
        %1415 = vmatprep.subr.mxu0 0.0
        %1416 = vmatpush1.msra.mxu0 0.0
        %1417 = vmatprep.subr.mxu0 0.0
        %1418 = vmatpush1.msra.mxu0 0.0
        %1419 = vmatprep.subr.mxu0 0.0
        %1420 = vmatpush1.msra.mxu0 0.0
        %1421 = vmatprep.subr.mxu0 0.0
        %1422 = vmatpush1.msra.mxu0 0.0
        %1423 = vmatprep.subr.mxu0 0.0
        %1424 = vmatpush1.msra.mxu0 0.0
        %1425 = vmatprep.subr.mxu0 0.0
        %1426 = vmatpush1.msra.mxu0 0.0
        %1427 = vmatprep.subr.mxu0 0.0
        %1428 = vmatpush1.msra.mxu0 0.0
        %1429 = vmatprep.subr.mxu0 0.0
        %1430 = vmatpush1.msra.mxu0 0.0
        %1431 = vmatprep.subr.mxu0 0.0
        %1432 = vmatpush1.msra.mxu0 0.0
        %1433 = vmatprep.mubr.f32.mxu0 0.0
        %1434 = vmatmul.mubr.f32.gmra.mrb[0].mxu0 %v1358
        %v1435 = vpop.f32.mrb[0].mxu0
        %v1436 = vadd.f32 0.0, %v1435
        %v1437 = vpop.f32.mrb[0].mxu0
        %1438 = vmatprep.mubr.f32.mxu0 0.0
        %1439 = vmatmul.mubr.f32.gmra.mrb[0].mxu0 %v1361
        %v1440 = vpop.f32.mrb[0].mxu0
        %v1441 = vadd.f32 0.0, %v1440
        %v1442 = vpop.f32.mrb[0].mxu0
        %1443 = vmatprep.mubr.f32.mxu0 0.0
        %1444 = vmatmul.mubr.f32.gmra.mrb[0].mxu0 %v1364
        %v1445 = vpop.f32.mrb[0].mxu0
        %v1446 = vadd.f32 0.0, %v1445
        %v1447 = vpop.f32.mrb[0].mxu0
        %1448 = vmatprep.mubr.f32.mxu0 0.0
        %1449 = vmatmul.mubr.f32.gmra.mrb[0].mxu0 %v1367
        %v1450 = vpop.f32.mrb[0].mxu0
        %v1451 = vadd.f32 0.0, %v1450
        %v1452 = vpop.f32.mrb[0].mxu0
        %1453 = vdwg.mxu0
        %v1455 = vsel %vm321, %v1436, 0
        %v1458 = vsel %vm321, %v1441, 0
        %v1461 = vsel %vm321, %v1446, 0
        %v1464 = vsel %vm321, %v1451, 0
        %1466 = vmatprep.subr.mxu0 0.0
        %1467 = vmatpush1.msra.mxu0 %v1353
        %1468 = vmatprep.subr.mxu0 0.0
        %1469 = vmatpush1.msra.mxu0 %v1354
        %1470 = vmatprep.subr.mxu0 0.0
        %1471 = vmatpush1.msra.mxu0 %v1355
        %1472 = vmatprep.subr.mxu0 0.0
        %1473 = vmatpush1.msra.mxu0 %v1356
        %1474 = vmatprep.subr.mxu0 0.0
        %1475 = vmatpush1.msra.mxu0 0.0
        %1476 = vmatprep.subr.mxu0 0.0
        %1477 = vmatpush1.msra.mxu0 0.0
        %1478 = vmatprep.subr.mxu0 0.0
        %1479 = vmatpush1.msra.mxu0 0.0
        %1480 = vmatprep.subr.mxu0 0.0
        %1481 = vmatpush1.msra.mxu0 0.0
        %1482 = vmatprep.subr.mxu0 0.0
        %1483 = vmatpush1.msra.mxu0 0.0
        %1484 = vmatprep.subr.mxu0 0.0
        %1485 = vmatpush1.msra.mxu0 0.0
        %1486 = vmatprep.subr.mxu0 0.0
        %1487 = vmatpush1.msra.mxu0 0.0
        %1488 = vmatprep.subr.mxu0 0.0
        %1489 = vmatpush1.msra.mxu0 0.0
        %1490 = vmatprep.subr.mxu0 0.0
        %1491 = vmatpush1.msra.mxu0 0.0
        %1492 = vmatprep.subr.mxu0 0.0
        %1493 = vmatpush1.msra.mxu0 0.0
        %1494 = vmatprep.subr.mxu0 0.0
        %1495 = vmatpush1.msra.mxu0 0.0
        %1496 = vmatprep.subr.mxu0 0.0
        %1497 = vmatpush1.msra.mxu0 0.0
        %1498 = vmatprep.subr.mxu0 0.0
        %1499 = vmatpush1.msra.mxu0 0.0
        %1500 = vmatprep.subr.mxu0 0.0
        %1501 = vmatpush1.msra.mxu0 0.0
        %1502 = vmatprep.subr.mxu0 0.0
        %1503 = vmatpush1.msra.mxu0 0.0
        %1504 = vmatprep.subr.mxu0 0.0
        %1505 = vmatpush1.msra.mxu0 0.0
        %1506 = vmatprep.subr.mxu0 0.0
        %1507 = vmatpush1.msra.mxu0 0.0
        %1508 = vmatprep.subr.mxu0 0.0
        %1509 = vmatpush1.msra.mxu0 0.0
        %1510 = vmatprep.subr.mxu0 0.0
        %1511 = vmatpush1.msra.mxu0 0.0
        %1512 = vmatprep.subr.mxu0 0.0
        %1513 = vmatpush1.msra.mxu0 0.0
        %1514 = vmatprep.subr.mxu0 0.0
        %1515 = vmatpush1.msra.mxu0 0.0
        %1516 = vmatprep.subr.mxu0 0.0
        %1517 = vmatpush1.msra.mxu0 0.0
        %1518 = vmatprep.subr.mxu0 0.0
        %1519 = vmatpush1.msra.mxu0 0.0
        %1520 = vmatprep.subr.mxu0 0.0
        %1521 = vmatpush1.msra.mxu0 0.0
        %1522 = vmatprep.subr.mxu0 0.0
        %1523 = vmatpush1.msra.mxu0 0.0
        %1524 = vmatprep.subr.mxu0 0.0
        %1525 = vmatpush1.msra.mxu0 0.0
        %1526 = vmatprep.subr.mxu0 0.0
        %1527 = vmatpush1.msra.mxu0 0.0
        %1528 = vmatprep.subr.mxu0 0.0
        %1529 = vmatpush1.msra.mxu0 0.0
        %1530 = vmatprep.mubr.f32.mxu0 0.0
        %1531 = vmatmul.mubr.f32.gmra.mrb[0].mxu0 %v1455
        %v1532 = vpop.f32.mrb[0].mxu0
        %v1533 = vadd.f32 0.0, %v1532
        %v1534 = vpop.f32.mrb[0].mxu0
        %1535 = vmatprep.mubr.f32.mxu0 0.0
        %1536 = vmatmul.mubr.f32.gmra.mrb[0].mxu0 %v1458
        %v1537 = vpop.f32.mrb[0].mxu0
        %v1538 = vadd.f32 0.0, %v1537
        %v1539 = vpop.f32.mrb[0].mxu0
        %1540 = vmatprep.mubr.f32.mxu0 0.0
        %1541 = vmatmul.mubr.f32.gmra.mrb[0].mxu0 %v1461
        %v1542 = vpop.f32.mrb[0].mxu0
        %v1543 = vadd.f32 0.0, %v1542
        %v1544 = vpop.f32.mrb[0].mxu0
        %1545 = vmatprep.mubr.f32.mxu0 0.0
        %1546 = vmatmul.mubr.f32.gmra.mrb[0].mxu0 %v1464
        %v1547 = vpop.f32.mrb[0].mxu0
        %v1548 = vadd.f32 0.0, %v1547
        %v1549 = vpop.f32.mrb[0].mxu0
        %1550 = vdwg.mxu0
        %1551 = vmatprep.subr.mxu0 0.0
        %1552 = vmatpush1.msra.mxu0 %v302
        %1553 = vmatprep.subr.mxu0 0.0
        %1554 = vmatpush1.msra.mxu0 %v303
        %1555 = vmatprep.subr.mxu0 0.0
        %1556 = vmatpush1.msra.mxu0 %v304
        %1557 = vmatprep.subr.mxu0 0.0
        %1558 = vmatpush1.msra.mxu0 %v305
        %1559 = vmatprep.subr.mxu0 0.0
        %1560 = vmatpush1.msra.mxu0 0.0
        %1561 = vmatprep.subr.mxu0 0.0
        %1562 = vmatpush1.msra.mxu0 0.0
        %1563 = vmatprep.subr.mxu0 0.0
        %1564 = vmatpush1.msra.mxu0 0.0
        %1565 = vmatprep.subr.mxu0 0.0
        %1566 = vmatpush1.msra.mxu0 0.0
        %1567 = vmatprep.subr.mxu0 0.0
        %1568 = vmatpush1.msra.mxu0 0.0
        %1569 = vmatprep.subr.mxu0 0.0
        %1570 = vmatpush1.msra.mxu0 0.0
        %1571 = vmatprep.subr.mxu0 0.0
        %1572 = vmatpush1.msra.mxu0 0.0
        %1573 = vmatprep.subr.mxu0 0.0
        %1574 = vmatpush1.msra.mxu0 0.0
        %1575 = vmatprep.subr.mxu0 0.0
        %1576 = vmatpush1.msra.mxu0 0.0
        %1577 = vmatprep.subr.mxu0 0.0
        %1578 = vmatpush1.msra.mxu0 0.0
        %1579 = vmatprep.subr.mxu0 0.0
        %1580 = vmatpush1.msra.mxu0 0.0
        %1581 = vmatprep.subr.mxu0 0.0
        %1582 = vmatpush1.msra.mxu0 0.0
        %1583 = vmatprep.subr.mxu0 0.0
        %1584 = vmatpush1.msra.mxu0 0.0
        %1585 = vmatprep.subr.mxu0 0.0
        %1586 = vmatpush1.msra.mxu0 0.0
        %1587 = vmatprep.subr.mxu0 0.0
        %1588 = vmatpush1.msra.mxu0 0.0
        %1589 = vmatprep.subr.mxu0 0.0
        %1590 = vmatpush1.msra.mxu0 0.0
        %1591 = vmatprep.subr.mxu0 0.0
        %1592 = vmatpush1.msra.mxu0 0.0
        %1593 = vmatprep.subr.mxu0 0.0
        %1594 = vmatpush1.msra.mxu0 0.0
        %1595 = vmatprep.subr.mxu0 0.0
        %1596 = vmatpush1.msra.mxu0 0.0
        %1597 = vmatprep.subr.mxu0 0.0
        %1598 = vmatpush1.msra.mxu0 0.0
        %1599 = vmatprep.subr.mxu0 0.0
        %1600 = vmatpush1.msra.mxu0 0.0
        %1601 = vmatprep.subr.mxu0 0.0
        %1602 = vmatpush1.msra.mxu0 0.0
        %1603 = vmatprep.subr.mxu0 0.0
        %1604 = vmatpush1.msra.mxu0 0.0
        %1605 = vmatprep.subr.mxu0 0.0
        %1606 = vmatpush1.msra.mxu0 0.0
        %1607 = vmatprep.subr.mxu0 0.0
        %1608 = vmatpush1.msra.mxu0 0.0
        %1609 = vmatprep.subr.mxu0 0.0
        %1610 = vmatpush1.msra.mxu0 0.0
        %1611 = vmatprep.subr.mxu0 0.0
        %1612 = vmatpush1.msra.mxu0 0.0
        %1613 = vmatprep.subr.mxu0 0.0
        %1614 = vmatpush1.msra.mxu0 0.0
        %1615 = vmatprep.mubr.f32.mxu0 0.0
        %1616 = vmatmul.mubr.f32.gmra.mrb[0].mxu0 %v1358
        %v1617 = vpop.f32.mrb[0].mxu0
        %v1618 = vadd.f32 0.0, %v1617
        %v1619 = vpop.f32.mrb[0].mxu0
        %1620 = vmatprep.mubr.f32.mxu0 0.0
        %1621 = vmatmul.mubr.f32.gmra.mrb[0].mxu0 %v1361
        %v1622 = vpop.f32.mrb[0].mxu0
        %v1623 = vadd.f32 0.0, %v1622
        %v1624 = vpop.f32.mrb[0].mxu0
        %1625 = vmatprep.mubr.f32.mxu0 0.0
        %1626 = vmatmul.mubr.f32.gmra.mrb[0].mxu0 %v1364
        %v1627 = vpop.f32.mrb[0].mxu0
        %v1628 = vadd.f32 0.0, %v1627
        %v1629 = vpop.f32.mrb[0].mxu0
        %1630 = vmatprep.mubr.f32.mxu0 0.0
        %1631 = vmatmul.mubr.f32.gmra.mrb[0].mxu0 %v1367
        %v1632 = vpop.f32.mrb[0].mxu0
        %v1633 = vadd.f32 0.0, %v1632
        %v1634 = vpop.f32.mrb[0].mxu0
        %1635 = vdwg.mxu0
        %v1637 = vsel %vm321, %v1618, 0
        %v1640 = vsel %vm321, %v1623, 0
        %v1643 = vsel %vm321, %v1628, 0
        %v1646 = vsel %vm321, %v1633, 0
        %1648 = vmatprep.subr.mxu0 0.0
        %1649 = vmatpush1.msra.mxu0 %v1353
        %1650 = vmatprep.subr.mxu0 0.0
        %1651 = vmatpush1.msra.mxu0 %v1354
        %1652 = vmatprep.subr.mxu0 0.0
        %1653 = vmatpush1.msra.mxu0 %v1355
        %1654 = vmatprep.subr.mxu0 0.0
        %1655 = vmatpush1.msra.mxu0 %v1356
        %1656 = vmatprep.subr.mxu0 0.0
        %1657 = vmatpush1.msra.mxu0 0.0
        %1658 = vmatprep.subr.mxu0 0.0
        %1659 = vmatpush1.msra.mxu0 0.0
        %1660 = vmatprep.subr.mxu0 0.0
        %1661 = vmatpush1.msra.mxu0 0.0
        %1662 = vmatprep.subr.mxu0 0.0
        %1663 = vmatpush1.msra.mxu0 0.0
        %1664 = vmatprep.subr.mxu0 0.0
        %1665 = vmatpush1.msra.mxu0 0.0
        %1666 = vmatprep.subr.mxu0 0.0
        %1667 = vmatpush1.msra.mxu0 0.0
        %1668 = vmatprep.subr.mxu0 0.0
        %1669 = vmatpush1.msra.mxu0 0.0
        %1670 = vmatprep.subr.mxu0 0.0
        %1671 = vmatpush1.msra.mxu0 0.0
        %1672 = vmatprep.subr.mxu0 0.0
        %1673 = vmatpush1.msra.mxu0 0.0
        %1674 = vmatprep.subr.mxu0 0.0
        %1675 = vmatpush1.msra.mxu0 0.0
        %1676 = vmatprep.subr.mxu0 0.0
        %1677 = vmatpush1.msra.mxu0 0.0
        %1678 = vmatprep.subr.mxu0 0.0
        %1679 = vmatpush1.msra.mxu0 0.0
        %1680 = vmatprep.subr.mxu0 0.0
        %1681 = vmatpush1.msra.mxu0 0.0
        %1682 = vmatprep.subr.mxu0 0.0
        %1683 = vmatpush1.msra.mxu0 0.0
        %1684 = vmatprep.subr.mxu0 0.0
        %1685 = vmatpush1.msra.mxu0 0.0
        %1686 = vmatprep.subr.mxu0 0.0
        %1687 = vmatpush1.msra.mxu0 0.0
        %1688 = vmatprep.subr.mxu0 0.0
        %1689 = vmatpush1.msra.mxu0 0.0
        %1690 = vmatprep.subr.mxu0 0.0
        %1691 = vmatpush1.msra.mxu0 0.0
        %1692 = vmatprep.subr.mxu0 0.0
        %1693 = vmatpush1.msra.mxu0 0.0
        %1694 = vmatprep.subr.mxu0 0.0
        %1695 = vmatpush1.msra.mxu0 0.0
        %1696 = vmatprep.subr.mxu0 0.0
        %1697 = vmatpush1.msra.mxu0 0.0
        %1698 = vmatprep.subr.mxu0 0.0
        %1699 = vmatpush1.msra.mxu0 0.0
        %1700 = vmatprep.subr.mxu0 0.0
        %1701 = vmatpush1.msra.mxu0 0.0
        %1702 = vmatprep.subr.mxu0 0.0
        %1703 = vmatpush1.msra.mxu0 0.0
        %1704 = vmatprep.subr.mxu0 0.0
        %1705 = vmatpush1.msra.mxu0 0.0
        %1706 = vmatprep.subr.mxu0 0.0
        %1707 = vmatpush1.msra.mxu0 0.0
        %1708 = vmatprep.subr.mxu0 0.0
        %1709 = vmatpush1.msra.mxu0 0.0
        %1710 = vmatprep.subr.mxu0 0.0
        %1711 = vmatpush1.msra.mxu0 0.0
        %1712 = vmatprep.mubr.f32.mxu0 0.0
        %1713 = vmatmul.mubr.f32.gmra.mrb[0].mxu0 %v1637
        %v1714 = vpop.f32.mrb[0].mxu0
        %v1715 = vadd.f32 0.0, %v1714
        %v1716 = vpop.f32.mrb[0].mxu0
        %1717 = vmatprep.mubr.f32.mxu0 0.0
        %1718 = vmatmul.mubr.f32.gmra.mrb[0].mxu0 %v1640
        %v1719 = vpop.f32.mrb[0].mxu0
        %v1720 = vadd.f32 0.0, %v1719
        %v1721 = vpop.f32.mrb[0].mxu0
        %1722 = vmatprep.mubr.f32.mxu0 0.0
        %1723 = vmatmul.mubr.f32.gmra.mrb[0].mxu0 %v1643
        %v1724 = vpop.f32.mrb[0].mxu0
        %v1725 = vadd.f32 0.0, %v1724
        %v1726 = vpop.f32.mrb[0].mxu0
        %1727 = vmatprep.mubr.f32.mxu0 0.0
        %1728 = vmatmul.mubr.f32.gmra.mrb[0].mxu0 %v1646
        %v1729 = vpop.f32.mrb[0].mxu0
        %v1730 = vadd.f32 0.0, %v1729
        %v1731 = vpop.f32.mrb[0].mxu0
        %1732 = vdwg.mxu0
        %s1733 = scalar_lea.vmem %s2, 32
        %v1734 = vld [vmem:[%s1733] sm:$0xff]
        %v1735 = vld [vmem:[%s1733 + $0x8] sm:$0xff]
        %v1736 = vld [vmem:[%s1733 + $0x10] sm:$0xff]
        %v1737 = vld [vmem:[%s1733 + $0x18] sm:$0xff]
        %s1738 = scalar_lea.vmem %s3, 32
        %v1739 = vld [vmem:[%s1738] sm:$0xff]
        %v1740 = vld [vmem:[%s1738 + $0x8] sm:$0xff]
        %v1741 = vld [vmem:[%s1738 + $0x10] sm:$0xff]
        %v1742 = vld [vmem:[%s1738 + $0x18] sm:$0xff]
        %v1744 = vsel %vm321, %v1734, 0
        %v1747 = vsel %vm321, %v1735, 0
        %v1750 = vsel %vm321, %v1736, 0
        %v1753 = vsel %vm321, %v1737, 0
        %1755 = vmatprep.subr.mxu0 0.0
        %1756 = vmatpush1.msra.mxu0 %v1533
        %1757 = vmatprep.subr.mxu0 0.0
        %1758 = vmatpush1.msra.mxu0 %v1538
        %1759 = vmatprep.subr.mxu0 0.0
        %1760 = vmatpush1.msra.mxu0 %v1543
        %1761 = vmatprep.subr.mxu0 0.0
        %1762 = vmatpush1.msra.mxu0 %v1548
        %1763 = vmatprep.subr.mxu0 0.0
        %1764 = vmatpush1.msra.mxu0 0.0
        %1765 = vmatprep.subr.mxu0 0.0
        %1766 = vmatpush1.msra.mxu0 0.0
        %1767 = vmatprep.subr.mxu0 0.0
        %1768 = vmatpush1.msra.mxu0 0.0
        %1769 = vmatprep.subr.mxu0 0.0
        %1770 = vmatpush1.msra.mxu0 0.0
        %1771 = vmatprep.subr.mxu0 0.0
        %1772 = vmatpush1.msra.mxu0 0.0
        %1773 = vmatprep.subr.mxu0 0.0
        %1774 = vmatpush1.msra.mxu0 0.0
        %1775 = vmatprep.subr.mxu0 0.0
        %1776 = vmatpush1.msra.mxu0 0.0
        %1777 = vmatprep.subr.mxu0 0.0
        %1778 = vmatpush1.msra.mxu0 0.0
        %1779 = vmatprep.subr.mxu0 0.0
        %1780 = vmatpush1.msra.mxu0 0.0
        %1781 = vmatprep.subr.mxu0 0.0
        %1782 = vmatpush1.msra.mxu0 0.0
        %1783 = vmatprep.subr.mxu0 0.0
        %1784 = vmatpush1.msra.mxu0 0.0
        %1785 = vmatprep.subr.mxu0 0.0
        %1786 = vmatpush1.msra.mxu0 0.0
        %1787 = vmatprep.subr.mxu0 0.0
        %1788 = vmatpush1.msra.mxu0 0.0
        %1789 = vmatprep.subr.mxu0 0.0
        %1790 = vmatpush1.msra.mxu0 0.0
        %1791 = vmatprep.subr.mxu0 0.0
        %1792 = vmatpush1.msra.mxu0 0.0
        %1793 = vmatprep.subr.mxu0 0.0
        %1794 = vmatpush1.msra.mxu0 0.0
        %1795 = vmatprep.subr.mxu0 0.0
        %1796 = vmatpush1.msra.mxu0 0.0
        %1797 = vmatprep.subr.mxu0 0.0
        %1798 = vmatpush1.msra.mxu0 0.0
        %1799 = vmatprep.subr.mxu0 0.0
        %1800 = vmatpush1.msra.mxu0 0.0
        %1801 = vmatprep.subr.mxu0 0.0
        %1802 = vmatpush1.msra.mxu0 0.0
        %1803 = vmatprep.subr.mxu0 0.0
        %1804 = vmatpush1.msra.mxu0 0.0
        %1805 = vmatprep.subr.mxu0 0.0
        %1806 = vmatpush1.msra.mxu0 0.0
        %1807 = vmatprep.subr.mxu0 0.0
        %1808 = vmatpush1.msra.mxu0 0.0
        %1809 = vmatprep.subr.mxu0 0.0
        %1810 = vmatpush1.msra.mxu0 0.0
        %1811 = vmatprep.subr.mxu0 0.0
        %1812 = vmatpush1.msra.mxu0 0.0
        %1813 = vmatprep.subr.mxu0 0.0
        %1814 = vmatpush1.msra.mxu0 0.0
        %1815 = vmatprep.subr.mxu0 0.0
        %1816 = vmatpush1.msra.mxu0 0.0
        %1817 = vmatprep.subr.mxu0 0.0
        %1818 = vmatpush1.msra.mxu0 0.0
        %1819 = vmatprep.mubr.f32.mxu0 0.0
        %1820 = vmatmul.mubr.f32.gmra.mrb[0].mxu0 %v1744
        %v1821 = vpop.f32.mrb[0].mxu0
        %v1822 = vadd.f32 0.0, %v1821
        %v1823 = vpop.f32.mrb[0].mxu0
        %1824 = vmatprep.mubr.f32.mxu0 0.0
        %1825 = vmatmul.mubr.f32.gmra.mrb[0].mxu0 %v1747
        %v1826 = vpop.f32.mrb[0].mxu0
        %v1827 = vadd.f32 0.0, %v1826
        %v1828 = vpop.f32.mrb[0].mxu0
        %1829 = vmatprep.mubr.f32.mxu0 0.0
        %1830 = vmatmul.mubr.f32.gmra.mrb[0].mxu0 %v1750
        %v1831 = vpop.f32.mrb[0].mxu0
        %v1832 = vadd.f32 0.0, %v1831
        %v1833 = vpop.f32.mrb[0].mxu0
        %1834 = vmatprep.mubr.f32.mxu0 0.0
        %1835 = vmatmul.mubr.f32.gmra.mrb[0].mxu0 %v1753
        %v1836 = vpop.f32.mrb[0].mxu0
        %v1837 = vadd.f32 0.0, %v1836
        %v1838 = vpop.f32.mrb[0].mxu0
        %1839 = vdwg.mxu0
        %v1841 = vsel %vm321, %v1822, 0
        %v1844 = vsel %vm321, %v1827, 0
        %v1847 = vsel %vm321, %v1832, 0
        %v1850 = vsel %vm321, %v1837, 0
        %1852 = vmatprep.subr.mxu0 0.0
        %1853 = vmatpush1.msra.mxu0 %v1739
        %1854 = vmatprep.subr.mxu0 0.0
        %1855 = vmatpush1.msra.mxu0 %v1740
        %1856 = vmatprep.subr.mxu0 0.0
        %1857 = vmatpush1.msra.mxu0 %v1741
        %1858 = vmatprep.subr.mxu0 0.0
        %1859 = vmatpush1.msra.mxu0 %v1742
        %1860 = vmatprep.subr.mxu0 0.0
        %1861 = vmatpush1.msra.mxu0 0.0
        %1862 = vmatprep.subr.mxu0 0.0
        %1863 = vmatpush1.msra.mxu0 0.0
        %1864 = vmatprep.subr.mxu0 0.0
        %1865 = vmatpush1.msra.mxu0 0.0
        %1866 = vmatprep.subr.mxu0 0.0
        %1867 = vmatpush1.msra.mxu0 0.0
        %1868 = vmatprep.subr.mxu0 0.0
        %1869 = vmatpush1.msra.mxu0 0.0
        %1870 = vmatprep.subr.mxu0 0.0
        %1871 = vmatpush1.msra.mxu0 0.0
        %1872 = vmatprep.subr.mxu0 0.0
        %1873 = vmatpush1.msra.mxu0 0.0
        %1874 = vmatprep.subr.mxu0 0.0
        %1875 = vmatpush1.msra.mxu0 0.0
        %1876 = vmatprep.subr.mxu0 0.0
        %1877 = vmatpush1.msra.mxu0 0.0
        %1878 = vmatprep.subr.mxu0 0.0
        %1879 = vmatpush1.msra.mxu0 0.0
        %1880 = vmatprep.subr.mxu0 0.0
        %1881 = vmatpush1.msra.mxu0 0.0
        %1882 = vmatprep.subr.mxu0 0.0
        %1883 = vmatpush1.msra.mxu0 0.0
        %1884 = vmatprep.subr.mxu0 0.0
        %1885 = vmatpush1.msra.mxu0 0.0
        %1886 = vmatprep.subr.mxu0 0.0
        %1887 = vmatpush1.msra.mxu0 0.0
        %1888 = vmatprep.subr.mxu0 0.0
        %1889 = vmatpush1.msra.mxu0 0.0
        %1890 = vmatprep.subr.mxu0 0.0
        %1891 = vmatpush1.msra.mxu0 0.0
        %1892 = vmatprep.subr.mxu0 0.0
        %1893 = vmatpush1.msra.mxu0 0.0
        %1894 = vmatprep.subr.mxu0 0.0
        %1895 = vmatpush1.msra.mxu0 0.0
        %1896 = vmatprep.subr.mxu0 0.0
        %1897 = vmatpush1.msra.mxu0 0.0
        %1898 = vmatprep.subr.mxu0 0.0
        %1899 = vmatpush1.msra.mxu0 0.0
        %1900 = vmatprep.subr.mxu0 0.0
        %1901 = vmatpush1.msra.mxu0 0.0
        %1902 = vmatprep.subr.mxu0 0.0
        %1903 = vmatpush1.msra.mxu0 0.0
        %1904 = vmatprep.subr.mxu0 0.0
        %1905 = vmatpush1.msra.mxu0 0.0
        %1906 = vmatprep.subr.mxu0 0.0
        %1907 = vmatpush1.msra.mxu0 0.0
        %1908 = vmatprep.subr.mxu0 0.0
        %1909 = vmatpush1.msra.mxu0 0.0
        %1910 = vmatprep.subr.mxu0 0.0
        %1911 = vmatpush1.msra.mxu0 0.0
        %1912 = vmatprep.subr.mxu0 0.0
        %1913 = vmatpush1.msra.mxu0 0.0
        %1914 = vmatprep.subr.mxu0 0.0
        %1915 = vmatpush1.msra.mxu0 0.0
        %1916 = vmatprep.mubr.f32.mxu0 0.0
        %1917 = vmatmul.mubr.f32.gmra.mrb[0].mxu0 %v1841
        %v1918 = vpop.f32.mrb[0].mxu0
        %v1919 = vadd.f32 0.0, %v1918
        %v1920 = vpop.f32.mrb[0].mxu0
        %1921 = vmatprep.mubr.f32.mxu0 0.0
        %1922 = vmatmul.mubr.f32.gmra.mrb[0].mxu0 %v1844
        %v1923 = vpop.f32.mrb[0].mxu0
        %v1924 = vadd.f32 0.0, %v1923
        %v1925 = vpop.f32.mrb[0].mxu0
        %1926 = vmatprep.mubr.f32.mxu0 0.0
        %1927 = vmatmul.mubr.f32.gmra.mrb[0].mxu0 %v1847
        %v1928 = vpop.f32.mrb[0].mxu0
        %v1929 = vadd.f32 0.0, %v1928
        %v1930 = vpop.f32.mrb[0].mxu0
        %1931 = vmatprep.mubr.f32.mxu0 0.0
        %1932 = vmatmul.mubr.f32.gmra.mrb[0].mxu0 %v1850
        %v1933 = vpop.f32.mrb[0].mxu0
        %v1934 = vadd.f32 0.0, %v1933
        %v1935 = vpop.f32.mrb[0].mxu0
        %1936 = vdwg.mxu0
        %1937 = vmatprep.subr.mxu0 0.0
        %1938 = vmatpush1.msra.mxu0 %v1715
        %1939 = vmatprep.subr.mxu0 0.0
        %1940 = vmatpush1.msra.mxu0 %v1720
        %1941 = vmatprep.subr.mxu0 0.0
        %1942 = vmatpush1.msra.mxu0 %v1725
        %1943 = vmatprep.subr.mxu0 0.0
        %1944 = vmatpush1.msra.mxu0 %v1730
        %1945 = vmatprep.subr.mxu0 0.0
        %1946 = vmatpush1.msra.mxu0 0.0
        %1947 = vmatprep.subr.mxu0 0.0
        %1948 = vmatpush1.msra.mxu0 0.0
        %1949 = vmatprep.subr.mxu0 0.0
        %1950 = vmatpush1.msra.mxu0 0.0
        %1951 = vmatprep.subr.mxu0 0.0
        %1952 = vmatpush1.msra.mxu0 0.0
        %1953 = vmatprep.subr.mxu0 0.0
        %1954 = vmatpush1.msra.mxu0 0.0
        %1955 = vmatprep.subr.mxu0 0.0
        %1956 = vmatpush1.msra.mxu0 0.0
        %1957 = vmatprep.subr.mxu0 0.0
        %1958 = vmatpush1.msra.mxu0 0.0
        %1959 = vmatprep.subr.mxu0 0.0
        %1960 = vmatpush1.msra.mxu0 0.0
        %1961 = vmatprep.subr.mxu0 0.0
        %1962 = vmatpush1.msra.mxu0 0.0
        %1963 = vmatprep.subr.mxu0 0.0
        %1964 = vmatpush1.msra.mxu0 0.0
        %1965 = vmatprep.subr.mxu0 0.0
        %1966 = vmatpush1.msra.mxu0 0.0
        %1967 = vmatprep.subr.mxu0 0.0
        %1968 = vmatpush1.msra.mxu0 0.0
        %1969 = vmatprep.subr.mxu0 0.0
        %1970 = vmatpush1.msra.mxu0 0.0
        %1971 = vmatprep.subr.mxu0 0.0
        %1972 = vmatpush1.msra.mxu0 0.0
        %1973 = vmatprep.subr.mxu0 0.0
        %1974 = vmatpush1.msra.mxu0 0.0
        %1975 = vmatprep.subr.mxu0 0.0
        %1976 = vmatpush1.msra.mxu0 0.0
        %1977 = vmatprep.subr.mxu0 0.0
        %1978 = vmatpush1.msra.mxu0 0.0
        %1979 = vmatprep.subr.mxu0 0.0
        %1980 = vmatpush1.msra.mxu0 0.0
        %1981 = vmatprep.subr.mxu0 0.0
        %1982 = vmatpush1.msra.mxu0 0.0
        %1983 = vmatprep.subr.mxu0 0.0
        %1984 = vmatpush1.msra.mxu0 0.0
        %1985 = vmatprep.subr.mxu0 0.0
        %1986 = vmatpush1.msra.mxu0 0.0
        %1987 = vmatprep.subr.mxu0 0.0
        %1988 = vmatpush1.msra.mxu0 0.0
        %1989 = vmatprep.subr.mxu0 0.0
        %1990 = vmatpush1.msra.mxu0 0.0
        %1991 = vmatprep.subr.mxu0 0.0
        %1992 = vmatpush1.msra.mxu0 0.0
        %1993 = vmatprep.subr.mxu0 0.0
        %1994 = vmatpush1.msra.mxu0 0.0
        %1995 = vmatprep.subr.mxu0 0.0
        %1996 = vmatpush1.msra.mxu0 0.0
        %1997 = vmatprep.subr.mxu0 0.0
        %1998 = vmatpush1.msra.mxu0 0.0
        %1999 = vmatprep.subr.mxu0 0.0
        %2000 = vmatpush1.msra.mxu0 0.0
        %2001 = vmatprep.mubr.f32.mxu0 0.0
        %2002 = vmatmul.mubr.f32.gmra.mrb[0].mxu0 %v1744
        %v2003 = vpop.f32.mrb[0].mxu0
        %v2004 = vadd.f32 0.0, %v2003
        %v2005 = vpop.f32.mrb[0].mxu0
        %2006 = vmatprep.mubr.f32.mxu0 0.0
        %2007 = vmatmul.mubr.f32.gmra.mrb[0].mxu0 %v1747
        %v2008 = vpop.f32.mrb[0].mxu0
        %v2009 = vadd.f32 0.0, %v2008
        %v2010 = vpop.f32.mrb[0].mxu0
        %2011 = vmatprep.mubr.f32.mxu0 0.0
        %2012 = vmatmul.mubr.f32.gmra.mrb[0].mxu0 %v1750
        %v2013 = vpop.f32.mrb[0].mxu0
        %v2014 = vadd.f32 0.0, %v2013
        %v2015 = vpop.f32.mrb[0].mxu0
        %2016 = vmatprep.mubr.f32.mxu0 0.0
        %2017 = vmatmul.mubr.f32.gmra.mrb[0].mxu0 %v1753
        %v2018 = vpop.f32.mrb[0].mxu0
        %v2019 = vadd.f32 0.0, %v2018
        %v2020 = vpop.f32.mrb[0].mxu0
        %2021 = vdwg.mxu0
        %v2023 = vsel %vm321, %v2004, 0
        %v2026 = vsel %vm321, %v2009, 0
        %v2029 = vsel %vm321, %v2014, 0
        %v2032 = vsel %vm321, %v2019, 0
        %2034 = vmatprep.subr.mxu0 0.0
        %2035 = vmatpush1.msra.mxu0 %v1739
        %2036 = vmatprep.subr.mxu0 0.0
        %2037 = vmatpush1.msra.mxu0 %v1740
        %2038 = vmatprep.subr.mxu0 0.0
        %2039 = vmatpush1.msra.mxu0 %v1741
        %2040 = vmatprep.subr.mxu0 0.0
        %2041 = vmatpush1.msra.mxu0 %v1742
        %2042 = vmatprep.subr.mxu0 0.0
        %2043 = vmatpush1.msra.mxu0 0.0
        %2044 = vmatprep.subr.mxu0 0.0
        %2045 = vmatpush1.msra.mxu0 0.0
        %2046 = vmatprep.subr.mxu0 0.0
        %2047 = vmatpush1.msra.mxu0 0.0
        %2048 = vmatprep.subr.mxu0 0.0
        %2049 = vmatpush1.msra.mxu0 0.0
        %2050 = vmatprep.subr.mxu0 0.0
        %2051 = vmatpush1.msra.mxu0 0.0
        %2052 = vmatprep.subr.mxu0 0.0
        %2053 = vmatpush1.msra.mxu0 0.0
        %2054 = vmatprep.subr.mxu0 0.0
        %2055 = vmatpush1.msra.mxu0 0.0
        %2056 = vmatprep.subr.mxu0 0.0
        %2057 = vmatpush1.msra.mxu0 0.0
        %2058 = vmatprep.subr.mxu0 0.0
        %2059 = vmatpush1.msra.mxu0 0.0
        %2060 = vmatprep.subr.mxu0 0.0
        %2061 = vmatpush1.msra.mxu0 0.0
        %2062 = vmatprep.subr.mxu0 0.0
        %2063 = vmatpush1.msra.mxu0 0.0
        %2064 = vmatprep.subr.mxu0 0.0
        %2065 = vmatpush1.msra.mxu0 0.0
        %2066 = vmatprep.subr.mxu0 0.0
        %2067 = vmatpush1.msra.mxu0 0.0
        %2068 = vmatprep.subr.mxu0 0.0
        %2069 = vmatpush1.msra.mxu0 0.0
        %2070 = vmatprep.subr.mxu0 0.0
        %2071 = vmatpush1.msra.mxu0 0.0
        %2072 = vmatprep.subr.mxu0 0.0
        %2073 = vmatpush1.msra.mxu0 0.0
        %2074 = vmatprep.subr.mxu0 0.0
        %2075 = vmatpush1.msra.mxu0 0.0
        %2076 = vmatprep.subr.mxu0 0.0
        %2077 = vmatpush1.msra.mxu0 0.0
        %2078 = vmatprep.subr.mxu0 0.0
        %2079 = vmatpush1.msra.mxu0 0.0
        %2080 = vmatprep.subr.mxu0 0.0
        %2081 = vmatpush1.msra.mxu0 0.0
        %2082 = vmatprep.subr.mxu0 0.0
        %2083 = vmatpush1.msra.mxu0 0.0
        %2084 = vmatprep.subr.mxu0 0.0
        %2085 = vmatpush1.msra.mxu0 0.0
        %2086 = vmatprep.subr.mxu0 0.0
        %2087 = vmatpush1.msra.mxu0 0.0
        %2088 = vmatprep.subr.mxu0 0.0
        %2089 = vmatpush1.msra.mxu0 0.0
        %2090 = vmatprep.subr.mxu0 0.0
        %2091 = vmatpush1.msra.mxu0 0.0
        %2092 = vmatprep.subr.mxu0 0.0
        %2093 = vmatpush1.msra.mxu0 0.0
        %2094 = vmatprep.subr.mxu0 0.0
        %2095 = vmatpush1.msra.mxu0 0.0
        %2096 = vmatprep.subr.mxu0 0.0
        %2097 = vmatpush1.msra.mxu0 0.0
        %2098 = vmatprep.mubr.f32.mxu0 0.0
        %2099 = vmatmul.mubr.f32.gmra.mrb[0].mxu0 %v2023
        %v2100 = vpop.f32.mrb[0].mxu0
        %v2101 = vadd.f32 0.0, %v2100
        %v2102 = vpop.f32.mrb[0].mxu0
        %2103 = vmatprep.mubr.f32.mxu0 0.0
        %2104 = vmatmul.mubr.f32.gmra.mrb[0].mxu0 %v2026
        %v2105 = vpop.f32.mrb[0].mxu0
        %v2106 = vadd.f32 0.0, %v2105
        %v2107 = vpop.f32.mrb[0].mxu0
        %2108 = vmatprep.mubr.f32.mxu0 0.0
        %2109 = vmatmul.mubr.f32.gmra.mrb[0].mxu0 %v2029
        %v2110 = vpop.f32.mrb[0].mxu0
        %v2111 = vadd.f32 0.0, %v2110
        %v2112 = vpop.f32.mrb[0].mxu0
        %2113 = vmatprep.mubr.f32.mxu0 0.0
        %2114 = vmatmul.mubr.f32.gmra.mrb[0].mxu0 %v2032
        %v2115 = vpop.f32.mrb[0].mxu0
        %v2116 = vadd.f32 0.0, %v2115
        %v2117 = vpop.f32.mrb[0].mxu0
        %2118 = vdwg.mxu0
        %v2119 = vmul.f32 %v1533, %v1533
        %v2120 = vmul.f32 %v1538, %v1538
        %v2121 = vmul.f32 %v1543, %v1543
        %v2122 = vmul.f32 %v1548, %v1548
        %2123 = vmatprep.subr.mxu0 0.0
        %2124 = vmatpush1.msra.mxu0 %v2119
        %2125 = vmatprep.subr.mxu0 0.0
        %2126 = vmatpush1.msra.mxu0 %v2120
        %2127 = vmatprep.subr.mxu0 0.0
        %2128 = vmatpush1.msra.mxu0 %v2121
        %2129 = vmatprep.subr.mxu0 0.0
        %2130 = vmatpush1.msra.mxu0 %v2122
        %2131 = vmatprep.subr.mxu0 0.0
        %2132 = vmatpush1.msra.mxu0 0.0
        %2133 = vmatprep.subr.mxu0 0.0
        %2134 = vmatpush1.msra.mxu0 0.0
        %2135 = vmatprep.subr.mxu0 0.0
        %2136 = vmatpush1.msra.mxu0 0.0
        %2137 = vmatprep.subr.mxu0 0.0
        %2138 = vmatpush1.msra.mxu0 0.0
        %2139 = vmatprep.subr.mxu0 0.0
        %2140 = vmatpush1.msra.mxu0 0.0
        %2141 = vmatprep.subr.mxu0 0.0
        %2142 = vmatpush1.msra.mxu0 0.0
        %2143 = vmatprep.subr.mxu0 0.0
        %2144 = vmatpush1.msra.mxu0 0.0
        %2145 = vmatprep.subr.mxu0 0.0
        %2146 = vmatpush1.msra.mxu0 0.0
        %2147 = vmatprep.subr.mxu0 0.0
        %2148 = vmatpush1.msra.mxu0 0.0
        %2149 = vmatprep.subr.mxu0 0.0
        %2150 = vmatpush1.msra.mxu0 0.0
        %2151 = vmatprep.subr.mxu0 0.0
        %2152 = vmatpush1.msra.mxu0 0.0
        %2153 = vmatprep.subr.mxu0 0.0
        %2154 = vmatpush1.msra.mxu0 0.0
        %2155 = vmatprep.subr.mxu0 0.0
        %2156 = vmatpush1.msra.mxu0 0.0
        %2157 = vmatprep.subr.mxu0 0.0
        %2158 = vmatpush1.msra.mxu0 0.0
        %2159 = vmatprep.subr.mxu0 0.0
        %2160 = vmatpush1.msra.mxu0 0.0
        %2161 = vmatprep.subr.mxu0 0.0
        %2162 = vmatpush1.msra.mxu0 0.0
        %2163 = vmatprep.subr.mxu0 0.0
        %2164 = vmatpush1.msra.mxu0 0.0
        %2165 = vmatprep.subr.mxu0 0.0
        %2166 = vmatpush1.msra.mxu0 0.0
        %2167 = vmatprep.subr.mxu0 0.0
        %2168 = vmatpush1.msra.mxu0 0.0
        %2169 = vmatprep.subr.mxu0 0.0
        %2170 = vmatpush1.msra.mxu0 0.0
        %2171 = vmatprep.subr.mxu0 0.0
        %2172 = vmatpush1.msra.mxu0 0.0
        %2173 = vmatprep.subr.mxu0 0.0
        %2174 = vmatpush1.msra.mxu0 0.0
        %2175 = vmatprep.subr.mxu0 0.0
        %2176 = vmatpush1.msra.mxu0 0.0
        %2177 = vmatprep.subr.mxu0 0.0
        %2178 = vmatpush1.msra.mxu0 0.0
        %2179 = vmatprep.subr.mxu0 0.0
        %2180 = vmatpush1.msra.mxu0 0.0
        %2181 = vmatprep.subr.mxu0 0.0
        %2182 = vmatpush1.msra.mxu0 0.0
        %2183 = vmatprep.subr.mxu0 0.0
        %2184 = vmatpush1.msra.mxu0 0.0
        %2185 = vmatprep.subr.mxu0 0.0
        %2186 = vmatpush1.msra.mxu0 0.0
        %2187 = vmatprep.mubr.f32.mxu0 0.0
        %2188 = vmatmul.mubr.f32.gmra.mrb[0].mxu0 %v1744
        %v2189 = vpop.f32.mrb[0].mxu0
        %v2190 = vadd.f32 0.0, %v2189
        %v2191 = vpop.f32.mrb[0].mxu0
        %2192 = vmatprep.mubr.f32.mxu0 0.0
        %2193 = vmatmul.mubr.f32.gmra.mrb[0].mxu0 %v1747
        %v2194 = vpop.f32.mrb[0].mxu0
        %v2195 = vadd.f32 0.0, %v2194
        %v2196 = vpop.f32.mrb[0].mxu0
        %2197 = vmatprep.mubr.f32.mxu0 0.0
        %2198 = vmatmul.mubr.f32.gmra.mrb[0].mxu0 %v1750
        %v2199 = vpop.f32.mrb[0].mxu0
        %v2200 = vadd.f32 0.0, %v2199
        %v2201 = vpop.f32.mrb[0].mxu0
        %2202 = vmatprep.mubr.f32.mxu0 0.0
        %2203 = vmatmul.mubr.f32.gmra.mrb[0].mxu0 %v1753
        %v2204 = vpop.f32.mrb[0].mxu0
        %v2205 = vadd.f32 0.0, %v2204
        %v2206 = vpop.f32.mrb[0].mxu0
        %2207 = vdwg.mxu0
        %v2209 = vsel %vm321, %v2190, 0
        %v2212 = vsel %vm321, %v2195, 0
        %v2215 = vsel %vm321, %v2200, 0
        %v2218 = vsel %vm321, %v2205, 0
        %2220 = vmatprep.subr.mxu0 0.0
        %2221 = vmatpush1.msra.mxu0 %v1739
        %2222 = vmatprep.subr.mxu0 0.0
        %2223 = vmatpush1.msra.mxu0 %v1740
        %2224 = vmatprep.subr.mxu0 0.0
        %2225 = vmatpush1.msra.mxu0 %v1741
        %2226 = vmatprep.subr.mxu0 0.0
        %2227 = vmatpush1.msra.mxu0 %v1742
        %2228 = vmatprep.subr.mxu0 0.0
        %2229 = vmatpush1.msra.mxu0 0.0
        %2230 = vmatprep.subr.mxu0 0.0
        %2231 = vmatpush1.msra.mxu0 0.0
        %2232 = vmatprep.subr.mxu0 0.0
        %2233 = vmatpush1.msra.mxu0 0.0
        %2234 = vmatprep.subr.mxu0 0.0
        %2235 = vmatpush1.msra.mxu0 0.0
        %2236 = vmatprep.subr.mxu0 0.0
        %2237 = vmatpush1.msra.mxu0 0.0
        %2238 = vmatprep.subr.mxu0 0.0
        %2239 = vmatpush1.msra.mxu0 0.0
        %2240 = vmatprep.subr.mxu0 0.0
        %2241 = vmatpush1.msra.mxu0 0.0
        %2242 = vmatprep.subr.mxu0 0.0
        %2243 = vmatpush1.msra.mxu0 0.0
        %2244 = vmatprep.subr.mxu0 0.0
        %2245 = vmatpush1.msra.mxu0 0.0
        %2246 = vmatprep.subr.mxu0 0.0
        %2247 = vmatpush1.msra.mxu0 0.0
        %2248 = vmatprep.subr.mxu0 0.0
        %2249 = vmatpush1.msra.mxu0 0.0
        %2250 = vmatprep.subr.mxu0 0.0
        %2251 = vmatpush1.msra.mxu0 0.0
        %2252 = vmatprep.subr.mxu0 0.0
        %2253 = vmatpush1.msra.mxu0 0.0
        %2254 = vmatprep.subr.mxu0 0.0
        %2255 = vmatpush1.msra.mxu0 0.0
        %2256 = vmatprep.subr.mxu0 0.0
        %2257 = vmatpush1.msra.mxu0 0.0
        %2258 = vmatprep.subr.mxu0 0.0
        %2259 = vmatpush1.msra.mxu0 0.0
        %2260 = vmatprep.subr.mxu0 0.0
        %2261 = vmatpush1.msra.mxu0 0.0
        %2262 = vmatprep.subr.mxu0 0.0
        %2263 = vmatpush1.msra.mxu0 0.0
        %2264 = vmatprep.subr.mxu0 0.0
        %2265 = vmatpush1.msra.mxu0 0.0
        %2266 = vmatprep.subr.mxu0 0.0
        %2267 = vmatpush1.msra.mxu0 0.0
        %2268 = vmatprep.subr.mxu0 0.0
        %2269 = vmatpush1.msra.mxu0 0.0
        %2270 = vmatprep.subr.mxu0 0.0
        %2271 = vmatpush1.msra.mxu0 0.0
        %2272 = vmatprep.subr.mxu0 0.0
        %2273 = vmatpush1.msra.mxu0 0.0
        %2274 = vmatprep.subr.mxu0 0.0
        %2275 = vmatpush1.msra.mxu0 0.0
        %2276 = vmatprep.subr.mxu0 0.0
        %2277 = vmatpush1.msra.mxu0 0.0
        %2278 = vmatprep.subr.mxu0 0.0
        %2279 = vmatpush1.msra.mxu0 0.0
        %2280 = vmatprep.subr.mxu0 0.0
        %2281 = vmatpush1.msra.mxu0 0.0
        %2282 = vmatprep.subr.mxu0 0.0
        %2283 = vmatpush1.msra.mxu0 0.0
        %2284 = vmatprep.mubr.f32.mxu0 0.0
        %2285 = vmatmul.mubr.f32.gmra.mrb[0].mxu0 %v2209
        %v2286 = vpop.f32.mrb[0].mxu0
        %v2287 = vadd.f32 0.0, %v2286
        %v2288 = vpop.f32.mrb[0].mxu0
        %2289 = vmatprep.mubr.f32.mxu0 0.0
        %2290 = vmatmul.mubr.f32.gmra.mrb[0].mxu0 %v2212
        %v2291 = vpop.f32.mrb[0].mxu0
        %v2292 = vadd.f32 0.0, %v2291
        %v2293 = vpop.f32.mrb[0].mxu0
        %2294 = vmatprep.mubr.f32.mxu0 0.0
        %2295 = vmatmul.mubr.f32.gmra.mrb[0].mxu0 %v2215
        %v2296 = vpop.f32.mrb[0].mxu0
        %v2297 = vadd.f32 0.0, %v2296
        %v2298 = vpop.f32.mrb[0].mxu0
        %2299 = vmatprep.mubr.f32.mxu0 0.0
        %2300 = vmatmul.mubr.f32.gmra.mrb[0].mxu0 %v2218
        %v2301 = vpop.f32.mrb[0].mxu0
        %v2302 = vadd.f32 0.0, %v2301
        %v2303 = vpop.f32.mrb[0].mxu0
        %2304 = vdwg.mxu0
        %v2305 = vmul.f32 %v1715, %v1715
        %v2306 = vmul.f32 %v1720, %v1720
        %v2307 = vmul.f32 %v1725, %v1725
        %v2308 = vmul.f32 %v1730, %v1730
        %2309 = vmatprep.subr.mxu0 0.0
        %2310 = vmatpush1.msra.mxu0 %v2305
        %2311 = vmatprep.subr.mxu0 0.0
        %2312 = vmatpush1.msra.mxu0 %v2306
        %2313 = vmatprep.subr.mxu0 0.0
        %2314 = vmatpush1.msra.mxu0 %v2307
        %2315 = vmatprep.subr.mxu0 0.0
        %2316 = vmatpush1.msra.mxu0 %v2308
        %2317 = vmatprep.subr.mxu0 0.0
        %2318 = vmatpush1.msra.mxu0 0.0
        %2319 = vmatprep.subr.mxu0 0.0
        %2320 = vmatpush1.msra.mxu0 0.0
        %2321 = vmatprep.subr.mxu0 0.0
        %2322 = vmatpush1.msra.mxu0 0.0
        %2323 = vmatprep.subr.mxu0 0.0
        %2324 = vmatpush1.msra.mxu0 0.0
        %2325 = vmatprep.subr.mxu0 0.0
        %2326 = vmatpush1.msra.mxu0 0.0
        %2327 = vmatprep.subr.mxu0 0.0
        %2328 = vmatpush1.msra.mxu0 0.0
        %2329 = vmatprep.subr.mxu0 0.0
        %2330 = vmatpush1.msra.mxu0 0.0
        %2331 = vmatprep.subr.mxu0 0.0
        %2332 = vmatpush1.msra.mxu0 0.0
        %2333 = vmatprep.subr.mxu0 0.0
        %2334 = vmatpush1.msra.mxu0 0.0
        %2335 = vmatprep.subr.mxu0 0.0
        %2336 = vmatpush1.msra.mxu0 0.0
        %2337 = vmatprep.subr.mxu0 0.0
        %2338 = vmatpush1.msra.mxu0 0.0
        %2339 = vmatprep.subr.mxu0 0.0
        %2340 = vmatpush1.msra.mxu0 0.0
        %2341 = vmatprep.subr.mxu0 0.0
        %2342 = vmatpush1.msra.mxu0 0.0
        %2343 = vmatprep.subr.mxu0 0.0
        %2344 = vmatpush1.msra.mxu0 0.0
        %2345 = vmatprep.subr.mxu0 0.0
        %2346 = vmatpush1.msra.mxu0 0.0
        %2347 = vmatprep.subr.mxu0 0.0
        %2348 = vmatpush1.msra.mxu0 0.0
        %2349 = vmatprep.subr.mxu0 0.0
        %2350 = vmatpush1.msra.mxu0 0.0
        %2351 = vmatprep.subr.mxu0 0.0
        %2352 = vmatpush1.msra.mxu0 0.0
        %2353 = vmatprep.subr.mxu0 0.0
        %2354 = vmatpush1.msra.mxu0 0.0
        %2355 = vmatprep.subr.mxu0 0.0
        %2356 = vmatpush1.msra.mxu0 0.0
        %2357 = vmatprep.subr.mxu0 0.0
        %2358 = vmatpush1.msra.mxu0 0.0
        %2359 = vmatprep.subr.mxu0 0.0
        %2360 = vmatpush1.msra.mxu0 0.0
        %2361 = vmatprep.subr.mxu0 0.0
        %2362 = vmatpush1.msra.mxu0 0.0
        %2363 = vmatprep.subr.mxu0 0.0
        %2364 = vmatpush1.msra.mxu0 0.0
        %2365 = vmatprep.subr.mxu0 0.0
        %2366 = vmatpush1.msra.mxu0 0.0
        %2367 = vmatprep.subr.mxu0 0.0
        %2368 = vmatpush1.msra.mxu0 0.0
        %2369 = vmatprep.subr.mxu0 0.0
        %2370 = vmatpush1.msra.mxu0 0.0
        %2371 = vmatprep.subr.mxu0 0.0
        %2372 = vmatpush1.msra.mxu0 0.0
        %2373 = vmatprep.mubr.f32.mxu0 0.0
        %2374 = vmatmul.mubr.f32.gmra.mrb[0].mxu0 %v1744
        %v2375 = vpop.f32.mrb[0].mxu0
        %v2376 = vadd.f32 0.0, %v2375
        %v2377 = vpop.f32.mrb[0].mxu0
        %2378 = vmatprep.mubr.f32.mxu0 0.0
        %2379 = vmatmul.mubr.f32.gmra.mrb[0].mxu0 %v1747
        %v2380 = vpop.f32.mrb[0].mxu0
        %v2381 = vadd.f32 0.0, %v2380
        %v2382 = vpop.f32.mrb[0].mxu0
        %2383 = vmatprep.mubr.f32.mxu0 0.0
        %2384 = vmatmul.mubr.f32.gmra.mrb[0].mxu0 %v1750
        %v2385 = vpop.f32.mrb[0].mxu0
        %v2386 = vadd.f32 0.0, %v2385
        %v2387 = vpop.f32.mrb[0].mxu0
        %2388 = vmatprep.mubr.f32.mxu0 0.0
        %2389 = vmatmul.mubr.f32.gmra.mrb[0].mxu0 %v1753
        %v2390 = vpop.f32.mrb[0].mxu0
        %v2391 = vadd.f32 0.0, %v2390
        %v2392 = vpop.f32.mrb[0].mxu0
        %2393 = vdwg.mxu0
        %v2395 = vsel %vm321, %v2376, 0
        %v2398 = vsel %vm321, %v2381, 0
        %v2401 = vsel %vm321, %v2386, 0
        %v2404 = vsel %vm321, %v2391, 0
        %2406 = vmatprep.subr.mxu0 0.0
        %2407 = vmatpush1.msra.mxu0 %v1739
        %2408 = vmatprep.subr.mxu0 0.0
        %2409 = vmatpush1.msra.mxu0 %v1740
        %2410 = vmatprep.subr.mxu0 0.0
        %2411 = vmatpush1.msra.mxu0 %v1741
        %2412 = vmatprep.subr.mxu0 0.0
        %2413 = vmatpush1.msra.mxu0 %v1742
        %2414 = vmatprep.subr.mxu0 0.0
        %2415 = vmatpush1.msra.mxu0 0.0
        %2416 = vmatprep.subr.mxu0 0.0
        %2417 = vmatpush1.msra.mxu0 0.0
        %2418 = vmatprep.subr.mxu0 0.0
        %2419 = vmatpush1.msra.mxu0 0.0
        %2420 = vmatprep.subr.mxu0 0.0
        %2421 = vmatpush1.msra.mxu0 0.0
        %2422 = vmatprep.subr.mxu0 0.0
        %2423 = vmatpush1.msra.mxu0 0.0
        %2424 = vmatprep.subr.mxu0 0.0
        %2425 = vmatpush1.msra.mxu0 0.0
        %2426 = vmatprep.subr.mxu0 0.0
        %2427 = vmatpush1.msra.mxu0 0.0
        %2428 = vmatprep.subr.mxu0 0.0
        %2429 = vmatpush1.msra.mxu0 0.0
        %2430 = vmatprep.subr.mxu0 0.0
        %2431 = vmatpush1.msra.mxu0 0.0
        %2432 = vmatprep.subr.mxu0 0.0
        %2433 = vmatpush1.msra.mxu0 0.0
        %2434 = vmatprep.subr.mxu0 0.0
        %2435 = vmatpush1.msra.mxu0 0.0
        %2436 = vmatprep.subr.mxu0 0.0
        %2437 = vmatpush1.msra.mxu0 0.0
        %2438 = vmatprep.subr.mxu0 0.0
        %2439 = vmatpush1.msra.mxu0 0.0
        %2440 = vmatprep.subr.mxu0 0.0
        %2441 = vmatpush1.msra.mxu0 0.0
        %2442 = vmatprep.subr.mxu0 0.0
        %2443 = vmatpush1.msra.mxu0 0.0
        %2444 = vmatprep.subr.mxu0 0.0
        %2445 = vmatpush1.msra.mxu0 0.0
        %2446 = vmatprep.subr.mxu0 0.0
        %2447 = vmatpush1.msra.mxu0 0.0
        %2448 = vmatprep.subr.mxu0 0.0
        %2449 = vmatpush1.msra.mxu0 0.0
        %2450 = vmatprep.subr.mxu0 0.0
        %2451 = vmatpush1.msra.mxu0 0.0
        %2452 = vmatprep.subr.mxu0 0.0
        %2453 = vmatpush1.msra.mxu0 0.0
        %2454 = vmatprep.subr.mxu0 0.0
        %2455 = vmatpush1.msra.mxu0 0.0
        %2456 = vmatprep.subr.mxu0 0.0
        %2457 = vmatpush1.msra.mxu0 0.0
        %2458 = vmatprep.subr.mxu0 0.0
        %2459 = vmatpush1.msra.mxu0 0.0
        %2460 = vmatprep.subr.mxu0 0.0
        %2461 = vmatpush1.msra.mxu0 0.0
        %2462 = vmatprep.subr.mxu0 0.0
        %2463 = vmatpush1.msra.mxu0 0.0
        %2464 = vmatprep.subr.mxu0 0.0
        %2465 = vmatpush1.msra.mxu0 0.0
        %2466 = vmatprep.subr.mxu0 0.0
        %2467 = vmatpush1.msra.mxu0 0.0
        %2468 = vmatprep.subr.mxu0 0.0
        %2469 = vmatpush1.msra.mxu0 0.0
        %2470 = vmatprep.mubr.f32.mxu0 0.0
        %2471 = vmatmul.mubr.f32.gmra.mrb[0].mxu0 %v2395
        %v2472 = vpop.f32.mrb[0].mxu0
        %v2473 = vadd.f32 0.0, %v2472
        %v2474 = vpop.f32.mrb[0].mxu0
        %2475 = vmatprep.mubr.f32.mxu0 0.0
        %2476 = vmatmul.mubr.f32.gmra.mrb[0].mxu0 %v2398
        %v2477 = vpop.f32.mrb[0].mxu0
        %v2478 = vadd.f32 0.0, %v2477
        %v2479 = vpop.f32.mrb[0].mxu0
        %2480 = vmatprep.mubr.f32.mxu0 0.0
        %2481 = vmatmul.mubr.f32.gmra.mrb[0].mxu0 %v2401
        %v2482 = vpop.f32.mrb[0].mxu0
        %v2483 = vadd.f32 0.0, %v2482
        %v2484 = vpop.f32.mrb[0].mxu0
        %2485 = vmatprep.mubr.f32.mxu0 0.0
        %2486 = vmatmul.mubr.f32.gmra.mrb[0].mxu0 %v2404
        %v2487 = vpop.f32.mrb[0].mxu0
        %v2488 = vadd.f32 0.0, %v2487
        %v2489 = vpop.f32.mrb[0].mxu0
        %2490 = vdwg.mxu0
        %v2491 = vmul.f32 %v1533, %v1715
        %v2492 = vmul.f32 %v1538, %v1720
        %v2493 = vmul.f32 %v1543, %v1725
        %v2494 = vmul.f32 %v1548, %v1730
        %2495 = vmatprep.subr.mxu0 0.0
        %2496 = vmatpush1.msra.mxu0 %v2491
        %2497 = vmatprep.subr.mxu0 0.0
        %2498 = vmatpush1.msra.mxu0 %v2492
        %2499 = vmatprep.subr.mxu0 0.0
        %2500 = vmatpush1.msra.mxu0 %v2493
        %2501 = vmatprep.subr.mxu0 0.0
        %2502 = vmatpush1.msra.mxu0 %v2494
        %2503 = vmatprep.subr.mxu0 0.0
        %2504 = vmatpush1.msra.mxu0 0.0
        %2505 = vmatprep.subr.mxu0 0.0
        %2506 = vmatpush1.msra.mxu0 0.0
        %2507 = vmatprep.subr.mxu0 0.0
        %2508 = vmatpush1.msra.mxu0 0.0
        %2509 = vmatprep.subr.mxu0 0.0
        %2510 = vmatpush1.msra.mxu0 0.0
        %2511 = vmatprep.subr.mxu0 0.0
        %2512 = vmatpush1.msra.mxu0 0.0
        %2513 = vmatprep.subr.mxu0 0.0
        %2514 = vmatpush1.msra.mxu0 0.0
        %2515 = vmatprep.subr.mxu0 0.0
        %2516 = vmatpush1.msra.mxu0 0.0
        %2517 = vmatprep.subr.mxu0 0.0
        %2518 = vmatpush1.msra.mxu0 0.0
        %2519 = vmatprep.subr.mxu0 0.0
        %2520 = vmatpush1.msra.mxu0 0.0
        %2521 = vmatprep.subr.mxu0 0.0
        %2522 = vmatpush1.msra.mxu0 0.0
        %2523 = vmatprep.subr.mxu0 0.0
        %2524 = vmatpush1.msra.mxu0 0.0
        %2525 = vmatprep.subr.mxu0 0.0
        %2526 = vmatpush1.msra.mxu0 0.0
        %2527 = vmatprep.subr.mxu0 0.0
        %2528 = vmatpush1.msra.mxu0 0.0
        %2529 = vmatprep.subr.mxu0 0.0
        %2530 = vmatpush1.msra.mxu0 0.0
        %2531 = vmatprep.subr.mxu0 0.0
        %2532 = vmatpush1.msra.mxu0 0.0
        %2533 = vmatprep.subr.mxu0 0.0
        %2534 = vmatpush1.msra.mxu0 0.0
        %2535 = vmatprep.subr.mxu0 0.0
        %2536 = vmatpush1.msra.mxu0 0.0
        %2537 = vmatprep.subr.mxu0 0.0
        %2538 = vmatpush1.msra.mxu0 0.0
        %2539 = vmatprep.subr.mxu0 0.0
        %2540 = vmatpush1.msra.mxu0 0.0
        %2541 = vmatprep.subr.mxu0 0.0
        %2542 = vmatpush1.msra.mxu0 0.0
        %2543 = vmatprep.subr.mxu0 0.0
        %2544 = vmatpush1.msra.mxu0 0.0
        %2545 = vmatprep.subr.mxu0 0.0
        %2546 = vmatpush1.msra.mxu0 0.0
        %2547 = vmatprep.subr.mxu0 0.0
        %2548 = vmatpush1.msra.mxu0 0.0
        %2549 = vmatprep.subr.mxu0 0.0
        %2550 = vmatpush1.msra.mxu0 0.0
        %2551 = vmatprep.subr.mxu0 0.0
        %2552 = vmatpush1.msra.mxu0 0.0
        %2553 = vmatprep.subr.mxu0 0.0
        %2554 = vmatpush1.msra.mxu0 0.0
        %2555 = vmatprep.subr.mxu0 0.0
        %2556 = vmatpush1.msra.mxu0 0.0
        %2557 = vmatprep.subr.mxu0 0.0
        %2558 = vmatpush1.msra.mxu0 0.0
        %2559 = vmatprep.mubr.f32.mxu0 0.0
        %2560 = vmatmul.mubr.f32.gmra.mrb[0].mxu0 %v1744
        %v2561 = vpop.f32.mrb[0].mxu0
        %v2562 = vadd.f32 0.0, %v2561
        %v2563 = vpop.f32.mrb[0].mxu0
        %2564 = vmatprep.mubr.f32.mxu0 0.0
        %2565 = vmatmul.mubr.f32.gmra.mrb[0].mxu0 %v1747
        %v2566 = vpop.f32.mrb[0].mxu0
        %v2567 = vadd.f32 0.0, %v2566
        %v2568 = vpop.f32.mrb[0].mxu0
        %2569 = vmatprep.mubr.f32.mxu0 0.0
        %2570 = vmatmul.mubr.f32.gmra.mrb[0].mxu0 %v1750
        %v2571 = vpop.f32.mrb[0].mxu0
        %v2572 = vadd.f32 0.0, %v2571
        %v2573 = vpop.f32.mrb[0].mxu0
        %2574 = vmatprep.mubr.f32.mxu0 0.0
        %2575 = vmatmul.mubr.f32.gmra.mrb[0].mxu0 %v1753
        %v2576 = vpop.f32.mrb[0].mxu0
        %v2577 = vadd.f32 0.0, %v2576
        %v2578 = vpop.f32.mrb[0].mxu0
        %2579 = vdwg.mxu0
        %v2581 = vsel %vm321, %v2562, 0
        %v2584 = vsel %vm321, %v2567, 0
        %v2587 = vsel %vm321, %v2572, 0
        %v2590 = vsel %vm321, %v2577, 0
        %2592 = vmatprep.subr.mxu0 0.0
        %2593 = vmatpush1.msra.mxu0 %v1739
        %2594 = vmatprep.subr.mxu0 0.0
        %2595 = vmatpush1.msra.mxu0 %v1740
        %2596 = vmatprep.subr.mxu0 0.0
        %2597 = vmatpush1.msra.mxu0 %v1741
        %2598 = vmatprep.subr.mxu0 0.0
        %2599 = vmatpush1.msra.mxu0 %v1742
        %2600 = vmatprep.subr.mxu0 0.0
        %2601 = vmatpush1.msra.mxu0 0.0
        %2602 = vmatprep.subr.mxu0 0.0
        %2603 = vmatpush1.msra.mxu0 0.0
        %2604 = vmatprep.subr.mxu0 0.0
        %2605 = vmatpush1.msra.mxu0 0.0
        %2606 = vmatprep.subr.mxu0 0.0
        %2607 = vmatpush1.msra.mxu0 0.0
        %2608 = vmatprep.subr.mxu0 0.0
        %2609 = vmatpush1.msra.mxu0 0.0
        %2610 = vmatprep.subr.mxu0 0.0
        %2611 = vmatpush1.msra.mxu0 0.0
        %2612 = vmatprep.subr.mxu0 0.0
        %2613 = vmatpush1.msra.mxu0 0.0
        %2614 = vmatprep.subr.mxu0 0.0
        %2615 = vmatpush1.msra.mxu0 0.0
        %2616 = vmatprep.subr.mxu0 0.0
        %2617 = vmatpush1.msra.mxu0 0.0
        %2618 = vmatprep.subr.mxu0 0.0
        %2619 = vmatpush1.msra.mxu0 0.0
        %2620 = vmatprep.subr.mxu0 0.0
        %2621 = vmatpush1.msra.mxu0 0.0
        %2622 = vmatprep.subr.mxu0 0.0
        %2623 = vmatpush1.msra.mxu0 0.0
        %2624 = vmatprep.subr.mxu0 0.0
        %2625 = vmatpush1.msra.mxu0 0.0
        %2626 = vmatprep.subr.mxu0 0.0
        %2627 = vmatpush1.msra.mxu0 0.0
        %2628 = vmatprep.subr.mxu0 0.0
        %2629 = vmatpush1.msra.mxu0 0.0
        %2630 = vmatprep.subr.mxu0 0.0
        %2631 = vmatpush1.msra.mxu0 0.0
        %2632 = vmatprep.subr.mxu0 0.0
        %2633 = vmatpush1.msra.mxu0 0.0
        %2634 = vmatprep.subr.mxu0 0.0
        %2635 = vmatpush1.msra.mxu0 0.0
        %2636 = vmatprep.subr.mxu0 0.0
        %2637 = vmatpush1.msra.mxu0 0.0
        %2638 = vmatprep.subr.mxu0 0.0
        %2639 = vmatpush1.msra.mxu0 0.0
        %2640 = vmatprep.subr.mxu0 0.0
        %2641 = vmatpush1.msra.mxu0 0.0
        %2642 = vmatprep.subr.mxu0 0.0
        %2643 = vmatpush1.msra.mxu0 0.0
        %2644 = vmatprep.subr.mxu0 0.0
        %2645 = vmatpush1.msra.mxu0 0.0
        %2646 = vmatprep.subr.mxu0 0.0
        %2647 = vmatpush1.msra.mxu0 0.0
        %2648 = vmatprep.subr.mxu0 0.0
        %2649 = vmatpush1.msra.mxu0 0.0
        %2650 = vmatprep.subr.mxu0 0.0
        %2651 = vmatpush1.msra.mxu0 0.0
        %2652 = vmatprep.subr.mxu0 0.0
        %2653 = vmatpush1.msra.mxu0 0.0
        %2654 = vmatprep.subr.mxu0 0.0
        %2655 = vmatpush1.msra.mxu0 0.0
        %2656 = vmatprep.mubr.f32.mxu0 0.0
        %2657 = vmatmul.mubr.f32.gmra.mrb[0].mxu0 %v2581
        %v2658 = vpop.f32.mrb[0].mxu0
        %v2659 = vadd.f32 0.0, %v2658
        %v2660 = vpop.f32.mrb[0].mxu0
        %2661 = vmatprep.mubr.f32.mxu0 0.0
        %2662 = vmatmul.mubr.f32.gmra.mrb[0].mxu0 %v2584
        %v2663 = vpop.f32.mrb[0].mxu0
        %v2664 = vadd.f32 0.0, %v2663
        %v2665 = vpop.f32.mrb[0].mxu0
        %2666 = vmatprep.mubr.f32.mxu0 0.0
        %2667 = vmatmul.mubr.f32.gmra.mrb[0].mxu0 %v2587
        %v2668 = vpop.f32.mrb[0].mxu0
        %v2669 = vadd.f32 0.0, %v2668
        %v2670 = vpop.f32.mrb[0].mxu0
        %2671 = vmatprep.mubr.f32.mxu0 0.0
        %2672 = vmatmul.mubr.f32.gmra.mrb[0].mxu0 %v2590
        %v2673 = vpop.f32.mrb[0].mxu0
        %v2674 = vadd.f32 0.0, %v2673
        %v2675 = vpop.f32.mrb[0].mxu0
        %2676 = vdwg.mxu0
        %v2677 = vmul.f32 %v1919, %v1919
        %v2678 = vmul.f32 %v1924, %v1924
        %v2679 = vmul.f32 %v1929, %v1929
        %v2680 = vmul.f32 %v1934, %v1934
        %v2681 = vmul.f32 %v2101, %v2101
        %v2682 = vmul.f32 %v2106, %v2106
        %v2683 = vmul.f32 %v2111, %v2111
        %v2684 = vmul.f32 %v2116, %v2116
        %v2685 = vmul.f32 %v1919, %v2101
        %v2686 = vmul.f32 %v1924, %v2106
        %v2687 = vmul.f32 %v1929, %v2111
        %v2688 = vmul.f32 %v1934, %v2116
        %v2689 = vsub.f32 %v2287, %v2677
        %v2690 = vsub.f32 %v2292, %v2678
        %v2691 = vsub.f32 %v2297, %v2679
        %v2692 = vsub.f32 %v2302, %v2680
        %v2693 = vsub.f32 %v2473, %v2681
        %v2694 = vsub.f32 %v2478, %v2682
        %v2695 = vsub.f32 %v2483, %v2683
        %v2696 = vsub.f32 %v2488, %v2684
        %v2697 = vsub.f32 %v2659, %v2685
        %v2698 = vsub.f32 %v2664, %v2686
        %v2699 = vsub.f32 %v2669, %v2687
        %v2700 = vsub.f32 %v2674, %v2688
        %v2701 = vmul.f32 %v2685, 2.0
        %v2702 = vmul.f32 %v2686, 2.0
        %v2703 = vmul.f32 %v2687, 2.0
        %v2704 = vmul.f32 %v2688, 2.0
        %v2705 = vadd.f32 %v2701, 6.5025
        %v2706 = vadd.f32 %v2702, 6.5025
        %v2707 = vadd.f32 %v2703, 6.5025
        %v2708 = vadd.f32 %v2704, 6.5025
        %v2709 = vmul.f32 %v2697, 2.0
        %v2710 = vmul.f32 %v2698, 2.0
        %v2711 = vmul.f32 %v2699, 2.0
        %v2712 = vmul.f32 %v2700, 2.0
        %v2713 = vadd.f32 %v2709, 58.5225
        %v2714 = vadd.f32 %v2710, 58.5225
        %v2715 = vadd.f32 %v2711, 58.5225
        %v2716 = vadd.f32 %v2712, 58.5225
        %v2717 = vmul.f32 %v2705, %v2713
        %v2718 = vmul.f32 %v2706, %v2714
        %v2719 = vmul.f32 %v2707, %v2715
        %v2720 = vmul.f32 %v2708, %v2716
        %v2721 = vadd.f32 %v2677, %v2681
        %v2722 = vadd.f32 %v2678, %v2682
        %v2723 = vadd.f32 %v2679, %v2683
        %v2724 = vadd.f32 %v2680, %v2684
        %v2725 = vadd.f32 %v2721, 6.5025
        %v2726 = vadd.f32 %v2722, 6.5025
        %v2727 = vadd.f32 %v2723, 6.5025
        %v2728 = vadd.f32 %v2724, 6.5025
        %v2729 = vadd.f32 %v2689, %v2693
        %v2730 = vadd.f32 %v2690, %v2694
        %v2731 = vadd.f32 %v2691, %v2695
        %v2732 = vadd.f32 %v2692, %v2696
        %v2733 = vadd.f32 %v2729, 58.5225
        %v2734 = vadd.f32 %v2730, 58.5225
        %v2735 = vadd.f32 %v2731, 58.5225
        %v2736 = vadd.f32 %v2732, 58.5225
        %v2737 = vmul.f32 %v2725, %v2733
        %v2738 = vmul.f32 %v2726, %v2734
        %v2739 = vmul.f32 %v2727, %v2735
        %v2740 = vmul.f32 %v2728, %v2736
        %v2741 = vrcp.pop %v2737
        %v2742 = vrcp.pop %v2738
        %v2743 = vrcp.pop %v2739
        %v2744 = vrcp.pop %v2740
        %v2745 = vmul.f32 %v2717, %v2741
        %v2746 = vmul.f32 %v2718, %v2742
        %v2747 = vmul.f32 %v2719, %v2743
        %v2748 = vmul.f32 %v2720, %v2744
        %vm2749 = vcmp.lt.s32.totalorder %v307, 16
        %vm2750 = vcmp.lt.s32.totalorder %v308, 16
        %vm2751 = vcmp.lt.s32.totalorder %v309, 16
        %vm2752 = vcmp.lt.s32.totalorder %v310, 16
        %vm2753 = vcmp.lt.s32.totalorder %v312, 16
        %vm2754 = vmand %vm2749, %vm2753
        %vm2755 = vmand %vm2750, %vm2753
        %vm2756 = vmand %vm2751, %vm2753
        %vm2757 = vmand %vm2752, %vm2753
        %v2758 = vsel %vm2754, %v2745, 0.0
        %v2759 = vsel %vm2755, %v2746, 0.0
        %v2760 = vsel %vm2756, %v2747, 0.0
        %v2761 = vsel %vm2757, %v2748, 0.0
        %v2762 = vsel %vm321, %v2758, 0.0
        %v2763 = vsel %vm321, %v2759, 0.0
        %v2764 = vadd.f32 %v2762, %v2763
        %v2765 = vsel %vm321, %v2760, 0.0
        %v2766 = vadd.f32 %v2764, %v2765
        %v2767 = vsel %vm321, %v2761, 0.0
        %v2768 = vadd.f32 %v2766, %v2767
        %2769 = vadd.xlane.f32.xlu0 %v2768
        %v2770 = vpop.xlane.xlu0 %2769
        %v2771 = vrot.slane %v2770, 4
        %v2772 = vadd.f32 %v2770, %v2771
        %v2773 = vrot.slane %v2772, 2
        %v2774 = vadd.f32 %v2772, %v2773
        %v2775 = vrot.slane %v2774, 1
        %v2776 = vadd.f32 %v2774, %v2775
        %s2777 = vtos %v2776
        %s2778 = smul.f32 %s2777, 0.00390625
        %vm2779 = vcmp.eq.s32.totalorder %v312, 1
        %v2780 = vstv %s2778
        %v2781 = vsel %vm2779, %v2780, 0.0
        %v2782 = vadd.f32 %v1348, %v2781
        %s2783 = scalar_lea.vmem [#allocation2], 32
        %v2784 = vld [vmem:[%s2783] sm:$0xff]
        %v2785 = vld [vmem:[%s2783 + $0x8] sm:$0xff]
        %v2786 = vld [vmem:[%s2783 + $0x10] sm:$0xff]
        %v2787 = vld [vmem:[%s2783 + $0x18] sm:$0xff]
        %s2788 = scalar_lea.vmem [#allocation4], 32
        %v2789 = vld [vmem:[%s2788] sm:$0xff]
        %v2790 = vld [vmem:[%s2788 + $0x8] sm:$0xff]
        %v2791 = vld [vmem:[%s2788 + $0x10] sm:$0xff]
        %v2792 = vld [vmem:[%s2788 + $0x18] sm:$0xff]
        %v2794 = vsel %vm321, %v2784, 0
        %v2797 = vsel %vm321, %v2785, 0
        %v2800 = vsel %vm321, %v2786, 0
        %v2803 = vsel %vm321, %v2787, 0
        %2805 = vmatprep.subr.mxu0 0.0
        %2806 = vmatpush1.msra.mxu0 %v1533
        %2807 = vmatprep.subr.mxu0 0.0
        %2808 = vmatpush1.msra.mxu0 %v1538
        %2809 = vmatprep.subr.mxu0 0.0
        %2810 = vmatpush1.msra.mxu0 %v1543
        %2811 = vmatprep.subr.mxu0 0.0
        %2812 = vmatpush1.msra.mxu0 %v1548
        %2813 = vmatprep.subr.mxu0 0.0
        %2814 = vmatpush1.msra.mxu0 0.0
        %2815 = vmatprep.subr.mxu0 0.0
        %2816 = vmatpush1.msra.mxu0 0.0
        %2817 = vmatprep.subr.mxu0 0.0
        %2818 = vmatpush1.msra.mxu0 0.0
        %2819 = vmatprep.subr.mxu0 0.0
        %2820 = vmatpush1.msra.mxu0 0.0
        %2821 = vmatprep.subr.mxu0 0.0
        %2822 = vmatpush1.msra.mxu0 0.0
        %2823 = vmatprep.subr.mxu0 0.0
        %2824 = vmatpush1.msra.mxu0 0.0
        %2825 = vmatprep.subr.mxu0 0.0
        %2826 = vmatpush1.msra.mxu0 0.0
        %2827 = vmatprep.subr.mxu0 0.0
        %2828 = vmatpush1.msra.mxu0 0.0
        %2829 = vmatprep.subr.mxu0 0.0
        %2830 = vmatpush1.msra.mxu0 0.0
        %2831 = vmatprep.subr.mxu0 0.0
        %2832 = vmatpush1.msra.mxu0 0.0
        %2833 = vmatprep.subr.mxu0 0.0
        %2834 = vmatpush1.msra.mxu0 0.0
        %2835 = vmatprep.subr.mxu0 0.0
        %2836 = vmatpush1.msra.mxu0 0.0
        %2837 = vmatprep.subr.mxu0 0.0
        %2838 = vmatpush1.msra.mxu0 0.0
        %2839 = vmatprep.subr.mxu0 0.0
        %2840 = vmatpush1.msra.mxu0 0.0
        %2841 = vmatprep.subr.mxu0 0.0
        %2842 = vmatpush1.msra.mxu0 0.0
        %2843 = vmatprep.subr.mxu0 0.0
        %2844 = vmatpush1.msra.mxu0 0.0
        %2845 = vmatprep.subr.mxu0 0.0
        %2846 = vmatpush1.msra.mxu0 0.0
        %2847 = vmatprep.subr.mxu0 0.0
        %2848 = vmatpush1.msra.mxu0 0.0
        %2849 = vmatprep.subr.mxu0 0.0
        %2850 = vmatpush1.msra.mxu0 0.0
        %2851 = vmatprep.subr.mxu0 0.0
        %2852 = vmatpush1.msra.mxu0 0.0
        %2853 = vmatprep.subr.mxu0 0.0
        %2854 = vmatpush1.msra.mxu0 0.0
        %2855 = vmatprep.subr.mxu0 0.0
        %2856 = vmatpush1.msra.mxu0 0.0
        %2857 = vmatprep.subr.mxu0 0.0
        %2858 = vmatpush1.msra.mxu0 0.0
        %2859 = vmatprep.subr.mxu0 0.0
        %2860 = vmatpush1.msra.mxu0 0.0
        %2861 = vmatprep.subr.mxu0 0.0
        %2862 = vmatpush1.msra.mxu0 0.0
        %2863 = vmatprep.subr.mxu0 0.0
        %2864 = vmatpush1.msra.mxu0 0.0
        %2865 = vmatprep.subr.mxu0 0.0
        %2866 = vmatpush1.msra.mxu0 0.0
        %2867 = vmatprep.subr.mxu0 0.0
        %2868 = vmatpush1.msra.mxu0 0.0
        %2869 = vmatprep.mubr.f32.mxu0 0.0
        %2870 = vmatmul.mubr.f32.gmra.mrb[0].mxu0 %v2794
        %v2871 = vpop.f32.mrb[0].mxu0
        %v2872 = vadd.f32 0.0, %v2871
        %v2873 = vpop.f32.mrb[0].mxu0
        %2874 = vmatprep.mubr.f32.mxu0 0.0
        %2875 = vmatmul.mubr.f32.gmra.mrb[0].mxu0 %v2797
        %v2876 = vpop.f32.mrb[0].mxu0
        %v2877 = vadd.f32 0.0, %v2876
        %v2878 = vpop.f32.mrb[0].mxu0
        %2879 = vmatprep.mubr.f32.mxu0 0.0
        %2880 = vmatmul.mubr.f32.gmra.mrb[0].mxu0 %v2800
        %v2881 = vpop.f32.mrb[0].mxu0
        %v2882 = vadd.f32 0.0, %v2881
        %v2883 = vpop.f32.mrb[0].mxu0
        %2884 = vmatprep.mubr.f32.mxu0 0.0
        %2885 = vmatmul.mubr.f32.gmra.mrb[0].mxu0 %v2803
        %v2886 = vpop.f32.mrb[0].mxu0
        %v2887 = vadd.f32 0.0, %v2886
        %v2888 = vpop.f32.mrb[0].mxu0
        %2889 = vdwg.mxu0
        %v2891 = vsel %vm321, %v2872, 0
        %v2894 = vsel %vm321, %v2877, 0
        %v2897 = vsel %vm321, %v2882, 0
        %v2900 = vsel %vm321, %v2887, 0
        %2902 = vmatprep.subr.mxu0 0.0
        %2903 = vmatpush1.msra.mxu0 %v2789
        %2904 = vmatprep.subr.mxu0 0.0
        %2905 = vmatpush1.msra.mxu0 %v2790
        %2906 = vmatprep.subr.mxu0 0.0
        %2907 = vmatpush1.msra.mxu0 %v2791
        %2908 = vmatprep.subr.mxu0 0.0
        %2909 = vmatpush1.msra.mxu0 %v2792
        %2910 = vmatprep.subr.mxu0 0.0
        %2911 = vmatpush1.msra.mxu0 0.0
        %2912 = vmatprep.subr.mxu0 0.0
        %2913 = vmatpush1.msra.mxu0 0.0
        %2914 = vmatprep.subr.mxu0 0.0
        %2915 = vmatpush1.msra.mxu0 0.0
        %2916 = vmatprep.subr.mxu0 0.0
        %2917 = vmatpush1.msra.mxu0 0.0
        %2918 = vmatprep.subr.mxu0 0.0
        %2919 = vmatpush1.msra.mxu0 0.0
        %2920 = vmatprep.subr.mxu0 0.0
        %2921 = vmatpush1.msra.mxu0 0.0
        %2922 = vmatprep.subr.mxu0 0.0
        %2923 = vmatpush1.msra.mxu0 0.0
        %2924 = vmatprep.subr.mxu0 0.0
        %2925 = vmatpush1.msra.mxu0 0.0
        %2926 = vmatprep.subr.mxu0 0.0
        %2927 = vmatpush1.msra.mxu0 0.0
        %2928 = vmatprep.subr.mxu0 0.0
        %2929 = vmatpush1.msra.mxu0 0.0
        %2930 = vmatprep.subr.mxu0 0.0
        %2931 = vmatpush1.msra.mxu0 0.0
        %2932 = vmatprep.subr.mxu0 0.0
        %2933 = vmatpush1.msra.mxu0 0.0
        %2934 = vmatprep.subr.mxu0 0.0
        %2935 = vmatpush1.msra.mxu0 0.0
        %2936 = vmatprep.subr.mxu0 0.0
        %2937 = vmatpush1.msra.mxu0 0.0
        %2938 = vmatprep.subr.mxu0 0.0
        %2939 = vmatpush1.msra.mxu0 0.0
        %2940 = vmatprep.subr.mxu0 0.0
        %2941 = vmatpush1.msra.mxu0 0.0
        %2942 = vmatprep.subr.mxu0 0.0
        %2943 = vmatpush1.msra.mxu0 0.0
        %2944 = vmatprep.subr.mxu0 0.0
        %2945 = vmatpush1.msra.mxu0 0.0
        %2946 = vmatprep.subr.mxu0 0.0
        %2947 = vmatpush1.msra.mxu0 0.0
        %2948 = vmatprep.subr.mxu0 0.0
        %2949 = vmatpush1.msra.mxu0 0.0
        %2950 = vmatprep.subr.mxu0 0.0
        %2951 = vmatpush1.msra.mxu0 0.0
        %2952 = vmatprep.subr.mxu0 0.0
        %2953 = vmatpush1.msra.mxu0 0.0
        %2954 = vmatprep.subr.mxu0 0.0
        %2955 = vmatpush1.msra.mxu0 0.0
        %2956 = vmatprep.subr.mxu0 0.0
        %2957 = vmatpush1.msra.mxu0 0.0
        %2958 = vmatprep.subr.mxu0 0.0
        %2959 = vmatpush1.msra.mxu0 0.0
        %2960 = vmatprep.subr.mxu0 0.0
        %2961 = vmatpush1.msra.mxu0 0.0
        %2962 = vmatprep.subr.mxu0 0.0
        %2963 = vmatpush1.msra.mxu0 0.0
        %2964 = vmatprep.subr.mxu0 0.0
        %2965 = vmatpush1.msra.mxu0 0.0
        %2966 = vmatprep.mubr.f32.mxu0 0.0
        %2967 = vmatmul.mubr.f32.gmra.mrb[0].mxu0 %v2891
        %v2968 = vpop.f32.mrb[0].mxu0
        %v2969 = vadd.f32 0.0, %v2968
        %v2970 = vpop.f32.mrb[0].mxu0
        %2971 = vmatprep.mubr.f32.mxu0 0.0
        %2972 = vmatmul.mubr.f32.gmra.mrb[0].mxu0 %v2894
        %v2973 = vpop.f32.mrb[0].mxu0
        %v2974 = vadd.f32 0.0, %v2973
        %v2975 = vpop.f32.mrb[0].mxu0
        %2976 = vmatprep.mubr.f32.mxu0 0.0
        %2977 = vmatmul.mubr.f32.gmra.mrb[0].mxu0 %v2897
        %v2978 = vpop.f32.mrb[0].mxu0
        %v2979 = vadd.f32 0.0, %v2978
        %v2980 = vpop.f32.mrb[0].mxu0
        %2981 = vmatprep.mubr.f32.mxu0 0.0
        %2982 = vmatmul.mubr.f32.gmra.mrb[0].mxu0 %v2900
        %v2983 = vpop.f32.mrb[0].mxu0
        %v2984 = vadd.f32 0.0, %v2983
        %v2985 = vpop.f32.mrb[0].mxu0
        %2986 = vdwg.mxu0
        %2987 = vmatprep.subr.mxu0 0.0
        %2988 = vmatpush1.msra.mxu0 %v1715
        %2989 = vmatprep.subr.mxu0 0.0
        %2990 = vmatpush1.msra.mxu0 %v1720
        %2991 = vmatprep.subr.mxu0 0.0
        %2992 = vmatpush1.msra.mxu0 %v1725
        %2993 = vmatprep.subr.mxu0 0.0
        %2994 = vmatpush1.msra.mxu0 %v1730
        %2995 = vmatprep.subr.mxu0 0.0
        %2996 = vmatpush1.msra.mxu0 0.0
        %2997 = vmatprep.subr.mxu0 0.0
        %2998 = vmatpush1.msra.mxu0 0.0
        %2999 = vmatprep.subr.mxu0 0.0
        %3000 = vmatpush1.msra.mxu0 0.0
        %3001 = vmatprep.subr.mxu0 0.0
        %3002 = vmatpush1.msra.mxu0 0.0
        %3003 = vmatprep.subr.mxu0 0.0
        %3004 = vmatpush1.msra.mxu0 0.0
        %3005 = vmatprep.subr.mxu0 0.0
        %3006 = vmatpush1.msra.mxu0 0.0
        %3007 = vmatprep.subr.mxu0 0.0
        %3008 = vmatpush1.msra.mxu0 0.0
        %3009 = vmatprep.subr.mxu0 0.0
        %3010 = vmatpush1.msra.mxu0 0.0
        %3011 = vmatprep.subr.mxu0 0.0
        %3012 = vmatpush1.msra.mxu0 0.0
        %3013 = vmatprep.subr.mxu0 0.0
        %3014 = vmatpush1.msra.mxu0 0.0
        %3015 = vmatprep.subr.mxu0 0.0
        %3016 = vmatpush1.msra.mxu0 0.0
        %3017 = vmatprep.subr.mxu0 0.0
        %3018 = vmatpush1.msra.mxu0 0.0
        %3019 = vmatprep.subr.mxu0 0.0
        %3020 = vmatpush1.msra.mxu0 0.0
        %3021 = vmatprep.subr.mxu0 0.0
        %3022 = vmatpush1.msra.mxu0 0.0
        %3023 = vmatprep.subr.mxu0 0.0
        %3024 = vmatpush1.msra.mxu0 0.0
        %3025 = vmatprep.subr.mxu0 0.0
        %3026 = vmatpush1.msra.mxu0 0.0
        %3027 = vmatprep.subr.mxu0 0.0
        %3028 = vmatpush1.msra.mxu0 0.0
        %3029 = vmatprep.subr.mxu0 0.0
        %3030 = vmatpush1.msra.mxu0 0.0
        %3031 = vmatprep.subr.mxu0 0.0
        %3032 = vmatpush1.msra.mxu0 0.0
        %3033 = vmatprep.subr.mxu0 0.0
        %3034 = vmatpush1.msra.mxu0 0.0
        %3035 = vmatprep.subr.mxu0 0.0
        %3036 = vmatpush1.msra.mxu0 0.0
        %3037 = vmatprep.subr.mxu0 0.0
        %3038 = vmatpush1.msra.mxu0 0.0
        %3039 = vmatprep.subr.mxu0 0.0
        %3040 = vmatpush1.msra.mxu0 0.0
        %3041 = vmatprep.subr.mxu0 0.0
        %3042 = vmatpush1.msra.mxu0 0.0
        %3043 = vmatprep.subr.mxu0 0.0
        %3044 = vmatpush1.msra.mxu0 0.0
        %3045 = vmatprep.subr.mxu0 0.0
        %3046 = vmatpush1.msra.mxu0 0.0
        %3047 = vmatprep.subr.mxu0 0.0
        %3048 = vmatpush1.msra.mxu0 0.0
        %3049 = vmatprep.subr.mxu0 0.0
        %3050 = vmatpush1.msra.mxu0 0.0
        %3051 = vmatprep.mubr.f32.mxu0 0.0
        %3052 = vmatmul.mubr.f32.gmra.mrb[0].mxu0 %v2794
        %v3053 = vpop.f32.mrb[0].mxu0
        %v3054 = vadd.f32 0.0, %v3053
        %v3055 = vpop.f32.mrb[0].mxu0
        %3056 = vmatprep.mubr.f32.mxu0 0.0
        %3057 = vmatmul.mubr.f32.gmra.mrb[0].mxu0 %v2797
        %v3058 = vpop.f32.mrb[0].mxu0
        %v3059 = vadd.f32 0.0, %v3058
        %v3060 = vpop.f32.mrb[0].mxu0
        %3061 = vmatprep.mubr.f32.mxu0 0.0
        %3062 = vmatmul.mubr.f32.gmra.mrb[0].mxu0 %v2800
        %v3063 = vpop.f32.mrb[0].mxu0
        %v3064 = vadd.f32 0.0, %v3063
        %v3065 = vpop.f32.mrb[0].mxu0
        %3066 = vmatprep.mubr.f32.mxu0 0.0
        %3067 = vmatmul.mubr.f32.gmra.mrb[0].mxu0 %v2803
        %v3068 = vpop.f32.mrb[0].mxu0
        %v3069 = vadd.f32 0.0, %v3068
        %v3070 = vpop.f32.mrb[0].mxu0
        %3071 = vdwg.mxu0
        %v3073 = vsel %vm321, %v3054, 0
        %v3076 = vsel %vm321, %v3059, 0
        %v3079 = vsel %vm321, %v3064, 0
        %v3082 = vsel %vm321, %v3069, 0
        %3084 = vmatprep.subr.mxu0 0.0
        %3085 = vmatpush1.msra.mxu0 %v2789
        %3086 = vmatprep.subr.mxu0 0.0
        %3087 = vmatpush1.msra.mxu0 %v2790
        %3088 = vmatprep.subr.mxu0 0.0
        %3089 = vmatpush1.msra.mxu0 %v2791
        %3090 = vmatprep.subr.mxu0 0.0
        %3091 = vmatpush1.msra.mxu0 %v2792
        %3092 = vmatprep.subr.mxu0 0.0
        %3093 = vmatpush1.msra.mxu0 0.0
        %3094 = vmatprep.subr.mxu0 0.0
        %3095 = vmatpush1.msra.mxu0 0.0
        %3096 = vmatprep.subr.mxu0 0.0
        %3097 = vmatpush1.msra.mxu0 0.0
        %3098 = vmatprep.subr.mxu0 0.0
        %3099 = vmatpush1.msra.mxu0 0.0
        %3100 = vmatprep.subr.mxu0 0.0
        %3101 = vmatpush1.msra.mxu0 0.0
        %3102 = vmatprep.subr.mxu0 0.0
        %3103 = vmatpush1.msra.mxu0 0.0
        %3104 = vmatprep.subr.mxu0 0.0
        %3105 = vmatpush1.msra.mxu0 0.0
        %3106 = vmatprep.subr.mxu0 0.0
        %3107 = vmatpush1.msra.mxu0 0.0
        %3108 = vmatprep.subr.mxu0 0.0
        %3109 = vmatpush1.msra.mxu0 0.0
        %3110 = vmatprep.subr.mxu0 0.0
        %3111 = vmatpush1.msra.mxu0 0.0
        %3112 = vmatprep.subr.mxu0 0.0
        %3113 = vmatpush1.msra.mxu0 0.0
        %3114 = vmatprep.subr.mxu0 0.0
        %3115 = vmatpush1.msra.mxu0 0.0
        %3116 = vmatprep.subr.mxu0 0.0
        %3117 = vmatpush1.msra.mxu0 0.0
        %3118 = vmatprep.subr.mxu0 0.0
        %3119 = vmatpush1.msra.mxu0 0.0
        %3120 = vmatprep.subr.mxu0 0.0
        %3121 = vmatpush1.msra.mxu0 0.0
        %3122 = vmatprep.subr.mxu0 0.0
        %3123 = vmatpush1.msra.mxu0 0.0
        %3124 = vmatprep.subr.mxu0 0.0
        %3125 = vmatpush1.msra.mxu0 0.0
        %3126 = vmatprep.subr.mxu0 0.0
        %3127 = vmatpush1.msra.mxu0 0.0
        %3128 = vmatprep.subr.mxu0 0.0
        %3129 = vmatpush1.msra.mxu0 0.0
        %3130 = vmatprep.subr.mxu0 0.0
        %3131 = vmatpush1.msra.mxu0 0.0
        %3132 = vmatprep.subr.mxu0 0.0
        %3133 = vmatpush1.msra.mxu0 0.0
        %3134 = vmatprep.subr.mxu0 0.0
        %3135 = vmatpush1.msra.mxu0 0.0
        %3136 = vmatprep.subr.mxu0 0.0
        %3137 = vmatpush1.msra.mxu0 0.0
        %3138 = vmatprep.subr.mxu0 0.0
        %3139 = vmatpush1.msra.mxu0 0.0
        %3140 = vmatprep.subr.mxu0 0.0
        %3141 = vmatpush1.msra.mxu0 0.0
        %3142 = vmatprep.subr.mxu0 0.0
        %3143 = vmatpush1.msra.mxu0 0.0
        %3144 = vmatprep.subr.mxu0 0.0
        %3145 = vmatpush1.msra.mxu0 0.0
        %3146 = vmatprep.subr.mxu0 0.0
        %3147 = vmatpush1.msra.mxu0 0.0
        %3148 = vmatprep.mubr.f32.mxu0 0.0
        %3149 = vmatmul.mubr.f32.gmra.mrb[0].mxu0 %v3073
        %v3150 = vpop.f32.mrb[0].mxu0
        %v3151 = vadd.f32 0.0, %v3150
        %v3152 = vpop.f32.mrb[0].mxu0
        %3153 = vmatprep.mubr.f32.mxu0 0.0
        %3154 = vmatmul.mubr.f32.gmra.mrb[0].mxu0 %v3076
        %v3155 = vpop.f32.mrb[0].mxu0
        %v3156 = vadd.f32 0.0, %v3155
        %v3157 = vpop.f32.mrb[0].mxu0
        %3158 = vmatprep.mubr.f32.mxu0 0.0
        %3159 = vmatmul.mubr.f32.gmra.mrb[0].mxu0 %v3079
        %v3160 = vpop.f32.mrb[0].mxu0
        %v3161 = vadd.f32 0.0, %v3160
        %v3162 = vpop.f32.mrb[0].mxu0
        %3163 = vmatprep.mubr.f32.mxu0 0.0
        %3164 = vmatmul.mubr.f32.gmra.mrb[0].mxu0 %v3082
        %v3165 = vpop.f32.mrb[0].mxu0
        %v3166 = vadd.f32 0.0, %v3165
        %v3167 = vpop.f32.mrb[0].mxu0
        %3168 = vdwg.mxu0
        %s3169 = scalar_lea.vmem %s2, 64
        %v3170 = vld [vmem:[%s3169] sm:$0xff]
        %v3171 = vld [vmem:[%s3169 + $0x8] sm:$0xff]
        %v3172 = vld [vmem:[%s3169 + $0x10] sm:$0xff]
        %v3173 = vld [vmem:[%s3169 + $0x18] sm:$0xff]
        %s3174 = scalar_lea.vmem %s3, 64
        %v3175 = vld [vmem:[%s3174] sm:$0xff]
        %v3176 = vld [vmem:[%s3174 + $0x8] sm:$0xff]
        %v3177 = vld [vmem:[%s3174 + $0x10] sm:$0xff]
        %v3178 = vld [vmem:[%s3174 + $0x18] sm:$0xff]
        %v3180 = vsel %vm321, %v3170, 0
        %v3183 = vsel %vm321, %v3171, 0
        %v3186 = vsel %vm321, %v3172, 0
        %v3189 = vsel %vm321, %v3173, 0
        %3191 = vmatprep.subr.mxu0 0.0
        %3192 = vmatpush1.msra.mxu0 %v2969
        %3193 = vmatprep.subr.mxu0 0.0
        %3194 = vmatpush1.msra.mxu0 %v2974
        %3195 = vmatprep.subr.mxu0 0.0
        %3196 = vmatpush1.msra.mxu0 %v2979
        %3197 = vmatprep.subr.mxu0 0.0
        %3198 = vmatpush1.msra.mxu0 %v2984
        %3199 = vmatprep.subr.mxu0 0.0
        %3200 = vmatpush1.msra.mxu0 0.0
        %3201 = vmatprep.subr.mxu0 0.0
        %3202 = vmatpush1.msra.mxu0 0.0
        %3203 = vmatprep.subr.mxu0 0.0
        %3204 = vmatpush1.msra.mxu0 0.0
        %3205 = vmatprep.subr.mxu0 0.0
        %3206 = vmatpush1.msra.mxu0 0.0
        %3207 = vmatprep.subr.mxu0 0.0
        %3208 = vmatpush1.msra.mxu0 0.0
        %3209 = vmatprep.subr.mxu0 0.0
        %3210 = vmatpush1.msra.mxu0 0.0
        %3211 = vmatprep.subr.mxu0 0.0
        %3212 = vmatpush1.msra.mxu0 0.0
        %3213 = vmatprep.subr.mxu0 0.0
        %3214 = vmatpush1.msra.mxu0 0.0
        %3215 = vmatprep.subr.mxu0 0.0
        %3216 = vmatpush1.msra.mxu0 0.0
        %3217 = vmatprep.subr.mxu0 0.0
        %3218 = vmatpush1.msra.mxu0 0.0
        %3219 = vmatprep.subr.mxu0 0.0
        %3220 = vmatpush1.msra.mxu0 0.0
        %3221 = vmatprep.subr.mxu0 0.0
        %3222 = vmatpush1.msra.mxu0 0.0
        %3223 = vmatprep.subr.mxu0 0.0
        %3224 = vmatpush1.msra.mxu0 0.0
        %3225 = vmatprep.subr.mxu0 0.0
        %3226 = vmatpush1.msra.mxu0 0.0
        %3227 = vmatprep.subr.mxu0 0.0
        %3228 = vmatpush1.msra.mxu0 0.0
        %3229 = vmatprep.subr.mxu0 0.0
        %3230 = vmatpush1.msra.mxu0 0.0
        %3231 = vmatprep.subr.mxu0 0.0
        %3232 = vmatpush1.msra.mxu0 0.0
        %3233 = vmatprep.subr.mxu0 0.0
        %3234 = vmatpush1.msra.mxu0 0.0
        %3235 = vmatprep.subr.mxu0 0.0
        %3236 = vmatpush1.msra.mxu0 0.0
        %3237 = vmatprep.subr.mxu0 0.0
        %3238 = vmatpush1.msra.mxu0 0.0
        %3239 = vmatprep.subr.mxu0 0.0
        %3240 = vmatpush1.msra.mxu0 0.0
        %3241 = vmatprep.subr.mxu0 0.0
        %3242 = vmatpush1.msra.mxu0 0.0
        %3243 = vmatprep.subr.mxu0 0.0
        %3244 = vmatpush1.msra.mxu0 0.0
        %3245 = vmatprep.subr.mxu0 0.0
        %3246 = vmatpush1.msra.mxu0 0.0
        %3247 = vmatprep.subr.mxu0 0.0
        %3248 = vmatpush1.msra.mxu0 0.0
        %3249 = vmatprep.subr.mxu0 0.0
        %3250 = vmatpush1.msra.mxu0 0.0
        %3251 = vmatprep.subr.mxu0 0.0
        %3252 = vmatpush1.msra.mxu0 0.0
        %3253 = vmatprep.subr.mxu0 0.0
        %3254 = vmatpush1.msra.mxu0 0.0
        %3255 = vmatprep.mubr.f32.mxu0 0.0
        %3256 = vmatmul.mubr.f32.gmra.mrb[0].mxu0 %v3180
        %v3257 = vpop.f32.mrb[0].mxu0
        %v3258 = vadd.f32 0.0, %v3257
        %v3259 = vpop.f32.mrb[0].mxu0
        %3260 = vmatprep.mubr.f32.mxu0 0.0
        %3261 = vmatmul.mubr.f32.gmra.mrb[0].mxu0 %v3183
        %v3262 = vpop.f32.mrb[0].mxu0
        %v3263 = vadd.f32 0.0, %v3262
        %v3264 = vpop.f32.mrb[0].mxu0
        %3265 = vmatprep.mubr.f32.mxu0 0.0
        %3266 = vmatmul.mubr.f32.gmra.mrb[0].mxu0 %v3186
        %v3267 = vpop.f32.mrb[0].mxu0
        %v3268 = vadd.f32 0.0, %v3267
        %v3269 = vpop.f32.mrb[0].mxu0
        %3270 = vmatprep.mubr.f32.mxu0 0.0
        %3271 = vmatmul.mubr.f32.gmra.mrb[0].mxu0 %v3189
        %v3272 = vpop.f32.mrb[0].mxu0
        %v3273 = vadd.f32 0.0, %v3272
        %v3274 = vpop.f32.mrb[0].mxu0
        %3275 = vdwg.mxu0
        %v3277 = vsel %vm321, %v3258, 0
        %v3280 = vsel %vm321, %v3263, 0
        %v3283 = vsel %vm321, %v3268, 0
        %v3286 = vsel %vm321, %v3273, 0
        %3288 = vmatprep.subr.mxu0 0.0
        %3289 = vmatpush1.msra.mxu0 %v3175
        %3290 = vmatprep.subr.mxu0 0.0
        %3291 = vmatpush1.msra.mxu0 %v3176
        %3292 = vmatprep.subr.mxu0 0.0
        %3293 = vmatpush1.msra.mxu0 %v3177
        %3294 = vmatprep.subr.mxu0 0.0
        %3295 = vmatpush1.msra.mxu0 %v3178
        %3296 = vmatprep.subr.mxu0 0.0
        %3297 = vmatpush1.msra.mxu0 0.0
        %3298 = vmatprep.subr.mxu0 0.0
        %3299 = vmatpush1.msra.mxu0 0.0
        %3300 = vmatprep.subr.mxu0 0.0
        %3301 = vmatpush1.msra.mxu0 0.0
        %3302 = vmatprep.subr.mxu0 0.0
        %3303 = vmatpush1.msra.mxu0 0.0
        %3304 = vmatprep.subr.mxu0 0.0
        %3305 = vmatpush1.msra.mxu0 0.0
        %3306 = vmatprep.subr.mxu0 0.0
        %3307 = vmatpush1.msra.mxu0 0.0
        %3308 = vmatprep.subr.mxu0 0.0
        %3309 = vmatpush1.msra.mxu0 0.0
        %3310 = vmatprep.subr.mxu0 0.0
        %3311 = vmatpush1.msra.mxu0 0.0
        %3312 = vmatprep.subr.mxu0 0.0
        %3313 = vmatpush1.msra.mxu0 0.0
        %3314 = vmatprep.subr.mxu0 0.0
        %3315 = vmatpush1.msra.mxu0 0.0
        %3316 = vmatprep.subr.mxu0 0.0
        %3317 = vmatpush1.msra.mxu0 0.0
        %3318 = vmatprep.subr.mxu0 0.0
        %3319 = vmatpush1.msra.mxu0 0.0
        %3320 = vmatprep.subr.mxu0 0.0
        %3321 = vmatpush1.msra.mxu0 0.0
        %3322 = vmatprep.subr.mxu0 0.0
        %3323 = vmatpush1.msra.mxu0 0.0
        %3324 = vmatprep.subr.mxu0 0.0
        %3325 = vmatpush1.msra.mxu0 0.0
        %3326 = vmatprep.subr.mxu0 0.0
        %3327 = vmatpush1.msra.mxu0 0.0
        %3328 = vmatprep.subr.mxu0 0.0
        %3329 = vmatpush1.msra.mxu0 0.0
        %3330 = vmatprep.subr.mxu0 0.0
        %3331 = vmatpush1.msra.mxu0 0.0
        %3332 = vmatprep.subr.mxu0 0.0
        %3333 = vmatpush1.msra.mxu0 0.0
        %3334 = vmatprep.subr.mxu0 0.0
        %3335 = vmatpush1.msra.mxu0 0.0
        %3336 = vmatprep.subr.mxu0 0.0
        %3337 = vmatpush1.msra.mxu0 0.0
        %3338 = vmatprep.subr.mxu0 0.0
        %3339 = vmatpush1.msra.mxu0 0.0
        %3340 = vmatprep.subr.mxu0 0.0
        %3341 = vmatpush1.msra.mxu0 0.0
        %3342 = vmatprep.subr.mxu0 0.0
        %3343 = vmatpush1.msra.mxu0 0.0
        %3344 = vmatprep.subr.mxu0 0.0
        %3345 = vmatpush1.msra.mxu0 0.0
        %3346 = vmatprep.subr.mxu0 0.0
        %3347 = vmatpush1.msra.mxu0 0.0
        %3348 = vmatprep.subr.mxu0 0.0
        %3349 = vmatpush1.msra.mxu0 0.0
        %3350 = vmatprep.subr.mxu0 0.0
        %3351 = vmatpush1.msra.mxu0 0.0
        %3352 = vmatprep.mubr.f32.mxu0 0.0
        %3353 = vmatmul.mubr.f32.gmra.mrb[0].mxu0 %v3277
        %v3354 = vpop.f32.mrb[0].mxu0
        %v3355 = vadd.f32 0.0, %v3354
        %v3356 = vpop.f32.mrb[0].mxu0
        %3357 = vmatprep.mubr.f32.mxu0 0.0
        %3358 = vmatmul.mubr.f32.gmra.mrb[0].mxu0 %v3280
        %v3359 = vpop.f32.mrb[0].mxu0
        %v3360 = vadd.f32 0.0, %v3359
        %v3361 = vpop.f32.mrb[0].mxu0
        %3362 = vmatprep.mubr.f32.mxu0 0.0
        %3363 = vmatmul.mubr.f32.gmra.mrb[0].mxu0 %v3283
        %v3364 = vpop.f32.mrb[0].mxu0
        %v3365 = vadd.f32 0.0, %v3364
        %v3366 = vpop.f32.mrb[0].mxu0
        %3367 = vmatprep.mubr.f32.mxu0 0.0
        %3368 = vmatmul.mubr.f32.gmra.mrb[0].mxu0 %v3286
        %v3369 = vpop.f32.mrb[0].mxu0
        %v3370 = vadd.f32 0.0, %v3369
        %v3371 = vpop.f32.mrb[0].mxu0
        %3372 = vdwg.mxu0
        %3373 = vmatprep.subr.mxu0 0.0
        %3374 = vmatpush1.msra.mxu0 %v3151
        %3375 = vmatprep.subr.mxu0 0.0
        %3376 = vmatpush1.msra.mxu0 %v3156
        %3377 = vmatprep.subr.mxu0 0.0
        %3378 = vmatpush1.msra.mxu0 %v3161
        %3379 = vmatprep.subr.mxu0 0.0
        %3380 = vmatpush1.msra.mxu0 %v3166
        %3381 = vmatprep.subr.mxu0 0.0
        %3382 = vmatpush1.msra.mxu0 0.0
        %3383 = vmatprep.subr.mxu0 0.0
        %3384 = vmatpush1.msra.mxu0 0.0
        %3385 = vmatprep.subr.mxu0 0.0
        %3386 = vmatpush1.msra.mxu0 0.0
        %3387 = vmatprep.subr.mxu0 0.0
        %3388 = vmatpush1.msra.mxu0 0.0
        %3389 = vmatprep.subr.mxu0 0.0
        %3390 = vmatpush1.msra.mxu0 0.0
        %3391 = vmatprep.subr.mxu0 0.0
        %3392 = vmatpush1.msra.mxu0 0.0
        %3393 = vmatprep.subr.mxu0 0.0
        %3394 = vmatpush1.msra.mxu0 0.0
        %3395 = vmatprep.subr.mxu0 0.0
        %3396 = vmatpush1.msra.mxu0 0.0
        %3397 = vmatprep.subr.mxu0 0.0
        %3398 = vmatpush1.msra.mxu0 0.0
        %3399 = vmatprep.subr.mxu0 0.0
        %3400 = vmatpush1.msra.mxu0 0.0
        %3401 = vmatprep.subr.mxu0 0.0
        %3402 = vmatpush1.msra.mxu0 0.0
        %3403 = vmatprep.subr.mxu0 0.0
        %3404 = vmatpush1.msra.mxu0 0.0
        %3405 = vmatprep.subr.mxu0 0.0
        %3406 = vmatpush1.msra.mxu0 0.0
        %3407 = vmatprep.subr.mxu0 0.0
        %3408 = vmatpush1.msra.mxu0 0.0
        %3409 = vmatprep.subr.mxu0 0.0
        %3410 = vmatpush1.msra.mxu0 0.0
        %3411 = vmatprep.subr.mxu0 0.0
        %3412 = vmatpush1.msra.mxu0 0.0
        %3413 = vmatprep.subr.mxu0 0.0
        %3414 = vmatpush1.msra.mxu0 0.0
        %3415 = vmatprep.subr.mxu0 0.0
        %3416 = vmatpush1.msra.mxu0 0.0
        %3417 = vmatprep.subr.mxu0 0.0
        %3418 = vmatpush1.msra.mxu0 0.0
        %3419 = vmatprep.subr.mxu0 0.0
        %3420 = vmatpush1.msra.mxu0 0.0
        %3421 = vmatprep.subr.mxu0 0.0
        %3422 = vmatpush1.msra.mxu0 0.0
        %3423 = vmatprep.subr.mxu0 0.0
        %3424 = vmatpush1.msra.mxu0 0.0
        %3425 = vmatprep.subr.mxu0 0.0
        %3426 = vmatpush1.msra.mxu0 0.0
        %3427 = vmatprep.subr.mxu0 0.0
        %3428 = vmatpush1.msra.mxu0 0.0
        %3429 = vmatprep.subr.mxu0 0.0
        %3430 = vmatpush1.msra.mxu0 0.0
        %3431 = vmatprep.subr.mxu0 0.0
        %3432 = vmatpush1.msra.mxu0 0.0
        %3433 = vmatprep.subr.mxu0 0.0
        %3434 = vmatpush1.msra.mxu0 0.0
        %3435 = vmatprep.subr.mxu0 0.0
        %3436 = vmatpush1.msra.mxu0 0.0
        %3437 = vmatprep.mubr.f32.mxu0 0.0
        %3438 = vmatmul.mubr.f32.gmra.mrb[0].mxu0 %v3180
        %v3439 = vpop.f32.mrb[0].mxu0
        %v3440 = vadd.f32 0.0, %v3439
        %v3441 = vpop.f32.mrb[0].mxu0
        %3442 = vmatprep.mubr.f32.mxu0 0.0
        %3443 = vmatmul.mubr.f32.gmra.mrb[0].mxu0 %v3183
        %v3444 = vpop.f32.mrb[0].mxu0
        %v3445 = vadd.f32 0.0, %v3444
        %v3446 = vpop.f32.mrb[0].mxu0
        %3447 = vmatprep.mubr.f32.mxu0 0.0
        %3448 = vmatmul.mubr.f32.gmra.mrb[0].mxu0 %v3186
        %v3449 = vpop.f32.mrb[0].mxu0
        %v3450 = vadd.f32 0.0, %v3449
        %v3451 = vpop.f32.mrb[0].mxu0
        %3452 = vmatprep.mubr.f32.mxu0 0.0
        %3453 = vmatmul.mubr.f32.gmra.mrb[0].mxu0 %v3189
        %v3454 = vpop.f32.mrb[0].mxu0
        %v3455 = vadd.f32 0.0, %v3454
        %v3456 = vpop.f32.mrb[0].mxu0
        %3457 = vdwg.mxu0
        %v3459 = vsel %vm321, %v3440, 0
        %v3462 = vsel %vm321, %v3445, 0
        %v3465 = vsel %vm321, %v3450, 0
        %v3468 = vsel %vm321, %v3455, 0
        %3470 = vmatprep.subr.mxu0 0.0
        %3471 = vmatpush1.msra.mxu0 %v3175
        %3472 = vmatprep.subr.mxu0 0.0
        %3473 = vmatpush1.msra.mxu0 %v3176
        %3474 = vmatprep.subr.mxu0 0.0
        %3475 = vmatpush1.msra.mxu0 %v3177
        %3476 = vmatprep.subr.mxu0 0.0
        %3477 = vmatpush1.msra.mxu0 %v3178
        %3478 = vmatprep.subr.mxu0 0.0
        %3479 = vmatpush1.msra.mxu0 0.0
        %3480 = vmatprep.subr.mxu0 0.0
        %3481 = vmatpush1.msra.mxu0 0.0
        %3482 = vmatprep.subr.mxu0 0.0
        %3483 = vmatpush1.msra.mxu0 0.0
        %3484 = vmatprep.subr.mxu0 0.0
        %3485 = vmatpush1.msra.mxu0 0.0
        %3486 = vmatprep.subr.mxu0 0.0
        %3487 = vmatpush1.msra.mxu0 0.0
        %3488 = vmatprep.subr.mxu0 0.0
        %3489 = vmatpush1.msra.mxu0 0.0
        %3490 = vmatprep.subr.mxu0 0.0
        %3491 = vmatpush1.msra.mxu0 0.0
        %3492 = vmatprep.subr.mxu0 0.0
        %3493 = vmatpush1.msra.mxu0 0.0
        %3494 = vmatprep.subr.mxu0 0.0
        %3495 = vmatpush1.msra.mxu0 0.0
        %3496 = vmatprep.subr.mxu0 0.0
        %3497 = vmatpush1.msra.mxu0 0.0
        %3498 = vmatprep.subr.mxu0 0.0
        %3499 = vmatpush1.msra.mxu0 0.0
        %3500 = vmatprep.subr.mxu0 0.0
        %3501 = vmatpush1.msra.mxu0 0.0
        %3502 = vmatprep.subr.mxu0 0.0
        %3503 = vmatpush1.msra.mxu0 0.0
        %3504 = vmatprep.subr.mxu0 0.0
        %3505 = vmatpush1.msra.mxu0 0.0
        %3506 = vmatprep.subr.mxu0 0.0
        %3507 = vmatpush1.msra.mxu0 0.0
        %3508 = vmatprep.subr.mxu0 0.0
        %3509 = vmatpush1.msra.mxu0 0.0
        %3510 = vmatprep.subr.mxu0 0.0
        %3511 = vmatpush1.msra.mxu0 0.0
        %3512 = vmatprep.subr.mxu0 0.0
        %3513 = vmatpush1.msra.mxu0 0.0
        %3514 = vmatprep.subr.mxu0 0.0
        %3515 = vmatpush1.msra.mxu0 0.0
        %3516 = vmatprep.subr.mxu0 0.0
        %3517 = vmatpush1.msra.mxu0 0.0
        %3518 = vmatprep.subr.mxu0 0.0
        %3519 = vmatpush1.msra.mxu0 0.0
        %3520 = vmatprep.subr.mxu0 0.0
        %3521 = vmatpush1.msra.mxu0 0.0
        %3522 = vmatprep.subr.mxu0 0.0
        %3523 = vmatpush1.msra.mxu0 0.0
        %3524 = vmatprep.subr.mxu0 0.0
        %3525 = vmatpush1.msra.mxu0 0.0
        %3526 = vmatprep.subr.mxu0 0.0
        %3527 = vmatpush1.msra.mxu0 0.0
        %3528 = vmatprep.subr.mxu0 0.0
        %3529 = vmatpush1.msra.mxu0 0.0
        %3530 = vmatprep.subr.mxu0 0.0
        %3531 = vmatpush1.msra.mxu0 0.0
        %3532 = vmatprep.subr.mxu0 0.0
        %3533 = vmatpush1.msra.mxu0 0.0
        %3534 = vmatprep.mubr.f32.mxu0 0.0
        %3535 = vmatmul.mubr.f32.gmra.mrb[0].mxu0 %v3459
        %v3536 = vpop.f32.mrb[0].mxu0
        %v3537 = vadd.f32 0.0, %v3536
        %v3538 = vpop.f32.mrb[0].mxu0
        %3539 = vmatprep.mubr.f32.mxu0 0.0
        %3540 = vmatmul.mubr.f32.gmra.mrb[0].mxu0 %v3462
        %v3541 = vpop.f32.mrb[0].mxu0
        %v3542 = vadd.f32 0.0, %v3541
        %v3543 = vpop.f32.mrb[0].mxu0
        %3544 = vmatprep.mubr.f32.mxu0 0.0
        %3545 = vmatmul.mubr.f32.gmra.mrb[0].mxu0 %v3465
        %v3546 = vpop.f32.mrb[0].mxu0
        %v3547 = vadd.f32 0.0, %v3546
        %v3548 = vpop.f32.mrb[0].mxu0
        %3549 = vmatprep.mubr.f32.mxu0 0.0
        %3550 = vmatmul.mubr.f32.gmra.mrb[0].mxu0 %v3468
        %v3551 = vpop.f32.mrb[0].mxu0
        %v3552 = vadd.f32 0.0, %v3551
        %v3553 = vpop.f32.mrb[0].mxu0
        %3554 = vdwg.mxu0
        %v3555 = vmul.f32 %v2969, %v2969
        %v3556 = vmul.f32 %v2974, %v2974
        %v3557 = vmul.f32 %v2979, %v2979
        %v3558 = vmul.f32 %v2984, %v2984
        %3559 = vmatprep.subr.mxu0 0.0
        %3560 = vmatpush1.msra.mxu0 %v3555
        %3561 = vmatprep.subr.mxu0 0.0
        %3562 = vmatpush1.msra.mxu0 %v3556
        %3563 = vmatprep.subr.mxu0 0.0
        %3564 = vmatpush1.msra.mxu0 %v3557
        %3565 = vmatprep.subr.mxu0 0.0
        %3566 = vmatpush1.msra.mxu0 %v3558
        %3567 = vmatprep.subr.mxu0 0.0
        %3568 = vmatpush1.msra.mxu0 0.0
        %3569 = vmatprep.subr.mxu0 0.0
        %3570 = vmatpush1.msra.mxu0 0.0
        %3571 = vmatprep.subr.mxu0 0.0
        %3572 = vmatpush1.msra.mxu0 0.0
        %3573 = vmatprep.subr.mxu0 0.0
        %3574 = vmatpush1.msra.mxu0 0.0
        %3575 = vmatprep.subr.mxu0 0.0
        %3576 = vmatpush1.msra.mxu0 0.0
        %3577 = vmatprep.subr.mxu0 0.0
        %3578 = vmatpush1.msra.mxu0 0.0
        %3579 = vmatprep.subr.mxu0 0.0
        %3580 = vmatpush1.msra.mxu0 0.0
        %3581 = vmatprep.subr.mxu0 0.0
        %3582 = vmatpush1.msra.mxu0 0.0
        %3583 = vmatprep.subr.mxu0 0.0
        %3584 = vmatpush1.msra.mxu0 0.0
        %3585 = vmatprep.subr.mxu0 0.0
        %3586 = vmatpush1.msra.mxu0 0.0
        %3587 = vmatprep.subr.mxu0 0.0
        %3588 = vmatpush1.msra.mxu0 0.0
        %3589 = vmatprep.subr.mxu0 0.0
        %3590 = vmatpush1.msra.mxu0 0.0
        %3591 = vmatprep.subr.mxu0 0.0
        %3592 = vmatpush1.msra.mxu0 0.0
        %3593 = vmatprep.subr.mxu0 0.0
        %3594 = vmatpush1.msra.mxu0 0.0
        %3595 = vmatprep.subr.mxu0 0.0
        %3596 = vmatpush1.msra.mxu0 0.0
        %3597 = vmatprep.subr.mxu0 0.0
        %3598 = vmatpush1.msra.mxu0 0.0
        %3599 = vmatprep.subr.mxu0 0.0
        %3600 = vmatpush1.msra.mxu0 0.0
        %3601 = vmatprep.subr.mxu0 0.0
        %3602 = vmatpush1.msra.mxu0 0.0
        %3603 = vmatprep.subr.mxu0 0.0
        %3604 = vmatpush1.msra.mxu0 0.0
        %3605 = vmatprep.subr.mxu0 0.0
        %3606 = vmatpush1.msra.mxu0 0.0
        %3607 = vmatprep.subr.mxu0 0.0
        %3608 = vmatpush1.msra.mxu0 0.0
        %3609 = vmatprep.subr.mxu0 0.0
        %3610 = vmatpush1.msra.mxu0 0.0
        %3611 = vmatprep.subr.mxu0 0.0
        %3612 = vmatpush1.msra.mxu0 0.0
        %3613 = vmatprep.subr.mxu0 0.0
        %3614 = vmatpush1.msra.mxu0 0.0
        %3615 = vmatprep.subr.mxu0 0.0
        %3616 = vmatpush1.msra.mxu0 0.0
        %3617 = vmatprep.subr.mxu0 0.0
        %3618 = vmatpush1.msra.mxu0 0.0
        %3619 = vmatprep.subr.mxu0 0.0
        %3620 = vmatpush1.msra.mxu0 0.0
        %3621 = vmatprep.subr.mxu0 0.0
        %3622 = vmatpush1.msra.mxu0 0.0
        %3623 = vmatprep.mubr.f32.mxu0 0.0
        %3624 = vmatmul.mubr.f32.gmra.mrb[0].mxu0 %v3180
        %v3625 = vpop.f32.mrb[0].mxu0
        %v3626 = vadd.f32 0.0, %v3625
        %v3627 = vpop.f32.mrb[0].mxu0
        %3628 = vmatprep.mubr.f32.mxu0 0.0
        %3629 = vmatmul.mubr.f32.gmra.mrb[0].mxu0 %v3183
        %v3630 = vpop.f32.mrb[0].mxu0
        %v3631 = vadd.f32 0.0, %v3630
        %v3632 = vpop.f32.mrb[0].mxu0
        %3633 = vmatprep.mubr.f32.mxu0 0.0
        %3634 = vmatmul.mubr.f32.gmra.mrb[0].mxu0 %v3186
        %v3635 = vpop.f32.mrb[0].mxu0
        %v3636 = vadd.f32 0.0, %v3635
        %v3637 = vpop.f32.mrb[0].mxu0
        %3638 = vmatprep.mubr.f32.mxu0 0.0
        %3639 = vmatmul.mubr.f32.gmra.mrb[0].mxu0 %v3189
        %v3640 = vpop.f32.mrb[0].mxu0
        %v3641 = vadd.f32 0.0, %v3640
        %v3642 = vpop.f32.mrb[0].mxu0
        %3643 = vdwg.mxu0
        %v3645 = vsel %vm321, %v3626, 0
        %v3648 = vsel %vm321, %v3631, 0
        %v3651 = vsel %vm321, %v3636, 0
        %v3654 = vsel %vm321, %v3641, 0
        %3656 = vmatprep.subr.mxu0 0.0
        %3657 = vmatpush1.msra.mxu0 %v3175
        %3658 = vmatprep.subr.mxu0 0.0
        %3659 = vmatpush1.msra.mxu0 %v3176
        %3660 = vmatprep.subr.mxu0 0.0
        %3661 = vmatpush1.msra.mxu0 %v3177
        %3662 = vmatprep.subr.mxu0 0.0
        %3663 = vmatpush1.msra.mxu0 %v3178
        %3664 = vmatprep.subr.mxu0 0.0
        %3665 = vmatpush1.msra.mxu0 0.0
        %3666 = vmatprep.subr.mxu0 0.0
        %3667 = vmatpush1.msra.mxu0 0.0
        %3668 = vmatprep.subr.mxu0 0.0
        %3669 = vmatpush1.msra.mxu0 0.0
        %3670 = vmatprep.subr.mxu0 0.0
        %3671 = vmatpush1.msra.mxu0 0.0
        %3672 = vmatprep.subr.mxu0 0.0
        %3673 = vmatpush1.msra.mxu0 0.0
        %3674 = vmatprep.subr.mxu0 0.0
        %3675 = vmatpush1.msra.mxu0 0.0
        %3676 = vmatprep.subr.mxu0 0.0
        %3677 = vmatpush1.msra.mxu0 0.0
        %3678 = vmatprep.subr.mxu0 0.0
        %3679 = vmatpush1.msra.mxu0 0.0
        %3680 = vmatprep.subr.mxu0 0.0
        %3681 = vmatpush1.msra.mxu0 0.0
        %3682 = vmatprep.subr.mxu0 0.0
        %3683 = vmatpush1.msra.mxu0 0.0
        %3684 = vmatprep.subr.mxu0 0.0
        %3685 = vmatpush1.msra.mxu0 0.0
        %3686 = vmatprep.subr.mxu0 0.0
        %3687 = vmatpush1.msra.mxu0 0.0
        %3688 = vmatprep.subr.mxu0 0.0
        %3689 = vmatpush1.msra.mxu0 0.0
        %3690 = vmatprep.subr.mxu0 0.0
        %3691 = vmatpush1.msra.mxu0 0.0
        %3692 = vmatprep.subr.mxu0 0.0
        %3693 = vmatpush1.msra.mxu0 0.0
        %3694 = vmatprep.subr.mxu0 0.0
        %3695 = vmatpush1.msra.mxu0 0.0
        %3696 = vmatprep.subr.mxu0 0.0
        %3697 = vmatpush1.msra.mxu0 0.0
        %3698 = vmatprep.subr.mxu0 0.0
        %3699 = vmatpush1.msra.mxu0 0.0
        %3700 = vmatprep.subr.mxu0 0.0
        %3701 = vmatpush1.msra.mxu0 0.0
        %3702 = vmatprep.subr.mxu0 0.0
        %3703 = vmatpush1.msra.mxu0 0.0
        %3704 = vmatprep.subr.mxu0 0.0
        %3705 = vmatpush1.msra.mxu0 0.0
        %3706 = vmatprep.subr.mxu0 0.0
        %3707 = vmatpush1.msra.mxu0 0.0
        %3708 = vmatprep.subr.mxu0 0.0
        %3709 = vmatpush1.msra.mxu0 0.0
        %3710 = vmatprep.subr.mxu0 0.0
        %3711 = vmatpush1.msra.mxu0 0.0
        %3712 = vmatprep.subr.mxu0 0.0
        %3713 = vmatpush1.msra.mxu0 0.0
        %3714 = vmatprep.subr.mxu0 0.0
        %3715 = vmatpush1.msra.mxu0 0.0
        %3716 = vmatprep.subr.mxu0 0.0
        %3717 = vmatpush1.msra.mxu0 0.0
        %3718 = vmatprep.subr.mxu0 0.0
        %3719 = vmatpush1.msra.mxu0 0.0
        %3720 = vmatprep.mubr.f32.mxu0 0.0
        %3721 = vmatmul.mubr.f32.gmra.mrb[0].mxu0 %v3645
        %v3722 = vpop.f32.mrb[0].mxu0
        %v3723 = vadd.f32 0.0, %v3722
        %v3724 = vpop.f32.mrb[0].mxu0
        %3725 = vmatprep.mubr.f32.mxu0 0.0
        %3726 = vmatmul.mubr.f32.gmra.mrb[0].mxu0 %v3648
        %v3727 = vpop.f32.mrb[0].mxu0
        %v3728 = vadd.f32 0.0, %v3727
        %v3729 = vpop.f32.mrb[0].mxu0
        %3730 = vmatprep.mubr.f32.mxu0 0.0
        %3731 = vmatmul.mubr.f32.gmra.mrb[0].mxu0 %v3651
        %v3732 = vpop.f32.mrb[0].mxu0
        %v3733 = vadd.f32 0.0, %v3732
        %v3734 = vpop.f32.mrb[0].mxu0
        %3735 = vmatprep.mubr.f32.mxu0 0.0
        %3736 = vmatmul.mubr.f32.gmra.mrb[0].mxu0 %v3654
        %v3737 = vpop.f32.mrb[0].mxu0
        %v3738 = vadd.f32 0.0, %v3737
        %v3739 = vpop.f32.mrb[0].mxu0
        %3740 = vdwg.mxu0
        %v3741 = vmul.f32 %v3151, %v3151
        %v3742 = vmul.f32 %v3156, %v3156
        %v3743 = vmul.f32 %v3161, %v3161
        %v3744 = vmul.f32 %v3166, %v3166
        %3745 = vmatprep.subr.mxu0 0.0
        %3746 = vmatpush1.msra.mxu0 %v3741
        %3747 = vmatprep.subr.mxu0 0.0
        %3748 = vmatpush1.msra.mxu0 %v3742
        %3749 = vmatprep.subr.mxu0 0.0
        %3750 = vmatpush1.msra.mxu0 %v3743
        %3751 = vmatprep.subr.mxu0 0.0
        %3752 = vmatpush1.msra.mxu0 %v3744
        %3753 = vmatprep.subr.mxu0 0.0
        %3754 = vmatpush1.msra.mxu0 0.0
        %3755 = vmatprep.subr.mxu0 0.0
        %3756 = vmatpush1.msra.mxu0 0.0
        %3757 = vmatprep.subr.mxu0 0.0
        %3758 = vmatpush1.msra.mxu0 0.0
        %3759 = vmatprep.subr.mxu0 0.0
        %3760 = vmatpush1.msra.mxu0 0.0
        %3761 = vmatprep.subr.mxu0 0.0
        %3762 = vmatpush1.msra.mxu0 0.0
        %3763 = vmatprep.subr.mxu0 0.0
        %3764 = vmatpush1.msra.mxu0 0.0
        %3765 = vmatprep.subr.mxu0 0.0
        %3766 = vmatpush1.msra.mxu0 0.0
        %3767 = vmatprep.subr.mxu0 0.0
        %3768 = vmatpush1.msra.mxu0 0.0
        %3769 = vmatprep.subr.mxu0 0.0
        %3770 = vmatpush1.msra.mxu0 0.0
        %3771 = vmatprep.subr.mxu0 0.0
        %3772 = vmatpush1.msra.mxu0 0.0
        %3773 = vmatprep.subr.mxu0 0.0
        %3774 = vmatpush1.msra.mxu0 0.0
        %3775 = vmatprep.subr.mxu0 0.0
        %3776 = vmatpush1.msra.mxu0 0.0
        %3777 = vmatprep.subr.mxu0 0.0
        %3778 = vmatpush1.msra.mxu0 0.0
        %3779 = vmatprep.subr.mxu0 0.0
        %3780 = vmatpush1.msra.mxu0 0.0
        %3781 = vmatprep.subr.mxu0 0.0
        %3782 = vmatpush1.msra.mxu0 0.0
        %3783 = vmatprep.subr.mxu0 0.0
        %3784 = vmatpush1.msra.mxu0 0.0
        %3785 = vmatprep.subr.mxu0 0.0
        %3786 = vmatpush1.msra.mxu0 0.0
        %3787 = vmatprep.subr.mxu0 0.0
        %3788 = vmatpush1.msra.mxu0 0.0
        %3789 = vmatprep.subr.mxu0 0.0
        %3790 = vmatpush1.msra.mxu0 0.0
        %3791 = vmatprep.subr.mxu0 0.0
        %3792 = vmatpush1.msra.mxu0 0.0
        %3793 = vmatprep.subr.mxu0 0.0
        %3794 = vmatpush1.msra.mxu0 0.0
        %3795 = vmatprep.subr.mxu0 0.0
        %3796 = vmatpush1.msra.mxu0 0.0
        %3797 = vmatprep.subr.mxu0 0.0
        %3798 = vmatpush1.msra.mxu0 0.0
        %3799 = vmatprep.subr.mxu0 0.0
        %3800 = vmatpush1.msra.mxu0 0.0
        %3801 = vmatprep.subr.mxu0 0.0
        %3802 = vmatpush1.msra.mxu0 0.0
        %3803 = vmatprep.subr.mxu0 0.0
        %3804 = vmatpush1.msra.mxu0 0.0
        %3805 = vmatprep.subr.mxu0 0.0
        %3806 = vmatpush1.msra.mxu0 0.0
        %3807 = vmatprep.subr.mxu0 0.0
        %3808 = vmatpush1.msra.mxu0 0.0
        %3809 = vmatprep.mubr.f32.mxu0 0.0
        %3810 = vmatmul.mubr.f32.gmra.mrb[0].mxu0 %v3180
        %v3811 = vpop.f32.mrb[0].mxu0
        %v3812 = vadd.f32 0.0, %v3811
        %v3813 = vpop.f32.mrb[0].mxu0
        %3814 = vmatprep.mubr.f32.mxu0 0.0
        %3815 = vmatmul.mubr.f32.gmra.mrb[0].mxu0 %v3183
        %v3816 = vpop.f32.mrb[0].mxu0
        %v3817 = vadd.f32 0.0, %v3816
        %v3818 = vpop.f32.mrb[0].mxu0
        %3819 = vmatprep.mubr.f32.mxu0 0.0
        %3820 = vmatmul.mubr.f32.gmra.mrb[0].mxu0 %v3186
        %v3821 = vpop.f32.mrb[0].mxu0
        %v3822 = vadd.f32 0.0, %v3821
        %v3823 = vpop.f32.mrb[0].mxu0
        %3824 = vmatprep.mubr.f32.mxu0 0.0
        %3825 = vmatmul.mubr.f32.gmra.mrb[0].mxu0 %v3189
        %v3826 = vpop.f32.mrb[0].mxu0
        %v3827 = vadd.f32 0.0, %v3826
        %v3828 = vpop.f32.mrb[0].mxu0
        %3829 = vdwg.mxu0
        %v3831 = vsel %vm321, %v3812, 0
        %v3834 = vsel %vm321, %v3817, 0
        %v3837 = vsel %vm321, %v3822, 0
        %v3840 = vsel %vm321, %v3827, 0
        %3842 = vmatprep.subr.mxu0 0.0
        %3843 = vmatpush1.msra.mxu0 %v3175
        %3844 = vmatprep.subr.mxu0 0.0
        %3845 = vmatpush1.msra.mxu0 %v3176
        %3846 = vmatprep.subr.mxu0 0.0
        %3847 = vmatpush1.msra.mxu0 %v3177
        %3848 = vmatprep.subr.mxu0 0.0
        %3849 = vmatpush1.msra.mxu0 %v3178
        %3850 = vmatprep.subr.mxu0 0.0
        %3851 = vmatpush1.msra.mxu0 0.0
        %3852 = vmatprep.subr.mxu0 0.0
        %3853 = vmatpush1.msra.mxu0 0.0
        %3854 = vmatprep.subr.mxu0 0.0
        %3855 = vmatpush1.msra.mxu0 0.0
        %3856 = vmatprep.subr.mxu0 0.0
        %3857 = vmatpush1.msra.mxu0 0.0
        %3858 = vmatprep.subr.mxu0 0.0
        %3859 = vmatpush1.msra.mxu0 0.0
        %3860 = vmatprep.subr.mxu0 0.0
        %3861 = vmatpush1.msra.mxu0 0.0
        %3862 = vmatprep.subr.mxu0 0.0
        %3863 = vmatpush1.msra.mxu0 0.0
        %3864 = vmatprep.subr.mxu0 0.0
        %3865 = vmatpush1.msra.mxu0 0.0
        %3866 = vmatprep.subr.mxu0 0.0
        %3867 = vmatpush1.msra.mxu0 0.0
        %3868 = vmatprep.subr.mxu0 0.0
        %3869 = vmatpush1.msra.mxu0 0.0
        %3870 = vmatprep.subr.mxu0 0.0
        %3871 = vmatpush1.msra.mxu0 0.0
        %3872 = vmatprep.subr.mxu0 0.0
        %3873 = vmatpush1.msra.mxu0 0.0
        %3874 = vmatprep.subr.mxu0 0.0
        %3875 = vmatpush1.msra.mxu0 0.0
        %3876 = vmatprep.subr.mxu0 0.0
        %3877 = vmatpush1.msra.mxu0 0.0
        %3878 = vmatprep.subr.mxu0 0.0
        %3879 = vmatpush1.msra.mxu0 0.0
        %3880 = vmatprep.subr.mxu0 0.0
        %3881 = vmatpush1.msra.mxu0 0.0
        %3882 = vmatprep.subr.mxu0 0.0
        %3883 = vmatpush1.msra.mxu0 0.0
        %3884 = vmatprep.subr.mxu0 0.0
        %3885 = vmatpush1.msra.mxu0 0.0
        %3886 = vmatprep.subr.mxu0 0.0
        %3887 = vmatpush1.msra.mxu0 0.0
        %3888 = vmatprep.subr.mxu0 0.0
        %3889 = vmatpush1.msra.mxu0 0.0
        %3890 = vmatprep.subr.mxu0 0.0
        %3891 = vmatpush1.msra.mxu0 0.0
        %3892 = vmatprep.subr.mxu0 0.0
        %3893 = vmatpush1.msra.mxu0 0.0
        %3894 = vmatprep.subr.mxu0 0.0
        %3895 = vmatpush1.msra.mxu0 0.0
        %3896 = vmatprep.subr.mxu0 0.0
        %3897 = vmatpush1.msra.mxu0 0.0
        %3898 = vmatprep.subr.mxu0 0.0
        %3899 = vmatpush1.msra.mxu0 0.0
        %3900 = vmatprep.subr.mxu0 0.0
        %3901 = vmatpush1.msra.mxu0 0.0
        %3902 = vmatprep.subr.mxu0 0.0
        %3903 = vmatpush1.msra.mxu0 0.0
        %3904 = vmatprep.subr.mxu0 0.0
        %3905 = vmatpush1.msra.mxu0 0.0
        %3906 = vmatprep.mubr.f32.mxu0 0.0
        %3907 = vmatmul.mubr.f32.gmra.mrb[0].mxu0 %v3831
        %v3908 = vpop.f32.mrb[0].mxu0
        %v3909 = vadd.f32 0.0, %v3908
        %v3910 = vpop.f32.mrb[0].mxu0
        %3911 = vmatprep.mubr.f32.mxu0 0.0
        %3912 = vmatmul.mubr.f32.gmra.mrb[0].mxu0 %v3834
        %v3913 = vpop.f32.mrb[0].mxu0
        %v3914 = vadd.f32 0.0, %v3913
        %v3915 = vpop.f32.mrb[0].mxu0
        %3916 = vmatprep.mubr.f32.mxu0 0.0
        %3917 = vmatmul.mubr.f32.gmra.mrb[0].mxu0 %v3837
        %v3918 = vpop.f32.mrb[0].mxu0
        %v3919 = vadd.f32 0.0, %v3918
        %v3920 = vpop.f32.mrb[0].mxu0
        %3921 = vmatprep.mubr.f32.mxu0 0.0
        %3922 = vmatmul.mubr.f32.gmra.mrb[0].mxu0 %v3840
        %v3923 = vpop.f32.mrb[0].mxu0
        %v3924 = vadd.f32 0.0, %v3923
        %v3925 = vpop.f32.mrb[0].mxu0
        %3926 = vdwg.mxu0
        %v3927 = vmul.f32 %v2969, %v3151
        %v3928 = vmul.f32 %v2974, %v3156
        %v3929 = vmul.f32 %v2979, %v3161
        %v3930 = vmul.f32 %v2984, %v3166
        %3931 = vmatprep.subr.mxu0 0.0
        %3932 = vmatpush1.msra.mxu0 %v3927
        %3933 = vmatprep.subr.mxu0 0.0
        %3934 = vmatpush1.msra.mxu0 %v3928
        %3935 = vmatprep.subr.mxu0 0.0
        %3936 = vmatpush1.msra.mxu0 %v3929
        %3937 = vmatprep.subr.mxu0 0.0
        %3938 = vmatpush1.msra.mxu0 %v3930
        %3939 = vmatprep.subr.mxu0 0.0
        %3940 = vmatpush1.msra.mxu0 0.0
        %3941 = vmatprep.subr.mxu0 0.0
        %3942 = vmatpush1.msra.mxu0 0.0
        %3943 = vmatprep.subr.mxu0 0.0
        %3944 = vmatpush1.msra.mxu0 0.0
        %3945 = vmatprep.subr.mxu0 0.0
        %3946 = vmatpush1.msra.mxu0 0.0
        %3947 = vmatprep.subr.mxu0 0.0
        %3948 = vmatpush1.msra.mxu0 0.0
        %3949 = vmatprep.subr.mxu0 0.0
        %3950 = vmatpush1.msra.mxu0 0.0
        %3951 = vmatprep.subr.mxu0 0.0
        %3952 = vmatpush1.msra.mxu0 0.0
        %3953 = vmatprep.subr.mxu0 0.0
        %3954 = vmatpush1.msra.mxu0 0.0
        %3955 = vmatprep.subr.mxu0 0.0
        %3956 = vmatpush1.msra.mxu0 0.0
        %3957 = vmatprep.subr.mxu0 0.0
        %3958 = vmatpush1.msra.mxu0 0.0
        %3959 = vmatprep.subr.mxu0 0.0
        %3960 = vmatpush1.msra.mxu0 0.0
        %3961 = vmatprep.subr.mxu0 0.0
        %3962 = vmatpush1.msra.mxu0 0.0
        %3963 = vmatprep.subr.mxu0 0.0
        %3964 = vmatpush1.msra.mxu0 0.0
        %3965 = vmatprep.subr.mxu0 0.0
        %3966 = vmatpush1.msra.mxu0 0.0
        %3967 = vmatprep.subr.mxu0 0.0
        %3968 = vmatpush1.msra.mxu0 0.0
        %3969 = vmatprep.subr.mxu0 0.0
        %3970 = vmatpush1.msra.mxu0 0.0
        %3971 = vmatprep.subr.mxu0 0.0
        %3972 = vmatpush1.msra.mxu0 0.0
        %3973 = vmatprep.subr.mxu0 0.0
        %3974 = vmatpush1.msra.mxu0 0.0
        %3975 = vmatprep.subr.mxu0 0.0
        %3976 = vmatpush1.msra.mxu0 0.0
        %3977 = vmatprep.subr.mxu0 0.0
        %3978 = vmatpush1.msra.mxu0 0.0
        %3979 = vmatprep.subr.mxu0 0.0
        %3980 = vmatpush1.msra.mxu0 0.0
        %3981 = vmatprep.subr.mxu0 0.0
        %3982 = vmatpush1.msra.mxu0 0.0
        %3983 = vmatprep.subr.mxu0 0.0
        %3984 = vmatpush1.msra.mxu0 0.0
        %3985 = vmatprep.subr.mxu0 0.0
        %3986 = vmatpush1.msra.mxu0 0.0
        %3987 = vmatprep.subr.mxu0 0.0
        %3988 = vmatpush1.msra.mxu0 0.0
        %3989 = vmatprep.subr.mxu0 0.0
        %3990 = vmatpush1.msra.mxu0 0.0
        %3991 = vmatprep.subr.mxu0 0.0
        %3992 = vmatpush1.msra.mxu0 0.0
        %3993 = vmatprep.subr.mxu0 0.0
        %3994 = vmatpush1.msra.mxu0 0.0
        %3995 = vmatprep.mubr.f32.mxu0 0.0
        %3996 = vmatmul.mubr.f32.gmra.mrb[0].mxu0 %v3180
        %v3997 = vpop.f32.mrb[0].mxu0
        %v3998 = vadd.f32 0.0, %v3997
        %v3999 = vpop.f32.mrb[0].mxu0
        %4000 = vmatprep.mubr.f32.mxu0 0.0
        %4001 = vmatmul.mubr.f32.gmra.mrb[0].mxu0 %v3183
        %v4002 = vpop.f32.mrb[0].mxu0
        %v4003 = vadd.f32 0.0, %v4002
        %v4004 = vpop.f32.mrb[0].mxu0
        %4005 = vmatprep.mubr.f32.mxu0 0.0
        %4006 = vmatmul.mubr.f32.gmra.mrb[0].mxu0 %v3186
        %v4007 = vpop.f32.mrb[0].mxu0
        %v4008 = vadd.f32 0.0, %v4007
        %v4009 = vpop.f32.mrb[0].mxu0
        %4010 = vmatprep.mubr.f32.mxu0 0.0
        %4011 = vmatmul.mubr.f32.gmra.mrb[0].mxu0 %v3189
        %v4012 = vpop.f32.mrb[0].mxu0
        %v4013 = vadd.f32 0.0, %v4012
        %v4014 = vpop.f32.mrb[0].mxu0
        %4015 = vdwg.mxu0
        %v4017 = vsel %vm321, %v3998, 0
        %v4020 = vsel %vm321, %v4003, 0
        %v4023 = vsel %vm321, %v4008, 0
        %v4026 = vsel %vm321, %v4013, 0
        %4028 = vmatprep.subr.mxu0 0.0
        %4029 = vmatpush1.msra.mxu0 %v3175
        %4030 = vmatprep.subr.mxu0 0.0
        %4031 = vmatpush1.msra.mxu0 %v3176
        %4032 = vmatprep.subr.mxu0 0.0
        %4033 = vmatpush1.msra.mxu0 %v3177
        %4034 = vmatprep.subr.mxu0 0.0
        %4035 = vmatpush1.msra.mxu0 %v3178
        %4036 = vmatprep.subr.mxu0 0.0
        %4037 = vmatpush1.msra.mxu0 0.0
        %4038 = vmatprep.subr.mxu0 0.0
        %4039 = vmatpush1.msra.mxu0 0.0
        %4040 = vmatprep.subr.mxu0 0.0
        %4041 = vmatpush1.msra.mxu0 0.0
        %4042 = vmatprep.subr.mxu0 0.0
        %4043 = vmatpush1.msra.mxu0 0.0
        %4044 = vmatprep.subr.mxu0 0.0
        %4045 = vmatpush1.msra.mxu0 0.0
        %4046 = vmatprep.subr.mxu0 0.0
        %4047 = vmatpush1.msra.mxu0 0.0
        %4048 = vmatprep.subr.mxu0 0.0
        %4049 = vmatpush1.msra.mxu0 0.0
        %4050 = vmatprep.subr.mxu0 0.0
        %4051 = vmatpush1.msra.mxu0 0.0
        %4052 = vmatprep.subr.mxu0 0.0
        %4053 = vmatpush1.msra.mxu0 0.0
        %4054 = vmatprep.subr.mxu0 0.0
        %4055 = vmatpush1.msra.mxu0 0.0
        %4056 = vmatprep.subr.mxu0 0.0
        %4057 = vmatpush1.msra.mxu0 0.0
        %4058 = vmatprep.subr.mxu0 0.0
        %4059 = vmatpush1.msra.mxu0 0.0
        %4060 = vmatprep.subr.mxu0 0.0
        %4061 = vmatpush1.msra.mxu0 0.0
        %4062 = vmatprep.subr.mxu0 0.0
        %4063 = vmatpush1.msra.mxu0 0.0
        %4064 = vmatprep.subr.mxu0 0.0
        %4065 = vmatpush1.msra.mxu0 0.0
        %4066 = vmatprep.subr.mxu0 0.0
        %4067 = vmatpush1.msra.mxu0 0.0
        %4068 = vmatprep.subr.mxu0 0.0
        %4069 = vmatpush1.msra.mxu0 0.0
        %4070 = vmatprep.subr.mxu0 0.0
        %4071 = vmatpush1.msra.mxu0 0.0
        %4072 = vmatprep.subr.mxu0 0.0
        %4073 = vmatpush1.msra.mxu0 0.0
        %4074 = vmatprep.subr.mxu0 0.0
        %4075 = vmatpush1.msra.mxu0 0.0
        %4076 = vmatprep.subr.mxu0 0.0
        %4077 = vmatpush1.msra.mxu0 0.0
        %4078 = vmatprep.subr.mxu0 0.0
        %4079 = vmatpush1.msra.mxu0 0.0
        %4080 = vmatprep.subr.mxu0 0.0
        %4081 = vmatpush1.msra.mxu0 0.0
        %4082 = vmatprep.subr.mxu0 0.0
        %4083 = vmatpush1.msra.mxu0 0.0
        %4084 = vmatprep.subr.mxu0 0.0
        %4085 = vmatpush1.msra.mxu0 0.0
        %4086 = vmatprep.subr.mxu0 0.0
        %4087 = vmatpush1.msra.mxu0 0.0
        %4088 = vmatprep.subr.mxu0 0.0
        %4089 = vmatpush1.msra.mxu0 0.0
        %4090 = vmatprep.subr.mxu0 0.0
        %4091 = vmatpush1.msra.mxu0 0.0
        %4092 = vmatprep.mubr.f32.mxu0 0.0
        %4093 = vmatmul.mubr.f32.gmra.mrb[0].mxu0 %v4017
        %v4094 = vpop.f32.mrb[0].mxu0
        %v4095 = vadd.f32 0.0, %v4094
        %v4096 = vpop.f32.mrb[0].mxu0
        %4097 = vmatprep.mubr.f32.mxu0 0.0
        %4098 = vmatmul.mubr.f32.gmra.mrb[0].mxu0 %v4020
        %v4099 = vpop.f32.mrb[0].mxu0
        %v4100 = vadd.f32 0.0, %v4099
        %v4101 = vpop.f32.mrb[0].mxu0
        %4102 = vmatprep.mubr.f32.mxu0 0.0
        %4103 = vmatmul.mubr.f32.gmra.mrb[0].mxu0 %v4023
        %v4104 = vpop.f32.mrb[0].mxu0
        %v4105 = vadd.f32 0.0, %v4104
        %v4106 = vpop.f32.mrb[0].mxu0
        %4107 = vmatprep.mubr.f32.mxu0 0.0
        %4108 = vmatmul.mubr.f32.gmra.mrb[0].mxu0 %v4026
        %v4109 = vpop.f32.mrb[0].mxu0
        %v4110 = vadd.f32 0.0, %v4109
        %v4111 = vpop.f32.mrb[0].mxu0
        %4112 = vdwg.mxu0
        %v4113 = vmul.f32 %v3355, %v3355
        %v4114 = vmul.f32 %v3360, %v3360
        %v4115 = vmul.f32 %v3365, %v3365
        %v4116 = vmul.f32 %v3370, %v3370
        %v4117 = vmul.f32 %v3537, %v3537
        %v4118 = vmul.f32 %v3542, %v3542
        %v4119 = vmul.f32 %v3547, %v3547
        %v4120 = vmul.f32 %v3552, %v3552
        %v4121 = vmul.f32 %v3355, %v3537
        %v4122 = vmul.f32 %v3360, %v3542
        %v4123 = vmul.f32 %v3365, %v3547
        %v4124 = vmul.f32 %v3370, %v3552
        %v4125 = vsub.f32 %v3723, %v4113
        %v4126 = vsub.f32 %v3728, %v4114
        %v4127 = vsub.f32 %v3733, %v4115
        %v4128 = vsub.f32 %v3738, %v4116
        %v4129 = vsub.f32 %v3909, %v4117
        %v4130 = vsub.f32 %v3914, %v4118
        %v4131 = vsub.f32 %v3919, %v4119
        %v4132 = vsub.f32 %v3924, %v4120
        %v4133 = vsub.f32 %v4095, %v4121
        %v4134 = vsub.f32 %v4100, %v4122
        %v4135 = vsub.f32 %v4105, %v4123
        %v4136 = vsub.f32 %v4110, %v4124
        %v4137 = vmul.f32 %v4121, 2.0
        %v4138 = vmul.f32 %v4122, 2.0
        %v4139 = vmul.f32 %v4123, 2.0
        %v4140 = vmul.f32 %v4124, 2.0
        %v4141 = vadd.f32 %v4137, 6.5025
        %v4142 = vadd.f32 %v4138, 6.5025
        %v4143 = vadd.f32 %v4139, 6.5025
        %v4144 = vadd.f32 %v4140, 6.5025
        %v4145 = vmul.f32 %v4133, 2.0
        %v4146 = vmul.f32 %v4134, 2.0
        %v4147 = vmul.f32 %v4135, 2.0
        %v4148 = vmul.f32 %v4136, 2.0
        %v4149 = vadd.f32 %v4145, 58.5225
        %v4150 = vadd.f32 %v4146, 58.5225
        %v4151 = vadd.f32 %v4147, 58.5225
        %v4152 = vadd.f32 %v4148, 58.5225
        %v4153 = vmul.f32 %v4141, %v4149
        %v4154 = vmul.f32 %v4142, %v4150
        %v4155 = vmul.f32 %v4143, %v4151
        %v4156 = vmul.f32 %v4144, %v4152
        %v4157 = vadd.f32 %v4113, %v4117
        %v4158 = vadd.f32 %v4114, %v4118
        %v4159 = vadd.f32 %v4115, %v4119
        %v4160 = vadd.f32 %v4116, %v4120
        %v4161 = vadd.f32 %v4157, 6.5025
        %v4162 = vadd.f32 %v4158, 6.5025
        %v4163 = vadd.f32 %v4159, 6.5025
        %v4164 = vadd.f32 %v4160, 6.5025
        %v4165 = vadd.f32 %v4125, %v4129
        %v4166 = vadd.f32 %v4126, %v4130
        %v4167 = vadd.f32 %v4127, %v4131
        %v4168 = vadd.f32 %v4128, %v4132
        %v4169 = vadd.f32 %v4165, 58.5225
        %v4170 = vadd.f32 %v4166, 58.5225
        %v4171 = vadd.f32 %v4167, 58.5225
        %v4172 = vadd.f32 %v4168, 58.5225
        %v4173 = vmul.f32 %v4161, %v4169
        %v4174 = vmul.f32 %v4162, %v4170
        %v4175 = vmul.f32 %v4163, %v4171
        %v4176 = vmul.f32 %v4164, %v4172
        %v4177 = vrcp.pop %v4173
        %v4178 = vrcp.pop %v4174
        %v4179 = vrcp.pop %v4175
        %v4180 = vrcp.pop %v4176
        %v4181 = vmul.f32 %v4153, %v4177
        %v4182 = vmul.f32 %v4154, %v4178
        %v4183 = vmul.f32 %v4155, %v4179
        %v4184 = vmul.f32 %v4156, %v4180
        %vm4185 = vcmp.lt.s32.totalorder %v307, 8
        %vm4186 = vcmp.lt.s32.totalorder %v308, 8
        %vm4187 = vcmp.lt.s32.totalorder %v309, 8
        %vm4188 = vcmp.lt.s32.totalorder %v310, 8
        %vm4189 = vcmp.lt.s32.totalorder %v312, 8
        %vm4190 = vmand %vm4185, %vm4189
        %vm4191 = vmand %vm4186, %vm4189
        %vm4192 = vmand %vm4187, %vm4189
        %vm4193 = vmand %vm4188, %vm4189
        %v4194 = vsel %vm4190, %v4181, 0.0
        %v4195 = vsel %vm4191, %v4182, 0.0
        %v4196 = vsel %vm4192, %v4183, 0.0
        %v4197 = vsel %vm4193, %v4184, 0.0
        %v4198 = vsel %vm321, %v4194, 0.0
        %v4199 = vsel %vm321, %v4195, 0.0
        %v4200 = vadd.f32 %v4198, %v4199
        %v4201 = vsel %vm321, %v4196, 0.0
        %v4202 = vadd.f32 %v4200, %v4201
        %v4203 = vsel %vm321, %v4197, 0.0
        %v4204 = vadd.f32 %v4202, %v4203
        %4205 = vadd.xlane.f32.xlu0 %v4204
        %v4206 = vpop.xlane.xlu0 %4205
        %v4207 = vrot.slane %v4206, 4
        %v4208 = vadd.f32 %v4206, %v4207
        %v4209 = vrot.slane %v4208, 2
        %v4210 = vadd.f32 %v4208, %v4209
        %v4211 = vrot.slane %v4210, 1
        %v4212 = vadd.f32 %v4210, %v4211
        %s4213 = vtos %v4212
        %s4214 = smul.f32 %s4213, 0.015625
        %vm4215 = vcmp.eq.s32.totalorder %v312, 2
        %v4216 = vstv %s4214
        %v4217 = vsel %vm4215, %v4216, 0.0
        %v4218 = vadd.f32 %v2782, %v4217
        %s4219 = scalar_lea.vmem [#allocation2], 64
        %v4220 = vld [vmem:[%s4219] sm:$0xff]
        %v4221 = vld [vmem:[%s4219 + $0x8] sm:$0xff]
        %v4222 = vld [vmem:[%s4219 + $0x10] sm:$0xff]
        %v4223 = vld [vmem:[%s4219 + $0x18] sm:$0xff]
        %s4224 = scalar_lea.vmem [#allocation4], 64
        %v4225 = vld [vmem:[%s4224] sm:$0xff]
        %v4226 = vld [vmem:[%s4224 + $0x8] sm:$0xff]
        %v4227 = vld [vmem:[%s4224 + $0x10] sm:$0xff]
        %v4228 = vld [vmem:[%s4224 + $0x18] sm:$0xff]
        %v4230 = vsel %vm321, %v4220, 0
        %v4233 = vsel %vm321, %v4221, 0
        %v4236 = vsel %vm321, %v4222, 0
        %v4239 = vsel %vm321, %v4223, 0
        %4241 = vmatprep.subr.mxu0 0.0
        %4242 = vmatpush1.msra.mxu0 %v2969
        %4243 = vmatprep.subr.mxu0 0.0
        %4244 = vmatpush1.msra.mxu0 %v2974
        %4245 = vmatprep.subr.mxu0 0.0
        %4246 = vmatpush1.msra.mxu0 %v2979
        %4247 = vmatprep.subr.mxu0 0.0
        %4248 = vmatpush1.msra.mxu0 %v2984
        %4249 = vmatprep.subr.mxu0 0.0
        %4250 = vmatpush1.msra.mxu0 0.0
        %4251 = vmatprep.subr.mxu0 0.0
        %4252 = vmatpush1.msra.mxu0 0.0
        %4253 = vmatprep.subr.mxu0 0.0
        %4254 = vmatpush1.msra.mxu0 0.0
        %4255 = vmatprep.subr.mxu0 0.0
        %4256 = vmatpush1.msra.mxu0 0.0
        %4257 = vmatprep.subr.mxu0 0.0
        %4258 = vmatpush1.msra.mxu0 0.0
        %4259 = vmatprep.subr.mxu0 0.0
        %4260 = vmatpush1.msra.mxu0 0.0
        %4261 = vmatprep.subr.mxu0 0.0
        %4262 = vmatpush1.msra.mxu0 0.0
        %4263 = vmatprep.subr.mxu0 0.0
        %4264 = vmatpush1.msra.mxu0 0.0
        %4265 = vmatprep.subr.mxu0 0.0
        %4266 = vmatpush1.msra.mxu0 0.0
        %4267 = vmatprep.subr.mxu0 0.0
        %4268 = vmatpush1.msra.mxu0 0.0
        %4269 = vmatprep.subr.mxu0 0.0
        %4270 = vmatpush1.msra.mxu0 0.0
        %4271 = vmatprep.subr.mxu0 0.0
        %4272 = vmatpush1.msra.mxu0 0.0
        %4273 = vmatprep.subr.mxu0 0.0
        %4274 = vmatpush1.msra.mxu0 0.0
        %4275 = vmatprep.subr.mxu0 0.0
        %4276 = vmatpush1.msra.mxu0 0.0
        %4277 = vmatprep.subr.mxu0 0.0
        %4278 = vmatpush1.msra.mxu0 0.0
        %4279 = vmatprep.subr.mxu0 0.0
        %4280 = vmatpush1.msra.mxu0 0.0
        %4281 = vmatprep.subr.mxu0 0.0
        %4282 = vmatpush1.msra.mxu0 0.0
        %4283 = vmatprep.subr.mxu0 0.0
        %4284 = vmatpush1.msra.mxu0 0.0
        %4285 = vmatprep.subr.mxu0 0.0
        %4286 = vmatpush1.msra.mxu0 0.0
        %4287 = vmatprep.subr.mxu0 0.0
        %4288 = vmatpush1.msra.mxu0 0.0
        %4289 = vmatprep.subr.mxu0 0.0
        %4290 = vmatpush1.msra.mxu0 0.0
        %4291 = vmatprep.subr.mxu0 0.0
        %4292 = vmatpush1.msra.mxu0 0.0
        %4293 = vmatprep.subr.mxu0 0.0
        %4294 = vmatpush1.msra.mxu0 0.0
        %4295 = vmatprep.subr.mxu0 0.0
        %4296 = vmatpush1.msra.mxu0 0.0
        %4297 = vmatprep.subr.mxu0 0.0
        %4298 = vmatpush1.msra.mxu0 0.0
        %4299 = vmatprep.subr.mxu0 0.0
        %4300 = vmatpush1.msra.mxu0 0.0
        %4301 = vmatprep.subr.mxu0 0.0
        %4302 = vmatpush1.msra.mxu0 0.0
        %4303 = vmatprep.subr.mxu0 0.0
        %4304 = vmatpush1.msra.mxu0 0.0
        %4305 = vmatprep.mubr.f32.mxu0 0.0
        %4306 = vmatmul.mubr.f32.gmra.mrb[0].mxu0 %v4230
        %v4307 = vpop.f32.mrb[0].mxu0
        %v4308 = vadd.f32 0.0, %v4307
        %v4309 = vpop.f32.mrb[0].mxu0
        %4310 = vmatprep.mubr.f32.mxu0 0.0
        %4311 = vmatmul.mubr.f32.gmra.mrb[0].mxu0 %v4233
        %v4312 = vpop.f32.mrb[0].mxu0
        %v4313 = vadd.f32 0.0, %v4312
        %v4314 = vpop.f32.mrb[0].mxu0
        %4315 = vmatprep.mubr.f32.mxu0 0.0
        %4316 = vmatmul.mubr.f32.gmra.mrb[0].mxu0 %v4236
        %v4317 = vpop.f32.mrb[0].mxu0
        %v4318 = vadd.f32 0.0, %v4317
        %v4319 = vpop.f32.mrb[0].mxu0
        %4320 = vmatprep.mubr.f32.mxu0 0.0
        %4321 = vmatmul.mubr.f32.gmra.mrb[0].mxu0 %v4239
        %v4322 = vpop.f32.mrb[0].mxu0
        %v4323 = vadd.f32 0.0, %v4322
        %v4324 = vpop.f32.mrb[0].mxu0
        %4325 = vdwg.mxu0
        %v4327 = vsel %vm321, %v4308, 0
        %v4330 = vsel %vm321, %v4313, 0
        %v4333 = vsel %vm321, %v4318, 0
        %v4336 = vsel %vm321, %v4323, 0
        %4338 = vmatprep.subr.mxu0 0.0
        %4339 = vmatpush1.msra.mxu0 %v4225
        %4340 = vmatprep.subr.mxu0 0.0
        %4341 = vmatpush1.msra.mxu0 %v4226
        %4342 = vmatprep.subr.mxu0 0.0
        %4343 = vmatpush1.msra.mxu0 %v4227
        %4344 = vmatprep.subr.mxu0 0.0
        %4345 = vmatpush1.msra.mxu0 %v4228
        %4346 = vmatprep.subr.mxu0 0.0
        %4347 = vmatpush1.msra.mxu0 0.0
        %4348 = vmatprep.subr.mxu0 0.0
        %4349 = vmatpush1.msra.mxu0 0.0
        %4350 = vmatprep.subr.mxu0 0.0
        %4351 = vmatpush1.msra.mxu0 0.0
        %4352 = vmatprep.subr.mxu0 0.0
        %4353 = vmatpush1.msra.mxu0 0.0
        %4354 = vmatprep.subr.mxu0 0.0
        %4355 = vmatpush1.msra.mxu0 0.0
        %4356 = vmatprep.subr.mxu0 0.0
        %4357 = vmatpush1.msra.mxu0 0.0
        %4358 = vmatprep.subr.mxu0 0.0
        %4359 = vmatpush1.msra.mxu0 0.0
        %4360 = vmatprep.subr.mxu0 0.0
        %4361 = vmatpush1.msra.mxu0 0.0
        %4362 = vmatprep.subr.mxu0 0.0
        %4363 = vmatpush1.msra.mxu0 0.0
        %4364 = vmatprep.subr.mxu0 0.0
        %4365 = vmatpush1.msra.mxu0 0.0
        %4366 = vmatprep.subr.mxu0 0.0
        %4367 = vmatpush1.msra.mxu0 0.0
        %4368 = vmatprep.subr.mxu0 0.0
        %4369 = vmatpush1.msra.mxu0 0.0
        %4370 = vmatprep.subr.mxu0 0.0
        %4371 = vmatpush1.msra.mxu0 0.0
        %4372 = vmatprep.subr.mxu0 0.0
        %4373 = vmatpush1.msra.mxu0 0.0
        %4374 = vmatprep.subr.mxu0 0.0
        %4375 = vmatpush1.msra.mxu0 0.0
        %4376 = vmatprep.subr.mxu0 0.0
        %4377 = vmatpush1.msra.mxu0 0.0
        %4378 = vmatprep.subr.mxu0 0.0
        %4379 = vmatpush1.msra.mxu0 0.0
        %4380 = vmatprep.subr.mxu0 0.0
        %4381 = vmatpush1.msra.mxu0 0.0
        %4382 = vmatprep.subr.mxu0 0.0
        %4383 = vmatpush1.msra.mxu0 0.0
        %4384 = vmatprep.subr.mxu0 0.0
        %4385 = vmatpush1.msra.mxu0 0.0
        %4386 = vmatprep.subr.mxu0 0.0
        %4387 = vmatpush1.msra.mxu0 0.0
        %4388 = vmatprep.subr.mxu0 0.0
        %4389 = vmatpush1.msra.mxu0 0.0
        %4390 = vmatprep.subr.mxu0 0.0
        %4391 = vmatpush1.msra.mxu0 0.0
        %4392 = vmatprep.subr.mxu0 0.0
        %4393 = vmatpush1.msra.mxu0 0.0
        %4394 = vmatprep.subr.mxu0 0.0
        %4395 = vmatpush1.msra.mxu0 0.0
        %4396 = vmatprep.subr.mxu0 0.0
        %4397 = vmatpush1.msra.mxu0 0.0
        %4398 = vmatprep.subr.mxu0 0.0
        %4399 = vmatpush1.msra.mxu0 0.0
        %4400 = vmatprep.subr.mxu0 0.0
        %4401 = vmatpush1.msra.mxu0 0.0
        %4402 = vmatprep.mubr.f32.mxu0 0.0
        %4403 = vmatmul.mubr.f32.gmra.mrb[0].mxu0 %v4327
        %v4404 = vpop.f32.mrb[0].mxu0
        %v4405 = vadd.f32 0.0, %v4404
        %v4406 = vpop.f32.mrb[0].mxu0
        %4407 = vmatprep.mubr.f32.mxu0 0.0
        %4408 = vmatmul.mubr.f32.gmra.mrb[0].mxu0 %v4330
        %v4409 = vpop.f32.mrb[0].mxu0
        %v4410 = vadd.f32 0.0, %v4409
        %v4411 = vpop.f32.mrb[0].mxu0
        %4412 = vmatprep.mubr.f32.mxu0 0.0
        %4413 = vmatmul.mubr.f32.gmra.mrb[0].mxu0 %v4333
        %v4414 = vpop.f32.mrb[0].mxu0
        %v4415 = vadd.f32 0.0, %v4414
        %v4416 = vpop.f32.mrb[0].mxu0
        %4417 = vmatprep.mubr.f32.mxu0 0.0
        %4418 = vmatmul.mubr.f32.gmra.mrb[0].mxu0 %v4336
        %v4419 = vpop.f32.mrb[0].mxu0
        %v4420 = vadd.f32 0.0, %v4419
        %v4421 = vpop.f32.mrb[0].mxu0
        %4422 = vdwg.mxu0
        %4423 = vmatprep.subr.mxu0 0.0
        %4424 = vmatpush1.msra.mxu0 %v3151
        %4425 = vmatprep.subr.mxu0 0.0
        %4426 = vmatpush1.msra.mxu0 %v3156
        %4427 = vmatprep.subr.mxu0 0.0
        %4428 = vmatpush1.msra.mxu0 %v3161
        %4429 = vmatprep.subr.mxu0 0.0
        %4430 = vmatpush1.msra.mxu0 %v3166
        %4431 = vmatprep.subr.mxu0 0.0
        %4432 = vmatpush1.msra.mxu0 0.0
        %4433 = vmatprep.subr.mxu0 0.0
        %4434 = vmatpush1.msra.mxu0 0.0
        %4435 = vmatprep.subr.mxu0 0.0
        %4436 = vmatpush1.msra.mxu0 0.0
        %4437 = vmatprep.subr.mxu0 0.0
        %4438 = vmatpush1.msra.mxu0 0.0
        %4439 = vmatprep.subr.mxu0 0.0
        %4440 = vmatpush1.msra.mxu0 0.0
        %4441 = vmatprep.subr.mxu0 0.0
        %4442 = vmatpush1.msra.mxu0 0.0
        %4443 = vmatprep.subr.mxu0 0.0
        %4444 = vmatpush1.msra.mxu0 0.0
        %4445 = vmatprep.subr.mxu0 0.0
        %4446 = vmatpush1.msra.mxu0 0.0
        %4447 = vmatprep.subr.mxu0 0.0
        %4448 = vmatpush1.msra.mxu0 0.0
        %4449 = vmatprep.subr.mxu0 0.0
        %4450 = vmatpush1.msra.mxu0 0.0
        %4451 = vmatprep.subr.mxu0 0.0
        %4452 = vmatpush1.msra.mxu0 0.0
        %4453 = vmatprep.subr.mxu0 0.0
        %4454 = vmatpush1.msra.mxu0 0.0
        %4455 = vmatprep.subr.mxu0 0.0
        %4456 = vmatpush1.msra.mxu0 0.0
        %4457 = vmatprep.subr.mxu0 0.0
        %4458 = vmatpush1.msra.mxu0 0.0
        %4459 = vmatprep.subr.mxu0 0.0
        %4460 = vmatpush1.msra.mxu0 0.0
        %4461 = vmatprep.subr.mxu0 0.0
        %4462 = vmatpush1.msra.mxu0 0.0
        %4463 = vmatprep.subr.mxu0 0.0
        %4464 = vmatpush1.msra.mxu0 0.0
        %4465 = vmatprep.subr.mxu0 0.0
        %4466 = vmatpush1.msra.mxu0 0.0
        %4467 = vmatprep.subr.mxu0 0.0
        %4468 = vmatpush1.msra.mxu0 0.0
        %4469 = vmatprep.subr.mxu0 0.0
        %4470 = vmatpush1.msra.mxu0 0.0
        %4471 = vmatprep.subr.mxu0 0.0
        %4472 = vmatpush1.msra.mxu0 0.0
        %4473 = vmatprep.subr.mxu0 0.0
        %4474 = vmatpush1.msra.mxu0 0.0
        %4475 = vmatprep.subr.mxu0 0.0
        %4476 = vmatpush1.msra.mxu0 0.0
        %4477 = vmatprep.subr.mxu0 0.0
        %4478 = vmatpush1.msra.mxu0 0.0
        %4479 = vmatprep.subr.mxu0 0.0
        %4480 = vmatpush1.msra.mxu0 0.0
        %4481 = vmatprep.subr.mxu0 0.0
        %4482 = vmatpush1.msra.mxu0 0.0
        %4483 = vmatprep.subr.mxu0 0.0
        %4484 = vmatpush1.msra.mxu0 0.0
        %4485 = vmatprep.subr.mxu0 0.0
        %4486 = vmatpush1.msra.mxu0 0.0
        %4487 = vmatprep.mubr.f32.mxu0 0.0
        %4488 = vmatmul.mubr.f32.gmra.mrb[0].mxu0 %v4230
        %v4489 = vpop.f32.mrb[0].mxu0
        %v4490 = vadd.f32 0.0, %v4489
        %v4491 = vpop.f32.mrb[0].mxu0
        %4492 = vmatprep.mubr.f32.mxu0 0.0
        %4493 = vmatmul.mubr.f32.gmra.mrb[0].mxu0 %v4233
        %v4494 = vpop.f32.mrb[0].mxu0
        %v4495 = vadd.f32 0.0, %v4494
        %v4496 = vpop.f32.mrb[0].mxu0
        %4497 = vmatprep.mubr.f32.mxu0 0.0
        %4498 = vmatmul.mubr.f32.gmra.mrb[0].mxu0 %v4236
        %v4499 = vpop.f32.mrb[0].mxu0
        %v4500 = vadd.f32 0.0, %v4499
        %v4501 = vpop.f32.mrb[0].mxu0
        %4502 = vmatprep.mubr.f32.mxu0 0.0
        %4503 = vmatmul.mubr.f32.gmra.mrb[0].mxu0 %v4239
        %v4504 = vpop.f32.mrb[0].mxu0
        %v4505 = vadd.f32 0.0, %v4504
        %v4506 = vpop.f32.mrb[0].mxu0
        %4507 = vdwg.mxu0
        %v4509 = vsel %vm321, %v4490, 0
        %v4512 = vsel %vm321, %v4495, 0
        %v4515 = vsel %vm321, %v4500, 0
        %v4518 = vsel %vm321, %v4505, 0
        %4520 = vmatprep.subr.mxu0 0.0
        %4521 = vmatpush1.msra.mxu0 %v4225
        %4522 = vmatprep.subr.mxu0 0.0
        %4523 = vmatpush1.msra.mxu0 %v4226
        %4524 = vmatprep.subr.mxu0 0.0
        %4525 = vmatpush1.msra.mxu0 %v4227
        %4526 = vmatprep.subr.mxu0 0.0
        %4527 = vmatpush1.msra.mxu0 %v4228
        %4528 = vmatprep.subr.mxu0 0.0
        %4529 = vmatpush1.msra.mxu0 0.0
        %4530 = vmatprep.subr.mxu0 0.0
        %4531 = vmatpush1.msra.mxu0 0.0
        %4532 = vmatprep.subr.mxu0 0.0
        %4533 = vmatpush1.msra.mxu0 0.0
        %4534 = vmatprep.subr.mxu0 0.0
        %4535 = vmatpush1.msra.mxu0 0.0
        %4536 = vmatprep.subr.mxu0 0.0
        %4537 = vmatpush1.msra.mxu0 0.0
        %4538 = vmatprep.subr.mxu0 0.0
        %4539 = vmatpush1.msra.mxu0 0.0
        %4540 = vmatprep.subr.mxu0 0.0
        %4541 = vmatpush1.msra.mxu0 0.0
        %4542 = vmatprep.subr.mxu0 0.0
        %4543 = vmatpush1.msra.mxu0 0.0
        %4544 = vmatprep.subr.mxu0 0.0
        %4545 = vmatpush1.msra.mxu0 0.0
        %4546 = vmatprep.subr.mxu0 0.0
        %4547 = vmatpush1.msra.mxu0 0.0
        %4548 = vmatprep.subr.mxu0 0.0
        %4549 = vmatpush1.msra.mxu0 0.0
        %4550 = vmatprep.subr.mxu0 0.0
        %4551 = vmatpush1.msra.mxu0 0.0
        %4552 = vmatprep.subr.mxu0 0.0
        %4553 = vmatpush1.msra.mxu0 0.0
        %4554 = vmatprep.subr.mxu0 0.0
        %4555 = vmatpush1.msra.mxu0 0.0
        %4556 = vmatprep.subr.mxu0 0.0
        %4557 = vmatpush1.msra.mxu0 0.0
        %4558 = vmatprep.subr.mxu0 0.0
        %4559 = vmatpush1.msra.mxu0 0.0
        %4560 = vmatprep.subr.mxu0 0.0
        %4561 = vmatpush1.msra.mxu0 0.0
        %4562 = vmatprep.subr.mxu0 0.0
        %4563 = vmatpush1.msra.mxu0 0.0
        %4564 = vmatprep.subr.mxu0 0.0
        %4565 = vmatpush1.msra.mxu0 0.0
        %4566 = vmatprep.subr.mxu0 0.0
        %4567 = vmatpush1.msra.mxu0 0.0
        %4568 = vmatprep.subr.mxu0 0.0
        %4569 = vmatpush1.msra.mxu0 0.0
        %4570 = vmatprep.subr.mxu0 0.0
        %4571 = vmatpush1.msra.mxu0 0.0
        %4572 = vmatprep.subr.mxu0 0.0
        %4573 = vmatpush1.msra.mxu0 0.0
        %4574 = vmatprep.subr.mxu0 0.0
        %4575 = vmatpush1.msra.mxu0 0.0
        %4576 = vmatprep.subr.mxu0 0.0
        %4577 = vmatpush1.msra.mxu0 0.0
        %4578 = vmatprep.subr.mxu0 0.0
        %4579 = vmatpush1.msra.mxu0 0.0
        %4580 = vmatprep.subr.mxu0 0.0
        %4581 = vmatpush1.msra.mxu0 0.0
        %4582 = vmatprep.subr.mxu0 0.0
        %4583 = vmatpush1.msra.mxu0 0.0
        %4584 = vmatprep.mubr.f32.mxu0 0.0
        %4585 = vmatmul.mubr.f32.gmra.mrb[0].mxu0 %v4509
        %v4586 = vpop.f32.mrb[0].mxu0
        %v4587 = vadd.f32 0.0, %v4586
        %v4588 = vpop.f32.mrb[0].mxu0
        %4589 = vmatprep.mubr.f32.mxu0 0.0
        %4590 = vmatmul.mubr.f32.gmra.mrb[0].mxu0 %v4512
        %v4591 = vpop.f32.mrb[0].mxu0
        %v4592 = vadd.f32 0.0, %v4591
        %v4593 = vpop.f32.mrb[0].mxu0
        %4594 = vmatprep.mubr.f32.mxu0 0.0
        %4595 = vmatmul.mubr.f32.gmra.mrb[0].mxu0 %v4515
        %v4596 = vpop.f32.mrb[0].mxu0
        %v4597 = vadd.f32 0.0, %v4596
        %v4598 = vpop.f32.mrb[0].mxu0
        %4599 = vmatprep.mubr.f32.mxu0 0.0
        %4600 = vmatmul.mubr.f32.gmra.mrb[0].mxu0 %v4518
        %v4601 = vpop.f32.mrb[0].mxu0
        %v4602 = vadd.f32 0.0, %v4601
        %v4603 = vpop.f32.mrb[0].mxu0
        %4604 = vdwg.mxu0
        %s4605 = scalar_lea.vmem %s2, 96
        %v4606 = vld [vmem:[%s4605] sm:$0xff]
        %v4607 = vld [vmem:[%s4605 + $0x8] sm:$0xff]
        %v4608 = vld [vmem:[%s4605 + $0x10] sm:$0xff]
        %v4609 = vld [vmem:[%s4605 + $0x18] sm:$0xff]
        %s4610 = scalar_lea.vmem %s3, 96
        %v4611 = vld [vmem:[%s4610] sm:$0xff]
        %v4612 = vld [vmem:[%s4610 + $0x8] sm:$0xff]
        %v4613 = vld [vmem:[%s4610 + $0x10] sm:$0xff]
        %v4614 = vld [vmem:[%s4610 + $0x18] sm:$0xff]
        %v4616 = vsel %vm321, %v4606, 0
        %v4619 = vsel %vm321, %v4607, 0
        %v4622 = vsel %vm321, %v4608, 0
        %v4625 = vsel %vm321, %v4609, 0
        %4627 = vmatprep.subr.mxu0 0.0
        %4628 = vmatpush1.msra.mxu0 %v4405
        %4629 = vmatprep.subr.mxu0 0.0
        %4630 = vmatpush1.msra.mxu0 %v4410
        %4631 = vmatprep.subr.mxu0 0.0
        %4632 = vmatpush1.msra.mxu0 %v4415
        %4633 = vmatprep.subr.mxu0 0.0
        %4634 = vmatpush1.msra.mxu0 %v4420
        %4635 = vmatprep.subr.mxu0 0.0
        %4636 = vmatpush1.msra.mxu0 0.0
        %4637 = vmatprep.subr.mxu0 0.0
        %4638 = vmatpush1.msra.mxu0 0.0
        %4639 = vmatprep.subr.mxu0 0.0
        %4640 = vmatpush1.msra.mxu0 0.0
        %4641 = vmatprep.subr.mxu0 0.0
        %4642 = vmatpush1.msra.mxu0 0.0
        %4643 = vmatprep.subr.mxu0 0.0
        %4644 = vmatpush1.msra.mxu0 0.0
        %4645 = vmatprep.subr.mxu0 0.0
        %4646 = vmatpush1.msra.mxu0 0.0
        %4647 = vmatprep.subr.mxu0 0.0
        %4648 = vmatpush1.msra.mxu0 0.0
        %4649 = vmatprep.subr.mxu0 0.0
        %4650 = vmatpush1.msra.mxu0 0.0
        %4651 = vmatprep.subr.mxu0 0.0
        %4652 = vmatpush1.msra.mxu0 0.0
        %4653 = vmatprep.subr.mxu0 0.0
        %4654 = vmatpush1.msra.mxu0 0.0
        %4655 = vmatprep.subr.mxu0 0.0
        %4656 = vmatpush1.msra.mxu0 0.0
        %4657 = vmatprep.subr.mxu0 0.0
        %4658 = vmatpush1.msra.mxu0 0.0
        %4659 = vmatprep.subr.mxu0 0.0
        %4660 = vmatpush1.msra.mxu0 0.0
        %4661 = vmatprep.subr.mxu0 0.0
        %4662 = vmatpush1.msra.mxu0 0.0
        %4663 = vmatprep.subr.mxu0 0.0
        %4664 = vmatpush1.msra.mxu0 0.0
        %4665 = vmatprep.subr.mxu0 0.0
        %4666 = vmatpush1.msra.mxu0 0.0
        %4667 = vmatprep.subr.mxu0 0.0
        %4668 = vmatpush1.msra.mxu0 0.0
        %4669 = vmatprep.subr.mxu0 0.0
        %4670 = vmatpush1.msra.mxu0 0.0
        %4671 = vmatprep.subr.mxu0 0.0
        %4672 = vmatpush1.msra.mxu0 0.0
        %4673 = vmatprep.subr.mxu0 0.0
        %4674 = vmatpush1.msra.mxu0 0.0
        %4675 = vmatprep.subr.mxu0 0.0
        %4676 = vmatpush1.msra.mxu0 0.0
        %4677 = vmatprep.subr.mxu0 0.0
        %4678 = vmatpush1.msra.mxu0 0.0
        %4679 = vmatprep.subr.mxu0 0.0
        %4680 = vmatpush1.msra.mxu0 0.0
        %4681 = vmatprep.subr.mxu0 0.0
        %4682 = vmatpush1.msra.mxu0 0.0
        %4683 = vmatprep.subr.mxu0 0.0
        %4684 = vmatpush1.msra.mxu0 0.0
        %4685 = vmatprep.subr.mxu0 0.0
        %4686 = vmatpush1.msra.mxu0 0.0
        %4687 = vmatprep.subr.mxu0 0.0
        %4688 = vmatpush1.msra.mxu0 0.0
        %4689 = vmatprep.subr.mxu0 0.0
        %4690 = vmatpush1.msra.mxu0 0.0
        %4691 = vmatprep.mubr.f32.mxu0 0.0
        %4692 = vmatmul.mubr.f32.gmra.mrb[0].mxu0 %v4616
        %v4693 = vpop.f32.mrb[0].mxu0
        %v4694 = vadd.f32 0.0, %v4693
        %v4695 = vpop.f32.mrb[0].mxu0
        %4696 = vmatprep.mubr.f32.mxu0 0.0
        %4697 = vmatmul.mubr.f32.gmra.mrb[0].mxu0 %v4619
        %v4698 = vpop.f32.mrb[0].mxu0
        %v4699 = vadd.f32 0.0, %v4698
        %v4700 = vpop.f32.mrb[0].mxu0
        %4701 = vmatprep.mubr.f32.mxu0 0.0
        %4702 = vmatmul.mubr.f32.gmra.mrb[0].mxu0 %v4622
        %v4703 = vpop.f32.mrb[0].mxu0
        %v4704 = vadd.f32 0.0, %v4703
        %v4705 = vpop.f32.mrb[0].mxu0
        %4706 = vmatprep.mubr.f32.mxu0 0.0
        %4707 = vmatmul.mubr.f32.gmra.mrb[0].mxu0 %v4625
        %v4708 = vpop.f32.mrb[0].mxu0
        %v4709 = vadd.f32 0.0, %v4708
        %v4710 = vpop.f32.mrb[0].mxu0
        %4711 = vdwg.mxu0
        %v4713 = vsel %vm321, %v4694, 0
        %v4716 = vsel %vm321, %v4699, 0
        %v4719 = vsel %vm321, %v4704, 0
        %v4722 = vsel %vm321, %v4709, 0
        %4724 = vmatprep.subr.mxu0 0.0
        %4725 = vmatpush1.msra.mxu0 %v4611
        %4726 = vmatprep.subr.mxu0 0.0
        %4727 = vmatpush1.msra.mxu0 %v4612
        %4728 = vmatprep.subr.mxu0 0.0
        %4729 = vmatpush1.msra.mxu0 %v4613
        %4730 = vmatprep.subr.mxu0 0.0
        %4731 = vmatpush1.msra.mxu0 %v4614
        %4732 = vmatprep.subr.mxu0 0.0
        %4733 = vmatpush1.msra.mxu0 0.0
        %4734 = vmatprep.subr.mxu0 0.0
        %4735 = vmatpush1.msra.mxu0 0.0
        %4736 = vmatprep.subr.mxu0 0.0
        %4737 = vmatpush1.msra.mxu0 0.0
        %4738 = vmatprep.subr.mxu0 0.0
        %4739 = vmatpush1.msra.mxu0 0.0
        %4740 = vmatprep.subr.mxu0 0.0
        %4741 = vmatpush1.msra.mxu0 0.0
        %4742 = vmatprep.subr.mxu0 0.0
        %4743 = vmatpush1.msra.mxu0 0.0
        %4744 = vmatprep.subr.mxu0 0.0
        %4745 = vmatpush1.msra.mxu0 0.0
        %4746 = vmatprep.subr.mxu0 0.0
        %4747 = vmatpush1.msra.mxu0 0.0
        %4748 = vmatprep.subr.mxu0 0.0
        %4749 = vmatpush1.msra.mxu0 0.0
        %4750 = vmatprep.subr.mxu0 0.0
        %4751 = vmatpush1.msra.mxu0 0.0
        %4752 = vmatprep.subr.mxu0 0.0
        %4753 = vmatpush1.msra.mxu0 0.0
        %4754 = vmatprep.subr.mxu0 0.0
        %4755 = vmatpush1.msra.mxu0 0.0
        %4756 = vmatprep.subr.mxu0 0.0
        %4757 = vmatpush1.msra.mxu0 0.0
        %4758 = vmatprep.subr.mxu0 0.0
        %4759 = vmatpush1.msra.mxu0 0.0
        %4760 = vmatprep.subr.mxu0 0.0
        %4761 = vmatpush1.msra.mxu0 0.0
        %4762 = vmatprep.subr.mxu0 0.0
        %4763 = vmatpush1.msra.mxu0 0.0
        %4764 = vmatprep.subr.mxu0 0.0
        %4765 = vmatpush1.msra.mxu0 0.0
        %4766 = vmatprep.subr.mxu0 0.0
        %4767 = vmatpush1.msra.mxu0 0.0
        %4768 = vmatprep.subr.mxu0 0.0
        %4769 = vmatpush1.msra.mxu0 0.0
        %4770 = vmatprep.subr.mxu0 0.0
        %4771 = vmatpush1.msra.mxu0 0.0
        %4772 = vmatprep.subr.mxu0 0.0
        %4773 = vmatpush1.msra.mxu0 0.0
        %4774 = vmatprep.subr.mxu0 0.0
        %4775 = vmatpush1.msra.mxu0 0.0
        %4776 = vmatprep.subr.mxu0 0.0
        %4777 = vmatpush1.msra.mxu0 0.0
        %4778 = vmatprep.subr.mxu0 0.0
        %4779 = vmatpush1.msra.mxu0 0.0
        %4780 = vmatprep.subr.mxu0 0.0
        %4781 = vmatpush1.msra.mxu0 0.0
        %4782 = vmatprep.subr.mxu0 0.0
        %4783 = vmatpush1.msra.mxu0 0.0
        %4784 = vmatprep.subr.mxu0 0.0
        %4785 = vmatpush1.msra.mxu0 0.0
        %4786 = vmatprep.subr.mxu0 0.0
        %4787 = vmatpush1.msra.mxu0 0.0
        %4788 = vmatprep.mubr.f32.mxu0 0.0
        %4789 = vmatmul.mubr.f32.gmra.mrb[0].mxu0 %v4713
        %v4790 = vpop.f32.mrb[0].mxu0
        %v4791 = vadd.f32 0.0, %v4790
        %v4792 = vpop.f32.mrb[0].mxu0
        %4793 = vmatprep.mubr.f32.mxu0 0.0
        %4794 = vmatmul.mubr.f32.gmra.mrb[0].mxu0 %v4716
        %v4795 = vpop.f32.mrb[0].mxu0
        %v4796 = vadd.f32 0.0, %v4795
        %v4797 = vpop.f32.mrb[0].mxu0
        %4798 = vmatprep.mubr.f32.mxu0 0.0
        %4799 = vmatmul.mubr.f32.gmra.mrb[0].mxu0 %v4719
        %v4800 = vpop.f32.mrb[0].mxu0
        %v4801 = vadd.f32 0.0, %v4800
        %v4802 = vpop.f32.mrb[0].mxu0
        %4803 = vmatprep.mubr.f32.mxu0 0.0
        %4804 = vmatmul.mubr.f32.gmra.mrb[0].mxu0 %v4722
        %v4805 = vpop.f32.mrb[0].mxu0
        %v4806 = vadd.f32 0.0, %v4805
        %v4807 = vpop.f32.mrb[0].mxu0
        %4808 = vdwg.mxu0
        %4809 = vmatprep.subr.mxu0 0.0
        %4810 = vmatpush1.msra.mxu0 %v4587
        %4811 = vmatprep.subr.mxu0 0.0
        %4812 = vmatpush1.msra.mxu0 %v4592
        %4813 = vmatprep.subr.mxu0 0.0
        %4814 = vmatpush1.msra.mxu0 %v4597
        %4815 = vmatprep.subr.mxu0 0.0
        %4816 = vmatpush1.msra.mxu0 %v4602
        %4817 = vmatprep.subr.mxu0 0.0
        %4818 = vmatpush1.msra.mxu0 0.0
        %4819 = vmatprep.subr.mxu0 0.0
        %4820 = vmatpush1.msra.mxu0 0.0
        %4821 = vmatprep.subr.mxu0 0.0
        %4822 = vmatpush1.msra.mxu0 0.0
        %4823 = vmatprep.subr.mxu0 0.0
        %4824 = vmatpush1.msra.mxu0 0.0
        %4825 = vmatprep.subr.mxu0 0.0
        %4826 = vmatpush1.msra.mxu0 0.0
        %4827 = vmatprep.subr.mxu0 0.0
        %4828 = vmatpush1.msra.mxu0 0.0
        %4829 = vmatprep.subr.mxu0 0.0
        %4830 = vmatpush1.msra.mxu0 0.0
        %4831 = vmatprep.subr.mxu0 0.0
        %4832 = vmatpush1.msra.mxu0 0.0
        %4833 = vmatprep.subr.mxu0 0.0
        %4834 = vmatpush1.msra.mxu0 0.0
        %4835 = vmatprep.subr.mxu0 0.0
        %4836 = vmatpush1.msra.mxu0 0.0
        %4837 = vmatprep.subr.mxu0 0.0
        %4838 = vmatpush1.msra.mxu0 0.0
        %4839 = vmatprep.subr.mxu0 0.0
        %4840 = vmatpush1.msra.mxu0 0.0
        %4841 = vmatprep.subr.mxu0 0.0
        %4842 = vmatpush1.msra.mxu0 0.0
        %4843 = vmatprep.subr.mxu0 0.0
        %4844 = vmatpush1.msra.mxu0 0.0
        %4845 = vmatprep.subr.mxu0 0.0
        %4846 = vmatpush1.msra.mxu0 0.0
        %4847 = vmatprep.subr.mxu0 0.0
        %4848 = vmatpush1.msra.mxu0 0.0
        %4849 = vmatprep.subr.mxu0 0.0
        %4850 = vmatpush1.msra.mxu0 0.0
        %4851 = vmatprep.subr.mxu0 0.0
        %4852 = vmatpush1.msra.mxu0 0.0
        %4853 = vmatprep.subr.mxu0 0.0
        %4854 = vmatpush1.msra.mxu0 0.0
        %4855 = vmatprep.subr.mxu0 0.0
        %4856 = vmatpush1.msra.mxu0 0.0
        %4857 = vmatprep.subr.mxu0 0.0
        %4858 = vmatpush1.msra.mxu0 0.0
        %4859 = vmatprep.subr.mxu0 0.0
        %4860 = vmatpush1.msra.mxu0 0.0
        %4861 = vmatprep.subr.mxu0 0.0
        %4862 = vmatpush1.msra.mxu0 0.0
        %4863 = vmatprep.subr.mxu0 0.0
        %4864 = vmatpush1.msra.mxu0 0.0
        %4865 = vmatprep.subr.mxu0 0.0
        %4866 = vmatpush1.msra.mxu0 0.0
        %4867 = vmatprep.subr.mxu0 0.0
        %4868 = vmatpush1.msra.mxu0 0.0
        %4869 = vmatprep.subr.mxu0 0.0
        %4870 = vmatpush1.msra.mxu0 0.0
        %4871 = vmatprep.subr.mxu0 0.0
        %4872 = vmatpush1.msra.mxu0 0.0
        %4873 = vmatprep.mubr.f32.mxu0 0.0
        %4874 = vmatmul.mubr.f32.gmra.mrb[0].mxu0 %v4616
        %v4875 = vpop.f32.mrb[0].mxu0
        %v4876 = vadd.f32 0.0, %v4875
        %v4877 = vpop.f32.mrb[0].mxu0
        %4878 = vmatprep.mubr.f32.mxu0 0.0
        %4879 = vmatmul.mubr.f32.gmra.mrb[0].mxu0 %v4619
        %v4880 = vpop.f32.mrb[0].mxu0
        %v4881 = vadd.f32 0.0, %v4880
        %v4882 = vpop.f32.mrb[0].mxu0
        %4883 = vmatprep.mubr.f32.mxu0 0.0
        %4884 = vmatmul.mubr.f32.gmra.mrb[0].mxu0 %v4622
        %v4885 = vpop.f32.mrb[0].mxu0
        %v4886 = vadd.f32 0.0, %v4885
        %v4887 = vpop.f32.mrb[0].mxu0
        %4888 = vmatprep.mubr.f32.mxu0 0.0
        %4889 = vmatmul.mubr.f32.gmra.mrb[0].mxu0 %v4625
        %v4890 = vpop.f32.mrb[0].mxu0
        %v4891 = vadd.f32 0.0, %v4890
        %v4892 = vpop.f32.mrb[0].mxu0
        %4893 = vdwg.mxu0
        %v4895 = vsel %vm321, %v4876, 0
        %v4898 = vsel %vm321, %v4881, 0
        %v4901 = vsel %vm321, %v4886, 0
        %v4904 = vsel %vm321, %v4891, 0
        %4906 = vmatprep.subr.mxu0 0.0
        %4907 = vmatpush1.msra.mxu0 %v4611
        %4908 = vmatprep.subr.mxu0 0.0
        %4909 = vmatpush1.msra.mxu0 %v4612
        %4910 = vmatprep.subr.mxu0 0.0
        %4911 = vmatpush1.msra.mxu0 %v4613
        %4912 = vmatprep.subr.mxu0 0.0
        %4913 = vmatpush1.msra.mxu0 %v4614
        %4914 = vmatprep.subr.mxu0 0.0
        %4915 = vmatpush1.msra.mxu0 0.0
        %4916 = vmatprep.subr.mxu0 0.0
        %4917 = vmatpush1.msra.mxu0 0.0
        %4918 = vmatprep.subr.mxu0 0.0
        %4919 = vmatpush1.msra.mxu0 0.0
        %4920 = vmatprep.subr.mxu0 0.0
        %4921 = vmatpush1.msra.mxu0 0.0
        %4922 = vmatprep.subr.mxu0 0.0
        %4923 = vmatpush1.msra.mxu0 0.0
        %4924 = vmatprep.subr.mxu0 0.0
        %4925 = vmatpush1.msra.mxu0 0.0
        %4926 = vmatprep.subr.mxu0 0.0
        %4927 = vmatpush1.msra.mxu0 0.0
        %4928 = vmatprep.subr.mxu0 0.0
        %4929 = vmatpush1.msra.mxu0 0.0
        %4930 = vmatprep.subr.mxu0 0.0
        %4931 = vmatpush1.msra.mxu0 0.0
        %4932 = vmatprep.subr.mxu0 0.0
        %4933 = vmatpush1.msra.mxu0 0.0
        %4934 = vmatprep.subr.mxu0 0.0
        %4935 = vmatpush1.msra.mxu0 0.0
        %4936 = vmatprep.subr.mxu0 0.0
        %4937 = vmatpush1.msra.mxu0 0.0
        %4938 = vmatprep.subr.mxu0 0.0
        %4939 = vmatpush1.msra.mxu0 0.0
        %4940 = vmatprep.subr.mxu0 0.0
        %4941 = vmatpush1.msra.mxu0 0.0
        %4942 = vmatprep.subr.mxu0 0.0
        %4943 = vmatpush1.msra.mxu0 0.0
        %4944 = vmatprep.subr.mxu0 0.0
        %4945 = vmatpush1.msra.mxu0 0.0
        %4946 = vmatprep.subr.mxu0 0.0
        %4947 = vmatpush1.msra.mxu0 0.0
        %4948 = vmatprep.subr.mxu0 0.0
        %4949 = vmatpush1.msra.mxu0 0.0
        %4950 = vmatprep.subr.mxu0 0.0
        %4951 = vmatpush1.msra.mxu0 0.0
        %4952 = vmatprep.subr.mxu0 0.0
        %4953 = vmatpush1.msra.mxu0 0.0
        %4954 = vmatprep.subr.mxu0 0.0
        %4955 = vmatpush1.msra.mxu0 0.0
        %4956 = vmatprep.subr.mxu0 0.0
        %4957 = vmatpush1.msra.mxu0 0.0
        %4958 = vmatprep.subr.mxu0 0.0
        %4959 = vmatpush1.msra.mxu0 0.0
        %4960 = vmatprep.subr.mxu0 0.0
        %4961 = vmatpush1.msra.mxu0 0.0
        %4962 = vmatprep.subr.mxu0 0.0
        %4963 = vmatpush1.msra.mxu0 0.0
        %4964 = vmatprep.subr.mxu0 0.0
        %4965 = vmatpush1.msra.mxu0 0.0
        %4966 = vmatprep.subr.mxu0 0.0
        %4967 = vmatpush1.msra.mxu0 0.0
        %4968 = vmatprep.subr.mxu0 0.0
        %4969 = vmatpush1.msra.mxu0 0.0
        %4970 = vmatprep.mubr.f32.mxu0 0.0
        %4971 = vmatmul.mubr.f32.gmra.mrb[0].mxu0 %v4895
        %v4972 = vpop.f32.mrb[0].mxu0
        %v4973 = vadd.f32 0.0, %v4972
        %v4974 = vpop.f32.mrb[0].mxu0
        %4975 = vmatprep.mubr.f32.mxu0 0.0
        %4976 = vmatmul.mubr.f32.gmra.mrb[0].mxu0 %v4898
        %v4977 = vpop.f32.mrb[0].mxu0
        %v4978 = vadd.f32 0.0, %v4977
        %v4979 = vpop.f32.mrb[0].mxu0
        %4980 = vmatprep.mubr.f32.mxu0 0.0
        %4981 = vmatmul.mubr.f32.gmra.mrb[0].mxu0 %v4901
        %v4982 = vpop.f32.mrb[0].mxu0
        %v4983 = vadd.f32 0.0, %v4982
        %v4984 = vpop.f32.mrb[0].mxu0
        %4985 = vmatprep.mubr.f32.mxu0 0.0
        %4986 = vmatmul.mubr.f32.gmra.mrb[0].mxu0 %v4904
        %v4987 = vpop.f32.mrb[0].mxu0
        %v4988 = vadd.f32 0.0, %v4987
        %v4989 = vpop.f32.mrb[0].mxu0
        %4990 = vdwg.mxu0
        %v4991 = vmul.f32 %v4405, %v4405
        %v4992 = vmul.f32 %v4410, %v4410
        %v4993 = vmul.f32 %v4415, %v4415
        %v4994 = vmul.f32 %v4420, %v4420
        %4995 = vmatprep.subr.mxu0 0.0
        %4996 = vmatpush1.msra.mxu0 %v4991
        %4997 = vmatprep.subr.mxu0 0.0
        %4998 = vmatpush1.msra.mxu0 %v4992
        %4999 = vmatprep.subr.mxu0 0.0
        %5000 = vmatpush1.msra.mxu0 %v4993
        %5001 = vmatprep.subr.mxu0 0.0
        %5002 = vmatpush1.msra.mxu0 %v4994
        %5003 = vmatprep.subr.mxu0 0.0
        %5004 = vmatpush1.msra.mxu0 0.0
        %5005 = vmatprep.subr.mxu0 0.0
        %5006 = vmatpush1.msra.mxu0 0.0
        %5007 = vmatprep.subr.mxu0 0.0
        %5008 = vmatpush1.msra.mxu0 0.0
        %5009 = vmatprep.subr.mxu0 0.0
        %5010 = vmatpush1.msra.mxu0 0.0
        %5011 = vmatprep.subr.mxu0 0.0
        %5012 = vmatpush1.msra.mxu0 0.0
        %5013 = vmatprep.subr.mxu0 0.0
        %5014 = vmatpush1.msra.mxu0 0.0
        %5015 = vmatprep.subr.mxu0 0.0
        %5016 = vmatpush1.msra.mxu0 0.0
        %5017 = vmatprep.subr.mxu0 0.0
        %5018 = vmatpush1.msra.mxu0 0.0
        %5019 = vmatprep.subr.mxu0 0.0
        %5020 = vmatpush1.msra.mxu0 0.0
        %5021 = vmatprep.subr.mxu0 0.0
        %5022 = vmatpush1.msra.mxu0 0.0
        %5023 = vmatprep.subr.mxu0 0.0
        %5024 = vmatpush1.msra.mxu0 0.0
        %5025 = vmatprep.subr.mxu0 0.0
        %5026 = vmatpush1.msra.mxu0 0.0
        %5027 = vmatprep.subr.mxu0 0.0
        %5028 = vmatpush1.msra.mxu0 0.0
        %5029 = vmatprep.subr.mxu0 0.0
        %5030 = vmatpush1.msra.mxu0 0.0
        %5031 = vmatprep.subr.mxu0 0.0
        %5032 = vmatpush1.msra.mxu0 0.0
        %5033 = vmatprep.subr.mxu0 0.0
        %5034 = vmatpush1.msra.mxu0 0.0
        %5035 = vmatprep.subr.mxu0 0.0
        %5036 = vmatpush1.msra.mxu0 0.0
        %5037 = vmatprep.subr.mxu0 0.0
        %5038 = vmatpush1.msra.mxu0 0.0
        %5039 = vmatprep.subr.mxu0 0.0
        %5040 = vmatpush1.msra.mxu0 0.0
        %5041 = vmatprep.subr.mxu0 0.0
        %5042 = vmatpush1.msra.mxu0 0.0
        %5043 = vmatprep.subr.mxu0 0.0
        %5044 = vmatpush1.msra.mxu0 0.0
        %5045 = vmatprep.subr.mxu0 0.0
        %5046 = vmatpush1.msra.mxu0 0.0
        %5047 = vmatprep.subr.mxu0 0.0
        %5048 = vmatpush1.msra.mxu0 0.0
        %5049 = vmatprep.subr.mxu0 0.0
        %5050 = vmatpush1.msra.mxu0 0.0
        %5051 = vmatprep.subr.mxu0 0.0
        %5052 = vmatpush1.msra.mxu0 0.0
        %5053 = vmatprep.subr.mxu0 0.0
        %5054 = vmatpush1.msra.mxu0 0.0
        %5055 = vmatprep.subr.mxu0 0.0
        %5056 = vmatpush1.msra.mxu0 0.0
        %5057 = vmatprep.subr.mxu0 0.0
        %5058 = vmatpush1.msra.mxu0 0.0
        %5059 = vmatprep.mubr.f32.mxu0 0.0
        %5060 = vmatmul.mubr.f32.gmra.mrb[0].mxu0 %v4616
        %v5061 = vpop.f32.mrb[0].mxu0
        %v5062 = vadd.f32 0.0, %v5061
        %v5063 = vpop.f32.mrb[0].mxu0
        %5064 = vmatprep.mubr.f32.mxu0 0.0
        %5065 = vmatmul.mubr.f32.gmra.mrb[0].mxu0 %v4619
        %v5066 = vpop.f32.mrb[0].mxu0
        %v5067 = vadd.f32 0.0, %v5066
        %v5068 = vpop.f32.mrb[0].mxu0
        %5069 = vmatprep.mubr.f32.mxu0 0.0
        %5070 = vmatmul.mubr.f32.gmra.mrb[0].mxu0 %v4622
        %v5071 = vpop.f32.mrb[0].mxu0
        %v5072 = vadd.f32 0.0, %v5071
        %v5073 = vpop.f32.mrb[0].mxu0
        %5074 = vmatprep.mubr.f32.mxu0 0.0
        %5075 = vmatmul.mubr.f32.gmra.mrb[0].mxu0 %v4625
        %v5076 = vpop.f32.mrb[0].mxu0
        %v5077 = vadd.f32 0.0, %v5076
        %v5078 = vpop.f32.mrb[0].mxu0
        %5079 = vdwg.mxu0
        %v5081 = vsel %vm321, %v5062, 0
        %v5084 = vsel %vm321, %v5067, 0
        %v5087 = vsel %vm321, %v5072, 0
        %v5090 = vsel %vm321, %v5077, 0
        %5092 = vmatprep.subr.mxu0 0.0
        %5093 = vmatpush1.msra.mxu0 %v4611
        %5094 = vmatprep.subr.mxu0 0.0
        %5095 = vmatpush1.msra.mxu0 %v4612
        %5096 = vmatprep.subr.mxu0 0.0
        %5097 = vmatpush1.msra.mxu0 %v4613
        %5098 = vmatprep.subr.mxu0 0.0
        %5099 = vmatpush1.msra.mxu0 %v4614
        %5100 = vmatprep.subr.mxu0 0.0
        %5101 = vmatpush1.msra.mxu0 0.0
        %5102 = vmatprep.subr.mxu0 0.0
        %5103 = vmatpush1.msra.mxu0 0.0
        %5104 = vmatprep.subr.mxu0 0.0
        %5105 = vmatpush1.msra.mxu0 0.0
        %5106 = vmatprep.subr.mxu0 0.0
        %5107 = vmatpush1.msra.mxu0 0.0
        %5108 = vmatprep.subr.mxu0 0.0
        %5109 = vmatpush1.msra.mxu0 0.0
        %5110 = vmatprep.subr.mxu0 0.0
        %5111 = vmatpush1.msra.mxu0 0.0
        %5112 = vmatprep.subr.mxu0 0.0
        %5113 = vmatpush1.msra.mxu0 0.0
        %5114 = vmatprep.subr.mxu0 0.0
        %5115 = vmatpush1.msra.mxu0 0.0
        %5116 = vmatprep.subr.mxu0 0.0
        %5117 = vmatpush1.msra.mxu0 0.0
        %5118 = vmatprep.subr.mxu0 0.0
        %5119 = vmatpush1.msra.mxu0 0.0
        %5120 = vmatprep.subr.mxu0 0.0
        %5121 = vmatpush1.msra.mxu0 0.0
        %5122 = vmatprep.subr.mxu0 0.0
        %5123 = vmatpush1.msra.mxu0 0.0
        %5124 = vmatprep.subr.mxu0 0.0
        %5125 = vmatpush1.msra.mxu0 0.0
        %5126 = vmatprep.subr.mxu0 0.0
        %5127 = vmatpush1.msra.mxu0 0.0
        %5128 = vmatprep.subr.mxu0 0.0
        %5129 = vmatpush1.msra.mxu0 0.0
        %5130 = vmatprep.subr.mxu0 0.0
        %5131 = vmatpush1.msra.mxu0 0.0
        %5132 = vmatprep.subr.mxu0 0.0
        %5133 = vmatpush1.msra.mxu0 0.0
        %5134 = vmatprep.subr.mxu0 0.0
        %5135 = vmatpush1.msra.mxu0 0.0
        %5136 = vmatprep.subr.mxu0 0.0
        %5137 = vmatpush1.msra.mxu0 0.0
        %5138 = vmatprep.subr.mxu0 0.0
        %5139 = vmatpush1.msra.mxu0 0.0
        %5140 = vmatprep.subr.mxu0 0.0
        %5141 = vmatpush1.msra.mxu0 0.0
        %5142 = vmatprep.subr.mxu0 0.0
        %5143 = vmatpush1.msra.mxu0 0.0
        %5144 = vmatprep.subr.mxu0 0.0
        %5145 = vmatpush1.msra.mxu0 0.0
        %5146 = vmatprep.subr.mxu0 0.0
        %5147 = vmatpush1.msra.mxu0 0.0
        %5148 = vmatprep.subr.mxu0 0.0
        %5149 = vmatpush1.msra.mxu0 0.0
        %5150 = vmatprep.subr.mxu0 0.0
        %5151 = vmatpush1.msra.mxu0 0.0
        %5152 = vmatprep.subr.mxu0 0.0
        %5153 = vmatpush1.msra.mxu0 0.0
        %5154 = vmatprep.subr.mxu0 0.0
        %5155 = vmatpush1.msra.mxu0 0.0
        %5156 = vmatprep.mubr.f32.mxu0 0.0
        %5157 = vmatmul.mubr.f32.gmra.mrb[0].mxu0 %v5081
        %v5158 = vpop.f32.mrb[0].mxu0
        %v5159 = vadd.f32 0.0, %v5158
        %v5160 = vpop.f32.mrb[0].mxu0
        %5161 = vmatprep.mubr.f32.mxu0 0.0
        %5162 = vmatmul.mubr.f32.gmra.mrb[0].mxu0 %v5084
        %v5163 = vpop.f32.mrb[0].mxu0
        %v5164 = vadd.f32 0.0, %v5163
        %v5165 = vpop.f32.mrb[0].mxu0
        %5166 = vmatprep.mubr.f32.mxu0 0.0
        %5167 = vmatmul.mubr.f32.gmra.mrb[0].mxu0 %v5087
        %v5168 = vpop.f32.mrb[0].mxu0
        %v5169 = vadd.f32 0.0, %v5168
        %v5170 = vpop.f32.mrb[0].mxu0
        %5171 = vmatprep.mubr.f32.mxu0 0.0
        %5172 = vmatmul.mubr.f32.gmra.mrb[0].mxu0 %v5090
        %v5173 = vpop.f32.mrb[0].mxu0
        %v5174 = vadd.f32 0.0, %v5173
        %v5175 = vpop.f32.mrb[0].mxu0
        %5176 = vdwg.mxu0
        %v5177 = vmul.f32 %v4587, %v4587
        %v5178 = vmul.f32 %v4592, %v4592
        %v5179 = vmul.f32 %v4597, %v4597
        %v5180 = vmul.f32 %v4602, %v4602
        %5181 = vmatprep.subr.mxu0 0.0
        %5182 = vmatpush1.msra.mxu0 %v5177
        %5183 = vmatprep.subr.mxu0 0.0
        %5184 = vmatpush1.msra.mxu0 %v5178
        %5185 = vmatprep.subr.mxu0 0.0
        %5186 = vmatpush1.msra.mxu0 %v5179
        %5187 = vmatprep.subr.mxu0 0.0
        %5188 = vmatpush1.msra.mxu0 %v5180
        %5189 = vmatprep.subr.mxu0 0.0
        %5190 = vmatpush1.msra.mxu0 0.0
        %5191 = vmatprep.subr.mxu0 0.0
        %5192 = vmatpush1.msra.mxu0 0.0
        %5193 = vmatprep.subr.mxu0 0.0
        %5194 = vmatpush1.msra.mxu0 0.0
        %5195 = vmatprep.subr.mxu0 0.0
        %5196 = vmatpush1.msra.mxu0 0.0
        %5197 = vmatprep.subr.mxu0 0.0
        %5198 = vmatpush1.msra.mxu0 0.0
        %5199 = vmatprep.subr.mxu0 0.0
        %5200 = vmatpush1.msra.mxu0 0.0
        %5201 = vmatprep.subr.mxu0 0.0
        %5202 = vmatpush1.msra.mxu0 0.0
        %5203 = vmatprep.subr.mxu0 0.0
        %5204 = vmatpush1.msra.mxu0 0.0
        %5205 = vmatprep.subr.mxu0 0.0
        %5206 = vmatpush1.msra.mxu0 0.0
        %5207 = vmatprep.subr.mxu0 0.0
        %5208 = vmatpush1.msra.mxu0 0.0
        %5209 = vmatprep.subr.mxu0 0.0
        %5210 = vmatpush1.msra.mxu0 0.0
        %5211 = vmatprep.subr.mxu0 0.0
        %5212 = vmatpush1.msra.mxu0 0.0
        %5213 = vmatprep.subr.mxu0 0.0
        %5214 = vmatpush1.msra.mxu0 0.0
        %5215 = vmatprep.subr.mxu0 0.0
        %5216 = vmatpush1.msra.mxu0 0.0
        %5217 = vmatprep.subr.mxu0 0.0
        %5218 = vmatpush1.msra.mxu0 0.0
        %5219 = vmatprep.subr.mxu0 0.0
        %5220 = vmatpush1.msra.mxu0 0.0
        %5221 = vmatprep.subr.mxu0 0.0
        %5222 = vmatpush1.msra.mxu0 0.0
        %5223 = vmatprep.subr.mxu0 0.0
        %5224 = vmatpush1.msra.mxu0 0.0
        %5225 = vmatprep.subr.mxu0 0.0
        %5226 = vmatpush1.msra.mxu0 0.0
        %5227 = vmatprep.subr.mxu0 0.0
        %5228 = vmatpush1.msra.mxu0 0.0
        %5229 = vmatprep.subr.mxu0 0.0
        %5230 = vmatpush1.msra.mxu0 0.0
        %5231 = vmatprep.subr.mxu0 0.0
        %5232 = vmatpush1.msra.mxu0 0.0
        %5233 = vmatprep.subr.mxu0 0.0
        %5234 = vmatpush1.msra.mxu0 0.0
        %5235 = vmatprep.subr.mxu0 0.0
        %5236 = vmatpush1.msra.mxu0 0.0
        %5237 = vmatprep.subr.mxu0 0.0
        %5238 = vmatpush1.msra.mxu0 0.0
        %5239 = vmatprep.subr.mxu0 0.0
        %5240 = vmatpush1.msra.mxu0 0.0
        %5241 = vmatprep.subr.mxu0 0.0
        %5242 = vmatpush1.msra.mxu0 0.0
        %5243 = vmatprep.subr.mxu0 0.0
        %5244 = vmatpush1.msra.mxu0 0.0
        %5245 = vmatprep.mubr.f32.mxu0 0.0
        %5246 = vmatmul.mubr.f32.gmra.mrb[0].mxu0 %v4616
        %v5247 = vpop.f32.mrb[0].mxu0
        %v5248 = vadd.f32 0.0, %v5247
        %v5249 = vpop.f32.mrb[0].mxu0
        %5250 = vmatprep.mubr.f32.mxu0 0.0
        %5251 = vmatmul.mubr.f32.gmra.mrb[0].mxu0 %v4619
        %v5252 = vpop.f32.mrb[0].mxu0
        %v5253 = vadd.f32 0.0, %v5252
        %v5254 = vpop.f32.mrb[0].mxu0
        %5255 = vmatprep.mubr.f32.mxu0 0.0
        %5256 = vmatmul.mubr.f32.gmra.mrb[0].mxu0 %v4622
        %v5257 = vpop.f32.mrb[0].mxu0
        %v5258 = vadd.f32 0.0, %v5257
        %v5259 = vpop.f32.mrb[0].mxu0
        %5260 = vmatprep.mubr.f32.mxu0 0.0
        %5261 = vmatmul.mubr.f32.gmra.mrb[0].mxu0 %v4625
        %v5262 = vpop.f32.mrb[0].mxu0
        %v5263 = vadd.f32 0.0, %v5262
        %v5264 = vpop.f32.mrb[0].mxu0
        %5265 = vdwg.mxu0
        %v5267 = vsel %vm321, %v5248, 0
        %v5270 = vsel %vm321, %v5253, 0
        %v5273 = vsel %vm321, %v5258, 0
        %v5276 = vsel %vm321, %v5263, 0
        %5278 = vmatprep.subr.mxu0 0.0
        %5279 = vmatpush1.msra.mxu0 %v4611
        %5280 = vmatprep.subr.mxu0 0.0
        %5281 = vmatpush1.msra.mxu0 %v4612
        %5282 = vmatprep.subr.mxu0 0.0
        %5283 = vmatpush1.msra.mxu0 %v4613
        %5284 = vmatprep.subr.mxu0 0.0
        %5285 = vmatpush1.msra.mxu0 %v4614
        %5286 = vmatprep.subr.mxu0 0.0
        %5287 = vmatpush1.msra.mxu0 0.0
        %5288 = vmatprep.subr.mxu0 0.0
        %5289 = vmatpush1.msra.mxu0 0.0
        %5290 = vmatprep.subr.mxu0 0.0
        %5291 = vmatpush1.msra.mxu0 0.0
        %5292 = vmatprep.subr.mxu0 0.0
        %5293 = vmatpush1.msra.mxu0 0.0
        %5294 = vmatprep.subr.mxu0 0.0
        %5295 = vmatpush1.msra.mxu0 0.0
        %5296 = vmatprep.subr.mxu0 0.0
        %5297 = vmatpush1.msra.mxu0 0.0
        %5298 = vmatprep.subr.mxu0 0.0
        %5299 = vmatpush1.msra.mxu0 0.0
        %5300 = vmatprep.subr.mxu0 0.0
        %5301 = vmatpush1.msra.mxu0 0.0
        %5302 = vmatprep.subr.mxu0 0.0
        %5303 = vmatpush1.msra.mxu0 0.0
        %5304 = vmatprep.subr.mxu0 0.0
        %5305 = vmatpush1.msra.mxu0 0.0
        %5306 = vmatprep.subr.mxu0 0.0
        %5307 = vmatpush1.msra.mxu0 0.0
        %5308 = vmatprep.subr.mxu0 0.0
        %5309 = vmatpush1.msra.mxu0 0.0
        %5310 = vmatprep.subr.mxu0 0.0
        %5311 = vmatpush1.msra.mxu0 0.0
        %5312 = vmatprep.subr.mxu0 0.0
        %5313 = vmatpush1.msra.mxu0 0.0
        %5314 = vmatprep.subr.mxu0 0.0
        %5315 = vmatpush1.msra.mxu0 0.0
        %5316 = vmatprep.subr.mxu0 0.0
        %5317 = vmatpush1.msra.mxu0 0.0
        %5318 = vmatprep.subr.mxu0 0.0
        %5319 = vmatpush1.msra.mxu0 0.0
        %5320 = vmatprep.subr.mxu0 0.0
        %5321 = vmatpush1.msra.mxu0 0.0
        %5322 = vmatprep.subr.mxu0 0.0
        %5323 = vmatpush1.msra.mxu0 0.0
        %5324 = vmatprep.subr.mxu0 0.0
        %5325 = vmatpush1.msra.mxu0 0.0
        %5326 = vmatprep.subr.mxu0 0.0
        %5327 = vmatpush1.msra.mxu0 0.0
        %5328 = vmatprep.subr.mxu0 0.0
        %5329 = vmatpush1.msra.mxu0 0.0
        %5330 = vmatprep.subr.mxu0 0.0
        %5331 = vmatpush1.msra.mxu0 0.0
        %5332 = vmatprep.subr.mxu0 0.0
        %5333 = vmatpush1.msra.mxu0 0.0
        %5334 = vmatprep.subr.mxu0 0.0
        %5335 = vmatpush1.msra.mxu0 0.0
        %5336 = vmatprep.subr.mxu0 0.0
        %5337 = vmatpush1.msra.mxu0 0.0
        %5338 = vmatprep.subr.mxu0 0.0
        %5339 = vmatpush1.msra.mxu0 0.0
        %5340 = vmatprep.subr.mxu0 0.0
        %5341 = vmatpush1.msra.mxu0 0.0
        %5342 = vmatprep.mubr.f32.mxu0 0.0
        %5343 = vmatmul.mubr.f32.gmra.mrb[0].mxu0 %v5267
        %v5344 = vpop.f32.mrb[0].mxu0
        %v5345 = vadd.f32 0.0, %v5344
        %v5346 = vpop.f32.mrb[0].mxu0
        %5347 = vmatprep.mubr.f32.mxu0 0.0
        %5348 = vmatmul.mubr.f32.gmra.mrb[0].mxu0 %v5270
        %v5349 = vpop.f32.mrb[0].mxu0
        %v5350 = vadd.f32 0.0, %v5349
        %v5351 = vpop.f32.mrb[0].mxu0
        %5352 = vmatprep.mubr.f32.mxu0 0.0
        %5353 = vmatmul.mubr.f32.gmra.mrb[0].mxu0 %v5273
        %v5354 = vpop.f32.mrb[0].mxu0
        %v5355 = vadd.f32 0.0, %v5354
        %v5356 = vpop.f32.mrb[0].mxu0
        %5357 = vmatprep.mubr.f32.mxu0 0.0
        %5358 = vmatmul.mubr.f32.gmra.mrb[0].mxu0 %v5276
        %v5359 = vpop.f32.mrb[0].mxu0
        %v5360 = vadd.f32 0.0, %v5359
        %v5361 = vpop.f32.mrb[0].mxu0
        %5362 = vdwg.mxu0
        %v5363 = vmul.f32 %v4405, %v4587
        %v5364 = vmul.f32 %v4410, %v4592
        %v5365 = vmul.f32 %v4415, %v4597
        %v5366 = vmul.f32 %v4420, %v4602
        %5367 = vmatprep.subr.mxu0 0.0
        %5368 = vmatpush1.msra.mxu0 %v5363
        %5369 = vmatprep.subr.mxu0 0.0
        %5370 = vmatpush1.msra.mxu0 %v5364
        %5371 = vmatprep.subr.mxu0 0.0
        %5372 = vmatpush1.msra.mxu0 %v5365
        %5373 = vmatprep.subr.mxu0 0.0
        %5374 = vmatpush1.msra.mxu0 %v5366
        %5375 = vmatprep.subr.mxu0 0.0
        %5376 = vmatpush1.msra.mxu0 0.0
        %5377 = vmatprep.subr.mxu0 0.0
        %5378 = vmatpush1.msra.mxu0 0.0
        %5379 = vmatprep.subr.mxu0 0.0
        %5380 = vmatpush1.msra.mxu0 0.0
        %5381 = vmatprep.subr.mxu0 0.0
        %5382 = vmatpush1.msra.mxu0 0.0
        %5383 = vmatprep.subr.mxu0 0.0
        %5384 = vmatpush1.msra.mxu0 0.0
        %5385 = vmatprep.subr.mxu0 0.0
        %5386 = vmatpush1.msra.mxu0 0.0
        %5387 = vmatprep.subr.mxu0 0.0
        %5388 = vmatpush1.msra.mxu0 0.0
        %5389 = vmatprep.subr.mxu0 0.0
        %5390 = vmatpush1.msra.mxu0 0.0
        %5391 = vmatprep.subr.mxu0 0.0
        %5392 = vmatpush1.msra.mxu0 0.0
        %5393 = vmatprep.subr.mxu0 0.0
        %5394 = vmatpush1.msra.mxu0 0.0
        %5395 = vmatprep.subr.mxu0 0.0
        %5396 = vmatpush1.msra.mxu0 0.0
        %5397 = vmatprep.subr.mxu0 0.0
        %5398 = vmatpush1.msra.mxu0 0.0
        %5399 = vmatprep.subr.mxu0 0.0
        %5400 = vmatpush1.msra.mxu0 0.0
        %5401 = vmatprep.subr.mxu0 0.0
        %5402 = vmatpush1.msra.mxu0 0.0
        %5403 = vmatprep.subr.mxu0 0.0
        %5404 = vmatpush1.msra.mxu0 0.0
        %5405 = vmatprep.subr.mxu0 0.0
        %5406 = vmatpush1.msra.mxu0 0.0
        %5407 = vmatprep.subr.mxu0 0.0
        %5408 = vmatpush1.msra.mxu0 0.0
        %5409 = vmatprep.subr.mxu0 0.0
        %5410 = vmatpush1.msra.mxu0 0.0
        %5411 = vmatprep.subr.mxu0 0.0
        %5412 = vmatpush1.msra.mxu0 0.0
        %5413 = vmatprep.subr.mxu0 0.0
        %5414 = vmatpush1.msra.mxu0 0.0
        %5415 = vmatprep.subr.mxu0 0.0
        %5416 = vmatpush1.msra.mxu0 0.0
        %5417 = vmatprep.subr.mxu0 0.0
        %5418 = vmatpush1.msra.mxu0 0.0
        %5419 = vmatprep.subr.mxu0 0.0
        %5420 = vmatpush1.msra.mxu0 0.0
        %5421 = vmatprep.subr.mxu0 0.0
        %5422 = vmatpush1.msra.mxu0 0.0
        %5423 = vmatprep.subr.mxu0 0.0
        %5424 = vmatpush1.msra.mxu0 0.0
        %5425 = vmatprep.subr.mxu0 0.0
        %5426 = vmatpush1.msra.mxu0 0.0
        %5427 = vmatprep.subr.mxu0 0.0
        %5428 = vmatpush1.msra.mxu0 0.0
        %5429 = vmatprep.subr.mxu0 0.0
        %5430 = vmatpush1.msra.mxu0 0.0
        %5431 = vmatprep.mubr.f32.mxu0 0.0
        %5432 = vmatmul.mubr.f32.gmra.mrb[0].mxu0 %v4616
        %v5433 = vpop.f32.mrb[0].mxu0
        %v5434 = vadd.f32 0.0, %v5433
        %v5435 = vpop.f32.mrb[0].mxu0
        %5436 = vmatprep.mubr.f32.mxu0 0.0
        %5437 = vmatmul.mubr.f32.gmra.mrb[0].mxu0 %v4619
        %v5438 = vpop.f32.mrb[0].mxu0
        %v5439 = vadd.f32 0.0, %v5438
        %v5440 = vpop.f32.mrb[0].mxu0
        %5441 = vmatprep.mubr.f32.mxu0 0.0
        %5442 = vmatmul.mubr.f32.gmra.mrb[0].mxu0 %v4622
        %v5443 = vpop.f32.mrb[0].mxu0
        %v5444 = vadd.f32 0.0, %v5443
        %v5445 = vpop.f32.mrb[0].mxu0
        %5446 = vmatprep.mubr.f32.mxu0 0.0
        %5447 = vmatmul.mubr.f32.gmra.mrb[0].mxu0 %v4625
        %v5448 = vpop.f32.mrb[0].mxu0
        %v5449 = vadd.f32 0.0, %v5448
        %v5450 = vpop.f32.mrb[0].mxu0
        %5451 = vdwg.mxu0
        %v5453 = vsel %vm321, %v5434, 0
        %v5456 = vsel %vm321, %v5439, 0
        %v5459 = vsel %vm321, %v5444, 0
        %v5462 = vsel %vm321, %v5449, 0
        %5464 = vmatprep.subr.mxu0 0.0
        %5465 = vmatpush1.msra.mxu0 %v4611
        %5466 = vmatprep.subr.mxu0 0.0
        %5467 = vmatpush1.msra.mxu0 %v4612
        %5468 = vmatprep.subr.mxu0 0.0
        %5469 = vmatpush1.msra.mxu0 %v4613
        %5470 = vmatprep.subr.mxu0 0.0
        %5471 = vmatpush1.msra.mxu0 %v4614
        %5472 = vmatprep.subr.mxu0 0.0
        %5473 = vmatpush1.msra.mxu0 0.0
        %5474 = vmatprep.subr.mxu0 0.0
        %5475 = vmatpush1.msra.mxu0 0.0
        %5476 = vmatprep.subr.mxu0 0.0
        %5477 = vmatpush1.msra.mxu0 0.0
        %5478 = vmatprep.subr.mxu0 0.0
        %5479 = vmatpush1.msra.mxu0 0.0
        %5480 = vmatprep.subr.mxu0 0.0
        %5481 = vmatpush1.msra.mxu0 0.0
        %5482 = vmatprep.subr.mxu0 0.0
        %5483 = vmatpush1.msra.mxu0 0.0
        %5484 = vmatprep.subr.mxu0 0.0
        %5485 = vmatpush1.msra.mxu0 0.0
        %5486 = vmatprep.subr.mxu0 0.0
        %5487 = vmatpush1.msra.mxu0 0.0
        %5488 = vmatprep.subr.mxu0 0.0
        %5489 = vmatpush1.msra.mxu0 0.0
        %5490 = vmatprep.subr.mxu0 0.0
        %5491 = vmatpush1.msra.mxu0 0.0
        %5492 = vmatprep.subr.mxu0 0.0
        %5493 = vmatpush1.msra.mxu0 0.0
        %5494 = vmatprep.subr.mxu0 0.0
        %5495 = vmatpush1.msra.mxu0 0.0
        %5496 = vmatprep.subr.mxu0 0.0
        %5497 = vmatpush1.msra.mxu0 0.0
        %5498 = vmatprep.subr.mxu0 0.0
        %5499 = vmatpush1.msra.mxu0 0.0
        %5500 = vmatprep.subr.mxu0 0.0
        %5501 = vmatpush1.msra.mxu0 0.0
        %5502 = vmatprep.subr.mxu0 0.0
        %5503 = vmatpush1.msra.mxu0 0.0
        %5504 = vmatprep.subr.mxu0 0.0
        %5505 = vmatpush1.msra.mxu0 0.0
        %5506 = vmatprep.subr.mxu0 0.0
        %5507 = vmatpush1.msra.mxu0 0.0
        %5508 = vmatprep.subr.mxu0 0.0
        %5509 = vmatpush1.msra.mxu0 0.0
        %5510 = vmatprep.subr.mxu0 0.0
        %5511 = vmatpush1.msra.mxu0 0.0
        %5512 = vmatprep.subr.mxu0 0.0
        %5513 = vmatpush1.msra.mxu0 0.0
        %5514 = vmatprep.subr.mxu0 0.0
        %5515 = vmatpush1.msra.mxu0 0.0
        %5516 = vmatprep.subr.mxu0 0.0
        %5517 = vmatpush1.msra.mxu0 0.0
        %5518 = vmatprep.subr.mxu0 0.0
        %5519 = vmatpush1.msra.mxu0 0.0
        %5520 = vmatprep.subr.mxu0 0.0
        %5521 = vmatpush1.msra.mxu0 0.0
        %5522 = vmatprep.subr.mxu0 0.0
        %5523 = vmatpush1.msra.mxu0 0.0
        %5524 = vmatprep.subr.mxu0 0.0
        %5525 = vmatpush1.msra.mxu0 0.0
        %5526 = vmatprep.subr.mxu0 0.0
        %5527 = vmatpush1.msra.mxu0 0.0
        %5528 = vmatprep.mubr.f32.mxu0 0.0
        %5529 = vmatmul.mubr.f32.gmra.mrb[0].mxu0 %v5453
        %v5530 = vpop.f32.mrb[0].mxu0
        %v5531 = vadd.f32 0.0, %v5530
        %v5532 = vpop.f32.mrb[0].mxu0
        %5533 = vmatprep.mubr.f32.mxu0 0.0
        %5534 = vmatmul.mubr.f32.gmra.mrb[0].mxu0 %v5456
        %v5535 = vpop.f32.mrb[0].mxu0
        %v5536 = vadd.f32 0.0, %v5535
        %v5537 = vpop.f32.mrb[0].mxu0
        %5538 = vmatprep.mubr.f32.mxu0 0.0
        %5539 = vmatmul.mubr.f32.gmra.mrb[0].mxu0 %v5459
        %v5540 = vpop.f32.mrb[0].mxu0
        %v5541 = vadd.f32 0.0, %v5540
        %v5542 = vpop.f32.mrb[0].mxu0
        %5543 = vmatprep.mubr.f32.mxu0 0.0
        %5544 = vmatmul.mubr.f32.gmra.mrb[0].mxu0 %v5462
        %v5545 = vpop.f32.mrb[0].mxu0
        %v5546 = vadd.f32 0.0, %v5545
        %v5547 = vpop.f32.mrb[0].mxu0
        %5548 = vdwg.mxu0
        %v5549 = vmul.f32 %v4791, %v4791
        %v5550 = vmul.f32 %v4796, %v4796
        %v5551 = vmul.f32 %v4801, %v4801
        %v5552 = vmul.f32 %v4806, %v4806
        %v5553 = vmul.f32 %v4973, %v4973
        %v5554 = vmul.f32 %v4978, %v4978
        %v5555 = vmul.f32 %v4983, %v4983
        %v5556 = vmul.f32 %v4988, %v4988
        %v5557 = vmul.f32 %v4791, %v4973
        %v5558 = vmul.f32 %v4796, %v4978
        %v5559 = vmul.f32 %v4801, %v4983
        %v5560 = vmul.f32 %v4806, %v4988
        %v5561 = vsub.f32 %v5159, %v5549
        %v5562 = vsub.f32 %v5164, %v5550
        %v5563 = vsub.f32 %v5169, %v5551
        %v5564 = vsub.f32 %v5174, %v5552
        %v5565 = vsub.f32 %v5345, %v5553
        %v5566 = vsub.f32 %v5350, %v5554
        %v5567 = vsub.f32 %v5355, %v5555
        %v5568 = vsub.f32 %v5360, %v5556
        %v5569 = vsub.f32 %v5531, %v5557
        %v5570 = vsub.f32 %v5536, %v5558
        %v5571 = vsub.f32 %v5541, %v5559
        %v5572 = vsub.f32 %v5546, %v5560
        %v5573 = vmul.f32 %v5557, 2.0
        %v5574 = vmul.f32 %v5558, 2.0
        %v5575 = vmul.f32 %v5559, 2.0
        %v5576 = vmul.f32 %v5560, 2.0
        %v5577 = vadd.f32 %v5573, 6.5025
        %v5578 = vadd.f32 %v5574, 6.5025
        %v5579 = vadd.f32 %v5575, 6.5025
        %v5580 = vadd.f32 %v5576, 6.5025
        %v5581 = vmul.f32 %v5569, 2.0
        %v5582 = vmul.f32 %v5570, 2.0
        %v5583 = vmul.f32 %v5571, 2.0
        %v5584 = vmul.f32 %v5572, 2.0
        %v5585 = vadd.f32 %v5581, 58.5225
        %v5586 = vadd.f32 %v5582, 58.5225
        %v5587 = vadd.f32 %v5583, 58.5225
        %v5588 = vadd.f32 %v5584, 58.5225
        %v5589 = vmul.f32 %v5577, %v5585
        %v5590 = vmul.f32 %v5578, %v5586
        %v5591 = vmul.f32 %v5579, %v5587
        %v5592 = vmul.f32 %v5580, %v5588
        %v5593 = vadd.f32 %v5549, %v5553
        %v5594 = vadd.f32 %v5550, %v5554
        %v5595 = vadd.f32 %v5551, %v5555
        %v5596 = vadd.f32 %v5552, %v5556
        %v5597 = vadd.f32 %v5593, 6.5025
        %v5598 = vadd.f32 %v5594, 6.5025
        %v5599 = vadd.f32 %v5595, 6.5025
        %v5600 = vadd.f32 %v5596, 6.5025
        %v5601 = vadd.f32 %v5561, %v5565
        %v5602 = vadd.f32 %v5562, %v5566
        %v5603 = vadd.f32 %v5563, %v5567
        %v5604 = vadd.f32 %v5564, %v5568
        %v5605 = vadd.f32 %v5601, 58.5225
        %v5606 = vadd.f32 %v5602, 58.5225
        %v5607 = vadd.f32 %v5603, 58.5225
        %v5608 = vadd.f32 %v5604, 58.5225
        %v5609 = vmul.f32 %v5597, %v5605
        %v5610 = vmul.f32 %v5598, %v5606
        %v5611 = vmul.f32 %v5599, %v5607
        %v5612 = vmul.f32 %v5600, %v5608
        %v5613 = vrcp.pop %v5609
        %v5614 = vrcp.pop %v5610
        %v5615 = vrcp.pop %v5611
        %v5616 = vrcp.pop %v5612
        %v5617 = vmul.f32 %v5589, %v5613
        %v5618 = vmul.f32 %v5590, %v5614
        %v5619 = vmul.f32 %v5591, %v5615
        %v5620 = vmul.f32 %v5592, %v5616
        %vm5621 = vcmp.lt.s32.totalorder %v307, 4
        %vm5622 = vcmp.lt.s32.totalorder %v308, 4
        %vm5623 = vcmp.lt.s32.totalorder %v309, 4
        %vm5624 = vcmp.lt.s32.totalorder %v310, 4
        %vm5625 = vcmp.lt.s32.totalorder %v312, 4
        %vm5626 = vmand %vm5621, %vm5625
        %vm5627 = vmand %vm5622, %vm5625
        %vm5628 = vmand %vm5623, %vm5625
        %vm5629 = vmand %vm5624, %vm5625
        %v5630 = vsel %vm5626, %v5617, 0.0
        %v5631 = vsel %vm5627, %v5618, 0.0
        %v5632 = vsel %vm5628, %v5619, 0.0
        %v5633 = vsel %vm5629, %v5620, 0.0
        %v5634 = vsel %vm321, %v5630, 0.0
        %v5635 = vsel %vm321, %v5631, 0.0
        %v5636 = vadd.f32 %v5634, %v5635
        %v5637 = vsel %vm321, %v5632, 0.0
        %v5638 = vadd.f32 %v5636, %v5637
        %v5639 = vsel %vm321, %v5633, 0.0
        %v5640 = vadd.f32 %v5638, %v5639
        %5641 = vadd.xlane.f32.xlu0 %v5640
        %v5642 = vpop.xlane.xlu0 %5641
        %v5643 = vrot.slane %v5642, 4
        %v5644 = vadd.f32 %v5642, %v5643
        %v5645 = vrot.slane %v5644, 2
        %v5646 = vadd.f32 %v5644, %v5645
        %v5647 = vrot.slane %v5646, 1
        %v5648 = vadd.f32 %v5646, %v5647
        %s5649 = vtos %v5648
        %s5650 = smul.f32 %s5649, 0.0625
        %vm5651 = vcmp.eq.s32.totalorder %v312, 3
        %v5652 = vstv %s5650
        %v5653 = vsel %vm5651, %v5652, 0.0
        %v5654 = vadd.f32 %v4218, %v5653
        %s5655 = scalar_lea.vmem [#allocation2], 96
        %v5656 = vld [vmem:[%s5655] sm:$0xff]
        %v5657 = vld [vmem:[%s5655 + $0x8] sm:$0xff]
        %v5658 = vld [vmem:[%s5655 + $0x10] sm:$0xff]
        %v5659 = vld [vmem:[%s5655 + $0x18] sm:$0xff]
        %s5660 = scalar_lea.vmem [#allocation4], 96
        %v5661 = vld [vmem:[%s5660] sm:$0xff]
        %v5662 = vld [vmem:[%s5660 + $0x8] sm:$0xff]
        %v5663 = vld [vmem:[%s5660 + $0x10] sm:$0xff]
        %v5664 = vld [vmem:[%s5660 + $0x18] sm:$0xff]
        %v5666 = vsel %vm321, %v5656, 0
        %v5669 = vsel %vm321, %v5657, 0
        %v5672 = vsel %vm321, %v5658, 0
        %v5675 = vsel %vm321, %v5659, 0
        %5677 = vmatprep.subr.mxu0 0.0
        %5678 = vmatpush1.msra.mxu0 %v4405
        %5679 = vmatprep.subr.mxu0 0.0
        %5680 = vmatpush1.msra.mxu0 %v4410
        %5681 = vmatprep.subr.mxu0 0.0
        %5682 = vmatpush1.msra.mxu0 %v4415
        %5683 = vmatprep.subr.mxu0 0.0
        %5684 = vmatpush1.msra.mxu0 %v4420
        %5685 = vmatprep.subr.mxu0 0.0
        %5686 = vmatpush1.msra.mxu0 0.0
        %5687 = vmatprep.subr.mxu0 0.0
        %5688 = vmatpush1.msra.mxu0 0.0
        %5689 = vmatprep.subr.mxu0 0.0
        %5690 = vmatpush1.msra.mxu0 0.0
        %5691 = vmatprep.subr.mxu0 0.0
        %5692 = vmatpush1.msra.mxu0 0.0
        %5693 = vmatprep.subr.mxu0 0.0
        %5694 = vmatpush1.msra.mxu0 0.0
        %5695 = vmatprep.subr.mxu0 0.0
        %5696 = vmatpush1.msra.mxu0 0.0
        %5697 = vmatprep.subr.mxu0 0.0
        %5698 = vmatpush1.msra.mxu0 0.0
        %5699 = vmatprep.subr.mxu0 0.0
        %5700 = vmatpush1.msra.mxu0 0.0
        %5701 = vmatprep.subr.mxu0 0.0
        %5702 = vmatpush1.msra.mxu0 0.0
        %5703 = vmatprep.subr.mxu0 0.0
        %5704 = vmatpush1.msra.mxu0 0.0
        %5705 = vmatprep.subr.mxu0 0.0
        %5706 = vmatpush1.msra.mxu0 0.0
        %5707 = vmatprep.subr.mxu0 0.0
        %5708 = vmatpush1.msra.mxu0 0.0
        %5709 = vmatprep.subr.mxu0 0.0
        %5710 = vmatpush1.msra.mxu0 0.0
        %5711 = vmatprep.subr.mxu0 0.0
        %5712 = vmatpush1.msra.mxu0 0.0
        %5713 = vmatprep.subr.mxu0 0.0
        %5714 = vmatpush1.msra.mxu0 0.0
        %5715 = vmatprep.subr.mxu0 0.0
        %5716 = vmatpush1.msra.mxu0 0.0
        %5717 = vmatprep.subr.mxu0 0.0
        %5718 = vmatpush1.msra.mxu0 0.0
        %5719 = vmatprep.subr.mxu0 0.0
        %5720 = vmatpush1.msra.mxu0 0.0
        %5721 = vmatprep.subr.mxu0 0.0
        %5722 = vmatpush1.msra.mxu0 0.0
        %5723 = vmatprep.subr.mxu0 0.0
        %5724 = vmatpush1.msra.mxu0 0.0
        %5725 = vmatprep.subr.mxu0 0.0
        %5726 = vmatpush1.msra.mxu0 0.0
        %5727 = vmatprep.subr.mxu0 0.0
        %5728 = vmatpush1.msra.mxu0 0.0
        %5729 = vmatprep.subr.mxu0 0.0
        %5730 = vmatpush1.msra.mxu0 0.0
        %5731 = vmatprep.subr.mxu0 0.0
        %5732 = vmatpush1.msra.mxu0 0.0
        %5733 = vmatprep.subr.mxu0 0.0
        %5734 = vmatpush1.msra.mxu0 0.0
        %5735 = vmatprep.subr.mxu0 0.0
        %5736 = vmatpush1.msra.mxu0 0.0
        %5737 = vmatprep.subr.mxu0 0.0
        %5738 = vmatpush1.msra.mxu0 0.0
        %5739 = vmatprep.subr.mxu0 0.0
        %5740 = vmatpush1.msra.mxu0 0.0
        %5741 = vmatprep.mubr.f32.mxu0 0.0
        %5742 = vmatmul.mubr.f32.gmra.mrb[0].mxu0 %v5666
        %v5743 = vpop.f32.mrb[0].mxu0
        %v5744 = vadd.f32 0.0, %v5743
        %v5745 = vpop.f32.mrb[0].mxu0
        %5746 = vmatprep.mubr.f32.mxu0 0.0
        %5747 = vmatmul.mubr.f32.gmra.mrb[0].mxu0 %v5669
        %v5748 = vpop.f32.mrb[0].mxu0
        %v5749 = vadd.f32 0.0, %v5748
        %v5750 = vpop.f32.mrb[0].mxu0
        %5751 = vmatprep.mubr.f32.mxu0 0.0
        %5752 = vmatmul.mubr.f32.gmra.mrb[0].mxu0 %v5672
        %v5753 = vpop.f32.mrb[0].mxu0
        %v5754 = vadd.f32 0.0, %v5753
        %v5755 = vpop.f32.mrb[0].mxu0
        %5756 = vmatprep.mubr.f32.mxu0 0.0
        %5757 = vmatmul.mubr.f32.gmra.mrb[0].mxu0 %v5675
        %v5758 = vpop.f32.mrb[0].mxu0
        %v5759 = vadd.f32 0.0, %v5758
        %v5760 = vpop.f32.mrb[0].mxu0
        %5761 = vdwg.mxu0
        %v5763 = vsel %vm321, %v5744, 0
        %v5766 = vsel %vm321, %v5749, 0
        %v5769 = vsel %vm321, %v5754, 0
        %v5772 = vsel %vm321, %v5759, 0
        %5774 = vmatprep.subr.mxu0 0.0
        %5775 = vmatpush1.msra.mxu0 %v5661
        %5776 = vmatprep.subr.mxu0 0.0
        %5777 = vmatpush1.msra.mxu0 %v5662
        %5778 = vmatprep.subr.mxu0 0.0
        %5779 = vmatpush1.msra.mxu0 %v5663
        %5780 = vmatprep.subr.mxu0 0.0
        %5781 = vmatpush1.msra.mxu0 %v5664
        %5782 = vmatprep.subr.mxu0 0.0
        %5783 = vmatpush1.msra.mxu0 0.0
        %5784 = vmatprep.subr.mxu0 0.0
        %5785 = vmatpush1.msra.mxu0 0.0
        %5786 = vmatprep.subr.mxu0 0.0
        %5787 = vmatpush1.msra.mxu0 0.0
        %5788 = vmatprep.subr.mxu0 0.0
        %5789 = vmatpush1.msra.mxu0 0.0
        %5790 = vmatprep.subr.mxu0 0.0
        %5791 = vmatpush1.msra.mxu0 0.0
        %5792 = vmatprep.subr.mxu0 0.0
        %5793 = vmatpush1.msra.mxu0 0.0
        %5794 = vmatprep.subr.mxu0 0.0
        %5795 = vmatpush1.msra.mxu0 0.0
        %5796 = vmatprep.subr.mxu0 0.0
        %5797 = vmatpush1.msra.mxu0 0.0
        %5798 = vmatprep.subr.mxu0 0.0
        %5799 = vmatpush1.msra.mxu0 0.0
        %5800 = vmatprep.subr.mxu0 0.0
        %5801 = vmatpush1.msra.mxu0 0.0
        %5802 = vmatprep.subr.mxu0 0.0
        %5803 = vmatpush1.msra.mxu0 0.0
        %5804 = vmatprep.subr.mxu0 0.0
        %5805 = vmatpush1.msra.mxu0 0.0
        %5806 = vmatprep.subr.mxu0 0.0
        %5807 = vmatpush1.msra.mxu0 0.0
        %5808 = vmatprep.subr.mxu0 0.0
        %5809 = vmatpush1.msra.mxu0 0.0
        %5810 = vmatprep.subr.mxu0 0.0
        %5811 = vmatpush1.msra.mxu0 0.0
        %5812 = vmatprep.subr.mxu0 0.0
        %5813 = vmatpush1.msra.mxu0 0.0
        %5814 = vmatprep.subr.mxu0 0.0
        %5815 = vmatpush1.msra.mxu0 0.0
        %5816 = vmatprep.subr.mxu0 0.0
        %5817 = vmatpush1.msra.mxu0 0.0
        %5818 = vmatprep.subr.mxu0 0.0
        %5819 = vmatpush1.msra.mxu0 0.0
        %5820 = vmatprep.subr.mxu0 0.0
        %5821 = vmatpush1.msra.mxu0 0.0
        %5822 = vmatprep.subr.mxu0 0.0
        %5823 = vmatpush1.msra.mxu0 0.0
        %5824 = vmatprep.subr.mxu0 0.0
        %5825 = vmatpush1.msra.mxu0 0.0
        %5826 = vmatprep.subr.mxu0 0.0
        %5827 = vmatpush1.msra.mxu0 0.0
        %5828 = vmatprep.subr.mxu0 0.0
        %5829 = vmatpush1.msra.mxu0 0.0
        %5830 = vmatprep.subr.mxu0 0.0
        %5831 = vmatpush1.msra.mxu0 0.0
        %5832 = vmatprep.subr.mxu0 0.0
        %5833 = vmatpush1.msra.mxu0 0.0
        %5834 = vmatprep.subr.mxu0 0.0
        %5835 = vmatpush1.msra.mxu0 0.0
        %5836 = vmatprep.subr.mxu0 0.0
        %5837 = vmatpush1.msra.mxu0 0.0
        %5838 = vmatprep.mubr.f32.mxu0 0.0
        %5839 = vmatmul.mubr.f32.gmra.mrb[0].mxu0 %v5763
        %v5840 = vpop.f32.mrb[0].mxu0
        %v5841 = vadd.f32 0.0, %v5840
        %v5842 = vpop.f32.mrb[0].mxu0
        %5843 = vmatprep.mubr.f32.mxu0 0.0
        %5844 = vmatmul.mubr.f32.gmra.mrb[0].mxu0 %v5766
        %v5845 = vpop.f32.mrb[0].mxu0
        %v5846 = vadd.f32 0.0, %v5845
        %v5847 = vpop.f32.mrb[0].mxu0
        %5848 = vmatprep.mubr.f32.mxu0 0.0
        %5849 = vmatmul.mubr.f32.gmra.mrb[0].mxu0 %v5769
        %v5850 = vpop.f32.mrb[0].mxu0
        %v5851 = vadd.f32 0.0, %v5850
        %v5852 = vpop.f32.mrb[0].mxu0
        %5853 = vmatprep.mubr.f32.mxu0 0.0
        %5854 = vmatmul.mubr.f32.gmra.mrb[0].mxu0 %v5772
        %v5855 = vpop.f32.mrb[0].mxu0
        %v5856 = vadd.f32 0.0, %v5855
        %v5857 = vpop.f32.mrb[0].mxu0
        %5858 = vdwg.mxu0
        %5859 = vmatprep.subr.mxu0 0.0
        %5860 = vmatpush1.msra.mxu0 %v4587
        %5861 = vmatprep.subr.mxu0 0.0
        %5862 = vmatpush1.msra.mxu0 %v4592
        %5863 = vmatprep.subr.mxu0 0.0
        %5864 = vmatpush1.msra.mxu0 %v4597
        %5865 = vmatprep.subr.mxu0 0.0
        %5866 = vmatpush1.msra.mxu0 %v4602
        %5867 = vmatprep.subr.mxu0 0.0
        %5868 = vmatpush1.msra.mxu0 0.0
        %5869 = vmatprep.subr.mxu0 0.0
        %5870 = vmatpush1.msra.mxu0 0.0
        %5871 = vmatprep.subr.mxu0 0.0
        %5872 = vmatpush1.msra.mxu0 0.0
        %5873 = vmatprep.subr.mxu0 0.0
        %5874 = vmatpush1.msra.mxu0 0.0
        %5875 = vmatprep.subr.mxu0 0.0
        %5876 = vmatpush1.msra.mxu0 0.0
        %5877 = vmatprep.subr.mxu0 0.0
        %5878 = vmatpush1.msra.mxu0 0.0
        %5879 = vmatprep.subr.mxu0 0.0
        %5880 = vmatpush1.msra.mxu0 0.0
        %5881 = vmatprep.subr.mxu0 0.0
        %5882 = vmatpush1.msra.mxu0 0.0
        %5883 = vmatprep.subr.mxu0 0.0
        %5884 = vmatpush1.msra.mxu0 0.0
        %5885 = vmatprep.subr.mxu0 0.0
        %5886 = vmatpush1.msra.mxu0 0.0
        %5887 = vmatprep.subr.mxu0 0.0
        %5888 = vmatpush1.msra.mxu0 0.0
        %5889 = vmatprep.subr.mxu0 0.0
        %5890 = vmatpush1.msra.mxu0 0.0
        %5891 = vmatprep.subr.mxu0 0.0
        %5892 = vmatpush1.msra.mxu0 0.0
        %5893 = vmatprep.subr.mxu0 0.0
        %5894 = vmatpush1.msra.mxu0 0.0
        %5895 = vmatprep.subr.mxu0 0.0
        %5896 = vmatpush1.msra.mxu0 0.0
        %5897 = vmatprep.subr.mxu0 0.0
        %5898 = vmatpush1.msra.mxu0 0.0
        %5899 = vmatprep.subr.mxu0 0.0
        %5900 = vmatpush1.msra.mxu0 0.0
        %5901 = vmatprep.subr.mxu0 0.0
        %5902 = vmatpush1.msra.mxu0 0.0
        %5903 = vmatprep.subr.mxu0 0.0
        %5904 = vmatpush1.msra.mxu0 0.0
        %5905 = vmatprep.subr.mxu0 0.0
        %5906 = vmatpush1.msra.mxu0 0.0
        %5907 = vmatprep.subr.mxu0 0.0
        %5908 = vmatpush1.msra.mxu0 0.0
        %5909 = vmatprep.subr.mxu0 0.0
        %5910 = vmatpush1.msra.mxu0 0.0
        %5911 = vmatprep.subr.mxu0 0.0
        %5912 = vmatpush1.msra.mxu0 0.0
        %5913 = vmatprep.subr.mxu0 0.0
        %5914 = vmatpush1.msra.mxu0 0.0
        %5915 = vmatprep.subr.mxu0 0.0
        %5916 = vmatpush1.msra.mxu0 0.0
        %5917 = vmatprep.subr.mxu0 0.0
        %5918 = vmatpush1.msra.mxu0 0.0
        %5919 = vmatprep.subr.mxu0 0.0
        %5920 = vmatpush1.msra.mxu0 0.0
        %5921 = vmatprep.subr.mxu0 0.0
        %5922 = vmatpush1.msra.mxu0 0.0
        %5923 = vmatprep.mubr.f32.mxu0 0.0
        %5924 = vmatmul.mubr.f32.gmra.mrb[0].mxu0 %v5666
        %v5925 = vpop.f32.mrb[0].mxu0
        %v5926 = vadd.f32 0.0, %v5925
        %v5927 = vpop.f32.mrb[0].mxu0
        %5928 = vmatprep.mubr.f32.mxu0 0.0
        %5929 = vmatmul.mubr.f32.gmra.mrb[0].mxu0 %v5669
        %v5930 = vpop.f32.mrb[0].mxu0
        %v5931 = vadd.f32 0.0, %v5930
        %v5932 = vpop.f32.mrb[0].mxu0
        %5933 = vmatprep.mubr.f32.mxu0 0.0
        %5934 = vmatmul.mubr.f32.gmra.mrb[0].mxu0 %v5672
        %v5935 = vpop.f32.mrb[0].mxu0
        %v5936 = vadd.f32 0.0, %v5935
        %v5937 = vpop.f32.mrb[0].mxu0
        %5938 = vmatprep.mubr.f32.mxu0 0.0
        %5939 = vmatmul.mubr.f32.gmra.mrb[0].mxu0 %v5675
        %v5940 = vpop.f32.mrb[0].mxu0
        %v5941 = vadd.f32 0.0, %v5940
        %v5942 = vpop.f32.mrb[0].mxu0
        %5943 = vdwg.mxu0
        %v5945 = vsel %vm321, %v5926, 0
        %v5948 = vsel %vm321, %v5931, 0
        %v5951 = vsel %vm321, %v5936, 0
        %v5954 = vsel %vm321, %v5941, 0
        %5956 = vmatprep.subr.mxu0 0.0
        %5957 = vmatpush1.msra.mxu0 %v5661
        %5958 = vmatprep.subr.mxu0 0.0
        %5959 = vmatpush1.msra.mxu0 %v5662
        %5960 = vmatprep.subr.mxu0 0.0
        %5961 = vmatpush1.msra.mxu0 %v5663
        %5962 = vmatprep.subr.mxu0 0.0
        %5963 = vmatpush1.msra.mxu0 %v5664
        %5964 = vmatprep.subr.mxu0 0.0
        %5965 = vmatpush1.msra.mxu0 0.0
        %5966 = vmatprep.subr.mxu0 0.0
        %5967 = vmatpush1.msra.mxu0 0.0
        %5968 = vmatprep.subr.mxu0 0.0
        %5969 = vmatpush1.msra.mxu0 0.0
        %5970 = vmatprep.subr.mxu0 0.0
        %5971 = vmatpush1.msra.mxu0 0.0
        %5972 = vmatprep.subr.mxu0 0.0
        %5973 = vmatpush1.msra.mxu0 0.0
        %5974 = vmatprep.subr.mxu0 0.0
        %5975 = vmatpush1.msra.mxu0 0.0
        %5976 = vmatprep.subr.mxu0 0.0
        %5977 = vmatpush1.msra.mxu0 0.0
        %5978 = vmatprep.subr.mxu0 0.0
        %5979 = vmatpush1.msra.mxu0 0.0
        %5980 = vmatprep.subr.mxu0 0.0
        %5981 = vmatpush1.msra.mxu0 0.0
        %5982 = vmatprep.subr.mxu0 0.0
        %5983 = vmatpush1.msra.mxu0 0.0
        %5984 = vmatprep.subr.mxu0 0.0
        %5985 = vmatpush1.msra.mxu0 0.0
        %5986 = vmatprep.subr.mxu0 0.0
        %5987 = vmatpush1.msra.mxu0 0.0
        %5988 = vmatprep.subr.mxu0 0.0
        %5989 = vmatpush1.msra.mxu0 0.0
        %5990 = vmatprep.subr.mxu0 0.0
        %5991 = vmatpush1.msra.mxu0 0.0
        %5992 = vmatprep.subr.mxu0 0.0
        %5993 = vmatpush1.msra.mxu0 0.0
        %5994 = vmatprep.subr.mxu0 0.0
        %5995 = vmatpush1.msra.mxu0 0.0
        %5996 = vmatprep.subr.mxu0 0.0
        %5997 = vmatpush1.msra.mxu0 0.0
        %5998 = vmatprep.subr.mxu0 0.0
        %5999 = vmatpush1.msra.mxu0 0.0
        %6000 = vmatprep.subr.mxu0 0.0
        %6001 = vmatpush1.msra.mxu0 0.0
        %6002 = vmatprep.subr.mxu0 0.0
        %6003 = vmatpush1.msra.mxu0 0.0
        %6004 = vmatprep.subr.mxu0 0.0
        %6005 = vmatpush1.msra.mxu0 0.0
        %6006 = vmatprep.subr.mxu0 0.0
        %6007 = vmatpush1.msra.mxu0 0.0
        %6008 = vmatprep.subr.mxu0 0.0
        %6009 = vmatpush1.msra.mxu0 0.0
        %6010 = vmatprep.subr.mxu0 0.0
        %6011 = vmatpush1.msra.mxu0 0.0
        %6012 = vmatprep.subr.mxu0 0.0
        %6013 = vmatpush1.msra.mxu0 0.0
        %6014 = vmatprep.subr.mxu0 0.0
        %6015 = vmatpush1.msra.mxu0 0.0
        %6016 = vmatprep.subr.mxu0 0.0
        %6017 = vmatpush1.msra.mxu0 0.0
        %6018 = vmatprep.subr.mxu0 0.0
        %6019 = vmatpush1.msra.mxu0 0.0
        %6020 = vmatprep.mubr.f32.mxu0 0.0
        %6021 = vmatmul.mubr.f32.gmra.mrb[0].mxu0 %v5945
        %v6022 = vpop.f32.mrb[0].mxu0
        %v6023 = vadd.f32 0.0, %v6022
        %v6024 = vpop.f32.mrb[0].mxu0
        %6025 = vmatprep.mubr.f32.mxu0 0.0
        %6026 = vmatmul.mubr.f32.gmra.mrb[0].mxu0 %v5948
        %v6027 = vpop.f32.mrb[0].mxu0
        %v6028 = vadd.f32 0.0, %v6027
        %v6029 = vpop.f32.mrb[0].mxu0
        %6030 = vmatprep.mubr.f32.mxu0 0.0
        %6031 = vmatmul.mubr.f32.gmra.mrb[0].mxu0 %v5951
        %v6032 = vpop.f32.mrb[0].mxu0
        %v6033 = vadd.f32 0.0, %v6032
        %v6034 = vpop.f32.mrb[0].mxu0
        %6035 = vmatprep.mubr.f32.mxu0 0.0
        %6036 = vmatmul.mubr.f32.gmra.mrb[0].mxu0 %v5954
        %v6037 = vpop.f32.mrb[0].mxu0
        %v6038 = vadd.f32 0.0, %v6037
        %v6039 = vpop.f32.mrb[0].mxu0
        %6040 = vdwg.mxu0
        %s6041 = scalar_lea.vmem %s2, 128
        %v6042 = vld [vmem:[%s6041] sm:$0xff]
        %v6043 = vld [vmem:[%s6041 + $0x8] sm:$0xff]
        %v6044 = vld [vmem:[%s6041 + $0x10] sm:$0xff]
        %v6045 = vld [vmem:[%s6041 + $0x18] sm:$0xff]
        %s6046 = scalar_lea.vmem %s3, 128
        %v6047 = vld [vmem:[%s6046] sm:$0xff]
        %v6048 = vld [vmem:[%s6046 + $0x8] sm:$0xff]
        %v6049 = vld [vmem:[%s6046 + $0x10] sm:$0xff]
        %v6050 = vld [vmem:[%s6046 + $0x18] sm:$0xff]
        %v6052 = vsel %vm321, %v6042, 0
        %v6055 = vsel %vm321, %v6043, 0
        %v6058 = vsel %vm321, %v6044, 0
        %v6061 = vsel %vm321, %v6045, 0
        %6063 = vmatprep.subr.mxu0 0.0
        %6064 = vmatpush1.msra.mxu0 %v5841
        %6065 = vmatprep.subr.mxu0 0.0
        %6066 = vmatpush1.msra.mxu0 %v5846
        %6067 = vmatprep.subr.mxu0 0.0
        %6068 = vmatpush1.msra.mxu0 %v5851
        %6069 = vmatprep.subr.mxu0 0.0
        %6070 = vmatpush1.msra.mxu0 %v5856
        %6071 = vmatprep.subr.mxu0 0.0
        %6072 = vmatpush1.msra.mxu0 0.0
        %6073 = vmatprep.subr.mxu0 0.0
        %6074 = vmatpush1.msra.mxu0 0.0
        %6075 = vmatprep.subr.mxu0 0.0
        %6076 = vmatpush1.msra.mxu0 0.0
        %6077 = vmatprep.subr.mxu0 0.0
        %6078 = vmatpush1.msra.mxu0 0.0
        %6079 = vmatprep.subr.mxu0 0.0
        %6080 = vmatpush1.msra.mxu0 0.0
        %6081 = vmatprep.subr.mxu0 0.0
        %6082 = vmatpush1.msra.mxu0 0.0
        %6083 = vmatprep.subr.mxu0 0.0
        %6084 = vmatpush1.msra.mxu0 0.0
        %6085 = vmatprep.subr.mxu0 0.0
        %6086 = vmatpush1.msra.mxu0 0.0
        %6087 = vmatprep.subr.mxu0 0.0
        %6088 = vmatpush1.msra.mxu0 0.0
        %6089 = vmatprep.subr.mxu0 0.0
        %6090 = vmatpush1.msra.mxu0 0.0
        %6091 = vmatprep.subr.mxu0 0.0
        %6092 = vmatpush1.msra.mxu0 0.0
        %6093 = vmatprep.subr.mxu0 0.0
        %6094 = vmatpush1.msra.mxu0 0.0
        %6095 = vmatprep.subr.mxu0 0.0
        %6096 = vmatpush1.msra.mxu0 0.0
        %6097 = vmatprep.subr.mxu0 0.0
        %6098 = vmatpush1.msra.mxu0 0.0
        %6099 = vmatprep.subr.mxu0 0.0
        %6100 = vmatpush1.msra.mxu0 0.0
        %6101 = vmatprep.subr.mxu0 0.0
        %6102 = vmatpush1.msra.mxu0 0.0
        %6103 = vmatprep.subr.mxu0 0.0
        %6104 = vmatpush1.msra.mxu0 0.0
        %6105 = vmatprep.subr.mxu0 0.0
        %6106 = vmatpush1.msra.mxu0 0.0
        %6107 = vmatprep.subr.mxu0 0.0
        %6108 = vmatpush1.msra.mxu0 0.0
        %6109 = vmatprep.subr.mxu0 0.0
        %6110 = vmatpush1.msra.mxu0 0.0
        %6111 = vmatprep.subr.mxu0 0.0
        %6112 = vmatpush1.msra.mxu0 0.0
        %6113 = vmatprep.subr.mxu0 0.0
        %6114 = vmatpush1.msra.mxu0 0.0
        %6115 = vmatprep.subr.mxu0 0.0
        %6116 = vmatpush1.msra.mxu0 0.0
        %6117 = vmatprep.subr.mxu0 0.0
        %6118 = vmatpush1.msra.mxu0 0.0
        %6119 = vmatprep.subr.mxu0 0.0
        %6120 = vmatpush1.msra.mxu0 0.0
        %6121 = vmatprep.subr.mxu0 0.0
        %6122 = vmatpush1.msra.mxu0 0.0
        %6123 = vmatprep.subr.mxu0 0.0
        %6124 = vmatpush1.msra.mxu0 0.0
        %6125 = vmatprep.subr.mxu0 0.0
        %6126 = vmatpush1.msra.mxu0 0.0
        %6127 = vmatprep.mubr.f32.mxu0 0.0
        %6128 = vmatmul.mubr.f32.gmra.mrb[0].mxu0 %v6052
        %v6129 = vpop.f32.mrb[0].mxu0
        %v6130 = vadd.f32 0.0, %v6129
        %v6131 = vpop.f32.mrb[0].mxu0
        %6132 = vmatprep.mubr.f32.mxu0 0.0
        %6133 = vmatmul.mubr.f32.gmra.mrb[0].mxu0 %v6055
        %v6134 = vpop.f32.mrb[0].mxu0
        %v6135 = vadd.f32 0.0, %v6134
        %v6136 = vpop.f32.mrb[0].mxu0
        %6137 = vmatprep.mubr.f32.mxu0 0.0
        %6138 = vmatmul.mubr.f32.gmra.mrb[0].mxu0 %v6058
        %v6139 = vpop.f32.mrb[0].mxu0
        %v6140 = vadd.f32 0.0, %v6139
        %v6141 = vpop.f32.mrb[0].mxu0
        %6142 = vmatprep.mubr.f32.mxu0 0.0
        %6143 = vmatmul.mubr.f32.gmra.mrb[0].mxu0 %v6061
        %v6144 = vpop.f32.mrb[0].mxu0
        %v6145 = vadd.f32 0.0, %v6144
        %v6146 = vpop.f32.mrb[0].mxu0
        %6147 = vdwg.mxu0
        %v6149 = vsel %vm321, %v6130, 0
        %v6152 = vsel %vm321, %v6135, 0
        %v6155 = vsel %vm321, %v6140, 0
        %v6158 = vsel %vm321, %v6145, 0
        %6160 = vmatprep.subr.mxu0 0.0
        %6161 = vmatpush1.msra.mxu0 %v6047
        %6162 = vmatprep.subr.mxu0 0.0
        %6163 = vmatpush1.msra.mxu0 %v6048
        %6164 = vmatprep.subr.mxu0 0.0
        %6165 = vmatpush1.msra.mxu0 %v6049
        %6166 = vmatprep.subr.mxu0 0.0
        %6167 = vmatpush1.msra.mxu0 %v6050
        %6168 = vmatprep.subr.mxu0 0.0
        %6169 = vmatpush1.msra.mxu0 0.0
        %6170 = vmatprep.subr.mxu0 0.0
        %6171 = vmatpush1.msra.mxu0 0.0
        %6172 = vmatprep.subr.mxu0 0.0
        %6173 = vmatpush1.msra.mxu0 0.0
        %6174 = vmatprep.subr.mxu0 0.0
        %6175 = vmatpush1.msra.mxu0 0.0
        %6176 = vmatprep.subr.mxu0 0.0
        %6177 = vmatpush1.msra.mxu0 0.0
        %6178 = vmatprep.subr.mxu0 0.0
        %6179 = vmatpush1.msra.mxu0 0.0
        %6180 = vmatprep.subr.mxu0 0.0
        %6181 = vmatpush1.msra.mxu0 0.0
        %6182 = vmatprep.subr.mxu0 0.0
        %6183 = vmatpush1.msra.mxu0 0.0
        %6184 = vmatprep.subr.mxu0 0.0
        %6185 = vmatpush1.msra.mxu0 0.0
        %6186 = vmatprep.subr.mxu0 0.0
        %6187 = vmatpush1.msra.mxu0 0.0
        %6188 = vmatprep.subr.mxu0 0.0
        %6189 = vmatpush1.msra.mxu0 0.0
        %6190 = vmatprep.subr.mxu0 0.0
        %6191 = vmatpush1.msra.mxu0 0.0
        %6192 = vmatprep.subr.mxu0 0.0
        %6193 = vmatpush1.msra.mxu0 0.0
        %6194 = vmatprep.subr.mxu0 0.0
        %6195 = vmatpush1.msra.mxu0 0.0
        %6196 = vmatprep.subr.mxu0 0.0
        %6197 = vmatpush1.msra.mxu0 0.0
        %6198 = vmatprep.subr.mxu0 0.0
        %6199 = vmatpush1.msra.mxu0 0.0
        %6200 = vmatprep.subr.mxu0 0.0
        %6201 = vmatpush1.msra.mxu0 0.0
        %6202 = vmatprep.subr.mxu0 0.0
        %6203 = vmatpush1.msra.mxu0 0.0
        %6204 = vmatprep.subr.mxu0 0.0
        %6205 = vmatpush1.msra.mxu0 0.0
        %6206 = vmatprep.subr.mxu0 0.0
        %6207 = vmatpush1.msra.mxu0 0.0
        %6208 = vmatprep.subr.mxu0 0.0
        %6209 = vmatpush1.msra.mxu0 0.0
        %6210 = vmatprep.subr.mxu0 0.0
        %6211 = vmatpush1.msra.mxu0 0.0
        %6212 = vmatprep.subr.mxu0 0.0
        %6213 = vmatpush1.msra.mxu0 0.0
        %6214 = vmatprep.subr.mxu0 0.0
        %6215 = vmatpush1.msra.mxu0 0.0
        %6216 = vmatprep.subr.mxu0 0.0
        %6217 = vmatpush1.msra.mxu0 0.0
        %6218 = vmatprep.subr.mxu0 0.0
        %6219 = vmatpush1.msra.mxu0 0.0
        %6220 = vmatprep.subr.mxu0 0.0
        %6221 = vmatpush1.msra.mxu0 0.0
        %6222 = vmatprep.subr.mxu0 0.0
        %6223 = vmatpush1.msra.mxu0 0.0
        %6224 = vmatprep.mubr.f32.mxu0 0.0
        %6225 = vmatmul.mubr.f32.gmra.mrb[0].mxu0 %v6149
        %v6226 = vpop.f32.mrb[0].mxu0
        %v6227 = vadd.f32 0.0, %v6226
        %v6228 = vpop.f32.mrb[0].mxu0
        %6229 = vmatprep.mubr.f32.mxu0 0.0
        %6230 = vmatmul.mubr.f32.gmra.mrb[0].mxu0 %v6152
        %v6231 = vpop.f32.mrb[0].mxu0
        %v6232 = vadd.f32 0.0, %v6231
        %v6233 = vpop.f32.mrb[0].mxu0
        %6234 = vmatprep.mubr.f32.mxu0 0.0
        %6235 = vmatmul.mubr.f32.gmra.mrb[0].mxu0 %v6155
        %v6236 = vpop.f32.mrb[0].mxu0
        %v6237 = vadd.f32 0.0, %v6236
        %v6238 = vpop.f32.mrb[0].mxu0
        %6239 = vmatprep.mubr.f32.mxu0 0.0
        %6240 = vmatmul.mubr.f32.gmra.mrb[0].mxu0 %v6158
        %v6241 = vpop.f32.mrb[0].mxu0
        %v6242 = vadd.f32 0.0, %v6241
        %v6243 = vpop.f32.mrb[0].mxu0
        %6244 = vdwg.mxu0
        %6245 = vmatprep.subr.mxu0 0.0
        %6246 = vmatpush1.msra.mxu0 %v6023
        %6247 = vmatprep.subr.mxu0 0.0
        %6248 = vmatpush1.msra.mxu0 %v6028
        %6249 = vmatprep.subr.mxu0 0.0
        %6250 = vmatpush1.msra.mxu0 %v6033
        %6251 = vmatprep.subr.mxu0 0.0
        %6252 = vmatpush1.msra.mxu0 %v6038
        %6253 = vmatprep.subr.mxu0 0.0
        %6254 = vmatpush1.msra.mxu0 0.0
        %6255 = vmatprep.subr.mxu0 0.0
        %6256 = vmatpush1.msra.mxu0 0.0
        %6257 = vmatprep.subr.mxu0 0.0
        %6258 = vmatpush1.msra.mxu0 0.0
        %6259 = vmatprep.subr.mxu0 0.0
        %6260 = vmatpush1.msra.mxu0 0.0
        %6261 = vmatprep.subr.mxu0 0.0
        %6262 = vmatpush1.msra.mxu0 0.0
        %6263 = vmatprep.subr.mxu0 0.0
        %6264 = vmatpush1.msra.mxu0 0.0
        %6265 = vmatprep.subr.mxu0 0.0
        %6266 = vmatpush1.msra.mxu0 0.0
        %6267 = vmatprep.subr.mxu0 0.0
        %6268 = vmatpush1.msra.mxu0 0.0
        %6269 = vmatprep.subr.mxu0 0.0
        %6270 = vmatpush1.msra.mxu0 0.0
        %6271 = vmatprep.subr.mxu0 0.0
        %6272 = vmatpush1.msra.mxu0 0.0
        %6273 = vmatprep.subr.mxu0 0.0
        %6274 = vmatpush1.msra.mxu0 0.0
        %6275 = vmatprep.subr.mxu0 0.0
        %6276 = vmatpush1.msra.mxu0 0.0
        %6277 = vmatprep.subr.mxu0 0.0
        %6278 = vmatpush1.msra.mxu0 0.0
        %6279 = vmatprep.subr.mxu0 0.0
        %6280 = vmatpush1.msra.mxu0 0.0
        %6281 = vmatprep.subr.mxu0 0.0
        %6282 = vmatpush1.msra.mxu0 0.0
        %6283 = vmatprep.subr.mxu0 0.0
        %6284 = vmatpush1.msra.mxu0 0.0
        %6285 = vmatprep.subr.mxu0 0.0
        %6286 = vmatpush1.msra.mxu0 0.0
        %6287 = vmatprep.subr.mxu0 0.0
        %6288 = vmatpush1.msra.mxu0 0.0
        %6289 = vmatprep.subr.mxu0 0.0
        %6290 = vmatpush1.msra.mxu0 0.0
        %6291 = vmatprep.subr.mxu0 0.0
        %6292 = vmatpush1.msra.mxu0 0.0
        %6293 = vmatprep.subr.mxu0 0.0
        %6294 = vmatpush1.msra.mxu0 0.0
        %6295 = vmatprep.subr.mxu0 0.0
        %6296 = vmatpush1.msra.mxu0 0.0
        %6297 = vmatprep.subr.mxu0 0.0
        %6298 = vmatpush1.msra.mxu0 0.0
        %6299 = vmatprep.subr.mxu0 0.0
        %6300 = vmatpush1.msra.mxu0 0.0
        %6301 = vmatprep.subr.mxu0 0.0
        %6302 = vmatpush1.msra.mxu0 0.0
        %6303 = vmatprep.subr.mxu0 0.0
        %6304 = vmatpush1.msra.mxu0 0.0
        %6305 = vmatprep.subr.mxu0 0.0
        %6306 = vmatpush1.msra.mxu0 0.0
        %6307 = vmatprep.subr.mxu0 0.0
        %6308 = vmatpush1.msra.mxu0 0.0
        %6309 = vmatprep.mubr.f32.mxu0 0.0
        %6310 = vmatmul.mubr.f32.gmra.mrb[0].mxu0 %v6052
        %v6311 = vpop.f32.mrb[0].mxu0
        %v6312 = vadd.f32 0.0, %v6311
        %v6313 = vpop.f32.mrb[0].mxu0
        %6314 = vmatprep.mubr.f32.mxu0 0.0
        %6315 = vmatmul.mubr.f32.gmra.mrb[0].mxu0 %v6055
        %v6316 = vpop.f32.mrb[0].mxu0
        %v6317 = vadd.f32 0.0, %v6316
        %v6318 = vpop.f32.mrb[0].mxu0
        %6319 = vmatprep.mubr.f32.mxu0 0.0
        %6320 = vmatmul.mubr.f32.gmra.mrb[0].mxu0 %v6058
        %v6321 = vpop.f32.mrb[0].mxu0
        %v6322 = vadd.f32 0.0, %v6321
        %v6323 = vpop.f32.mrb[0].mxu0
        %6324 = vmatprep.mubr.f32.mxu0 0.0
        %6325 = vmatmul.mubr.f32.gmra.mrb[0].mxu0 %v6061
        %v6326 = vpop.f32.mrb[0].mxu0
        %v6327 = vadd.f32 0.0, %v6326
        %v6328 = vpop.f32.mrb[0].mxu0
        %6329 = vdwg.mxu0
        %v6331 = vsel %vm321, %v6312, 0
        %v6334 = vsel %vm321, %v6317, 0
        %v6337 = vsel %vm321, %v6322, 0
        %v6340 = vsel %vm321, %v6327, 0
        %6342 = vmatprep.subr.mxu0 0.0
        %6343 = vmatpush1.msra.mxu0 %v6047
        %6344 = vmatprep.subr.mxu0 0.0
        %6345 = vmatpush1.msra.mxu0 %v6048
        %6346 = vmatprep.subr.mxu0 0.0
        %6347 = vmatpush1.msra.mxu0 %v6049
        %6348 = vmatprep.subr.mxu0 0.0
        %6349 = vmatpush1.msra.mxu0 %v6050
        %6350 = vmatprep.subr.mxu0 0.0
        %6351 = vmatpush1.msra.mxu0 0.0
        %6352 = vmatprep.subr.mxu0 0.0
        %6353 = vmatpush1.msra.mxu0 0.0
        %6354 = vmatprep.subr.mxu0 0.0
        %6355 = vmatpush1.msra.mxu0 0.0
        %6356 = vmatprep.subr.mxu0 0.0
        %6357 = vmatpush1.msra.mxu0 0.0
        %6358 = vmatprep.subr.mxu0 0.0
        %6359 = vmatpush1.msra.mxu0 0.0
        %6360 = vmatprep.subr.mxu0 0.0
        %6361 = vmatpush1.msra.mxu0 0.0
        %6362 = vmatprep.subr.mxu0 0.0
        %6363 = vmatpush1.msra.mxu0 0.0
        %6364 = vmatprep.subr.mxu0 0.0
        %6365 = vmatpush1.msra.mxu0 0.0
        %6366 = vmatprep.subr.mxu0 0.0
        %6367 = vmatpush1.msra.mxu0 0.0
        %6368 = vmatprep.subr.mxu0 0.0
        %6369 = vmatpush1.msra.mxu0 0.0
        %6370 = vmatprep.subr.mxu0 0.0
        %6371 = vmatpush1.msra.mxu0 0.0
        %6372 = vmatprep.subr.mxu0 0.0
        %6373 = vmatpush1.msra.mxu0 0.0
        %6374 = vmatprep.subr.mxu0 0.0
        %6375 = vmatpush1.msra.mxu0 0.0
        %6376 = vmatprep.subr.mxu0 0.0
        %6377 = vmatpush1.msra.mxu0 0.0
        %6378 = vmatprep.subr.mxu0 0.0
        %6379 = vmatpush1.msra.mxu0 0.0
        %6380 = vmatprep.subr.mxu0 0.0
        %6381 = vmatpush1.msra.mxu0 0.0
        %6382 = vmatprep.subr.mxu0 0.0
        %6383 = vmatpush1.msra.mxu0 0.0
        %6384 = vmatprep.subr.mxu0 0.0
        %6385 = vmatpush1.msra.mxu0 0.0
        %6386 = vmatprep.subr.mxu0 0.0
        %6387 = vmatpush1.msra.mxu0 0.0
        %6388 = vmatprep.subr.mxu0 0.0
        %6389 = vmatpush1.msra.mxu0 0.0
        %6390 = vmatprep.subr.mxu0 0.0
        %6391 = vmatpush1.msra.mxu0 0.0
        %6392 = vmatprep.subr.mxu0 0.0
        %6393 = vmatpush1.msra.mxu0 0.0
        %6394 = vmatprep.subr.mxu0 0.0
        %6395 = vmatpush1.msra.mxu0 0.0
        %6396 = vmatprep.subr.mxu0 0.0
        %6397 = vmatpush1.msra.mxu0 0.0
        %6398 = vmatprep.subr.mxu0 0.0
        %6399 = vmatpush1.msra.mxu0 0.0
        %6400 = vmatprep.subr.mxu0 0.0
        %6401 = vmatpush1.msra.mxu0 0.0
        %6402 = vmatprep.subr.mxu0 0.0
        %6403 = vmatpush1.msra.mxu0 0.0
        %6404 = vmatprep.subr.mxu0 0.0
        %6405 = vmatpush1.msra.mxu0 0.0
        %6406 = vmatprep.mubr.f32.mxu0 0.0
        %6407 = vmatmul.mubr.f32.gmra.mrb[0].mxu0 %v6331
        %v6408 = vpop.f32.mrb[0].mxu0
        %v6409 = vadd.f32 0.0, %v6408
        %v6410 = vpop.f32.mrb[0].mxu0
        %6411 = vmatprep.mubr.f32.mxu0 0.0
        %6412 = vmatmul.mubr.f32.gmra.mrb[0].mxu0 %v6334
        %v6413 = vpop.f32.mrb[0].mxu0
        %v6414 = vadd.f32 0.0, %v6413
        %v6415 = vpop.f32.mrb[0].mxu0
        %6416 = vmatprep.mubr.f32.mxu0 0.0
        %6417 = vmatmul.mubr.f32.gmra.mrb[0].mxu0 %v6337
        %v6418 = vpop.f32.mrb[0].mxu0
        %v6419 = vadd.f32 0.0, %v6418
        %v6420 = vpop.f32.mrb[0].mxu0
        %6421 = vmatprep.mubr.f32.mxu0 0.0
        %6422 = vmatmul.mubr.f32.gmra.mrb[0].mxu0 %v6340
        %v6423 = vpop.f32.mrb[0].mxu0
        %v6424 = vadd.f32 0.0, %v6423
        %v6425 = vpop.f32.mrb[0].mxu0
        %6426 = vdwg.mxu0
        %v6427 = vmul.f32 %v5841, %v5841
        %v6428 = vmul.f32 %v5846, %v5846
        %v6429 = vmul.f32 %v5851, %v5851
        %v6430 = vmul.f32 %v5856, %v5856
        %6431 = vmatprep.subr.mxu0 0.0
        %6432 = vmatpush1.msra.mxu0 %v6427
        %6433 = vmatprep.subr.mxu0 0.0
        %6434 = vmatpush1.msra.mxu0 %v6428
        %6435 = vmatprep.subr.mxu0 0.0
        %6436 = vmatpush1.msra.mxu0 %v6429
        %6437 = vmatprep.subr.mxu0 0.0
        %6438 = vmatpush1.msra.mxu0 %v6430
        %6439 = vmatprep.subr.mxu0 0.0
        %6440 = vmatpush1.msra.mxu0 0.0
        %6441 = vmatprep.subr.mxu0 0.0
        %6442 = vmatpush1.msra.mxu0 0.0
        %6443 = vmatprep.subr.mxu0 0.0
        %6444 = vmatpush1.msra.mxu0 0.0
        %6445 = vmatprep.subr.mxu0 0.0
        %6446 = vmatpush1.msra.mxu0 0.0
        %6447 = vmatprep.subr.mxu0 0.0
        %6448 = vmatpush1.msra.mxu0 0.0
        %6449 = vmatprep.subr.mxu0 0.0
        %6450 = vmatpush1.msra.mxu0 0.0
        %6451 = vmatprep.subr.mxu0 0.0
        %6452 = vmatpush1.msra.mxu0 0.0
        %6453 = vmatprep.subr.mxu0 0.0
        %6454 = vmatpush1.msra.mxu0 0.0
        %6455 = vmatprep.subr.mxu0 0.0
        %6456 = vmatpush1.msra.mxu0 0.0
        %6457 = vmatprep.subr.mxu0 0.0
        %6458 = vmatpush1.msra.mxu0 0.0
        %6459 = vmatprep.subr.mxu0 0.0
        %6460 = vmatpush1.msra.mxu0 0.0
        %6461 = vmatprep.subr.mxu0 0.0
        %6462 = vmatpush1.msra.mxu0 0.0
        %6463 = vmatprep.subr.mxu0 0.0
        %6464 = vmatpush1.msra.mxu0 0.0
        %6465 = vmatprep.subr.mxu0 0.0
        %6466 = vmatpush1.msra.mxu0 0.0
        %6467 = vmatprep.subr.mxu0 0.0
        %6468 = vmatpush1.msra.mxu0 0.0
        %6469 = vmatprep.subr.mxu0 0.0
        %6470 = vmatpush1.msra.mxu0 0.0
        %6471 = vmatprep.subr.mxu0 0.0
        %6472 = vmatpush1.msra.mxu0 0.0
        %6473 = vmatprep.subr.mxu0 0.0
        %6474 = vmatpush1.msra.mxu0 0.0
        %6475 = vmatprep.subr.mxu0 0.0
        %6476 = vmatpush1.msra.mxu0 0.0
        %6477 = vmatprep.subr.mxu0 0.0
        %6478 = vmatpush1.msra.mxu0 0.0
        %6479 = vmatprep.subr.mxu0 0.0
        %6480 = vmatpush1.msra.mxu0 0.0
        %6481 = vmatprep.subr.mxu0 0.0
        %6482 = vmatpush1.msra.mxu0 0.0
        %6483 = vmatprep.subr.mxu0 0.0
        %6484 = vmatpush1.msra.mxu0 0.0
        %6485 = vmatprep.subr.mxu0 0.0
        %6486 = vmatpush1.msra.mxu0 0.0
        %6487 = vmatprep.subr.mxu0 0.0
        %6488 = vmatpush1.msra.mxu0 0.0
        %6489 = vmatprep.subr.mxu0 0.0
        %6490 = vmatpush1.msra.mxu0 0.0
        %6491 = vmatprep.subr.mxu0 0.0
        %6492 = vmatpush1.msra.mxu0 0.0
        %6493 = vmatprep.subr.mxu0 0.0
        %6494 = vmatpush1.msra.mxu0 0.0
        %6495 = vmatprep.mubr.f32.mxu0 0.0
        %6496 = vmatmul.mubr.f32.gmra.mrb[0].mxu0 %v6052
        %v6497 = vpop.f32.mrb[0].mxu0
        %v6498 = vadd.f32 0.0, %v6497
        %v6499 = vpop.f32.mrb[0].mxu0
        %6500 = vmatprep.mubr.f32.mxu0 0.0
        %6501 = vmatmul.mubr.f32.gmra.mrb[0].mxu0 %v6055
        %v6502 = vpop.f32.mrb[0].mxu0
        %v6503 = vadd.f32 0.0, %v6502
        %v6504 = vpop.f32.mrb[0].mxu0
        %6505 = vmatprep.mubr.f32.mxu0 0.0
        %6506 = vmatmul.mubr.f32.gmra.mrb[0].mxu0 %v6058
        %v6507 = vpop.f32.mrb[0].mxu0
        %v6508 = vadd.f32 0.0, %v6507
        %v6509 = vpop.f32.mrb[0].mxu0
        %6510 = vmatprep.mubr.f32.mxu0 0.0
        %6511 = vmatmul.mubr.f32.gmra.mrb[0].mxu0 %v6061
        %v6512 = vpop.f32.mrb[0].mxu0
        %v6513 = vadd.f32 0.0, %v6512
        %v6514 = vpop.f32.mrb[0].mxu0
        %6515 = vdwg.mxu0
        %v6517 = vsel %vm321, %v6498, 0
        %v6520 = vsel %vm321, %v6503, 0
        %v6523 = vsel %vm321, %v6508, 0
        %v6526 = vsel %vm321, %v6513, 0
        %6528 = vmatprep.subr.mxu0 0.0
        %6529 = vmatpush1.msra.mxu0 %v6047
        %6530 = vmatprep.subr.mxu0 0.0
        %6531 = vmatpush1.msra.mxu0 %v6048
        %6532 = vmatprep.subr.mxu0 0.0
        %6533 = vmatpush1.msra.mxu0 %v6049
        %6534 = vmatprep.subr.mxu0 0.0
        %6535 = vmatpush1.msra.mxu0 %v6050
        %6536 = vmatprep.subr.mxu0 0.0
        %6537 = vmatpush1.msra.mxu0 0.0
        %6538 = vmatprep.subr.mxu0 0.0
        %6539 = vmatpush1.msra.mxu0 0.0
        %6540 = vmatprep.subr.mxu0 0.0
        %6541 = vmatpush1.msra.mxu0 0.0
        %6542 = vmatprep.subr.mxu0 0.0
        %6543 = vmatpush1.msra.mxu0 0.0
        %6544 = vmatprep.subr.mxu0 0.0
        %6545 = vmatpush1.msra.mxu0 0.0
        %6546 = vmatprep.subr.mxu0 0.0
        %6547 = vmatpush1.msra.mxu0 0.0
        %6548 = vmatprep.subr.mxu0 0.0
        %6549 = vmatpush1.msra.mxu0 0.0
        %6550 = vmatprep.subr.mxu0 0.0
        %6551 = vmatpush1.msra.mxu0 0.0
        %6552 = vmatprep.subr.mxu0 0.0
        %6553 = vmatpush1.msra.mxu0 0.0
        %6554 = vmatprep.subr.mxu0 0.0
        %6555 = vmatpush1.msra.mxu0 0.0
        %6556 = vmatprep.subr.mxu0 0.0
        %6557 = vmatpush1.msra.mxu0 0.0
        %6558 = vmatprep.subr.mxu0 0.0
        %6559 = vmatpush1.msra.mxu0 0.0
        %6560 = vmatprep.subr.mxu0 0.0
        %6561 = vmatpush1.msra.mxu0 0.0
        %6562 = vmatprep.subr.mxu0 0.0
        %6563 = vmatpush1.msra.mxu0 0.0
        %6564 = vmatprep.subr.mxu0 0.0
        %6565 = vmatpush1.msra.mxu0 0.0
        %6566 = vmatprep.subr.mxu0 0.0
        %6567 = vmatpush1.msra.mxu0 0.0
        %6568 = vmatprep.subr.mxu0 0.0
        %6569 = vmatpush1.msra.mxu0 0.0
        %6570 = vmatprep.subr.mxu0 0.0
        %6571 = vmatpush1.msra.mxu0 0.0
        %6572 = vmatprep.subr.mxu0 0.0
        %6573 = vmatpush1.msra.mxu0 0.0
        %6574 = vmatprep.subr.mxu0 0.0
        %6575 = vmatpush1.msra.mxu0 0.0
        %6576 = vmatprep.subr.mxu0 0.0
        %6577 = vmatpush1.msra.mxu0 0.0
        %6578 = vmatprep.subr.mxu0 0.0
        %6579 = vmatpush1.msra.mxu0 0.0
        %6580 = vmatprep.subr.mxu0 0.0
        %6581 = vmatpush1.msra.mxu0 0.0
        %6582 = vmatprep.subr.mxu0 0.0
        %6583 = vmatpush1.msra.mxu0 0.0
        %6584 = vmatprep.subr.mxu0 0.0
        %6585 = vmatpush1.msra.mxu0 0.0
        %6586 = vmatprep.subr.mxu0 0.0
        %6587 = vmatpush1.msra.mxu0 0.0
        %6588 = vmatprep.subr.mxu0 0.0
        %6589 = vmatpush1.msra.mxu0 0.0
        %6590 = vmatprep.subr.mxu0 0.0
        %6591 = vmatpush1.msra.mxu0 0.0
        %6592 = vmatprep.mubr.f32.mxu0 0.0
        %6593 = vmatmul.mubr.f32.gmra.mrb[0].mxu0 %v6517
        %v6594 = vpop.f32.mrb[0].mxu0
        %v6595 = vadd.f32 0.0, %v6594
        %v6596 = vpop.f32.mrb[0].mxu0
        %6597 = vmatprep.mubr.f32.mxu0 0.0
        %6598 = vmatmul.mubr.f32.gmra.mrb[0].mxu0 %v6520
        %v6599 = vpop.f32.mrb[0].mxu0
        %v6600 = vadd.f32 0.0, %v6599
        %v6601 = vpop.f32.mrb[0].mxu0
        %6602 = vmatprep.mubr.f32.mxu0 0.0
        %6603 = vmatmul.mubr.f32.gmra.mrb[0].mxu0 %v6523
        %v6604 = vpop.f32.mrb[0].mxu0
        %v6605 = vadd.f32 0.0, %v6604
        %v6606 = vpop.f32.mrb[0].mxu0
        %6607 = vmatprep.mubr.f32.mxu0 0.0
        %6608 = vmatmul.mubr.f32.gmra.mrb[0].mxu0 %v6526
        %v6609 = vpop.f32.mrb[0].mxu0
        %v6610 = vadd.f32 0.0, %v6609
        %v6611 = vpop.f32.mrb[0].mxu0
        %6612 = vdwg.mxu0
        %v6613 = vmul.f32 %v6023, %v6023
        %v6614 = vmul.f32 %v6028, %v6028
        %v6615 = vmul.f32 %v6033, %v6033
        %v6616 = vmul.f32 %v6038, %v6038
        %6617 = vmatprep.subr.mxu0 0.0
        %6618 = vmatpush1.msra.mxu0 %v6613
        %6619 = vmatprep.subr.mxu0 0.0
        %6620 = vmatpush1.msra.mxu0 %v6614
        %6621 = vmatprep.subr.mxu0 0.0
        %6622 = vmatpush1.msra.mxu0 %v6615
        %6623 = vmatprep.subr.mxu0 0.0
        %6624 = vmatpush1.msra.mxu0 %v6616
        %6625 = vmatprep.subr.mxu0 0.0
        %6626 = vmatpush1.msra.mxu0 0.0
        %6627 = vmatprep.subr.mxu0 0.0
        %6628 = vmatpush1.msra.mxu0 0.0
        %6629 = vmatprep.subr.mxu0 0.0
        %6630 = vmatpush1.msra.mxu0 0.0
        %6631 = vmatprep.subr.mxu0 0.0
        %6632 = vmatpush1.msra.mxu0 0.0
        %6633 = vmatprep.subr.mxu0 0.0
        %6634 = vmatpush1.msra.mxu0 0.0
        %6635 = vmatprep.subr.mxu0 0.0
        %6636 = vmatpush1.msra.mxu0 0.0
        %6637 = vmatprep.subr.mxu0 0.0
        %6638 = vmatpush1.msra.mxu0 0.0
        %6639 = vmatprep.subr.mxu0 0.0
        %6640 = vmatpush1.msra.mxu0 0.0
        %6641 = vmatprep.subr.mxu0 0.0
        %6642 = vmatpush1.msra.mxu0 0.0
        %6643 = vmatprep.subr.mxu0 0.0
        %6644 = vmatpush1.msra.mxu0 0.0
        %6645 = vmatprep.subr.mxu0 0.0
        %6646 = vmatpush1.msra.mxu0 0.0
        %6647 = vmatprep.subr.mxu0 0.0
        %6648 = vmatpush1.msra.mxu0 0.0
        %6649 = vmatprep.subr.mxu0 0.0
        %6650 = vmatpush1.msra.mxu0 0.0
        %6651 = vmatprep.subr.mxu0 0.0
        %6652 = vmatpush1.msra.mxu0 0.0
        %6653 = vmatprep.subr.mxu0 0.0
        %6654 = vmatpush1.msra.mxu0 0.0
        %6655 = vmatprep.subr.mxu0 0.0
        %6656 = vmatpush1.msra.mxu0 0.0
        %6657 = vmatprep.subr.mxu0 0.0
        %6658 = vmatpush1.msra.mxu0 0.0
        %6659 = vmatprep.subr.mxu0 0.0
        %6660 = vmatpush1.msra.mxu0 0.0
        %6661 = vmatprep.subr.mxu0 0.0
        %6662 = vmatpush1.msra.mxu0 0.0
        %6663 = vmatprep.subr.mxu0 0.0
        %6664 = vmatpush1.msra.mxu0 0.0
        %6665 = vmatprep.subr.mxu0 0.0
        %6666 = vmatpush1.msra.mxu0 0.0
        %6667 = vmatprep.subr.mxu0 0.0
        %6668 = vmatpush1.msra.mxu0 0.0
        %6669 = vmatprep.subr.mxu0 0.0
        %6670 = vmatpush1.msra.mxu0 0.0
        %6671 = vmatprep.subr.mxu0 0.0
        %6672 = vmatpush1.msra.mxu0 0.0
        %6673 = vmatprep.subr.mxu0 0.0
        %6674 = vmatpush1.msra.mxu0 0.0
        %6675 = vmatprep.subr.mxu0 0.0
        %6676 = vmatpush1.msra.mxu0 0.0
        %6677 = vmatprep.subr.mxu0 0.0
        %6678 = vmatpush1.msra.mxu0 0.0
        %6679 = vmatprep.subr.mxu0 0.0
        %6680 = vmatpush1.msra.mxu0 0.0
        %6681 = vmatprep.mubr.f32.mxu0 0.0
        %6682 = vmatmul.mubr.f32.gmra.mrb[0].mxu0 %v6052
        %v6683 = vpop.f32.mrb[0].mxu0
        %v6684 = vadd.f32 0.0, %v6683
        %v6685 = vpop.f32.mrb[0].mxu0
        %6686 = vmatprep.mubr.f32.mxu0 0.0
        %6687 = vmatmul.mubr.f32.gmra.mrb[0].mxu0 %v6055
        %v6688 = vpop.f32.mrb[0].mxu0
        %v6689 = vadd.f32 0.0, %v6688
        %v6690 = vpop.f32.mrb[0].mxu0
        %6691 = vmatprep.mubr.f32.mxu0 0.0
        %6692 = vmatmul.mubr.f32.gmra.mrb[0].mxu0 %v6058
        %v6693 = vpop.f32.mrb[0].mxu0
        %v6694 = vadd.f32 0.0, %v6693
        %v6695 = vpop.f32.mrb[0].mxu0
        %6696 = vmatprep.mubr.f32.mxu0 0.0
        %6697 = vmatmul.mubr.f32.gmra.mrb[0].mxu0 %v6061
        %v6698 = vpop.f32.mrb[0].mxu0
        %v6699 = vadd.f32 0.0, %v6698
        %v6700 = vpop.f32.mrb[0].mxu0
        %6701 = vdwg.mxu0
        %v6703 = vsel %vm321, %v6684, 0
        %v6706 = vsel %vm321, %v6689, 0
        %v6709 = vsel %vm321, %v6694, 0
        %v6712 = vsel %vm321, %v6699, 0
        %6714 = vmatprep.subr.mxu0 0.0
        %6715 = vmatpush1.msra.mxu0 %v6047
        %6716 = vmatprep.subr.mxu0 0.0
        %6717 = vmatpush1.msra.mxu0 %v6048
        %6718 = vmatprep.subr.mxu0 0.0
        %6719 = vmatpush1.msra.mxu0 %v6049
        %6720 = vmatprep.subr.mxu0 0.0
        %6721 = vmatpush1.msra.mxu0 %v6050
        %6722 = vmatprep.subr.mxu0 0.0
        %6723 = vmatpush1.msra.mxu0 0.0
        %6724 = vmatprep.subr.mxu0 0.0
        %6725 = vmatpush1.msra.mxu0 0.0
        %6726 = vmatprep.subr.mxu0 0.0
        %6727 = vmatpush1.msra.mxu0 0.0
        %6728 = vmatprep.subr.mxu0 0.0
        %6729 = vmatpush1.msra.mxu0 0.0
        %6730 = vmatprep.subr.mxu0 0.0
        %6731 = vmatpush1.msra.mxu0 0.0
        %6732 = vmatprep.subr.mxu0 0.0
        %6733 = vmatpush1.msra.mxu0 0.0
        %6734 = vmatprep.subr.mxu0 0.0
        %6735 = vmatpush1.msra.mxu0 0.0
        %6736 = vmatprep.subr.mxu0 0.0
        %6737 = vmatpush1.msra.mxu0 0.0
        %6738 = vmatprep.subr.mxu0 0.0
        %6739 = vmatpush1.msra.mxu0 0.0
        %6740 = vmatprep.subr.mxu0 0.0
        %6741 = vmatpush1.msra.mxu0 0.0
        %6742 = vmatprep.subr.mxu0 0.0
        %6743 = vmatpush1.msra.mxu0 0.0
        %6744 = vmatprep.subr.mxu0 0.0
        %6745 = vmatpush1.msra.mxu0 0.0
        %6746 = vmatprep.subr.mxu0 0.0
        %6747 = vmatpush1.msra.mxu0 0.0
        %6748 = vmatprep.subr.mxu0 0.0
        %6749 = vmatpush1.msra.mxu0 0.0
        %6750 = vmatprep.subr.mxu0 0.0
        %6751 = vmatpush1.msra.mxu0 0.0
        %6752 = vmatprep.subr.mxu0 0.0
        %6753 = vmatpush1.msra.mxu0 0.0
        %6754 = vmatprep.subr.mxu0 0.0
        %6755 = vmatpush1.msra.mxu0 0.0
        %6756 = vmatprep.subr.mxu0 0.0
        %6757 = vmatpush1.msra.mxu0 0.0
        %6758 = vmatprep.subr.mxu0 0.0
        %6759 = vmatpush1.msra.mxu0 0.0
        %6760 = vmatprep.subr.mxu0 0.0
        %6761 = vmatpush1.msra.mxu0 0.0
        %6762 = vmatprep.subr.mxu0 0.0
        %6763 = vmatpush1.msra.mxu0 0.0
        %6764 = vmatprep.subr.mxu0 0.0
        %6765 = vmatpush1.msra.mxu0 0.0
        %6766 = vmatprep.subr.mxu0 0.0
        %6767 = vmatpush1.msra.mxu0 0.0
        %6768 = vmatprep.subr.mxu0 0.0
        %6769 = vmatpush1.msra.mxu0 0.0
        %6770 = vmatprep.subr.mxu0 0.0
        %6771 = vmatpush1.msra.mxu0 0.0
        %6772 = vmatprep.subr.mxu0 0.0
        %6773 = vmatpush1.msra.mxu0 0.0
        %6774 = vmatprep.subr.mxu0 0.0
        %6775 = vmatpush1.msra.mxu0 0.0
        %6776 = vmatprep.subr.mxu0 0.0
        %6777 = vmatpush1.msra.mxu0 0.0
        %6778 = vmatprep.mubr.f32.mxu0 0.0
        %6779 = vmatmul.mubr.f32.gmra.mrb[0].mxu0 %v6703
        %v6780 = vpop.f32.mrb[0].mxu0
        %v6781 = vadd.f32 0.0, %v6780
        %v6782 = vpop.f32.mrb[0].mxu0
        %6783 = vmatprep.mubr.f32.mxu0 0.0
        %6784 = vmatmul.mubr.f32.gmra.mrb[0].mxu0 %v6706
        %v6785 = vpop.f32.mrb[0].mxu0
        %v6786 = vadd.f32 0.0, %v6785
        %v6787 = vpop.f32.mrb[0].mxu0
        %6788 = vmatprep.mubr.f32.mxu0 0.0
        %6789 = vmatmul.mubr.f32.gmra.mrb[0].mxu0 %v6709
        %v6790 = vpop.f32.mrb[0].mxu0
        %v6791 = vadd.f32 0.0, %v6790
        %v6792 = vpop.f32.mrb[0].mxu0
        %6793 = vmatprep.mubr.f32.mxu0 0.0
        %6794 = vmatmul.mubr.f32.gmra.mrb[0].mxu0 %v6712
        %v6795 = vpop.f32.mrb[0].mxu0
        %v6796 = vadd.f32 0.0, %v6795
        %v6797 = vpop.f32.mrb[0].mxu0
        %6798 = vdwg.mxu0
        %v6799 = vmul.f32 %v5841, %v6023
        %v6800 = vmul.f32 %v5846, %v6028
        %v6801 = vmul.f32 %v5851, %v6033
        %v6802 = vmul.f32 %v5856, %v6038
        %6803 = vmatprep.subr.mxu0 0.0
        %6804 = vmatpush1.msra.mxu0 %v6799
        %6805 = vmatprep.subr.mxu0 0.0
        %6806 = vmatpush1.msra.mxu0 %v6800
        %6807 = vmatprep.subr.mxu0 0.0
        %6808 = vmatpush1.msra.mxu0 %v6801
        %6809 = vmatprep.subr.mxu0 0.0
        %6810 = vmatpush1.msra.mxu0 %v6802
        %6811 = vmatprep.subr.mxu0 0.0
        %6812 = vmatpush1.msra.mxu0 0.0
        %6813 = vmatprep.subr.mxu0 0.0
        %6814 = vmatpush1.msra.mxu0 0.0
        %6815 = vmatprep.subr.mxu0 0.0
        %6816 = vmatpush1.msra.mxu0 0.0
        %6817 = vmatprep.subr.mxu0 0.0
        %6818 = vmatpush1.msra.mxu0 0.0
        %6819 = vmatprep.subr.mxu0 0.0
        %6820 = vmatpush1.msra.mxu0 0.0
        %6821 = vmatprep.subr.mxu0 0.0
        %6822 = vmatpush1.msra.mxu0 0.0
        %6823 = vmatprep.subr.mxu0 0.0
        %6824 = vmatpush1.msra.mxu0 0.0
        %6825 = vmatprep.subr.mxu0 0.0
        %6826 = vmatpush1.msra.mxu0 0.0
        %6827 = vmatprep.subr.mxu0 0.0
        %6828 = vmatpush1.msra.mxu0 0.0
        %6829 = vmatprep.subr.mxu0 0.0
        %6830 = vmatpush1.msra.mxu0 0.0
        %6831 = vmatprep.subr.mxu0 0.0
        %6832 = vmatpush1.msra.mxu0 0.0
        %6833 = vmatprep.subr.mxu0 0.0
        %6834 = vmatpush1.msra.mxu0 0.0
        %6835 = vmatprep.subr.mxu0 0.0
        %6836 = vmatpush1.msra.mxu0 0.0
        %6837 = vmatprep.subr.mxu0 0.0
        %6838 = vmatpush1.msra.mxu0 0.0
        %6839 = vmatprep.subr.mxu0 0.0
        %6840 = vmatpush1.msra.mxu0 0.0
        %6841 = vmatprep.subr.mxu0 0.0
        %6842 = vmatpush1.msra.mxu0 0.0
        %6843 = vmatprep.subr.mxu0 0.0
        %6844 = vmatpush1.msra.mxu0 0.0
        %6845 = vmatprep.subr.mxu0 0.0
        %6846 = vmatpush1.msra.mxu0 0.0
        %6847 = vmatprep.subr.mxu0 0.0
        %6848 = vmatpush1.msra.mxu0 0.0
        %6849 = vmatprep.subr.mxu0 0.0
        %6850 = vmatpush1.msra.mxu0 0.0
        %6851 = vmatprep.subr.mxu0 0.0
        %6852 = vmatpush1.msra.mxu0 0.0
        %6853 = vmatprep.subr.mxu0 0.0
        %6854 = vmatpush1.msra.mxu0 0.0
        %6855 = vmatprep.subr.mxu0 0.0
        %6856 = vmatpush1.msra.mxu0 0.0
        %6857 = vmatprep.subr.mxu0 0.0
        %6858 = vmatpush1.msra.mxu0 0.0
        %6859 = vmatprep.subr.mxu0 0.0
        %6860 = vmatpush1.msra.mxu0 0.0
        %6861 = vmatprep.subr.mxu0 0.0
        %6862 = vmatpush1.msra.mxu0 0.0
        %6863 = vmatprep.subr.mxu0 0.0
        %6864 = vmatpush1.msra.mxu0 0.0
        %6865 = vmatprep.subr.mxu0 0.0
        %6866 = vmatpush1.msra.mxu0 0.0
        %6867 = vmatprep.mubr.f32.mxu0 0.0
        %6868 = vmatmul.mubr.f32.gmra.mrb[0].mxu0 %v6052
        %v6869 = vpop.f32.mrb[0].mxu0
        %v6870 = vadd.f32 0.0, %v6869
        %v6871 = vpop.f32.mrb[0].mxu0
        %6872 = vmatprep.mubr.f32.mxu0 0.0
        %6873 = vmatmul.mubr.f32.gmra.mrb[0].mxu0 %v6055
        %v6874 = vpop.f32.mrb[0].mxu0
        %v6875 = vadd.f32 0.0, %v6874
        %v6876 = vpop.f32.mrb[0].mxu0
        %6877 = vmatprep.mubr.f32.mxu0 0.0
        %6878 = vmatmul.mubr.f32.gmra.mrb[0].mxu0 %v6058
        %v6879 = vpop.f32.mrb[0].mxu0
        %v6880 = vadd.f32 0.0, %v6879
        %v6881 = vpop.f32.mrb[0].mxu0
        %6882 = vmatprep.mubr.f32.mxu0 0.0
        %6883 = vmatmul.mubr.f32.gmra.mrb[0].mxu0 %v6061
        %v6884 = vpop.f32.mrb[0].mxu0
        %v6885 = vadd.f32 0.0, %v6884
        %v6886 = vpop.f32.mrb[0].mxu0
        %6887 = vdwg.mxu0
        %v6889 = vsel %vm321, %v6870, 0
        %v6892 = vsel %vm321, %v6875, 0
        %v6895 = vsel %vm321, %v6880, 0
        %v6898 = vsel %vm321, %v6885, 0
        %6900 = vmatprep.subr.mxu0 0.0
        %6901 = vmatpush1.msra.mxu0 %v6047
        %6902 = vmatprep.subr.mxu0 0.0
        %6903 = vmatpush1.msra.mxu0 %v6048
        %6904 = vmatprep.subr.mxu0 0.0
        %6905 = vmatpush1.msra.mxu0 %v6049
        %6906 = vmatprep.subr.mxu0 0.0
        %6907 = vmatpush1.msra.mxu0 %v6050
        %6908 = vmatprep.subr.mxu0 0.0
        %6909 = vmatpush1.msra.mxu0 0.0
        %6910 = vmatprep.subr.mxu0 0.0
        %6911 = vmatpush1.msra.mxu0 0.0
        %6912 = vmatprep.subr.mxu0 0.0
        %6913 = vmatpush1.msra.mxu0 0.0
        %6914 = vmatprep.subr.mxu0 0.0
        %6915 = vmatpush1.msra.mxu0 0.0
        %6916 = vmatprep.subr.mxu0 0.0
        %6917 = vmatpush1.msra.mxu0 0.0
        %6918 = vmatprep.subr.mxu0 0.0
        %6919 = vmatpush1.msra.mxu0 0.0
        %6920 = vmatprep.subr.mxu0 0.0
        %6921 = vmatpush1.msra.mxu0 0.0
        %6922 = vmatprep.subr.mxu0 0.0
        %6923 = vmatpush1.msra.mxu0 0.0
        %6924 = vmatprep.subr.mxu0 0.0
        %6925 = vmatpush1.msra.mxu0 0.0
        %6926 = vmatprep.subr.mxu0 0.0
        %6927 = vmatpush1.msra.mxu0 0.0
        %6928 = vmatprep.subr.mxu0 0.0
        %6929 = vmatpush1.msra.mxu0 0.0
        %6930 = vmatprep.subr.mxu0 0.0
        %6931 = vmatpush1.msra.mxu0 0.0
        %6932 = vmatprep.subr.mxu0 0.0
        %6933 = vmatpush1.msra.mxu0 0.0
        %6934 = vmatprep.subr.mxu0 0.0
        %6935 = vmatpush1.msra.mxu0 0.0
        %6936 = vmatprep.subr.mxu0 0.0
        %6937 = vmatpush1.msra.mxu0 0.0
        %6938 = vmatprep.subr.mxu0 0.0
        %6939 = vmatpush1.msra.mxu0 0.0
        %6940 = vmatprep.subr.mxu0 0.0
        %6941 = vmatpush1.msra.mxu0 0.0
        %6942 = vmatprep.subr.mxu0 0.0
        %6943 = vmatpush1.msra.mxu0 0.0
        %6944 = vmatprep.subr.mxu0 0.0
        %6945 = vmatpush1.msra.mxu0 0.0
        %6946 = vmatprep.subr.mxu0 0.0
        %6947 = vmatpush1.msra.mxu0 0.0
        %6948 = vmatprep.subr.mxu0 0.0
        %6949 = vmatpush1.msra.mxu0 0.0
        %6950 = vmatprep.subr.mxu0 0.0
        %6951 = vmatpush1.msra.mxu0 0.0
        %6952 = vmatprep.subr.mxu0 0.0
        %6953 = vmatpush1.msra.mxu0 0.0
        %6954 = vmatprep.subr.mxu0 0.0
        %6955 = vmatpush1.msra.mxu0 0.0
        %6956 = vmatprep.subr.mxu0 0.0
        %6957 = vmatpush1.msra.mxu0 0.0
        %6958 = vmatprep.subr.mxu0 0.0
        %6959 = vmatpush1.msra.mxu0 0.0
        %6960 = vmatprep.subr.mxu0 0.0
        %6961 = vmatpush1.msra.mxu0 0.0
        %6962 = vmatprep.subr.mxu0 0.0
        %6963 = vmatpush1.msra.mxu0 0.0
        %6964 = vmatprep.mubr.f32.mxu0 0.0
        %6965 = vmatmul.mubr.f32.gmra.mrb[0].mxu0 %v6889
        %v6966 = vpop.f32.mrb[0].mxu0
        %v6967 = vadd.f32 0.0, %v6966
        %v6968 = vpop.f32.mrb[0].mxu0
        %6969 = vmatprep.mubr.f32.mxu0 0.0
        %6970 = vmatmul.mubr.f32.gmra.mrb[0].mxu0 %v6892
        %v6971 = vpop.f32.mrb[0].mxu0
        %v6972 = vadd.f32 0.0, %v6971
        %v6973 = vpop.f32.mrb[0].mxu0
        %6974 = vmatprep.mubr.f32.mxu0 0.0
        %6975 = vmatmul.mubr.f32.gmra.mrb[0].mxu0 %v6895
        %v6976 = vpop.f32.mrb[0].mxu0
        %v6977 = vadd.f32 0.0, %v6976
        %v6978 = vpop.f32.mrb[0].mxu0
        %6979 = vmatprep.mubr.f32.mxu0 0.0
        %6980 = vmatmul.mubr.f32.gmra.mrb[0].mxu0 %v6898
        %v6981 = vpop.f32.mrb[0].mxu0
        %v6982 = vadd.f32 0.0, %v6981
        %v6983 = vpop.f32.mrb[0].mxu0
        %6984 = vdwg.mxu0
        %v6985 = vmul.f32 %v6227, %v6227
        %v6986 = vmul.f32 %v6232, %v6232
        %v6987 = vmul.f32 %v6237, %v6237
        %v6988 = vmul.f32 %v6242, %v6242
        %v6989 = vmul.f32 %v6409, %v6409
        %v6990 = vmul.f32 %v6414, %v6414
        %v6991 = vmul.f32 %v6419, %v6419
        %v6992 = vmul.f32 %v6424, %v6424
        %v6993 = vmul.f32 %v6227, %v6409
        %v6994 = vmul.f32 %v6232, %v6414
        %v6995 = vmul.f32 %v6237, %v6419
        %v6996 = vmul.f32 %v6242, %v6424
        %v6997 = vsub.f32 %v6595, %v6985
        %v6998 = vsub.f32 %v6600, %v6986
        %v6999 = vsub.f32 %v6605, %v6987
        %v7000 = vsub.f32 %v6610, %v6988
        %v7001 = vsub.f32 %v6781, %v6989
        %v7002 = vsub.f32 %v6786, %v6990
        %v7003 = vsub.f32 %v6791, %v6991
        %v7004 = vsub.f32 %v6796, %v6992
        %v7005 = vsub.f32 %v6967, %v6993
        %v7006 = vsub.f32 %v6972, %v6994
        %v7007 = vsub.f32 %v6977, %v6995
        %v7008 = vsub.f32 %v6982, %v6996
        %v7009 = vmul.f32 %v6993, 2.0
        %v7010 = vmul.f32 %v6994, 2.0
        %v7011 = vmul.f32 %v6995, 2.0
        %v7012 = vmul.f32 %v6996, 2.0
        %v7013 = vadd.f32 %v7009, 6.5025
        %v7014 = vadd.f32 %v7010, 6.5025
        %v7015 = vadd.f32 %v7011, 6.5025
        %v7016 = vadd.f32 %v7012, 6.5025
        %v7017 = vmul.f32 %v7005, 2.0
        %v7018 = vmul.f32 %v7006, 2.0
        %v7019 = vmul.f32 %v7007, 2.0
        %v7020 = vmul.f32 %v7008, 2.0
        %v7021 = vadd.f32 %v7017, 58.5225
        %v7022 = vadd.f32 %v7018, 58.5225
        %v7023 = vadd.f32 %v7019, 58.5225
        %v7024 = vadd.f32 %v7020, 58.5225
        %v7025 = vmul.f32 %v7013, %v7021
        %v7026 = vmul.f32 %v7014, %v7022
        %v7027 = vmul.f32 %v7015, %v7023
        %v7028 = vmul.f32 %v7016, %v7024
        %v7029 = vadd.f32 %v6985, %v6989
        %v7030 = vadd.f32 %v6986, %v6990
        %v7031 = vadd.f32 %v6987, %v6991
        %v7032 = vadd.f32 %v6988, %v6992
        %v7033 = vadd.f32 %v7029, 6.5025
        %v7034 = vadd.f32 %v7030, 6.5025
        %v7035 = vadd.f32 %v7031, 6.5025
        %v7036 = vadd.f32 %v7032, 6.5025
        %v7037 = vadd.f32 %v6997, %v7001
        %v7038 = vadd.f32 %v6998, %v7002
        %v7039 = vadd.f32 %v6999, %v7003
        %v7040 = vadd.f32 %v7000, %v7004
        %v7041 = vadd.f32 %v7037, 58.5225
        %v7042 = vadd.f32 %v7038, 58.5225
        %v7043 = vadd.f32 %v7039, 58.5225
        %v7044 = vadd.f32 %v7040, 58.5225
        %v7045 = vmul.f32 %v7033, %v7041
        %v7046 = vmul.f32 %v7034, %v7042
        %v7047 = vmul.f32 %v7035, %v7043
        %v7048 = vmul.f32 %v7036, %v7044
        %v7049 = vrcp.pop %v7045
        %v7050 = vrcp.pop %v7046
        %v7051 = vrcp.pop %v7047
        %v7052 = vrcp.pop %v7048
        %v7053 = vmul.f32 %v7025, %v7049
        %v7054 = vmul.f32 %v7026, %v7050
        %v7055 = vmul.f32 %v7027, %v7051
        %v7056 = vmul.f32 %v7028, %v7052
        %vm7057 = vcmp.lt.s32.totalorder %v307, 2
        %vm7058 = vcmp.lt.s32.totalorder %v308, 2
        %vm7059 = vcmp.lt.s32.totalorder %v309, 2
        %vm7060 = vcmp.lt.s32.totalorder %v310, 2
        %vm7061 = vcmp.lt.s32.totalorder %v312, 2
        %vm7062 = vmand %vm7057, %vm7061
        %vm7063 = vmand %vm7058, %vm7061
        %vm7064 = vmand %vm7059, %vm7061
        %vm7065 = vmand %vm7060, %vm7061
        %v7066 = vsel %vm7062, %v7053, 0.0
        %v7067 = vsel %vm7063, %v7054, 0.0
        %v7068 = vsel %vm7064, %v7055, 0.0
        %v7069 = vsel %vm7065, %v7056, 0.0
        %v7070 = vsel %vm321, %v7066, 0.0
        %v7071 = vsel %vm321, %v7067, 0.0
        %v7072 = vadd.f32 %v7070, %v7071
        %v7073 = vsel %vm321, %v7068, 0.0
        %v7074 = vadd.f32 %v7072, %v7073
        %v7075 = vsel %vm321, %v7069, 0.0
        %v7076 = vadd.f32 %v7074, %v7075
        %7077 = vadd.xlane.f32.xlu0 %v7076
        %v7078 = vpop.xlane.xlu0 %7077
        %v7079 = vrot.slane %v7078, 4
        %v7080 = vadd.f32 %v7078, %v7079
        %v7081 = vrot.slane %v7080, 2
        %v7082 = vadd.f32 %v7080, %v7081
        %v7083 = vrot.slane %v7082, 1
        %v7084 = vadd.f32 %v7082, %v7083
        %s7085 = vtos %v7084
        %s7086 = smul.f32 %s7085, 0.25
        %vm7087 = vcmp.eq.s32.totalorder %v312, 4
        %v7088 = vstv %s7086
        %v7089 = vsel %vm7087, %v7088, 0.0
        %v7090 = vadd.f32 %v5654, %v7089
        %vm7091 = vcmask 32768
        %7092 = vst.msk [vmem:[%s297] sm:$0x1] %vm7091, %v7090
        %p7093 = scmp.lt.s32.totalorder %s19, 1
        %s7094 = scalar_select %p7093, %s19, 1
        %s7095 = scalar_lea.vmem %s6, %s7094
        // Predicated region
        $region53: #{a_call__.1} parent=43 // pred_check
          %p7096 = pneg %p173
        $region54: #{a_call__.1} parent=43 // pred_check_branch
          %7098 = sbr.rel (%p7096) target = $region56
        $region55: #{a_call__.1} parent=43 // pred_region
          _
        $region56: #{a_call__.1} parent=43 // pred_fallthru
          _
      $region44: #{a_call__.1} parent=5 // pred_fallthru
        _
      %p7099 = scmp.le.s32.totalorder 2, %s14
      // Predicated region
      $region57: #{a_call__.1} parent=5 // pred_check
        %p7100 = pneg %p7099
      $region58: #{a_call__.1} parent=5 // pred_check_branch
        %7102 = sbr.rel (%p7100) target = $region60
      $region59: #{a_call__.1} parent=5 // pred_region
        %s7103 = ssub.s32 %s14, 2
        // Predicated region
        $region61: #{a_call__.1} parent=59 // pred_check
          %p7104 = pneg %p179
        $region62: #{a_call__.1} parent=59 // pred_check_branch
          %7106 = sbr.rel (%p7104) target = $region64
        $region63: #{a_call__.1} parent=59 // pred_region
          %p7107 = scmp.lt.s32.totalorder %s20, 1
          %s7108 = scalar_select %p7107, %s20, 1
          %s7109 = scalar_lea.vmem %s6, %s7108
        $region64: #{a_call__.1} parent=59 // pred_fallthru
          _
      $region60: #{a_call__.1} parent=5 // pred_fallthru
        _
    $region6: #{a_call__.1} parent=1 // loop_footer
      %s18 = sadd.s32 1, %s14
    $region7: #{a_call__.1} parent=1 // loop_footer_branch
      %13 = sbr.rel target = $region3
    $region8: #{a_call__.1} parent=1 // loop_exit
      _
    %7110 = vsyncpa [#allocation3], 1
    %s7111 = scalar_lea.sflag [#allocation3], 1
    %7112 = vsyncpa %s7111, 1
    %7113 = vsyncpa [#allocation5], 1

</llo_original>
